<compile_context>
chip_gen: v6e
topology: v6e:2x2x1
jax: 0.10.0
libtpu: 0.0.40
codegen_flags: <defaults>
</compile_context>

<pallas_src>
import functools
import numpy as np
import jax
import jax.numpy as jnp
from jax import lax
from jax.experimental import pallas as pl
from jax.experimental.pallas import tpu as pltpu

BIN_AGG = 8  # binAgg in the PyTorch module


def _round_up(x, m):
    return ((x + m - 1) // m) * m


# ---------------------------------------------------------------- constants --
def _chunk_matrices(oh, ow, W, PW, NCHp, agg=BIN_AGG):
    """Factored chunk-mean operators for binFunc's torch.split(.., 8, dim=-1).

    Patch positions (oy, ox) live on the sublane axis with row stride W
    (r = oy*W + ox).  msum (NCHp, PW) maps |x| -> per-chunk means (1/cnt folded
    in, last-chunk residual handled); bcast (PW, NCHp) broadcasts each chunk
    mean back to its members.  Rows/cols of padding positions (ox>=ow, oy>=oh)
    are zero, so garbage read there never contributes.  This replaces the dense
    (L1, L1) averaging matrix with two thin rectangular factors.
    """
    L1 = oh * ow
    msum = np.zeros((NCHp, PW), np.float32)
    bcast = np.zeros((PW, NCHp), np.float32)
    for oy in range(oh):
        for ox in range(ow):
            l_orig = oy * ow + ox
            ch = l_orig // agg
            cnt = min(agg, L1 - ch * agg)
            r = oy * W + ox
            msum[ch, r] = 1.0 / cnt
            bcast[r, ch] = 1.0
    return jnp.asarray(msum), jnp.asarray(bcast)


# ------------------------------------------------------------- Pallas kernel --
def _hb_pass_kernel(x_ref, msum_ref, bcast_ref, w_ref, b_ref, o_ref,
                    macc, ybuf, *, K1, W, HW, HWp, PW, M2, COUT):
    """One batch element, channels-last.

    x_ref:  (1, HWM1, C)  image flattened (py*W+px on sublanes), zero tail rows
    msum:   (NCHp, PW)    chunk-mean sum operator (1/cnt folded in)
    bcast:  (PW, NCHp)    chunk-mean broadcast-back operator
    w_ref:  (9, C, COUT)  bf16 conv taps, j = jy*3 + jx
    b_ref:  (1, COUT)     conv bias
    o_ref:  (1, HWp, COUT)
    macc:   (PWA, C) f32 scratch  (fold accumulator of the mean field)
    ybuf:   (YH,  C) f32 scratch  (folded y surrounded by zero conv halo rows)
    """
    xs = x_ref[0]                                   # (HWM1, C)
    ax = jnp.abs(xs)
    macc[...] = jnp.zeros_like(macc)
    ybuf[...] = jnp.zeros_like(ybuf)

    # ---- BinActive + Col2Im fold -------------------------------------------
    # For patch offset (ky,kx) both the im2col gather and the col2im scatter
    # are the same flattened shift off = ky*W + kx; sign(x) factors out and is
    # applied once at the end:  y = sign(x) * sum_kk shift(mean_field_kk).
    for ky in range(K1):
        for kx in range(K1):
            off = ky * W + kx
            a_kk = ax[off:off + PW, :]                              # (PW, C)
            mch = jnp.dot(msum_ref[...], a_kk,
                          preferred_element_type=jnp.float32)       # (NCHp, C)
            mf = jnp.dot(bcast_ref[...], mch,
                         preferred_element_type=jnp.float32)        # (PW, C)
            macc[off:off + PW, :] = macc[off:off + PW, :] + mf

    xin = xs[:HW, :]
    sgn = jnp.where(xin > 0, 1.0, jnp.where(xin < 0, -1.0, 0.0))
    ybuf[M2:M2 + HW, :] = sgn * macc[:HW, :]        # zero halo stays around it

    # ---- FPconv 3x3 (stride 1, pad 1) + bias + ReLU -------------------------
    # Sum of 9 shifted bf16 matmuls over the VMEM-resident y (no cols2 in HBM).
    # Row (py) out-of-range taps read the zero halo rows; column (px) wraps are
    # masked with an iota-derived mask.  f32 accumulation.
    C = x_ref.shape[-1]
    pxcol = lax.broadcasted_iota(jnp.int32, (HWp, C), 0) % W
    mask_l = (pxcol != 0).astype(jnp.bfloat16)       # kills px == 0     (jx=0)
    mask_r = (pxcol != W - 1).astype(jnp.bfloat16)   # kills px == W-1   (jx=2)

    acc = jnp.zeros((HWp, COUT), jnp.float32)
    for jy in range(K1):
        for jx in range(K1):
            d = (jy - 1) * W + (jx - 1)
            ysh = ybuf[M2 + d:M2 + d + HWp, :].astype(jnp.bfloat16)  # (HWp, C)
            if jx == 0:
                ysh = ysh * mask_l
            elif jx == K1 - 1:
                ysh = ysh * mask_r
            acc = acc + jnp.dot(ysh, w_ref[jy * K1 + jx],
                                preferred_element_type=jnp.float32)
    o_ref[0] = jnp.maximum(acc + b_ref[...], 0.0)


# ----------------------------------------------------------------- wrapper ---
def hb_pass_forward(x, conv_w, conv_b):
    """hbPass(C, C_out, kernel_size=3, stride=1, padding=1, Linear=False)."""
    N, C, H, W = x.shape
    C_out, C_in, kh, kw = conv_w.shape
    assert C_in == C and kh == 3 and kw == 3, "conv path assumes a 3x3 FPconv"
    K1 = 3                                 # forward() im2col/col2im: k=3, p=0, s=1
    oh, ow = H - K1 + 1, W - K1 + 1
    L1 = oh * ow
    assert L1 > BIN_AGG                    # binFunc main (chunked) path
    HW = H * W

    HWp = _round_up(HW, 8)                 # output rows (sublane aligned)
    OFFMAX = (K1 - 1) * W + (K1 - 1)       # largest fold shift
    PW = _round_up(oh * W, 8)              # patch-window rows for the chunk matmuls
    NCHp = _round_up(-(-L1 // BIN_AGG), 8)
    HWM1 = _round_up(max(HW, OFFMAX + PW), 8)
    PWA = _round_up(OFFMAX + PW, 8)
    M2 = _round_up(W + 1, 8)               # zero halo above y (conv pad=1 rows)
    YH = _round_up(M2 + HWp + W + 1, 8)

    msum, bcast = _chunk_matrices(oh, ow, W, PW, NCHp)

    # channels-last flatten (spatial on sublanes, channels on lanes) + zero tail
    xcl = jnp.transpose(x, (0, 2, 3, 1)).reshape(N, HW, C).astype(jnp.float32)
    xp = jnp.pad(xcl, ((0, 0), (0, HWM1 - HW), (0, 0)))

    # conv taps as (9, C, C_out) bf16, bias as (1, C_out) f32
    wj = jnp.transpose(conv_w, (2, 3, 1, 0)).reshape(K1 * K1, C, C_out)
    wj = wj.astype(jnp.bfloat16)
    bias = conv_b.reshape(1, C_out).astype(jnp.float32)

    kernel = functools.partial(_hb_pass_kernel, K1=K1, W=W, HW=HW, HWp=HWp,
                               PW=PW, M2=M2, COUT=C_out)

    out = pl.pallas_call(
        kernel,
        out_shape=jax.ShapeDtypeStruct((N, HWp, C_out), jnp.float32),
        grid=(N,),
        in_specs=[
            pl.BlockSpec((1, HWM1, C), lambda n: (n, 0, 0)),
            pl.BlockSpec((NCHp, PW), lambda n: (0, 0)),
            pl.BlockSpec((PW, NCHp), lambda n: (0, 0)),
            pl.BlockSpec((K1 * K1, C, C_out), lambda n: (0, 0, 0)),
            pl.BlockSpec((1, C_out), lambda n: (0, 0)),
        ],
        out_specs=pl.BlockSpec((1, HWp, C_out), lambda n: (n, 0, 0)),
        scratch_shapes=[
            pltpu.VMEM((PWA, C), jnp.float32),   # fold accumulator (mean field)
            pltpu.VMEM((YH, C), jnp.float32),    # folded y with zero conv halo
        ],
        compiler_params=pltpu.CompilerParams(
            dimension_semantics=("parallel",),
            vmem_limit_bytes=32 * 1024 * 1024,
        ),
    )(xp, msum, bcast, wj, bias)

    out = out[:, :HW, :].reshape(N, H, W, C_out)
    return jnp.transpose(out, (0, 3, 1, 2))


# ---------------------------------------------------------- pure-JAX reference
def unfold_patches(x, k, pad, stride):
    if pad:
        x = jnp.pad(x, ((0, 0), (0, 0), (pad, pad), (pad, pad)))
    N, C, H, W = x.shape
    oh = (H - k) // stride + 1
    ow = (W - k) // stride + 1
    pats = []
    for ky in range(k):
        for kx in range(k):
            pats.append(x[:, :, ky::stride, kx::stride][:, :, :oh, :ow])
    return jnp.stack(pats, axis=2)  # (N, C, k*k, oh, ow)


def ref_forward(x, conv_w, conv_b):
    N, C, H, W = x.shape
    k1 = 3
    p = unfold_patches(x, k1, 0, 1)
    oh1, ow1 = p.shape[3], p.shape[4]
    L1 = oh1 * ow1
    cols = p.reshape(N, C * k1 * k1, L1)
    # binFunc(abs_bin): per-8 chunk means along the output-position axis
    chunks = []
    start = 0
    while start < L1:
        sz = min(BIN_AGG, L1 - start)
        m = jnp.mean(jnp.abs(cols[..., start:start + sz]), axis=-1, keepdims=True)
        chunks.append(jnp.broadcast_to(m, cols.shape[:-1] + (sz,)))
        start += sz
    mean_abs = jnp.concatenate(chunks, axis=-1)
    bcols = jnp.sign(cols) * mean_abs                    # BinActive
    b5 = bcols.reshape(N, C, k1 * k1, oh1, ow1)
    y = jnp.zeros((N, C, H, W), jnp.float32)             # Col2Im (fold)
    for ky in range(k1):
        for kx in range(k1):
            y = y.at[:, :, ky:ky + oh1, kx:kx + ow1].add(b5[:, :, ky * k1 + kx])
    out = jax.lax.conv_general_dilated(
        y, conv_w, (1, 1), ((1, 1), (1, 1)),
        dimension_numbers=("NCHW", "OIHW", "NCHW"))
    out = out + conv_b[None, :, None, None]
    return jnp.maximum(out, 0.0)


if __name__ == "__main__":
    key = jax.random.PRNGKey(0)
    kx_, kw_, kb_ = jax.random.split(key, 3)
    N, C, H, W = 2, 4, 16, 16
    C_out = 8
    x = jax.random.normal(kx_, (N, C, H, W), jnp.float32)
    conv_w = jax.random.normal(kw_, (C_out, C, 3, 3), jnp.float32) * 0.1
    conv_b = jax.random.normal(kb_, (C_out,), jnp.float32) * 0.1

    out = jax.jit(hb_pass_forward)(x, conv_w, conv_b)
    out = jax.block_until_ready(out)

    ref = ref_forward(x, conv_w, conv_b)
    assert out.shape == (N, C_out, H, W), out.shape
    # Conv matmul operands are bf16 (f32 accumulation) per the perf review, so
    # the tolerance vs. the exact-f32 reference is loosened accordingly.
    np.testing.assert_allclose(np.asarray(out), np.asarray(ref),
                               rtol=5e-2, atol=5e-2)
    print("KERNEL_OK")
</pallas_src>

<mosaic_0001>
module attributes {stable_mosaic.version = 11 : i64} {
  func.func @_hb_pass_kernel(%arg0: i32, %arg1: memref<1x264x4xf32, #tpu.memory_space<vmem>>, %arg2: memref<32x224xf32, #tpu.memory_space<vmem>>, %arg3: memref<224x32xf32, #tpu.memory_space<vmem>>, %arg4: memref<9x4x8xbf16, #tpu.memory_space<vmem>>, %arg5: memref<1x8xf32, #tpu.memory_space<vmem>>, %arg6: memref<1x256x8xf32, #tpu.memory_space<vmem>>, %arg7: memref<264x4xf32, #tpu.memory_space<vmem>>, %arg8: memref<304x4xf32, #tpu.memory_space<vmem>>) attributes {dimension_semantics = [#tpu.dimension_semantics<parallel>], iteration_bounds = array<i64: 2>, scalar_prefetch = 0 : i64, scratch_operands = 2 : i64, tpu.core_type = #tpu.core_type<tc>, window_params = [{transform_indices = @transform_0, window_bounds = array<i64: 1, 264, 4>}, {pipeline_mode = #tpu.pipeline_mode<synchronous>, transform_indices = @transform_1, window_bounds = array<i64: 32, 224>}, {pipeline_mode = #tpu.pipeline_mode<synchronous>, transform_indices = @transform_2, window_bounds = array<i64: 224, 32>}, {pipeline_mode = #tpu.pipeline_mode<synchronous>, transform_indices = @transform_3, window_bounds = array<i64: 9, 4, 8>}, {pipeline_mode = #tpu.pipeline_mode<synchronous>, transform_indices = @transform_4, window_bounds = array<i64: 1, 8>}, {transform_indices = @transform_5, window_bounds = array<i64: 1, 256, 8>}]} {
    %c0 = arith.constant 0 : index
    %c0_0 = arith.constant 0 : index
    %c0_1 = arith.constant 0 : index
    %0 = vector.load %arg1[%c0, %c0_0, %c0_1] : memref<1x264x4xf32, #tpu.memory_space<vmem>>, vector<1x264x4xf32>
    %1 = vector.shape_cast %0 : vector<1x264x4xf32> to vector<264x4xf32>
    %2 = math.absf %1 : vector<264x4xf32>
    %cst = arith.constant 0.000000e+00 : f32
    %3 = vector.broadcast %cst : f32 to vector<264x4xf32>
    %c0_2 = arith.constant 0 : index
    %c0_3 = arith.constant 0 : index
    %4 = vector.load %arg7[%c0_2, %c0_3] : memref<264x4xf32, #tpu.memory_space<vmem>>, vector<264x4xf32>
    tpu.vector_store %arg7[%c0_2, %c0_3], %3 {strides = array<i32>} : memref<264x4xf32, #tpu.memory_space<vmem>>, vector<264x4xf32>,
    %cst_4 = arith.constant 0.000000e+00 : f32
    %5 = vector.broadcast %cst_4 : f32 to vector<304x4xf32>
    %c0_5 = arith.constant 0 : index
    %c0_6 = arith.constant 0 : index
    %6 = vector.load %arg8[%c0_5, %c0_6] : memref<304x4xf32, #tpu.memory_space<vmem>>, vector<304x4xf32>
    tpu.vector_store %arg8[%c0_5, %c0_6], %5 {strides = array<i32>} : memref<304x4xf32, #tpu.memory_space<vmem>>, vector<304x4xf32>,
    %7 = vector.extract_strided_slice %2 {offsets = [0, 0], sizes = [224, 4], strides = [1, 1]} : vector<264x4xf32> to vector<224x4xf32>
    %c0_7 = arith.constant 0 : index
    %c0_8 = arith.constant 0 : index
    %8 = vector.load %arg2[%c0_7, %c0_8] : memref<32x224xf32, #tpu.memory_space<vmem>>, vector<32x224xf32>
    %cst_9 = arith.constant dense<0.000000e+00> : vector<32x4xf32>
    %9 = tpu.matmul %8, %7, %cst_9 {dimension_numbers = #tpu.dot_dimension_numbers<[1], [0], [0], [1], [0, 0, 1, 1], [], []>} : vector<32x224xf32>, vector<224x4xf32>, vector<32x4xf32> -> vector<32x4xf32>
    %c0_10 = arith.constant 0 : index
    %c0_11 = arith.constant 0 : index
    %10 = vector.load %arg3[%c0_10, %c0_11] : memref<224x32xf32, #tpu.memory_space<vmem>>, vector<224x32xf32>
    %cst_12 = arith.constant dense<0.000000e+00> : vector<224x4xf32>
    %11 = tpu.matmul %10, %9, %cst_12 {dimension_numbers = #tpu.dot_dimension_numbers<[1], [0], [0], [1], [0, 0, 1, 1], [], []>} : vector<224x32xf32>, vector<32x4xf32>, vector<224x4xf32> -> vector<224x4xf32>
    %c0_13 = arith.constant 0 : index
    %c0_14 = arith.constant 0 : index
    %12 = vector.load %arg7[%c0_13, %c0_14] : memref<264x4xf32, #tpu.memory_space<vmem>>, vector<224x4xf32>
    %13 = arith.addf %12, %11 : vector<224x4xf32>
    %c0_15 = arith.constant 0 : index
    %c0_16 = arith.constant 0 : index
    %14 = vector.load %arg7[%c0_15, %c0_16] : memref<264x4xf32, #tpu.memory_space<vmem>>, vector<224x4xf32>
    tpu.vector_store %arg7[%c0_15, %c0_16], %13 {strides = array<i32>} : memref<264x4xf32, #tpu.memory_space<vmem>>, vector<224x4xf32>,
    %15 = vector.extract_strided_slice %2 {offsets = [1, 0], sizes = [224, 4], strides = [1, 1]} : vector<264x4xf32> to vector<224x4xf32>
    %c0_17 = arith.constant 0 : index
    %c0_18 = arith.constant 0 : index
    %16 = vector.load %arg2[%c0_17, %c0_18] : memref<32x224xf32, #tpu.memory_space<vmem>>, vector<32x224xf32>
    %cst_19 = arith.constant dense<0.000000e+00> : vector<32x4xf32>
    %17 = tpu.matmul %16, %15, %cst_19 {dimension_numbers = #tpu.dot_dimension_numbers<[1], [0], [0], [1], [0, 0, 1, 1], [], []>} : vector<32x224xf32>, vector<224x4xf32>, vector<32x4xf32> -> vector<32x4xf32>
    %c0_20 = arith.constant 0 : index
    %c0_21 = arith.constant 0 : index
    %18 = vector.load %arg3[%c0_20, %c0_21] : memref<224x32xf32, #tpu.memory_space<vmem>>, vector<224x32xf32>
    %cst_22 = arith.constant dense<0.000000e+00> : vector<224x4xf32>
    %19 = tpu.matmul %18, %17, %cst_22 {dimension_numbers = #tpu.dot_dimension_numbers<[1], [0], [0], [1], [0, 0, 1, 1], [], []>} : vector<224x32xf32>, vector<32x4xf32>, vector<224x4xf32> -> vector<224x4xf32>
    %c1 = arith.constant 1 : index
    %c0_23 = arith.constant 0 : index
    %20 = vector.load %arg7[%c1, %c0_23] : memref<264x4xf32, #tpu.memory_space<vmem>>, vector<224x4xf32>
    %21 = arith.addf %20, %19 : vector<224x4xf32>
    %c1_24 = arith.constant 1 : index
    %c0_25 = arith.constant 0 : index
    %22 = vector.load %arg7[%c1_24, %c0_25] : memref<264x4xf32, #tpu.memory_space<vmem>>, vector<224x4xf32>
    tpu.vector_store %arg7[%c1_24, %c0_25], %21 {strides = array<i32>} : memref<264x4xf32, #tpu.memory_space<vmem>>, vector<224x4xf32>,
    %23 = vector.extract_strided_slice %2 {offsets = [2, 0], sizes = [224, 4], strides = [1, 1]} : vector<264x4xf32> to vector<224x4xf32>
    %c0_26 = arith.constant 0 : index
    %c0_27 = arith.constant 0 : index
    %24 = vector.load %arg2[%c0_26, %c0_27] : memref<32x224xf32, #tpu.memory_space<vmem>>, vector<32x224xf32>
    %cst_28 = arith.constant dense<0.000000e+00> : vector<32x4xf32>
    %25 = tpu.matmul %24, %23, %cst_28 {dimension_numbers = #tpu.dot_dimension_numbers<[1], [0], [0], [1], [0, 0, 1, 1], [], []>} : vector<32x224xf32>, vector<224x4xf32>, vector<32x4xf32> -> vector<32x4xf32>
    %c0_29 = arith.constant 0 : index
    %c0_30 = arith.constant 0 : index
    %26 = vector.load %arg3[%c0_29, %c0_30] : memref<224x32xf32, #tpu.memory_space<vmem>>, vector<224x32xf32>
    %cst_31 = arith.constant dense<0.000000e+00> : vector<224x4xf32>
    %27 = tpu.matmul %26, %25, %cst_31 {dimension_numbers = #tpu.dot_dimension_numbers<[1], [0], [0], [1], [0, 0, 1, 1], [], []>} : vector<224x32xf32>, vector<32x4xf32>, vector<224x4xf32> -> vector<224x4xf32>
    %c2 = arith.constant 2 : index
    %c0_32 = arith.constant 0 : index
    %28 = vector.load %arg7[%c2, %c0_32] : memref<264x4xf32, #tpu.memory_space<vmem>>, vector<224x4xf32>
    %29 = arith.addf %28, %27 : vector<224x4xf32>
    %c2_33 = arith.constant 2 : index
    %c0_34 = arith.constant 0 : index
    %30 = vector.load %arg7[%c2_33, %c0_34] : memref<264x4xf32, #tpu.memory_space<vmem>>, vector<224x4xf32>
    tpu.vector_store %arg7[%c2_33, %c0_34], %29 {strides = array<i32>} : memref<264x4xf32, #tpu.memory_space<vmem>>, vector<224x4xf32>,
    %31 = vector.extract_strided_slice %2 {offsets = [16, 0], sizes = [224, 4], strides = [1, 1]} : vector<264x4xf32> to vector<224x4xf32>
    %c0_35 = arith.constant 0 : index
    %c0_36 = arith.constant 0 : index
    %32 = vector.load %arg2[%c0_35, %c0_36] : memref<32x224xf32, #tpu.memory_space<vmem>>, vector<32x224xf32>
    %cst_37 = arith.constant dense<0.000000e+00> : vector<32x4xf32>
    %33 = tpu.matmul %32, %31, %cst_37 {dimension_numbers = #tpu.dot_dimension_numbers<[1], [0], [0], [1], [0, 0, 1, 1], [], []>} : vector<32x224xf32>, vector<224x4xf32>, vector<32x4xf32> -> vector<32x4xf32>
    %c0_38 = arith.constant 0 : index
    %c0_39 = arith.constant 0 : index
    %34 = vector.load %arg3[%c0_38, %c0_39] : memref<224x32xf32, #tpu.memory_space<vmem>>, vector<224x32xf32>
    %cst_40 = arith.constant dense<0.000000e+00> : vector<224x4xf32>
    %35 = tpu.matmul %34, %33, %cst_40 {dimension_numbers = #tpu.dot_dimension_numbers<[1], [0], [0], [1], [0, 0, 1, 1], [], []>} : vector<224x32xf32>, vector<32x4xf32>, vector<224x4xf32> -> vector<224x4xf32>
    %c16 = arith.constant 16 : index
    %c0_41 = arith.constant 0 : index
    %36 = vector.load %arg7[%c16, %c0_41] : memref<264x4xf32, #tpu.memory_space<vmem>>, vector<224x4xf32>
    %37 = arith.addf %36, %35 : vector<224x4xf32>
    %c16_42 = arith.constant 16 : index
    %c0_43 = arith.constant 0 : index
    %38 = vector.load %arg7[%c16_42, %c0_43] : memref<264x4xf32, #tpu.memory_space<vmem>>, vector<224x4xf32>
    tpu.vector_store %arg7[%c16_42, %c0_43], %37 {strides = array<i32>} : memref<264x4xf32, #tpu.memory_space<vmem>>, vector<224x4xf32>,
    %39 = vector.extract_strided_slice %2 {offsets = [17, 0], sizes = [224, 4], strides = [1, 1]} : vector<264x4xf32> to vector<224x4xf32>
    %c0_44 = arith.constant 0 : index
    %c0_45 = arith.constant 0 : index
    %40 = vector.load %arg2[%c0_44, %c0_45] : memref<32x224xf32, #tpu.memory_space<vmem>>, vector<32x224xf32>
    %cst_46 = arith.constant dense<0.000000e+00> : vector<32x4xf32>
    %41 = tpu.matmul %40, %39, %cst_46 {dimension_numbers = #tpu.dot_dimension_numbers<[1], [0], [0], [1], [0, 0, 1, 1], [], []>} : vector<32x224xf32>, vector<224x4xf32>, vector<32x4xf32> -> vector<32x4xf32>
    %c0_47 = arith.constant 0 : index
    %c0_48 = arith.constant 0 : index
    %42 = vector.load %arg3[%c0_47, %c0_48] : memref<224x32xf32, #tpu.memory_space<vmem>>, vector<224x32xf32>
    %cst_49 = arith.constant dense<0.000000e+00> : vector<224x4xf32>
    %43 = tpu.matmul %42, %41, %cst_49 {dimension_numbers = #tpu.dot_dimension_numbers<[1], [0], [0], [1], [0, 0, 1, 1], [], []>} : vector<224x32xf32>, vector<32x4xf32>, vector<224x4xf32> -> vector<224x4xf32>
    %c17 = arith.constant 17 : index
    %c0_50 = arith.constant 0 : index
    %44 = vector.load %arg7[%c17, %c0_50] : memref<264x4xf32, #tpu.memory_space<vmem>>, vector<224x4xf32>
    %45 = arith.addf %44, %43 : vector<224x4xf32>
    %c17_51 = arith.constant 17 : index
    %c0_52 = arith.constant 0 : index
    %46 = vector.load %arg7[%c17_51, %c0_52] : memref<264x4xf32, #tpu.memory_space<vmem>>, vector<224x4xf32>
    tpu.vector_store %arg7[%c17_51, %c0_52], %45 {strides = array<i32>} : memref<264x4xf32, #tpu.memory_space<vmem>>, vector<224x4xf32>,
    %47 = vector.extract_strided_slice %2 {offsets = [18, 0], sizes = [224, 4], strides = [1, 1]} : vector<264x4xf32> to vector<224x4xf32>
    %c0_53 = arith.constant 0 : index
    %c0_54 = arith.constant 0 : index
    %48 = vector.load %arg2[%c0_53, %c0_54] : memref<32x224xf32, #tpu.memory_space<vmem>>, vector<32x224xf32>
    %cst_55 = arith.constant dense<0.000000e+00> : vector<32x4xf32>
    %49 = tpu.matmul %48, %47, %cst_55 {dimension_numbers = #tpu.dot_dimension_numbers<[1], [0], [0], [1], [0, 0, 1, 1], [], []>} : vector<32x224xf32>, vector<224x4xf32>, vector<32x4xf32> -> vector<32x4xf32>
    %c0_56 = arith.constant 0 : index
    %c0_57 = arith.constant 0 : index
    %50 = vector.load %arg3[%c0_56, %c0_57] : memref<224x32xf32, #tpu.memory_space<vmem>>, vector<224x32xf32>
    %cst_58 = arith.constant dense<0.000000e+00> : vector<224x4xf32>
    %51 = tpu.matmul %50, %49, %cst_58 {dimension_numbers = #tpu.dot_dimension_numbers<[1], [0], [0], [1], [0, 0, 1, 1], [], []>} : vector<224x32xf32>, vector<32x4xf32>, vector<224x4xf32> -> vector<224x4xf32>
    %c18 = arith.constant 18 : index
    %c0_59 = arith.constant 0 : index
    %52 = vector.load %arg7[%c18, %c0_59] : memref<264x4xf32, #tpu.memory_space<vmem>>, vector<224x4xf32>
    %53 = arith.addf %52, %51 : vector<224x4xf32>
    %c18_60 = arith.constant 18 : index
    %c0_61 = arith.constant 0 : index
    %54 = vector.load %arg7[%c18_60, %c0_61] : memref<264x4xf32, #tpu.memory_space<vmem>>, vector<224x4xf32>
    tpu.vector_store %arg7[%c18_60, %c0_61], %53 {strides = array<i32>} : memref<264x4xf32, #tpu.memory_space<vmem>>, vector<224x4xf32>,
    %55 = vector.extract_strided_slice %2 {offsets = [32, 0], sizes = [224, 4], strides = [1, 1]} : vector<264x4xf32> to vector<224x4xf32>
    %c0_62 = arith.constant 0 : index
    %c0_63 = arith.constant 0 : index
    %56 = vector.load %arg2[%c0_62, %c0_63] : memref<32x224xf32, #tpu.memory_space<vmem>>, vector<32x224xf32>
    %cst_64 = arith.constant dense<0.000000e+00> : vector<32x4xf32>
    %57 = tpu.matmul %56, %55, %cst_64 {dimension_numbers = #tpu.dot_dimension_numbers<[1], [0], [0], [1], [0, 0, 1, 1], [], []>} : vector<32x224xf32>, vector<224x4xf32>, vector<32x4xf32> -> vector<32x4xf32>
    %c0_65 = arith.constant 0 : index
    %c0_66 = arith.constant 0 : index
    %58 = vector.load %arg3[%c0_65, %c0_66] : memref<224x32xf32, #tpu.memory_space<vmem>>, vector<224x32xf32>
    %cst_67 = arith.constant dense<0.000000e+00> : vector<224x4xf32>
    %59 = tpu.matmul %58, %57, %cst_67 {dimension_numbers = #tpu.dot_dimension_numbers<[1], [0], [0], [1], [0, 0, 1, 1], [], []>} : vector<224x32xf32>, vector<32x4xf32>, vector<224x4xf32> -> vector<224x4xf32>
    %c32 = arith.constant 32 : index
    %c0_68 = arith.constant 0 : index
    %60 = vector.load %arg7[%c32, %c0_68] : memref<264x4xf32, #tpu.memory_space<vmem>>, vector<224x4xf32>
    %61 = arith.addf %60, %59 : vector<224x4xf32>
    %c32_69 = arith.constant 32 : index
    %c0_70 = arith.constant 0 : index
    %62 = vector.load %arg7[%c32_69, %c0_70] : memref<264x4xf32, #tpu.memory_space<vmem>>, vector<224x4xf32>
    tpu.vector_store %arg7[%c32_69, %c0_70], %61 {strides = array<i32>} : memref<264x4xf32, #tpu.memory_space<vmem>>, vector<224x4xf32>,
    %63 = vector.extract_strided_slice %2 {offsets = [33, 0], sizes = [224, 4], strides = [1, 1]} : vector<264x4xf32> to vector<224x4xf32>
    %c0_71 = arith.constant 0 : index
    %c0_72 = arith.constant 0 : index
    %64 = vector.load %arg2[%c0_71, %c0_72] : memref<32x224xf32, #tpu.memory_space<vmem>>, vector<32x224xf32>
    %cst_73 = arith.constant dense<0.000000e+00> : vector<32x4xf32>
    %65 = tpu.matmul %64, %63, %cst_73 {dimension_numbers = #tpu.dot_dimension_numbers<[1], [0], [0], [1], [0, 0, 1, 1], [], []>} : vector<32x224xf32>, vector<224x4xf32>, vector<32x4xf32> -> vector<32x4xf32>
    %c0_74 = arith.constant 0 : index
    %c0_75 = arith.constant 0 : index
    %66 = vector.load %arg3[%c0_74, %c0_75] : memref<224x32xf32, #tpu.memory_space<vmem>>, vector<224x32xf32>
    %cst_76 = arith.constant dense<0.000000e+00> : vector<224x4xf32>
    %67 = tpu.matmul %66, %65, %cst_76 {dimension_numbers = #tpu.dot_dimension_numbers<[1], [0], [0], [1], [0, 0, 1, 1], [], []>} : vector<224x32xf32>, vector<32x4xf32>, vector<224x4xf32> -> vector<224x4xf32>
    %c33 = arith.constant 33 : index
    %c0_77 = arith.constant 0 : index
    %68 = vector.load %arg7[%c33, %c0_77] : memref<264x4xf32, #tpu.memory_space<vmem>>, vector<224x4xf32>
    %69 = arith.addf %68, %67 : vector<224x4xf32>
    %c33_78 = arith.constant 33 : index
    %c0_79 = arith.constant 0 : index
    %70 = vector.load %arg7[%c33_78, %c0_79] : memref<264x4xf32, #tpu.memory_space<vmem>>, vector<224x4xf32>
    tpu.vector_store %arg7[%c33_78, %c0_79], %69 {strides = array<i32>} : memref<264x4xf32, #tpu.memory_space<vmem>>, vector<224x4xf32>,
    %71 = vector.extract_strided_slice %2 {offsets = [34, 0], sizes = [224, 4], strides = [1, 1]} : vector<264x4xf32> to vector<224x4xf32>
    %c0_80 = arith.constant 0 : index
    %c0_81 = arith.constant 0 : index
    %72 = vector.load %arg2[%c0_80, %c0_81] : memref<32x224xf32, #tpu.memory_space<vmem>>, vector<32x224xf32>
    %cst_82 = arith.constant dense<0.000000e+00> : vector<32x4xf32>
    %73 = tpu.matmul %72, %71, %cst_82 {dimension_numbers = #tpu.dot_dimension_numbers<[1], [0], [0], [1], [0, 0, 1, 1], [], []>} : vector<32x224xf32>, vector<224x4xf32>, vector<32x4xf32> -> vector<32x4xf32>
    %c0_83 = arith.constant 0 : index
    %c0_84 = arith.constant 0 : index
    %74 = vector.load %arg3[%c0_83, %c0_84] : memref<224x32xf32, #tpu.memory_space<vmem>>, vector<224x32xf32>
    %cst_85 = arith.constant dense<0.000000e+00> : vector<224x4xf32>
    %75 = tpu.matmul %74, %73, %cst_85 {dimension_numbers = #tpu.dot_dimension_numbers<[1], [0], [0], [1], [0, 0, 1, 1], [], []>} : vector<224x32xf32>, vector<32x4xf32>, vector<224x4xf32> -> vector<224x4xf32>
    %c34 = arith.constant 34 : index
    %c0_86 = arith.constant 0 : index
    %76 = vector.load %arg7[%c34, %c0_86] : memref<264x4xf32, #tpu.memory_space<vmem>>, vector<224x4xf32>
    %77 = arith.addf %76, %75 : vector<224x4xf32>
    %c34_87 = arith.constant 34 : index
    %c0_88 = arith.constant 0 : index
    %78 = vector.load %arg7[%c34_87, %c0_88] : memref<264x4xf32, #tpu.memory_space<vmem>>, vector<224x4xf32>
    tpu.vector_store %arg7[%c34_87, %c0_88], %77 {strides = array<i32>} : memref<264x4xf32, #tpu.memory_space<vmem>>, vector<224x4xf32>,
    %79 = vector.extract_strided_slice %1 {offsets = [0, 0], sizes = [256, 4], strides = [1, 1]} : vector<264x4xf32> to vector<256x4xf32>
    %cst_89 = arith.constant 0.000000e+00 : f32
    %80 = vector.broadcast %cst_89 : f32 to vector<256x4xf32>
    %81 = arith.cmpf ogt, %79, %80 : vector<256x4xf32>
    %cst_90 = arith.constant 0.000000e+00 : f32
    %82 = vector.broadcast %cst_90 : f32 to vector<256x4xf32>
    %83 = arith.cmpf olt, %79, %82 : vector<256x4xf32>
    %cst_91 = arith.constant -1.000000e+00 : f32
    %cst_92 = arith.constant 0.000000e+00 : f32
    %84 = vector.broadcast %cst_91 : f32 to vector<256x4xf32>
    %85 = vector.broadcast %cst_92 : f32 to vector<256x4xf32>
    %86 = arith.select %83, %84, %85 : vector<256x4xi1>, vector<256x4xf32>
    %cst_93 = arith.constant 1.000000e+00 : f32
    %87 = vector.broadcast %cst_93 : f32 to vector<256x4xf32>
    %88 = arith.select %81, %87, %86 : vector<256x4xi1>, vector<256x4xf32>
    %c0_94 = arith.constant 0 : index
    %c0_95 = arith.constant 0 : index
    %89 = vector.load %arg7[%c0_94, %c0_95] : memref<264x4xf32, #tpu.memory_space<vmem>>, vector<256x4xf32>
    %90 = arith.mulf %88, %89 : vector<256x4xf32>
    %c24 = arith.constant 24 : index
    %c0_96 = arith.constant 0 : index
    %91 = vector.load %arg8[%c24, %c0_96] : memref<304x4xf32, #tpu.memory_space<vmem>>, vector<256x4xf32>
    tpu.vector_store %arg8[%c24, %c0_96], %90 {strides = array<i32>} : memref<304x4xf32, #tpu.memory_space<vmem>>, vector<256x4xf32>,
    %92 = tpu.iota {dimensions = array<i32: 0>} : vector<256x4xi32>
    %c16_i32 = arith.constant 16 : i32
    %c0_i32 = arith.constant 0 : i32
    %93 = arith.cmpi eq, %c16_i32, %c0_i32 : i32
    %c1_i32 = arith.constant 1 : i32
    %94 = arith.select %93, %c1_i32, %c16_i32 : i32
    %95 = vector.broadcast %94 : i32 to vector<256x4xi32>
    %96 = arith.remsi %92, %95 : vector<256x4xi32>
    %c0_i32_97 = arith.constant 0 : i32
    %97 = vector.broadcast %c0_i32_97 : i32 to vector<256x4xi32>
    %98 = arith.cmpi ne, %96, %97 : vector<256x4xi32>
    %c0_i32_98 = arith.constant 0 : i32
    %99 = vector.broadcast %c0_i32_98 : i32 to vector<256x4xi32>
    %100 = arith.cmpi slt, %96, %99 : vector<256x4xi32>
    %c0_i32_99 = arith.constant 0 : i32
    %101 = arith.cmpi slt, %94, %c0_i32_99 : i32
    %102 = vector.broadcast %101 : i1 to vector<256x4xi1>
    %103 = vector.broadcast %102 : vector<256x4xi1> to vector<256x4xi1>
    %104 = arith.xori %100, %103 : vector<256x4xi1>
    %105 = arith.andi %104, %98 : vector<256x4xi1>
    %106 = vector.broadcast %94 : i32 to vector<256x4xi32>
    %107 = arith.addi %96, %106 : vector<256x4xi32>
    %108 = arith.select %105, %107, %96 : vector<256x4xi1>, vector<256x4xi32>
    %c0_i32_100 = arith.constant 0 : i32
    %109 = vector.broadcast %c0_i32_100 : i32 to vector<256x4xi32>
    %110 = arith.cmpi ne, %108, %109 : vector<256x4xi32>
    %111 = arith.extui %110 : vector<256x4xi1> to vector<256x4xi32>
    %112 = arith.sitofp %111 : vector<256x4xi32> to vector<256x4xf32>
    %113 = arith.truncf %112 : vector<256x4xf32> to vector<256x4xbf16>
    %c15_i32 = arith.constant 15 : i32
    %114 = vector.broadcast %c15_i32 : i32 to vector<256x4xi32>
    %115 = arith.cmpi ne, %108, %114 : vector<256x4xi32>
    %116 = arith.extui %115 : vector<256x4xi1> to vector<256x4xi32>
    %117 = arith.sitofp %116 : vector<256x4xi32> to vector<256x4xf32>
    %118 = arith.truncf %117 : vector<256x4xf32> to vector<256x4xbf16>
    %cst_101 = arith.constant 0.000000e+00 : f32
    %119 = vector.broadcast %cst_101 : f32 to vector<256x8xf32>
    %c7 = arith.constant 7 : index
    %c0_102 = arith.constant 0 : index
    %120 = vector.load %arg8[%c7, %c0_102] : memref<304x4xf32, #tpu.memory_space<vmem>>, vector<256x4xf32>
    %121 = arith.truncf %120 : vector<256x4xf32> to vector<256x4xbf16>
    %122 = arith.mulf %121, %113 : vector<256x4xbf16>
    %c0_103 = arith.constant 0 : index
    %c0_104 = arith.constant 0 : index
    %c0_105 = arith.constant 0 : index
    %123 = vector.load %arg4[%c0_103, %c0_104, %c0_105] : memref<9x4x8xbf16, #tpu.memory_space<vmem>>, vector<1x4x8xbf16>
    %124 = vector.shape_cast %123 : vector<1x4x8xbf16> to vector<4x8xbf16>
    %cst_106 = arith.constant dense<0.000000e+00> : vector<256x8xf32>
    %125 = tpu.matmul %122, %124, %cst_106 {dimension_numbers = #tpu.dot_dimension_numbers<[1], [0], [0], [1], [0, 0, 1, 1], [], []>} : vector<256x4xbf16>, vector<4x8xbf16>, vector<256x8xf32> -> vector<256x8xf32>
    %126 = arith.addf %119, %125 : vector<256x8xf32>
    %c8 = arith.constant 8 : index
    %c0_107 = arith.constant 0 : index
    %127 = vector.load %arg8[%c8, %c0_107] : memref<304x4xf32, #tpu.memory_space<vmem>>, vector<256x4xf32>
    %128 = arith.truncf %127 : vector<256x4xf32> to vector<256x4xbf16>
    %c1_108 = arith.constant 1 : index
    %c0_109 = arith.constant 0 : index
    %c0_110 = arith.constant 0 : index
    %129 = vector.load %arg4[%c1_108, %c0_109, %c0_110] : memref<9x4x8xbf16, #tpu.memory_space<vmem>>, vector<1x4x8xbf16>
    %130 = vector.shape_cast %129 : vector<1x4x8xbf16> to vector<4x8xbf16>
    %cst_111 = arith.constant dense<0.000000e+00> : vector<256x8xf32>
    %131 = tpu.matmul %128, %130, %cst_111 {dimension_numbers = #tpu.dot_dimension_numbers<[1], [0], [0], [1], [0, 0, 1, 1], [], []>} : vector<256x4xbf16>, vector<4x8xbf16>, vector<256x8xf32> -> vector<256x8xf32>
    %132 = arith.addf %126, %131 : vector<256x8xf32>
    %c9 = arith.constant 9 : index
    %c0_112 = arith.constant 0 : index
    %133 = vector.load %arg8[%c9, %c0_112] : memref<304x4xf32, #tpu.memory_space<vmem>>, vector<256x4xf32>
    %134 = arith.truncf %133 : vector<256x4xf32> to vector<256x4xbf16>
    %135 = arith.mulf %134, %118 : vector<256x4xbf16>
    %c2_113 = arith.constant 2 : index
    %c0_114 = arith.constant 0 : index
    %c0_115 = arith.constant 0 : index
    %136 = vector.load %arg4[%c2_113, %c0_114, %c0_115] : memref<9x4x8xbf16, #tpu.memory_space<vmem>>, vector<1x4x8xbf16>
    %137 = vector.shape_cast %136 : vector<1x4x8xbf16> to vector<4x8xbf16>
    %cst_116 = arith.constant dense<0.000000e+00> : vector<256x8xf32>
    %138 = tpu.matmul %135, %137, %cst_116 {dimension_numbers = #tpu.dot_dimension_numbers<[1], [0], [0], [1], [0, 0, 1, 1], [], []>} : vector<256x4xbf16>, vector<4x8xbf16>, vector<256x8xf32> -> vector<256x8xf32>
    %139 = arith.addf %132, %138 : vector<256x8xf32>
    %c23 = arith.constant 23 : index
    %c0_117 = arith.constant 0 : index
    %140 = vector.load %arg8[%c23, %c0_117] : memref<304x4xf32, #tpu.memory_space<vmem>>, vector<256x4xf32>
    %141 = arith.truncf %140 : vector<256x4xf32> to vector<256x4xbf16>
    %142 = arith.mulf %141, %113 : vector<256x4xbf16>
    %c3 = arith.constant 3 : index
    %c0_118 = arith.constant 0 : index
    %c0_119 = arith.constant 0 : index
    %143 = vector.load %arg4[%c3, %c0_118, %c0_119] : memref<9x4x8xbf16, #tpu.memory_space<vmem>>, vector<1x4x8xbf16>
    %144 = vector.shape_cast %143 : vector<1x4x8xbf16> to vector<4x8xbf16>
    %cst_120 = arith.constant dense<0.000000e+00> : vector<256x8xf32>
    %145 = tpu.matmul %142, %144, %cst_120 {dimension_numbers = #tpu.dot_dimension_numbers<[1], [0], [0], [1], [0, 0, 1, 1], [], []>} : vector<256x4xbf16>, vector<4x8xbf16>, vector<256x8xf32> -> vector<256x8xf32>
    %146 = arith.addf %139, %145 : vector<256x8xf32>
    %c24_121 = arith.constant 24 : index
    %c0_122 = arith.constant 0 : index
    %147 = vector.load %arg8[%c24_121, %c0_122] : memref<304x4xf32, #tpu.memory_space<vmem>>, vector<256x4xf32>
    %148 = arith.truncf %147 : vector<256x4xf32> to vector<256x4xbf16>
    %c4 = arith.constant 4 : index
    %c0_123 = arith.constant 0 : index
    %c0_124 = arith.constant 0 : index
    %149 = vector.load %arg4[%c4, %c0_123, %c0_124] : memref<9x4x8xbf16, #tpu.memory_space<vmem>>, vector<1x4x8xbf16>
    %150 = vector.shape_cast %149 : vector<1x4x8xbf16> to vector<4x8xbf16>
    %cst_125 = arith.constant dense<0.000000e+00> : vector<256x8xf32>
    %151 = tpu.matmul %148, %150, %cst_125 {dimension_numbers = #tpu.dot_dimension_numbers<[1], [0], [0], [1], [0, 0, 1, 1], [], []>} : vector<256x4xbf16>, vector<4x8xbf16>, vector<256x8xf32> -> vector<256x8xf32>
    %152 = arith.addf %146, %151 : vector<256x8xf32>
    %c25 = arith.constant 25 : index
    %c0_126 = arith.constant 0 : index
    %153 = vector.load %arg8[%c25, %c0_126] : memref<304x4xf32, #tpu.memory_space<vmem>>, vector<256x4xf32>
    %154 = arith.truncf %153 : vector<256x4xf32> to vector<256x4xbf16>
    %155 = arith.mulf %154, %118 : vector<256x4xbf16>
    %c5 = arith.constant 5 : index
    %c0_127 = arith.constant 0 : index
    %c0_128 = arith.constant 0 : index
    %156 = vector.load %arg4[%c5, %c0_127, %c0_128] : memref<9x4x8xbf16, #tpu.memory_space<vmem>>, vector<1x4x8xbf16>
    %157 = vector.shape_cast %156 : vector<1x4x8xbf16> to vector<4x8xbf16>
    %cst_129 = arith.constant dense<0.000000e+00> : vector<256x8xf32>
    %158 = tpu.matmul %155, %157, %cst_129 {dimension_numbers = #tpu.dot_dimension_numbers<[1], [0], [0], [1], [0, 0, 1, 1], [], []>} : vector<256x4xbf16>, vector<4x8xbf16>, vector<256x8xf32> -> vector<256x8xf32>
    %159 = arith.addf %152, %158 : vector<256x8xf32>
    %c39 = arith.constant 39 : index
    %c0_130 = arith.constant 0 : index
    %160 = vector.load %arg8[%c39, %c0_130] : memref<304x4xf32, #tpu.memory_space<vmem>>, vector<256x4xf32>
    %161 = arith.truncf %160 : vector<256x4xf32> to vector<256x4xbf16>
    %162 = arith.mulf %161, %113 : vector<256x4xbf16>
    %c6 = arith.constant 6 : index
    %c0_131 = arith.constant 0 : index
    %c0_132 = arith.constant 0 : index
    %163 = vector.load %arg4[%c6, %c0_131, %c0_132] : memref<9x4x8xbf16, #tpu.memory_space<vmem>>, vector<1x4x8xbf16>
    %164 = vector.shape_cast %163 : vector<1x4x8xbf16> to vector<4x8xbf16>
    %cst_133 = arith.constant dense<0.000000e+00> : vector<256x8xf32>
    %165 = tpu.matmul %162, %164, %cst_133 {dimension_numbers = #tpu.dot_dimension_numbers<[1], [0], [0], [1], [0, 0, 1, 1], [], []>} : vector<256x4xbf16>, vector<4x8xbf16>, vector<256x8xf32> -> vector<256x8xf32>
    %166 = arith.addf %159, %165 : vector<256x8xf32>
    %c40 = arith.constant 40 : index
    %c0_134 = arith.constant 0 : index
    %167 = vector.load %arg8[%c40, %c0_134] : memref<304x4xf32, #tpu.memory_space<vmem>>, vector<256x4xf32>
    %168 = arith.truncf %167 : vector<256x4xf32> to vector<256x4xbf16>
    %c7_135 = arith.constant 7 : index
    %c0_136 = arith.constant 0 : index
    %c0_137 = arith.constant 0 : index
    %169 = vector.load %arg4[%c7_135, %c0_136, %c0_137] : memref<9x4x8xbf16, #tpu.memory_space<vmem>>, vector<1x4x8xbf16>
    %170 = vector.shape_cast %169 : vector<1x4x8xbf16> to vector<4x8xbf16>
    %cst_138 = arith.constant dense<0.000000e+00> : vector<256x8xf32>
    %171 = tpu.matmul %168, %170, %cst_138 {dimension_numbers = #tpu.dot_dimension_numbers<[1], [0], [0], [1], [0, 0, 1, 1], [], []>} : vector<256x4xbf16>, vector<4x8xbf16>, vector<256x8xf32> -> vector<256x8xf32>
    %172 = arith.addf %166, %171 : vector<256x8xf32>
    %c41 = arith.constant 41 : index
    %c0_139 = arith.constant 0 : index
    %173 = vector.load %arg8[%c41, %c0_139] : memref<304x4xf32, #tpu.memory_space<vmem>>, vector<256x4xf32>
    %174 = arith.truncf %173 : vector<256x4xf32> to vector<256x4xbf16>
    %175 = arith.mulf %174, %118 : vector<256x4xbf16>
    %c8_140 = arith.constant 8 : index
    %c0_141 = arith.constant 0 : index
    %c0_142 = arith.constant 0 : index
    %176 = vector.load %arg4[%c8_140, %c0_141, %c0_142] : memref<9x4x8xbf16, #tpu.memory_space<vmem>>, vector<1x4x8xbf16>
    %177 = vector.shape_cast %176 : vector<1x4x8xbf16> to vector<4x8xbf16>
    %cst_143 = arith.constant dense<0.000000e+00> : vector<256x8xf32>
    %178 = tpu.matmul %175, %177, %cst_143 {dimension_numbers = #tpu.dot_dimension_numbers<[1], [0], [0], [1], [0, 0, 1, 1], [], []>} : vector<256x4xbf16>, vector<4x8xbf16>, vector<256x8xf32> -> vector<256x8xf32>
    %179 = arith.addf %172, %178 : vector<256x8xf32>
    %c0_144 = arith.constant 0 : index
    %c0_145 = arith.constant 0 : index
    %180 = vector.load %arg5[%c0_144, %c0_145] : memref<1x8xf32, #tpu.memory_space<vmem>>, vector<1x8xf32>
    %181 = vector.broadcast %180 : vector<1x8xf32> to vector<256x8xf32>
    %182 = arith.addf %179, %181 : vector<256x8xf32>
    %cst_146 = arith.constant 0.000000e+00 : f32
    %183 = vector.broadcast %cst_146 : f32 to vector<256x8xf32>
    %184 = arith.maximumf %182, %183 : vector<256x8xf32>
    %c0_147 = arith.constant 0 : index
    %c0_148 = arith.constant 0 : index
    %c0_149 = arith.constant 0 : index
    %185 = vector.load %arg6[%c0_147, %c0_148, %c0_149] : memref<1x256x8xf32, #tpu.memory_space<vmem>>, vector<1x256x8xf32>
    %186 = vector.shape_cast %185 : vector<1x256x8xf32> to vector<256x8xf32>
    %187 = vector.shape_cast %184 : vector<256x8xf32> to vector<1x256x8xf32>
    tpu.vector_store %arg6[%c0_147, %c0_148, %c0_149], %187 {strides = array<i32>} : memref<1x256x8xf32, #tpu.memory_space<vmem>>, vector<1x256x8xf32>,
    return
  }
  func.func @transform_0(%arg0: i32) -> (i32, i32, i32) {
    %c0_i32 = arith.constant 0 : i32
    %c0_i32_0 = arith.constant 0 : i32
    %c0_i32_1 = arith.constant 0 : i32
    return %arg0, %c0_i32, %c0_i32_0 : i32, i32, i32
  }
  func.func @transform_1(%arg0: i32) -> (i32, i32) {
    %c0_i32 = arith.constant 0 : i32
    %c0_i32_0 = arith.constant 0 : i32
    %c0_i32_1 = arith.constant 0 : i32
    return %c0_i32, %c0_i32_0 : i32, i32
  }
  func.func @transform_2(%arg0: i32) -> (i32, i32) {
    %c0_i32 = arith.constant 0 : i32
    %c0_i32_0 = arith.constant 0 : i32
    %c0_i32_1 = arith.constant 0 : i32
    return %c0_i32, %c0_i32_0 : i32, i32
  }
  func.func @transform_3(%arg0: i32) -> (i32, i32, i32) {
    %c0_i32 = arith.constant 0 : i32
    %c0_i32_0 = arith.constant 0 : i32
    %c0_i32_1 = arith.constant 0 : i32
    %c0_i32_2 = arith.constant 0 : i32
    return %c0_i32, %c0_i32_0, %c0_i32_1 : i32, i32, i32
  }
  func.func @transform_4(%arg0: i32) -> (i32, i32) {
    %c0_i32 = arith.constant 0 : i32
    %c0_i32_0 = arith.constant 0 : i32
    %c0_i32_1 = arith.constant 0 : i32
    return %c0_i32, %c0_i32_0 : i32, i32
  }
  func.func @transform_5(%arg0: i32) -> (i32, i32, i32) {
    %c0_i32 = arith.constant 0 : i32
    %c0_i32_0 = arith.constant 0 : i32
    %c0_i32_1 = arith.constant 0 : i32
    return %arg0, %c0_i32, %c0_i32_0 : i32, i32, i32
  }
}

</mosaic_0001>

<llo_original>
// kernel: hb_pass_forward.1
$region0: #{hb_pass_forward.1}
  #allocation0 [shape = 'u32[]', space=smem, size = 0x4, offset = 0x4, fixed_abs, tag = 'smem constant byte address 0x4 - core index']
  #allocation1 [shape = 'u32[144,128]{1,0:T(1,128)}', space=vmem, size = 0x12000, scoped, tag = 'internal scratch']
  #allocation2 [shape = 'f32[264,4]{1,0:T(8,128)}', space=vmem, size = 0x21000, scoped, tag = 'scratch operand']
  #allocation3 [shape = 'f32[304,4]{1,0:T(8,128)}', space=vmem, size = 0x26000, scoped, tag = 'scratch operand']
  %s0 = inlined_call_operand.vmem [shape: f32[2,264,4], index: 0, kind: input, shape index: {}]
  %s1 = inlined_call_operand.vmem [shape: f32[32,224], index: 1, kind: input, shape index: {}]
  %s2 = inlined_call_operand.vmem [shape: f32[224,32], index: 2, kind: input, shape index: {}]
  %s3 = inlined_call_operand.vmem [shape: bf16[9,4,8], index: 3, kind: input, shape index: {}]
  %s4 = inlined_call_operand.vmem [shape: f32[1,8], index: 4, kind: input, shape index: {}]
  %s5 = inlined_call_operand.vmem [shape: f32[2,256,8], index: 5, kind: output, shape index: {}]
  %s6 = sld [smem:[#allocation0]]
  $region53: #{hb_pass_forward.1} parent=0
    _
  %s8 = ssub.s32 1, %s6
  %s9 = scalar_select 0, %s8, %s6
  loop: start=0, step=1, limit=4
  $region2: #{hb_pass_forward.1} parent=0 // loop_pre_header
    _
  $region3: #{hb_pass_forward.1} parent=0 // loop_header
    %s11 = sphi 0, %s15
    %p12 = scmp.ge.s32.totalorder %s11, 4
    %s21 = sphi 0, %s23
    %s24 = sphi 0, %s21
    %s25 = sphi 0, %s24
    %s41 = sphi 0, %s25
    %s45 = sphi 0, %s45
    %s47 = sphi 0, %s45
    %s48 = sphi 0, %s47
    %s62 = sphi 0, %s48
    %s66 = sphi 0, %s66
    %s68 = sphi 0, %s66
    %s69 = sphi 0, %s68
    %s83 = sphi 0, %s69
    %s87 = sphi 0, %s87
    %s89 = sphi 0, %s87
    %s90 = sphi 0, %s89
    %s104 = sphi 0, %s90
    %s108 = sphi 0, %s108
    %s110 = sphi 0, %s108
    %s111 = sphi 0, %s110
    %s125 = sphi 0, %s111
    %s131 = sphi 0, %s133
    %s134 = sphi 0, %s131
    %s135 = sphi 0, %s134
    %s151 = sphi 0, %s135
  $region4: #{hb_pass_forward.1} parent=0 // loop_header_branch
    %14 = sbr.rel (%p12) target = $region8
  $region5: #{hb_pass_forward.1} parent=0 // loop_body
    %s16 = ssub.s32 %s11, 1
    %s17 = ssub.s32 %s11, 2
    %s18 = sadd.s32 %s11, 1
    %s19 = ssub.s32 %s11, %s18
    %p20 = scmp.eq.s32.totalorder %s19, 0
    %s22 = sadd.s32 %s21, 1
    %s23 = scalar_select %p20, %s21, %s22
    %p26 = pneg %p20
    %p27 = scmp.eq.s32.totalorder %s11, 1
    %p28 = por %p26, %p27
    %p29 = scmp.ne.s32.totalorder %s21, %s24
    %p30 = scmp.eq.s32.totalorder %s11, 0
    %p31 = por %p29, %p30
    %p32 = scmp.ne.s32.totalorder %s21, %s24
    %p33 = scmp.eq.s32.totalorder %s16, 1
    %p34 = por %p32, %p33
    %p35 = scmp.ne.s32.totalorder %s24, %s25
    %p36 = scmp.eq.s32.totalorder %s16, 0
    %p37 = por %p35, %p36
    %p38 = scmp.ne.s32.totalorder %s24, %s25
    %p39 = scmp.eq.s32.totalorder %s17, 1
    %p40 = por %p38, %p39
    %p42 = scmp.ne.s32.totalorder %s25, %s41
    %p43 = scmp.eq.s32.totalorder %s17, 0
    %p44 = por %p42, %p43
    %s46 = sadd.s32 %s45, 1
    %p49 = scmp.eq.s32.totalorder %s11, 1
    %p50 = scmp.ne.s32.totalorder %s45, %s47
    %p51 = scmp.eq.s32.totalorder %s11, 0
    %p52 = por %p50, %p51
    %p53 = scmp.ne.s32.totalorder %s45, %s47
    %p54 = scmp.eq.s32.totalorder %s16, 1
    %p55 = por %p53, %p54
    %p56 = scmp.ne.s32.totalorder %s47, %s48
    %p57 = scmp.eq.s32.totalorder %s16, 0
    %p58 = por %p56, %p57
    %p59 = scmp.ne.s32.totalorder %s47, %s48
    %p60 = scmp.eq.s32.totalorder %s17, 1
    %p61 = por %p59, %p60
    %p63 = scmp.ne.s32.totalorder %s48, %s62
    %p64 = scmp.eq.s32.totalorder %s17, 0
    %p65 = por %p63, %p64
    %s67 = sadd.s32 %s66, 1
    %p70 = scmp.eq.s32.totalorder %s11, 1
    %p71 = scmp.ne.s32.totalorder %s66, %s68
    %p72 = scmp.eq.s32.totalorder %s11, 0
    %p73 = por %p71, %p72
    %p74 = scmp.ne.s32.totalorder %s66, %s68
    %p75 = scmp.eq.s32.totalorder %s16, 1
    %p76 = por %p74, %p75
    %p77 = scmp.ne.s32.totalorder %s68, %s69
    %p78 = scmp.eq.s32.totalorder %s16, 0
    %p79 = por %p77, %p78
    %p80 = scmp.ne.s32.totalorder %s68, %s69
    %p81 = scmp.eq.s32.totalorder %s17, 1
    %p82 = por %p80, %p81
    %p84 = scmp.ne.s32.totalorder %s69, %s83
    %p85 = scmp.eq.s32.totalorder %s17, 0
    %p86 = por %p84, %p85
    %s88 = sadd.s32 %s87, 1
    %p91 = scmp.eq.s32.totalorder %s11, 1
    %p92 = scmp.ne.s32.totalorder %s87, %s89
    %p93 = scmp.eq.s32.totalorder %s11, 0
    %p94 = por %p92, %p93
    %p95 = scmp.ne.s32.totalorder %s87, %s89
    %p96 = scmp.eq.s32.totalorder %s16, 1
    %p97 = por %p95, %p96
    %p98 = scmp.ne.s32.totalorder %s89, %s90
    %p99 = scmp.eq.s32.totalorder %s16, 0
    %p100 = por %p98, %p99
    %p101 = scmp.ne.s32.totalorder %s89, %s90
    %p102 = scmp.eq.s32.totalorder %s17, 1
    %p103 = por %p101, %p102
    %p105 = scmp.ne.s32.totalorder %s90, %s104
    %p106 = scmp.eq.s32.totalorder %s17, 0
    %p107 = por %p105, %p106
    %s109 = sadd.s32 %s108, 1
    %p112 = scmp.eq.s32.totalorder %s11, 1
    %p113 = scmp.ne.s32.totalorder %s108, %s110
    %p114 = scmp.eq.s32.totalorder %s11, 0
    %p115 = por %p113, %p114
    %p116 = scmp.ne.s32.totalorder %s108, %s110
    %p117 = scmp.eq.s32.totalorder %s16, 1
    %p118 = por %p116, %p117
    %p119 = scmp.ne.s32.totalorder %s110, %s111
    %p120 = scmp.eq.s32.totalorder %s16, 0
    %p121 = por %p119, %p120
    %p122 = scmp.ne.s32.totalorder %s110, %s111
    %p123 = scmp.eq.s32.totalorder %s17, 1
    %p124 = por %p122, %p123
    %p126 = scmp.ne.s32.totalorder %s111, %s125
    %p127 = scmp.eq.s32.totalorder %s17, 0
    %p128 = por %p126, %p127
    %s129 = ssub.s32 %s11, %s18
    %p130 = scmp.eq.s32.totalorder %s129, 0
    %s132 = sadd.s32 %s131, 1
    %s133 = scalar_select %p130, %s131, %s132
    %p136 = pneg %p130
    %p137 = scmp.eq.s32.totalorder %s11, 1
    %p138 = por %p136, %p137
    %p139 = scmp.ne.s32.totalorder %s131, %s134
    %p140 = scmp.eq.s32.totalorder %s11, 0
    %p141 = por %p139, %p140
    %p142 = scmp.ne.s32.totalorder %s131, %s134
    %p143 = scmp.eq.s32.totalorder %s16, 1
    %p144 = por %p142, %p143
    %p145 = scmp.ne.s32.totalorder %s134, %s135
    %p146 = scmp.eq.s32.totalorder %s16, 0
    %p147 = por %p145, %p146
    %p148 = scmp.ne.s32.totalorder %s134, %s135
    %p149 = scmp.eq.s32.totalorder %s17, 1
    %p150 = por %p148, %p149
    %p152 = scmp.ne.s32.totalorder %s135, %s151
    %p153 = scmp.eq.s32.totalorder %s17, 0
    %p154 = por %p152, %p153
    %p155 = scmp.le.s32.totalorder 1, %s11
    %p156 = scmp.lt.s32.totalorder %s11, 3
    %p157 = pnand %p155, %p156
    %p158 = pneg %p157
    // Predicated region
    $region9: #{hb_pass_forward.1} parent=5 // pred_check
      _
    $region10: #{hb_pass_forward.1} parent=5 // pred_check_branch
      %160 = sbr.rel (%p157) target = $region12
    $region11: #{hb_pass_forward.1} parent=5 // pred_region
      %s161 = ssub.s32 %s11, 1
      // Predicated region
      $region13: #{hb_pass_forward.1} parent=11 // pred_check
        %p162 = pneg %p58
      $region14: #{hb_pass_forward.1} parent=11 // pred_check_branch
        %164 = sbr.rel (%p162) target = $region16
      $region15: #{hb_pass_forward.1} parent=11 // pred_region
        _
      $region16: #{hb_pass_forward.1} parent=11 // pred_fallthru
        _
      // Predicated region
      $region17: #{hb_pass_forward.1} parent=11 // pred_check
        %p165 = pneg %p79
      $region18: #{hb_pass_forward.1} parent=11 // pred_check_branch
        %167 = sbr.rel (%p165) target = $region20
      $region19: #{hb_pass_forward.1} parent=11 // pred_region
        _
      $region20: #{hb_pass_forward.1} parent=11 // pred_fallthru
        _
      // Predicated region
      $region21: #{hb_pass_forward.1} parent=11 // pred_check
        %p168 = pneg %p100
      $region22: #{hb_pass_forward.1} parent=11 // pred_check_branch
        %170 = sbr.rel (%p168) target = $region24
      $region23: #{hb_pass_forward.1} parent=11 // pred_region
        _
      $region24: #{hb_pass_forward.1} parent=11 // pred_fallthru
        _
      // Predicated region
      $region25: #{hb_pass_forward.1} parent=11 // pred_check
        %p171 = pneg %p121
      $region26: #{hb_pass_forward.1} parent=11 // pred_check_branch
        %173 = sbr.rel (%p171) target = $region28
      $region27: #{hb_pass_forward.1} parent=11 // pred_region
        _
      $region28: #{hb_pass_forward.1} parent=11 // pred_fallthru
        _
    $region12: #{hb_pass_forward.1} parent=5 // pred_fallthru
      _
    %p174 = scmp.lt.s32.totalorder %s11, 2
    // Predicated region
    $region29: #{hb_pass_forward.1} parent=5 // pred_check
      %p175 = pneg %p174
    $region30: #{hb_pass_forward.1} parent=5 // pred_check_branch
      %177 = sbr.rel (%p175) target = $region32
    $region31: #{hb_pass_forward.1} parent=5 // pred_region
      // Predicated region
      $region33: #{hb_pass_forward.1} parent=31 // pred_check
        %p178 = pneg %p31
      $region34: #{hb_pass_forward.1} parent=31 // pred_check_branch
        %180 = sbr.rel (%p178) target = $region36
      $region35: #{hb_pass_forward.1} parent=31 // pred_region
        %p181 = scmp.lt.s32.totalorder %s11, 1
        %s182 = scalar_select %p181, %s11, 1
        %s183 = smul.addr %s182, 33
        %s184 = smul.addr %s183, 8
        %s185 = scalar_lea.vmem %s0, %s184
      $region36: #{hb_pass_forward.1} parent=31 // pred_fallthru
        _
    $region32: #{hb_pass_forward.1} parent=5 // pred_fallthru
      _
    %p186 = scmp.le.s32.totalorder 1, %s11
    %p187 = scmp.lt.s32.totalorder %s11, 3
    %p188 = pnand %p186, %p187
    %p189 = pneg %p188
    // Predicated region
    $region37: #{hb_pass_forward.1} parent=5 // pred_check
      _
    $region38: #{hb_pass_forward.1} parent=5 // pred_check_branch
      %191 = sbr.rel (%p188) target = $region40
    $region39: #{hb_pass_forward.1} parent=5 // pred_region
      %s192 = ssub.s32 %s11, 1
      %p193 = scmp.lt.s32.totalorder %s16, 1
      %s194 = scalar_select %p193, %s16, 1
      %s195 = smul.addr %s194, 33
      %s196 = smul.addr %s195, 8
      %s197 = scalar_lea.vmem %s0, %s196
      %p198 = pneg %p37
      %p199 = pneg %p34
      %p200 = pneg %p58
      %p201 = pneg %p55
      %p202 = pneg %p79
      %p203 = pneg %p76
      %p204 = pneg %p100
      %p205 = pneg %p97
      %p206 = pneg %p121
      %p207 = pneg %p118
      %p208 = pneg %p147
      %p209 = pneg %p144
      %p210 = scmp.lt.s32.totalorder %s16, 1
      %s211 = scalar_select %p210, %s16, 1
      %s212 = smul.addr %s211, 32
      %s213 = smul.addr %s212, 8
      %s214 = scalar_lea.vmem %s5, %s213
      %p215 = scmp.lt.s32.totalorder %s16, 1
      %s216 = scalar_select %p215, %s16, 1
      %s217 = smul.addr %s216, 33
      %s218 = smul.addr %s217, 8
      %s219 = scalar_lea.vmem %s0, %s218
      %p220 = scmp.lt.s32.totalorder %s16, 1
      %s221 = scalar_select %p220, %s16, 1
      %s222 = smul.addr %s221, 32
      %s223 = smul.addr %s222, 8
      %s224 = scalar_lea.vmem %s5, %s223
      %v226 = vld [vmem:[%s219] sm:$0xff]
      %v227 = vld [vmem:[%s219 + $0x8] sm:$0xff]
      %v228 = vld [vmem:[%s219 + $0x10] sm:$0xff]
      %v229 = vld [vmem:[%s219 + $0x18] sm:$0xff]
      %v230 = vld [vmem:[%s219 + $0x20] sm:$0xff]
      %v231 = vld [vmem:[%s219 + $0x28] sm:$0xff]
      %v232 = vld [vmem:[%s219 + $0x30] sm:$0xff]
      %v233 = vld [vmem:[%s219 + $0x38] sm:$0xff]
      %v234 = vld [vmem:[%s219 + $0x40] sm:$0xff]
      %v235 = vld [vmem:[%s219 + $0x48] sm:$0xff]
      %v236 = vld [vmem:[%s219 + $0x50] sm:$0xff]
      %v237 = vld [vmem:[%s219 + $0x58] sm:$0xff]
      %v238 = vld [vmem:[%s219 + $0x60] sm:$0xff]
      %v239 = vld [vmem:[%s219 + $0x68] sm:$0xff]
      %v240 = vld [vmem:[%s219 + $0x70] sm:$0xff]
      %v241 = vld [vmem:[%s219 + $0x78] sm:$0xff]
      %v242 = vld [vmem:[%s219 + $0x80] sm:$0xff]
      %v243 = vld [vmem:[%s219 + $0x88] sm:$0xff]
      %v244 = vld [vmem:[%s219 + $0x90] sm:$0xff]
      %v245 = vld [vmem:[%s219 + $0x98] sm:$0xff]
      %v246 = vld [vmem:[%s219 + $0xa0] sm:$0xff]
      %v247 = vld [vmem:[%s219 + $0xa8] sm:$0xff]
      %v248 = vld [vmem:[%s219 + $0xb0] sm:$0xff]
      %v249 = vld [vmem:[%s219 + $0xb8] sm:$0xff]
      %v250 = vld [vmem:[%s219 + $0xc0] sm:$0xff]
      %v251 = vld [vmem:[%s219 + $0xc8] sm:$0xff]
      %v252 = vld [vmem:[%s219 + $0xd0] sm:$0xff]
      %v253 = vld [vmem:[%s219 + $0xd8] sm:$0xff]
      %v254 = vld [vmem:[%s219 + $0xe0] sm:$0xff]
      %v255 = vld [vmem:[%s219 + $0xe8] sm:$0xff]
      %v256 = vld [vmem:[%s219 + $0xf0] sm:$0xff]
      %v257 = vld [vmem:[%s219 + $0xf8] sm:$0xff]
      %v258 = vld [vmem:[%s219 + $0x100] sm:$0xff]
      %v259 = vand.u32 2147483647, %v226
      %v260 = vand.u32 2147483647, %v227
      %v261 = vand.u32 2147483647, %v228
      %v262 = vand.u32 2147483647, %v229
      %v263 = vand.u32 2147483647, %v230
      %v264 = vand.u32 2147483647, %v231
      %v265 = vand.u32 2147483647, %v232
      %v266 = vand.u32 2147483647, %v233
      %v267 = vand.u32 2147483647, %v234
      %v268 = vand.u32 2147483647, %v235
      %v269 = vand.u32 2147483647, %v236
      %v270 = vand.u32 2147483647, %v237
      %v271 = vand.u32 2147483647, %v238
      %v272 = vand.u32 2147483647, %v239
      %v273 = vand.u32 2147483647, %v240
      %v274 = vand.u32 2147483647, %v241
      %v275 = vand.u32 2147483647, %v242
      %v276 = vand.u32 2147483647, %v243
      %v277 = vand.u32 2147483647, %v244
      %v278 = vand.u32 2147483647, %v245
      %v279 = vand.u32 2147483647, %v246
      %v280 = vand.u32 2147483647, %v247
      %v281 = vand.u32 2147483647, %v248
      %v282 = vand.u32 2147483647, %v249
      %v283 = vand.u32 2147483647, %v250
      %v284 = vand.u32 2147483647, %v251
      %v285 = vand.u32 2147483647, %v252
      %v286 = vand.u32 2147483647, %v253
      %v287 = vand.u32 2147483647, %v254
      %v288 = vand.u32 2147483647, %v255
      %v289 = vand.u32 2147483647, %v256
      %v290 = vand.u32 2147483647, %v257
      %v291 = vand.u32 2147483647, %v258
      %vm292 = vcmask 31744
      %293 = vst.msk [vmem:[#allocation2] sm:$0xff] %vm292, 0.0
      %294 = vst.msk [vmem:[#allocation2 + $0x8] sm:$0xff] %vm292, 0.0
      %295 = vst.msk [vmem:[#allocation2 + $0x10] sm:$0xff] %vm292, 0.0
      %296 = vst.msk [vmem:[#allocation2 + $0x18] sm:$0xff] %vm292, 0.0
      %297 = vst.msk [vmem:[#allocation2 + $0x20] sm:$0xff] %vm292, 0.0
      %298 = vst.msk [vmem:[#allocation2 + $0x28] sm:$0xff] %vm292, 0.0
      %299 = vst.msk [vmem:[#allocation2 + $0x30] sm:$0xff] %vm292, 0.0
      %300 = vst.msk [vmem:[#allocation2 + $0x38] sm:$0xff] %vm292, 0.0
      %301 = vst.msk [vmem:[#allocation2 + $0x40] sm:$0xff] %vm292, 0.0
      %302 = vst.msk [vmem:[#allocation2 + $0x48] sm:$0xff] %vm292, 0.0
      %303 = vst.msk [vmem:[#allocation2 + $0x50] sm:$0xff] %vm292, 0.0
      %304 = vst.msk [vmem:[#allocation2 + $0x58] sm:$0xff] %vm292, 0.0
      %305 = vst.msk [vmem:[#allocation2 + $0x60] sm:$0xff] %vm292, 0.0
      %306 = vst.msk [vmem:[#allocation2 + $0x68] sm:$0xff] %vm292, 0.0
      %307 = vst.msk [vmem:[#allocation2 + $0x70] sm:$0xff] %vm292, 0.0
      %308 = vst.msk [vmem:[#allocation2 + $0x78] sm:$0xff] %vm292, 0.0
      %309 = vst.msk [vmem:[#allocation2 + $0x80] sm:$0xff] %vm292, 0.0
      %310 = vst.msk [vmem:[#allocation2 + $0x88] sm:$0xff] %vm292, 0.0
      %311 = vst.msk [vmem:[#allocation2 + $0x90] sm:$0xff] %vm292, 0.0
      %312 = vst.msk [vmem:[#allocation2 + $0x98] sm:$0xff] %vm292, 0.0
      %313 = vst.msk [vmem:[#allocation2 + $0xa0] sm:$0xff] %vm292, 0.0
      %314 = vst.msk [vmem:[#allocation2 + $0xa8] sm:$0xff] %vm292, 0.0
      %315 = vst.msk [vmem:[#allocation2 + $0xb0] sm:$0xff] %vm292, 0.0
      %316 = vst.msk [vmem:[#allocation2 + $0xb8] sm:$0xff] %vm292, 0.0
      %317 = vst.msk [vmem:[#allocation2 + $0xc0] sm:$0xff] %vm292, 0.0
      %318 = vst.msk [vmem:[#allocation2 + $0xc8] sm:$0xff] %vm292, 0.0
      %319 = vst.msk [vmem:[#allocation2 + $0xd0] sm:$0xff] %vm292, 0.0
      %320 = vst.msk [vmem:[#allocation2 + $0xd8] sm:$0xff] %vm292, 0.0
      %321 = vst.msk [vmem:[#allocation2 + $0xe0] sm:$0xff] %vm292, 0.0
      %322 = vst.msk [vmem:[#allocation2 + $0xe8] sm:$0xff] %vm292, 0.0
      %323 = vst.msk [vmem:[#allocation2 + $0xf0] sm:$0xff] %vm292, 0.0
      %324 = vst.msk [vmem:[#allocation2 + $0xf8] sm:$0xff] %vm292, 0.0
      %325 = vst.msk [vmem:[#allocation2 + $0x100] sm:$0xff] %vm292, 0.0
      %326 = vst.msk [vmem:[#allocation3] sm:$0xff] %vm292, 0.0
      %327 = vst.msk [vmem:[#allocation3 + $0x8] sm:$0xff] %vm292, 0.0
      %328 = vst.msk [vmem:[#allocation3 + $0x10] sm:$0xff] %vm292, 0.0
      %329 = vst.msk [vmem:[#allocation3 + $0x18] sm:$0xff] %vm292, 0.0
      %330 = vst.msk [vmem:[#allocation3 + $0x20] sm:$0xff] %vm292, 0.0
      %331 = vst.msk [vmem:[#allocation3 + $0x28] sm:$0xff] %vm292, 0.0
      %332 = vst.msk [vmem:[#allocation3 + $0x30] sm:$0xff] %vm292, 0.0
      %333 = vst.msk [vmem:[#allocation3 + $0x38] sm:$0xff] %vm292, 0.0
      %334 = vst.msk [vmem:[#allocation3 + $0x40] sm:$0xff] %vm292, 0.0
      %335 = vst.msk [vmem:[#allocation3 + $0x48] sm:$0xff] %vm292, 0.0
      %336 = vst.msk [vmem:[#allocation3 + $0x50] sm:$0xff] %vm292, 0.0
      %337 = vst.msk [vmem:[#allocation3 + $0x58] sm:$0xff] %vm292, 0.0
      %338 = vst.msk [vmem:[#allocation3 + $0x60] sm:$0xff] %vm292, 0.0
      %339 = vst.msk [vmem:[#allocation3 + $0x68] sm:$0xff] %vm292, 0.0
      %340 = vst.msk [vmem:[#allocation3 + $0x70] sm:$0xff] %vm292, 0.0
      %341 = vst.msk [vmem:[#allocation3 + $0x78] sm:$0xff] %vm292, 0.0
      %342 = vst.msk [vmem:[#allocation3 + $0x80] sm:$0xff] %vm292, 0.0
      %343 = vst.msk [vmem:[#allocation3 + $0x88] sm:$0xff] %vm292, 0.0
      %344 = vst.msk [vmem:[#allocation3 + $0x90] sm:$0xff] %vm292, 0.0
      %345 = vst.msk [vmem:[#allocation3 + $0x98] sm:$0xff] %vm292, 0.0
      %346 = vst.msk [vmem:[#allocation3 + $0xa0] sm:$0xff] %vm292, 0.0
      %347 = vst.msk [vmem:[#allocation3 + $0xa8] sm:$0xff] %vm292, 0.0
      %348 = vst.msk [vmem:[#allocation3 + $0xb0] sm:$0xff] %vm292, 0.0
      %349 = vst.msk [vmem:[#allocation3 + $0xb8] sm:$0xff] %vm292, 0.0
      %350 = vst.msk [vmem:[#allocation3 + $0xc0] sm:$0xff] %vm292, 0.0
      %351 = vst.msk [vmem:[#allocation3 + $0xc8] sm:$0xff] %vm292, 0.0
      %352 = vst.msk [vmem:[#allocation3 + $0xd0] sm:$0xff] %vm292, 0.0
      %353 = vst.msk [vmem:[#allocation3 + $0xd8] sm:$0xff] %vm292, 0.0
      %354 = vst.msk [vmem:[#allocation3 + $0xe0] sm:$0xff] %vm292, 0.0
      %355 = vst.msk [vmem:[#allocation3 + $0xe8] sm:$0xff] %vm292, 0.0
      %356 = vst.msk [vmem:[#allocation3 + $0xf0] sm:$0xff] %vm292, 0.0
      %357 = vst.msk [vmem:[#allocation3 + $0xf8] sm:$0xff] %vm292, 0.0
      %358 = vst.msk [vmem:[#allocation3 + $0x100] sm:$0xff] %vm292, 0.0
      %359 = vst.msk [vmem:[#allocation3 + $0x108] sm:$0xff] %vm292, 0.0
      %360 = vst.msk [vmem:[#allocation3 + $0x110] sm:$0xff] %vm292, 0.0
      %361 = vst.msk [vmem:[#allocation3 + $0x118] sm:$0xff] %vm292, 0.0
      %362 = vst.msk [vmem:[#allocation3 + $0x120] sm:$0xff] %vm292, 0.0
      %363 = vst.msk [vmem:[#allocation3 + $0x128] sm:$0xff] %vm292, 0.0
      %v364 = vld [vmem:[%s1] sm:$0xff]
      %v365 = vld [vmem:[%s1 + $0x8] sm:$0xff]
      %v366 = vld [vmem:[%s1 + $0x10] sm:$0xff]
      %v367 = vld [vmem:[%s1 + $0x18] sm:$0xff]
      %v368 = vld [vmem:[%s1 + $0x20] sm:$0xff]
      %v369 = vld [vmem:[%s1 + $0x28] sm:$0xff]
      %v370 = vld [vmem:[%s1 + $0x30] sm:$0xff]
      %v371 = vld [vmem:[%s1 + $0x38] sm:$0xff]
      %vm372 = vcmask 785408
      %v374 = vsel %vm372, %v365, 0
      %v377 = vsel %vm372, %v367, 0
      %v380 = vsel %vm372, %v369, 0
      %v383 = vsel %vm372, %v371, 0
      %385 = vmatprep.subr.mxu0 0.0
      %386 = vmatpush1.msra.mxu0 %v274
      %387 = vmatprep.subr.mxu0 0.0
      %388 = vmatpush1.msra.mxu0 %v273
      %389 = vmatprep.subr.mxu0 0.0
      %390 = vmatpush1.msra.mxu0 %v272
      %391 = vmatprep.subr.mxu0 0.0
      %392 = vmatpush1.msra.mxu0 %v271
      %393 = vmatprep.subr.mxu0 0.0
      %394 = vmatpush1.msra.mxu0 %v270
      %395 = vmatprep.subr.mxu0 0.0
      %396 = vmatpush1.msra.mxu0 %v269
      %397 = vmatprep.subr.mxu0 0.0
      %398 = vmatpush1.msra.mxu0 %v268
      %399 = vmatprep.subr.mxu0 0.0
      %400 = vmatpush1.msra.mxu0 %v267
      %401 = vmatprep.subr.mxu0 0.0
      %402 = vmatpush1.msra.mxu0 %v266
      %403 = vmatprep.subr.mxu0 0.0
      %404 = vmatpush1.msra.mxu0 %v265
      %405 = vmatprep.subr.mxu0 0.0
      %406 = vmatpush1.msra.mxu0 %v264
      %407 = vmatprep.subr.mxu0 0.0
      %408 = vmatpush1.msra.mxu0 %v263
      %409 = vmatprep.subr.mxu0 0.0
      %410 = vmatpush1.msra.mxu0 %v262
      %411 = vmatprep.subr.mxu0 0.0
      %412 = vmatpush1.msra.mxu0 %v261
      %413 = vmatprep.subr.mxu0 0.0
      %414 = vmatpush1.msra.mxu0 %v260
      %415 = vmatprep.subr.mxu0 0.0
      %416 = vmatpush1.msra.mxu0 %v259
      %417 = vmatprep.subr.mxu0 0.0
      %418 = vmatpush2.msra.mxu0 0.0
      %419 = vmatprep.subr.mxu0 0.0
      %420 = vmatpush2.msra.mxu0 0.0
      %421 = vmatprep.subr.mxu0 0.0
      %422 = vmatpush2.msra.mxu0 0.0
      %423 = vmatprep.subr.mxu0 0.0
      %424 = vmatpush2.msra.mxu0 0.0
      %425 = vmatprep.subr.mxu0 0.0
      %426 = vmatpush2.msra.mxu0 %v286
      %427 = vmatprep.subr.mxu0 0.0
      %428 = vmatpush2.msra.mxu0 %v285
      %429 = vmatprep.subr.mxu0 0.0
      %430 = vmatpush2.msra.mxu0 %v284
      %431 = vmatprep.subr.mxu0 0.0
      %432 = vmatpush2.msra.mxu0 %v283
      %433 = vmatprep.subr.mxu0 0.0
      %434 = vmatpush2.msra.mxu0 %v282
      %435 = vmatprep.subr.mxu0 0.0
      %436 = vmatpush2.msra.mxu0 %v281
      %437 = vmatprep.subr.mxu0 0.0
      %438 = vmatpush2.msra.mxu0 %v280
      %439 = vmatprep.subr.mxu0 0.0
      %440 = vmatpush2.msra.mxu0 %v279
      %441 = vmatprep.subr.mxu0 0.0
      %442 = vmatpush2.msra.mxu0 %v278
      %443 = vmatprep.subr.mxu0 0.0
      %444 = vmatpush2.msra.mxu0 %v277
      %445 = vmatprep.subr.mxu0 0.0
      %446 = vmatpush2.msra.mxu0 %v276
      %447 = vmatprep.subr.mxu0 0.0
      %448 = vmatpush2.msra.mxu0 %v275
      %449 = vmatprep.mubr.f32.mxu0 %v374
      %450 = vmatmul.mubr.f32.gmra.mxu0 %v364
      %v451 = vpop.f32.mrf.mxu0
      %v452 = vadd.f32 0.0, %v451
      %v453 = vpop.f32.mrf.mxu0
      %454 = vmatprep.mubr.f32.mxu0 %v377
      %455 = vmatmul.mubr.f32.gmra.mxu0 %v366
      %v456 = vpop.f32.mrf.mxu0
      %v457 = vadd.f32 0.0, %v456
      %v458 = vpop.f32.mrf.mxu0
      %459 = vmatprep.mubr.f32.mxu0 %v380
      %460 = vmatmul.mubr.f32.gmra.mxu0 %v368
      %v461 = vpop.f32.mrf.mxu0
      %v462 = vadd.f32 0.0, %v461
      %v463 = vpop.f32.mrf.mxu0
      %464 = vmatprep.mubr.f32.mxu0 %v383
      %465 = vmatmul.mubr.f32.gmra.mxu0 %v370
      %v466 = vpop.f32.mrf.mxu0
      %v467 = vadd.f32 0.0, %v466
      %v468 = vpop.f32.mrf.mxu0
      %469 = vdwg.mxu0
      %v470 = vld [vmem:[%s2] sm:$0xff]
      %v471 = vld [vmem:[%s2 + $0x8] sm:$0xff]
      %v472 = vld [vmem:[%s2 + $0x10] sm:$0xff]
      %v473 = vld [vmem:[%s2 + $0x18] sm:$0xff]
      %v474 = vld [vmem:[%s2 + $0x20] sm:$0xff]
      %v475 = vld [vmem:[%s2 + $0x28] sm:$0xff]
      %v476 = vld [vmem:[%s2 + $0x30] sm:$0xff]
      %v477 = vld [vmem:[%s2 + $0x38] sm:$0xff]
      %v478 = vld [vmem:[%s2 + $0x40] sm:$0xff]
      %v479 = vld [vmem:[%s2 + $0x48] sm:$0xff]
      %v480 = vld [vmem:[%s2 + $0x50] sm:$0xff]
      %v481 = vld [vmem:[%s2 + $0x58] sm:$0xff]
      %v482 = vld [vmem:[%s2 + $0x60] sm:$0xff]
      %v483 = vld [vmem:[%s2 + $0x68] sm:$0xff]
      %v484 = vld [vmem:[%s2 + $0x70] sm:$0xff]
      %v485 = vld [vmem:[%s2 + $0x78] sm:$0xff]
      %v486 = vld [vmem:[%s2 + $0x80] sm:$0xff]
      %v487 = vld [vmem:[%s2 + $0x88] sm:$0xff]
      %v488 = vld [vmem:[%s2 + $0x90] sm:$0xff]
      %v489 = vld [vmem:[%s2 + $0x98] sm:$0xff]
      %v490 = vld [vmem:[%s2 + $0xa0] sm:$0xff]
      %v491 = vld [vmem:[%s2 + $0xa8] sm:$0xff]
      %v492 = vld [vmem:[%s2 + $0xb0] sm:$0xff]
      %v493 = vld [vmem:[%s2 + $0xb8] sm:$0xff]
      %v494 = vld [vmem:[%s2 + $0xc0] sm:$0xff]
      %v495 = vld [vmem:[%s2 + $0xc8] sm:$0xff]
      %v496 = vld [vmem:[%s2 + $0xd0] sm:$0xff]
      %v497 = vld [vmem:[%s2 + $0xd8] sm:$0xff]
      %vm498 = vcmask 261120
      %v500 = vsel %vm498, %v470, 0
      %v503 = vsel %vm498, %v471, 0
      %v506 = vsel %vm498, %v472, 0
      %v509 = vsel %vm498, %v473, 0
      %v512 = vsel %vm498, %v474, 0
      %v515 = vsel %vm498, %v475, 0
      %v518 = vsel %vm498, %v476, 0
      %v521 = vsel %vm498, %v477, 0
      %v524 = vsel %vm498, %v478, 0
      %v527 = vsel %vm498, %v479, 0
      %v530 = vsel %vm498, %v480, 0
      %v533 = vsel %vm498, %v481, 0
      %v536 = vsel %vm498, %v482, 0
      %v539 = vsel %vm498, %v483, 0
      %v542 = vsel %vm498, %v484, 0
      %v545 = vsel %vm498, %v485, 0
      %v548 = vsel %vm498, %v486, 0
      %v551 = vsel %vm498, %v487, 0
      %v554 = vsel %vm498, %v488, 0
      %v557 = vsel %vm498, %v489, 0
      %v560 = vsel %vm498, %v490, 0
      %v563 = vsel %vm498, %v491, 0
      %v566 = vsel %vm498, %v492, 0
      %v569 = vsel %vm498, %v493, 0
      %v572 = vsel %vm498, %v494, 0
      %v575 = vsel %vm498, %v495, 0
      %v578 = vsel %vm498, %v496, 0
      %v581 = vsel %vm498, %v497, 0
      %583 = vmatprep.subr.mxu0 0.0
      %584 = vmatpush1.msra.mxu0 0.0
      %585 = vmatprep.subr.mxu0 0.0
      %586 = vmatpush1.msra.mxu0 0.0
      %587 = vmatprep.subr.mxu0 0.0
      %588 = vmatpush1.msra.mxu0 0.0
      %589 = vmatprep.subr.mxu0 0.0
      %590 = vmatpush1.msra.mxu0 0.0
      %591 = vmatprep.subr.mxu0 0.0
      %592 = vmatpush1.msra.mxu0 0.0
      %593 = vmatprep.subr.mxu0 0.0
      %594 = vmatpush1.msra.mxu0 0.0
      %595 = vmatprep.subr.mxu0 0.0
      %596 = vmatpush1.msra.mxu0 0.0
      %597 = vmatprep.subr.mxu0 0.0
      %598 = vmatpush1.msra.mxu0 0.0
      %599 = vmatprep.subr.mxu0 0.0
      %600 = vmatpush1.msra.mxu0 0.0
      %601 = vmatprep.subr.mxu0 0.0
      %602 = vmatpush1.msra.mxu0 0.0
      %603 = vmatprep.subr.mxu0 0.0
      %604 = vmatpush1.msra.mxu0 0.0
      %605 = vmatprep.subr.mxu0 0.0
      %606 = vmatpush1.msra.mxu0 0.0
      %607 = vmatprep.subr.mxu0 0.0
      %608 = vmatpush1.msra.mxu0 %v467
      %609 = vmatprep.subr.mxu0 0.0
      %610 = vmatpush1.msra.mxu0 %v462
      %611 = vmatprep.subr.mxu0 0.0
      %612 = vmatpush1.msra.mxu0 %v457
      %613 = vmatprep.subr.mxu0 0.0
      %614 = vmatpush1.msra.mxu0 %v452
      %615 = vmatprep.subr.mxu0 0.0
      %616 = vmatpush2.msra.mxu0 0.0
      %617 = vmatprep.subr.mxu0 0.0
      %618 = vmatpush2.msra.mxu0 0.0
      %619 = vmatprep.subr.mxu0 0.0
      %620 = vmatpush2.msra.mxu0 0.0
      %621 = vmatprep.subr.mxu0 0.0
      %622 = vmatpush2.msra.mxu0 0.0
      %623 = vmatprep.subr.mxu0 0.0
      %624 = vmatpush2.msra.mxu0 0.0
      %625 = vmatprep.subr.mxu0 0.0
      %626 = vmatpush2.msra.mxu0 0.0
      %627 = vmatprep.subr.mxu0 0.0
      %628 = vmatpush2.msra.mxu0 0.0
      %629 = vmatprep.subr.mxu0 0.0
      %630 = vmatpush2.msra.mxu0 0.0
      %631 = vmatprep.subr.mxu0 0.0
      %632 = vmatpush2.msra.mxu0 0.0
      %633 = vmatprep.subr.mxu0 0.0
      %634 = vmatpush2.msra.mxu0 0.0
      %635 = vmatprep.subr.mxu0 0.0
      %636 = vmatpush2.msra.mxu0 0.0
      %637 = vmatprep.subr.mxu0 0.0
      %638 = vmatpush2.msra.mxu0 0.0
      %639 = vmatprep.subr.mxu0 0.0
      %640 = vmatpush2.msra.mxu0 0.0
      %641 = vmatprep.subr.mxu0 0.0
      %642 = vmatpush2.msra.mxu0 0.0
      %643 = vmatprep.subr.mxu0 0.0
      %644 = vmatpush2.msra.mxu0 0.0
      %645 = vmatprep.subr.mxu0 0.0
      %646 = vmatpush2.msra.mxu0 0.0
      %647 = vmatprep.mubr.f32.mxu0 0.0
      %648 = vmatmul.mubr.f32.gmra.mxu0 %v500
      %v649 = vpop.f32.mrf.mxu0
      %v650 = vadd.f32 0.0, %v649
      %v651 = vpop.f32.mrf.mxu0
      %652 = vmatprep.mubr.f32.mxu0 0.0
      %653 = vmatmul.mubr.f32.gmra.mxu0 %v503
      %v654 = vpop.f32.mrf.mxu0
      %v655 = vadd.f32 0.0, %v654
      %v656 = vpop.f32.mrf.mxu0
      %657 = vmatprep.mubr.f32.mxu0 0.0
      %658 = vmatmul.mubr.f32.gmra.mxu0 %v506
      %v659 = vpop.f32.mrf.mxu0
      %v660 = vadd.f32 0.0, %v659
      %v661 = vpop.f32.mrf.mxu0
      %662 = vmatprep.mubr.f32.mxu0 0.0
      %663 = vmatmul.mubr.f32.gmra.mxu0 %v509
      %v664 = vpop.f32.mrf.mxu0
      %v665 = vadd.f32 0.0, %v664
      %v666 = vpop.f32.mrf.mxu0
      %667 = vmatprep.mubr.f32.mxu0 0.0
      %668 = vmatmul.mubr.f32.gmra.mxu0 %v512
      %v669 = vpop.f32.mrf.mxu0
      %v670 = vadd.f32 0.0, %v669
      %v671 = vpop.f32.mrf.mxu0
      %672 = vmatprep.mubr.f32.mxu0 0.0
      %673 = vmatmul.mubr.f32.gmra.mxu0 %v515
      %v674 = vpop.f32.mrf.mxu0
      %v675 = vadd.f32 0.0, %v674
      %v676 = vpop.f32.mrf.mxu0
      %677 = vmatprep.mubr.f32.mxu0 0.0
      %678 = vmatmul.mubr.f32.gmra.mxu0 %v518
      %v679 = vpop.f32.mrf.mxu0
      %v680 = vadd.f32 0.0, %v679
      %v681 = vpop.f32.mrf.mxu0
      %682 = vmatprep.mubr.f32.mxu0 0.0
      %683 = vmatmul.mubr.f32.gmra.mxu0 %v521
      %v684 = vpop.f32.mrf.mxu0
      %v685 = vadd.f32 0.0, %v684
      %v686 = vpop.f32.mrf.mxu0
      %687 = vmatprep.mubr.f32.mxu0 0.0
      %688 = vmatmul.mubr.f32.gmra.mxu0 %v524
      %v689 = vpop.f32.mrf.mxu0
      %v690 = vadd.f32 0.0, %v689
      %v691 = vpop.f32.mrf.mxu0
      %692 = vmatprep.mubr.f32.mxu0 0.0
      %693 = vmatmul.mubr.f32.gmra.mxu0 %v527
      %v694 = vpop.f32.mrf.mxu0
      %v695 = vadd.f32 0.0, %v694
      %v696 = vpop.f32.mrf.mxu0
      %697 = vmatprep.mubr.f32.mxu0 0.0
      %698 = vmatmul.mubr.f32.gmra.mxu0 %v530
      %v699 = vpop.f32.mrf.mxu0
      %v700 = vadd.f32 0.0, %v699
      %v701 = vpop.f32.mrf.mxu0
      %702 = vmatprep.mubr.f32.mxu0 0.0
      %703 = vmatmul.mubr.f32.gmra.mxu0 %v533
      %v704 = vpop.f32.mrf.mxu0
      %v705 = vadd.f32 0.0, %v704
      %v706 = vpop.f32.mrf.mxu0
      %707 = vmatprep.mubr.f32.mxu0 0.0
      %708 = vmatmul.mubr.f32.gmra.mxu0 %v536
      %v709 = vpop.f32.mrf.mxu0
      %v710 = vadd.f32 0.0, %v709
      %v711 = vpop.f32.mrf.mxu0
      %712 = vmatprep.mubr.f32.mxu0 0.0
      %713 = vmatmul.mubr.f32.gmra.mxu0 %v539
      %v714 = vpop.f32.mrf.mxu0
      %v715 = vadd.f32 0.0, %v714
      %v716 = vpop.f32.mrf.mxu0
      %717 = vmatprep.mubr.f32.mxu0 0.0
      %718 = vmatmul.mubr.f32.gmra.mxu0 %v542
      %v719 = vpop.f32.mrf.mxu0
      %v720 = vadd.f32 0.0, %v719
      %v721 = vpop.f32.mrf.mxu0
      %722 = vmatprep.mubr.f32.mxu0 0.0
      %723 = vmatmul.mubr.f32.gmra.mxu0 %v545
      %v724 = vpop.f32.mrf.mxu0
      %v725 = vadd.f32 0.0, %v724
      %v726 = vpop.f32.mrf.mxu0
      %727 = vmatprep.mubr.f32.mxu0 0.0
      %728 = vmatmul.mubr.f32.gmra.mxu0 %v548
      %v729 = vpop.f32.mrf.mxu0
      %v730 = vadd.f32 0.0, %v729
      %v731 = vpop.f32.mrf.mxu0
      %732 = vmatprep.mubr.f32.mxu0 0.0
      %733 = vmatmul.mubr.f32.gmra.mxu0 %v551
      %v734 = vpop.f32.mrf.mxu0
      %v735 = vadd.f32 0.0, %v734
      %v736 = vpop.f32.mrf.mxu0
      %737 = vmatprep.mubr.f32.mxu0 0.0
      %738 = vmatmul.mubr.f32.gmra.mxu0 %v554
      %v739 = vpop.f32.mrf.mxu0
      %v740 = vadd.f32 0.0, %v739
      %v741 = vpop.f32.mrf.mxu0
      %742 = vmatprep.mubr.f32.mxu0 0.0
      %743 = vmatmul.mubr.f32.gmra.mxu0 %v557
      %v744 = vpop.f32.mrf.mxu0
      %v745 = vadd.f32 0.0, %v744
      %v746 = vpop.f32.mrf.mxu0
      %747 = vmatprep.mubr.f32.mxu0 0.0
      %748 = vmatmul.mubr.f32.gmra.mxu0 %v560
      %v749 = vpop.f32.mrf.mxu0
      %v750 = vadd.f32 0.0, %v749
      %v751 = vpop.f32.mrf.mxu0
      %752 = vmatprep.mubr.f32.mxu0 0.0
      %753 = vmatmul.mubr.f32.gmra.mxu0 %v563
      %v754 = vpop.f32.mrf.mxu0
      %v755 = vadd.f32 0.0, %v754
      %v756 = vpop.f32.mrf.mxu0
      %757 = vmatprep.mubr.f32.mxu0 0.0
      %758 = vmatmul.mubr.f32.gmra.mxu0 %v566
      %v759 = vpop.f32.mrf.mxu0
      %v760 = vadd.f32 0.0, %v759
      %v761 = vpop.f32.mrf.mxu0
      %762 = vmatprep.mubr.f32.mxu0 0.0
      %763 = vmatmul.mubr.f32.gmra.mxu0 %v569
      %v764 = vpop.f32.mrf.mxu0
      %v765 = vadd.f32 0.0, %v764
      %v766 = vpop.f32.mrf.mxu0
      %767 = vmatprep.mubr.f32.mxu0 0.0
      %768 = vmatmul.mubr.f32.gmra.mxu0 %v572
      %v769 = vpop.f32.mrf.mxu0
      %v770 = vadd.f32 0.0, %v769
      %v771 = vpop.f32.mrf.mxu0
      %772 = vmatprep.mubr.f32.mxu0 0.0
      %773 = vmatmul.mubr.f32.gmra.mxu0 %v575
      %v774 = vpop.f32.mrf.mxu0
      %v775 = vadd.f32 0.0, %v774
      %v776 = vpop.f32.mrf.mxu0
      %777 = vmatprep.mubr.f32.mxu0 0.0
      %778 = vmatmul.mubr.f32.gmra.mxu0 %v578
      %v779 = vpop.f32.mrf.mxu0
      %v780 = vadd.f32 0.0, %v779
      %v781 = vpop.f32.mrf.mxu0
      %782 = vmatprep.mubr.f32.mxu0 0.0
      %783 = vmatmul.mubr.f32.gmra.mxu0 %v581
      %v784 = vpop.f32.mrf.mxu0
      %v785 = vadd.f32 0.0, %v784
      %v786 = vpop.f32.mrf.mxu0
      %787 = vdwg.mxu0
      %v788 = vld [vmem:[#allocation2] sm:$0xff]
      %v789 = vld [vmem:[#allocation2 + $0x8] sm:$0xff]
      %v790 = vld [vmem:[#allocation2 + $0x10] sm:$0xff]
      %v791 = vld [vmem:[#allocation2 + $0x18] sm:$0xff]
      %v792 = vld [vmem:[#allocation2 + $0x20] sm:$0xff]
      %v793 = vld [vmem:[#allocation2 + $0x28] sm:$0xff]
      %v794 = vld [vmem:[#allocation2 + $0x30] sm:$0xff]
      %v795 = vld [vmem:[#allocation2 + $0x38] sm:$0xff]
      %v796 = vld [vmem:[#allocation2 + $0x40] sm:$0xff]
      %v797 = vld [vmem:[#allocation2 + $0x48] sm:$0xff]
      %v798 = vld [vmem:[#allocation2 + $0x50] sm:$0xff]
      %v799 = vld [vmem:[#allocation2 + $0x58] sm:$0xff]
      %v800 = vld [vmem:[#allocation2 + $0x60] sm:$0xff]
      %v801 = vld [vmem:[#allocation2 + $0x68] sm:$0xff]
      %v802 = vld [vmem:[#allocation2 + $0x70] sm:$0xff]
      %v803 = vld [vmem:[#allocation2 + $0x78] sm:$0xff]
      %v804 = vld [vmem:[#allocation2 + $0x80] sm:$0xff]
      %v805 = vld [vmem:[#allocation2 + $0x88] sm:$0xff]
      %v806 = vld [vmem:[#allocation2 + $0x90] sm:$0xff]
      %v807 = vld [vmem:[#allocation2 + $0x98] sm:$0xff]
      %v808 = vld [vmem:[#allocation2 + $0xa0] sm:$0xff]
      %v809 = vld [vmem:[#allocation2 + $0xa8] sm:$0xff]
      %v810 = vld [vmem:[#allocation2 + $0xb0] sm:$0xff]
      %v811 = vld [vmem:[#allocation2 + $0xb8] sm:$0xff]
      %v812 = vld [vmem:[#allocation2 + $0xc0] sm:$0xff]
      %v813 = vld [vmem:[#allocation2 + $0xc8] sm:$0xff]
      %v814 = vld [vmem:[#allocation2 + $0xd0] sm:$0xff]
      %v815 = vld [vmem:[#allocation2 + $0xd8] sm:$0xff]
      %v816 = vadd.f32 %v788, %v650
      %v817 = vadd.f32 %v789, %v655
      %v818 = vadd.f32 %v790, %v660
      %v819 = vadd.f32 %v791, %v665
      %v820 = vadd.f32 %v792, %v670
      %v821 = vadd.f32 %v793, %v675
      %v822 = vadd.f32 %v794, %v680
      %v823 = vadd.f32 %v795, %v685
      %v824 = vadd.f32 %v796, %v690
      %v825 = vadd.f32 %v797, %v695
      %v826 = vadd.f32 %v798, %v700
      %v827 = vadd.f32 %v799, %v705
      %v828 = vadd.f32 %v800, %v710
      %v829 = vadd.f32 %v801, %v715
      %v830 = vadd.f32 %v802, %v720
      %v831 = vadd.f32 %v803, %v725
      %v832 = vadd.f32 %v804, %v730
      %v833 = vadd.f32 %v805, %v735
      %v834 = vadd.f32 %v806, %v740
      %v835 = vadd.f32 %v807, %v745
      %v836 = vadd.f32 %v808, %v750
      %v837 = vadd.f32 %v809, %v755
      %v838 = vadd.f32 %v810, %v760
      %v839 = vadd.f32 %v811, %v765
      %v840 = vadd.f32 %v812, %v770
      %v841 = vadd.f32 %v813, %v775
      %v842 = vadd.f32 %v814, %v780
      %v843 = vadd.f32 %v815, %v785
      %844 = vst.msk [vmem:[#allocation2] sm:$0xff] %vm292, %v816
      %845 = vst.msk [vmem:[#allocation2 + $0x8] sm:$0xff] %vm292, %v817
      %846 = vst.msk [vmem:[#allocation2 + $0x10] sm:$0xff] %vm292, %v818
      %847 = vst.msk [vmem:[#allocation2 + $0x18] sm:$0xff] %vm292, %v819
      %848 = vst.msk [vmem:[#allocation2 + $0x20] sm:$0xff] %vm292, %v820
      %849 = vst.msk [vmem:[#allocation2 + $0x28] sm:$0xff] %vm292, %v821
      %850 = vst.msk [vmem:[#allocation2 + $0x30] sm:$0xff] %vm292, %v822
      %851 = vst.msk [vmem:[#allocation2 + $0x38] sm:$0xff] %vm292, %v823
      %852 = vst.msk [vmem:[#allocation2 + $0x40] sm:$0xff] %vm292, %v824
      %853 = vst.msk [vmem:[#allocation2 + $0x48] sm:$0xff] %vm292, %v825
      %854 = vst.msk [vmem:[#allocation2 + $0x50] sm:$0xff] %vm292, %v826
      %855 = vst.msk [vmem:[#allocation2 + $0x58] sm:$0xff] %vm292, %v827
      %856 = vst.msk [vmem:[#allocation2 + $0x60] sm:$0xff] %vm292, %v828
      %857 = vst.msk [vmem:[#allocation2 + $0x68] sm:$0xff] %vm292, %v829
      %858 = vst.msk [vmem:[#allocation2 + $0x70] sm:$0xff] %vm292, %v830
      %859 = vst.msk [vmem:[#allocation2 + $0x78] sm:$0xff] %vm292, %v831
      %860 = vst.msk [vmem:[#allocation2 + $0x80] sm:$0xff] %vm292, %v832
      %861 = vst.msk [vmem:[#allocation2 + $0x88] sm:$0xff] %vm292, %v833
      %862 = vst.msk [vmem:[#allocation2 + $0x90] sm:$0xff] %vm292, %v834
      %863 = vst.msk [vmem:[#allocation2 + $0x98] sm:$0xff] %vm292, %v835
      %864 = vst.msk [vmem:[#allocation2 + $0xa0] sm:$0xff] %vm292, %v836
      %865 = vst.msk [vmem:[#allocation2 + $0xa8] sm:$0xff] %vm292, %v837
      %866 = vst.msk [vmem:[#allocation2 + $0xb0] sm:$0xff] %vm292, %v838
      %867 = vst.msk [vmem:[#allocation2 + $0xb8] sm:$0xff] %vm292, %v839
      %868 = vst.msk [vmem:[#allocation2 + $0xc0] sm:$0xff] %vm292, %v840
      %869 = vst.msk [vmem:[#allocation2 + $0xc8] sm:$0xff] %vm292, %v841
      %870 = vst.msk [vmem:[#allocation2 + $0xd0] sm:$0xff] %vm292, %v842
      %871 = vst.msk [vmem:[#allocation2 + $0xd8] sm:$0xff] %vm292, %v843
      %v872 = vld [vmem:[%s1] sm:$0xff]
      %v873 = vld [vmem:[%s1 + $0x8] sm:$0xff]
      %v874 = vld [vmem:[%s1 + $0x10] sm:$0xff]
      %v875 = vld [vmem:[%s1 + $0x18] sm:$0xff]
      %v876 = vld [vmem:[%s1 + $0x20] sm:$0xff]
      %v877 = vld [vmem:[%s1 + $0x28] sm:$0xff]
      %v878 = vld [vmem:[%s1 + $0x30] sm:$0xff]
      %v879 = vld [vmem:[%s1 + $0x38] sm:$0xff]
      %vm909 = vcmask 1046528
      %v910 = vrot.slane %v259, 1
      %v911 = vrot.slane %v260, 1
      %v912 = vsel %vm909, %v910, %v911
      %v913 = vrot.slane %v261, 1
      %v914 = vsel %vm909, %v911, %v913
      %v915 = vrot.slane %v262, 1
      %v916 = vsel %vm909, %v913, %v915
      %v917 = vrot.slane %v263, 1
      %v918 = vsel %vm909, %v915, %v917
      %v919 = vrot.slane %v264, 1
      %v920 = vsel %vm909, %v917, %v919
      %v921 = vrot.slane %v265, 1
      %v922 = vsel %vm909, %v919, %v921
      %v923 = vrot.slane %v266, 1
      %v924 = vsel %vm909, %v921, %v923
      %v925 = vrot.slane %v267, 1
      %v926 = vsel %vm909, %v923, %v925
      %v927 = vrot.slane %v268, 1
      %v928 = vsel %vm909, %v925, %v927
      %v929 = vrot.slane %v269, 1
      %v930 = vsel %vm909, %v927, %v929
      %v931 = vrot.slane %v270, 1
      %v932 = vsel %vm909, %v929, %v931
      %v933 = vrot.slane %v271, 1
      %v934 = vsel %vm909, %v931, %v933
      %v935 = vrot.slane %v272, 1
      %v936 = vsel %vm909, %v933, %v935
      %v937 = vrot.slane %v273, 1
      %v938 = vsel %vm909, %v935, %v937
      %v939 = vrot.slane %v274, 1
      %v940 = vsel %vm909, %v937, %v939
      %v941 = vrot.slane %v275, 1
      %v942 = vsel %vm909, %v939, %v941
      %v943 = vrot.slane %v276, 1
      %v944 = vsel %vm909, %v941, %v943
      %v945 = vrot.slane %v277, 1
      %v946 = vsel %vm909, %v943, %v945
      %v947 = vrot.slane %v278, 1
      %v948 = vsel %vm909, %v945, %v947
      %v949 = vrot.slane %v279, 1
      %v950 = vsel %vm909, %v947, %v949
      %v951 = vrot.slane %v280, 1
      %v952 = vsel %vm909, %v949, %v951
      %v953 = vrot.slane %v281, 1
      %v954 = vsel %vm909, %v951, %v953
      %v955 = vrot.slane %v282, 1
      %v956 = vsel %vm909, %v953, %v955
      %v957 = vrot.slane %v283, 1
      %v958 = vsel %vm909, %v955, %v957
      %v959 = vrot.slane %v284, 1
      %v960 = vsel %vm909, %v957, %v959
      %v961 = vrot.slane %v285, 1
      %v962 = vsel %vm909, %v959, %v961
      %v963 = vrot.slane %v286, 1
      %v964 = vsel %vm909, %v961, %v963
      %v965 = vrot.slane %v287, 1
      %v966 = vsel %vm909, %v963, %v965
      %v996 = vsel %vm372, %v873, 0
      %v999 = vsel %vm372, %v875, 0
      %v1002 = vsel %vm372, %v877, 0
      %v1005 = vsel %vm372, %v879, 0
      %1007 = vmatprep.subr.mxu0 0.0
      %1008 = vmatpush1.msra.mxu0 %v942
      %1009 = vmatprep.subr.mxu0 0.0
      %1010 = vmatpush1.msra.mxu0 %v940
      %1011 = vmatprep.subr.mxu0 0.0
      %1012 = vmatpush1.msra.mxu0 %v938
      %1013 = vmatprep.subr.mxu0 0.0
      %1014 = vmatpush1.msra.mxu0 %v936
      %1015 = vmatprep.subr.mxu0 0.0
      %1016 = vmatpush1.msra.mxu0 %v934
      %1017 = vmatprep.subr.mxu0 0.0
      %1018 = vmatpush1.msra.mxu0 %v932
      %1019 = vmatprep.subr.mxu0 0.0
      %1020 = vmatpush1.msra.mxu0 %v930
      %1021 = vmatprep.subr.mxu0 0.0
      %1022 = vmatpush1.msra.mxu0 %v928
      %1023 = vmatprep.subr.mxu0 0.0
      %1024 = vmatpush1.msra.mxu0 %v926
      %1025 = vmatprep.subr.mxu0 0.0
      %1026 = vmatpush1.msra.mxu0 %v924
      %1027 = vmatprep.subr.mxu0 0.0
      %1028 = vmatpush1.msra.mxu0 %v922
      %1029 = vmatprep.subr.mxu0 0.0
      %1030 = vmatpush1.msra.mxu0 %v920
      %1031 = vmatprep.subr.mxu0 0.0
      %1032 = vmatpush1.msra.mxu0 %v918
      %1033 = vmatprep.subr.mxu0 0.0
      %1034 = vmatpush1.msra.mxu0 %v916
      %1035 = vmatprep.subr.mxu0 0.0
      %1036 = vmatpush1.msra.mxu0 %v914
      %1037 = vmatprep.subr.mxu0 0.0
      %1038 = vmatpush1.msra.mxu0 %v912
      %1039 = vmatprep.subr.mxu0 0.0
      %1040 = vmatpush2.msra.mxu0 0.0
      %1041 = vmatprep.subr.mxu0 0.0
      %1042 = vmatpush2.msra.mxu0 0.0
      %1043 = vmatprep.subr.mxu0 0.0
      %1044 = vmatpush2.msra.mxu0 0.0
      %1045 = vmatprep.subr.mxu0 0.0
      %1046 = vmatpush2.msra.mxu0 0.0
      %1047 = vmatprep.subr.mxu0 0.0
      %1048 = vmatpush2.msra.mxu0 %v966
      %1049 = vmatprep.subr.mxu0 0.0
      %1050 = vmatpush2.msra.mxu0 %v964
      %1051 = vmatprep.subr.mxu0 0.0
      %1052 = vmatpush2.msra.mxu0 %v962
      %1053 = vmatprep.subr.mxu0 0.0
      %1054 = vmatpush2.msra.mxu0 %v960
      %1055 = vmatprep.subr.mxu0 0.0
      %1056 = vmatpush2.msra.mxu0 %v958
      %1057 = vmatprep.subr.mxu0 0.0
      %1058 = vmatpush2.msra.mxu0 %v956
      %1059 = vmatprep.subr.mxu0 0.0
      %1060 = vmatpush2.msra.mxu0 %v954
      %1061 = vmatprep.subr.mxu0 0.0
      %1062 = vmatpush2.msra.mxu0 %v952
      %1063 = vmatprep.subr.mxu0 0.0
      %1064 = vmatpush2.msra.mxu0 %v950
      %1065 = vmatprep.subr.mxu0 0.0
      %1066 = vmatpush2.msra.mxu0 %v948
      %1067 = vmatprep.subr.mxu0 0.0
      %1068 = vmatpush2.msra.mxu0 %v946
      %1069 = vmatprep.subr.mxu0 0.0
      %1070 = vmatpush2.msra.mxu0 %v944
      %1071 = vmatprep.mubr.f32.mxu0 %v996
      %1072 = vmatmul.mubr.f32.gmra.mxu0 %v872
      %v1073 = vpop.f32.mrf.mxu0
      %v1074 = vadd.f32 0.0, %v1073
      %v1075 = vpop.f32.mrf.mxu0
      %1076 = vmatprep.mubr.f32.mxu0 %v999
      %1077 = vmatmul.mubr.f32.gmra.mxu0 %v874
      %v1078 = vpop.f32.mrf.mxu0
      %v1079 = vadd.f32 0.0, %v1078
      %v1080 = vpop.f32.mrf.mxu0
      %1081 = vmatprep.mubr.f32.mxu0 %v1002
      %1082 = vmatmul.mubr.f32.gmra.mxu0 %v876
      %v1083 = vpop.f32.mrf.mxu0
      %v1084 = vadd.f32 0.0, %v1083
      %v1085 = vpop.f32.mrf.mxu0
      %1086 = vmatprep.mubr.f32.mxu0 %v1005
      %1087 = vmatmul.mubr.f32.gmra.mxu0 %v878
      %v1088 = vpop.f32.mrf.mxu0
      %v1089 = vadd.f32 0.0, %v1088
      %v1090 = vpop.f32.mrf.mxu0
      %1091 = vdwg.mxu0
      %v1092 = vld [vmem:[%s2] sm:$0xff]
      %v1093 = vld [vmem:[%s2 + $0x8] sm:$0xff]
      %v1094 = vld [vmem:[%s2 + $0x10] sm:$0xff]
      %v1095 = vld [vmem:[%s2 + $0x18] sm:$0xff]
      %v1096 = vld [vmem:[%s2 + $0x20] sm:$0xff]
      %v1097 = vld [vmem:[%s2 + $0x28] sm:$0xff]
      %v1098 = vld [vmem:[%s2 + $0x30] sm:$0xff]
      %v1099 = vld [vmem:[%s2 + $0x38] sm:$0xff]
      %v1100 = vld [vmem:[%s2 + $0x40] sm:$0xff]
      %v1101 = vld [vmem:[%s2 + $0x48] sm:$0xff]
      %v1102 = vld [vmem:[%s2 + $0x50] sm:$0xff]
      %v1103 = vld [vmem:[%s2 + $0x58] sm:$0xff]
      %v1104 = vld [vmem:[%s2 + $0x60] sm:$0xff]
      %v1105 = vld [vmem:[%s2 + $0x68] sm:$0xff]
      %v1106 = vld [vmem:[%s2 + $0x70] sm:$0xff]
      %v1107 = vld [vmem:[%s2 + $0x78] sm:$0xff]
      %v1108 = vld [vmem:[%s2 + $0x80] sm:$0xff]
      %v1109 = vld [vmem:[%s2 + $0x88] sm:$0xff]
      %v1110 = vld [vmem:[%s2 + $0x90] sm:$0xff]
      %v1111 = vld [vmem:[%s2 + $0x98] sm:$0xff]
      %v1112 = vld [vmem:[%s2 + $0xa0] sm:$0xff]
      %v1113 = vld [vmem:[%s2 + $0xa8] sm:$0xff]
      %v1114 = vld [vmem:[%s2 + $0xb0] sm:$0xff]
      %v1115 = vld [vmem:[%s2 + $0xb8] sm:$0xff]
      %v1116 = vld [vmem:[%s2 + $0xc0] sm:$0xff]
      %v1117 = vld [vmem:[%s2 + $0xc8] sm:$0xff]
      %v1118 = vld [vmem:[%s2 + $0xd0] sm:$0xff]
      %v1119 = vld [vmem:[%s2 + $0xd8] sm:$0xff]
      %v1121 = vsel %vm498, %v1092, 0
      %v1124 = vsel %vm498, %v1093, 0
      %v1127 = vsel %vm498, %v1094, 0
      %v1130 = vsel %vm498, %v1095, 0
      %v1133 = vsel %vm498, %v1096, 0
      %v1136 = vsel %vm498, %v1097, 0
      %v1139 = vsel %vm498, %v1098, 0
      %v1142 = vsel %vm498, %v1099, 0
      %v1145 = vsel %vm498, %v1100, 0
      %v1148 = vsel %vm498, %v1101, 0
      %v1151 = vsel %vm498, %v1102, 0
      %v1154 = vsel %vm498, %v1103, 0
      %v1157 = vsel %vm498, %v1104, 0
      %v1160 = vsel %vm498, %v1105, 0
      %v1163 = vsel %vm498, %v1106, 0
      %v1166 = vsel %vm498, %v1107, 0
      %v1169 = vsel %vm498, %v1108, 0
      %v1172 = vsel %vm498, %v1109, 0
      %v1175 = vsel %vm498, %v1110, 0
      %v1178 = vsel %vm498, %v1111, 0
      %v1181 = vsel %vm498, %v1112, 0
      %v1184 = vsel %vm498, %v1113, 0
      %v1187 = vsel %vm498, %v1114, 0
      %v1190 = vsel %vm498, %v1115, 0
      %v1193 = vsel %vm498, %v1116, 0
      %v1196 = vsel %vm498, %v1117, 0
      %v1199 = vsel %vm498, %v1118, 0
      %v1202 = vsel %vm498, %v1119, 0
      %1204 = vmatprep.subr.mxu0 0.0
      %1205 = vmatpush1.msra.mxu0 0.0
      %1206 = vmatprep.subr.mxu0 0.0
      %1207 = vmatpush1.msra.mxu0 0.0
      %1208 = vmatprep.subr.mxu0 0.0
      %1209 = vmatpush1.msra.mxu0 0.0
      %1210 = vmatprep.subr.mxu0 0.0
      %1211 = vmatpush1.msra.mxu0 0.0
      %1212 = vmatprep.subr.mxu0 0.0
      %1213 = vmatpush1.msra.mxu0 0.0
      %1214 = vmatprep.subr.mxu0 0.0
      %1215 = vmatpush1.msra.mxu0 0.0
      %1216 = vmatprep.subr.mxu0 0.0
      %1217 = vmatpush1.msra.mxu0 0.0
      %1218 = vmatprep.subr.mxu0 0.0
      %1219 = vmatpush1.msra.mxu0 0.0
      %1220 = vmatprep.subr.mxu0 0.0
      %1221 = vmatpush1.msra.mxu0 0.0
      %1222 = vmatprep.subr.mxu0 0.0
      %1223 = vmatpush1.msra.mxu0 0.0
      %1224 = vmatprep.subr.mxu0 0.0
      %1225 = vmatpush1.msra.mxu0 0.0
      %1226 = vmatprep.subr.mxu0 0.0
      %1227 = vmatpush1.msra.mxu0 0.0
      %1228 = vmatprep.subr.mxu0 0.0
      %1229 = vmatpush1.msra.mxu0 %v1089
      %1230 = vmatprep.subr.mxu0 0.0
      %1231 = vmatpush1.msra.mxu0 %v1084
      %1232 = vmatprep.subr.mxu0 0.0
      %1233 = vmatpush1.msra.mxu0 %v1079
      %1234 = vmatprep.subr.mxu0 0.0
      %1235 = vmatpush1.msra.mxu0 %v1074
      %1236 = vmatprep.subr.mxu0 0.0
      %1237 = vmatpush2.msra.mxu0 0.0
      %1238 = vmatprep.subr.mxu0 0.0
      %1239 = vmatpush2.msra.mxu0 0.0
      %1240 = vmatprep.subr.mxu0 0.0
      %1241 = vmatpush2.msra.mxu0 0.0
      %1242 = vmatprep.subr.mxu0 0.0
      %1243 = vmatpush2.msra.mxu0 0.0
      %1244 = vmatprep.subr.mxu0 0.0
      %1245 = vmatpush2.msra.mxu0 0.0
      %1246 = vmatprep.subr.mxu0 0.0
      %1247 = vmatpush2.msra.mxu0 0.0
      %1248 = vmatprep.subr.mxu0 0.0
      %1249 = vmatpush2.msra.mxu0 0.0
      %1250 = vmatprep.subr.mxu0 0.0
      %1251 = vmatpush2.msra.mxu0 0.0
      %1252 = vmatprep.subr.mxu0 0.0
      %1253 = vmatpush2.msra.mxu0 0.0
      %1254 = vmatprep.subr.mxu0 0.0
      %1255 = vmatpush2.msra.mxu0 0.0
      %1256 = vmatprep.subr.mxu0 0.0
      %1257 = vmatpush2.msra.mxu0 0.0
      %1258 = vmatprep.subr.mxu0 0.0
      %1259 = vmatpush2.msra.mxu0 0.0
      %1260 = vmatprep.subr.mxu0 0.0
      %1261 = vmatpush2.msra.mxu0 0.0
      %1262 = vmatprep.subr.mxu0 0.0
      %1263 = vmatpush2.msra.mxu0 0.0
      %1264 = vmatprep.subr.mxu0 0.0
      %1265 = vmatpush2.msra.mxu0 0.0
      %1266 = vmatprep.subr.mxu0 0.0
      %1267 = vmatpush2.msra.mxu0 0.0
      %1268 = vmatprep.mubr.f32.mxu0 0.0
      %1269 = vmatmul.mubr.f32.gmra.mxu0 %v1121
      %v1270 = vpop.f32.mrf.mxu0
      %v1271 = vadd.f32 0.0, %v1270
      %v1272 = vpop.f32.mrf.mxu0
      %1273 = vmatprep.mubr.f32.mxu0 0.0
      %1274 = vmatmul.mubr.f32.gmra.mxu0 %v1124
      %v1275 = vpop.f32.mrf.mxu0
      %v1276 = vadd.f32 0.0, %v1275
      %v1277 = vpop.f32.mrf.mxu0
      %1278 = vmatprep.mubr.f32.mxu0 0.0
      %1279 = vmatmul.mubr.f32.gmra.mxu0 %v1127
      %v1280 = vpop.f32.mrf.mxu0
      %v1281 = vadd.f32 0.0, %v1280
      %v1282 = vpop.f32.mrf.mxu0
      %1283 = vmatprep.mubr.f32.mxu0 0.0
      %1284 = vmatmul.mubr.f32.gmra.mxu0 %v1130
      %v1285 = vpop.f32.mrf.mxu0
      %v1286 = vadd.f32 0.0, %v1285
      %v1287 = vpop.f32.mrf.mxu0
      %1288 = vmatprep.mubr.f32.mxu0 0.0
      %1289 = vmatmul.mubr.f32.gmra.mxu0 %v1133
      %v1290 = vpop.f32.mrf.mxu0
      %v1291 = vadd.f32 0.0, %v1290
      %v1292 = vpop.f32.mrf.mxu0
      %1293 = vmatprep.mubr.f32.mxu0 0.0
      %1294 = vmatmul.mubr.f32.gmra.mxu0 %v1136
      %v1295 = vpop.f32.mrf.mxu0
      %v1296 = vadd.f32 0.0, %v1295
      %v1297 = vpop.f32.mrf.mxu0
      %1298 = vmatprep.mubr.f32.mxu0 0.0
      %1299 = vmatmul.mubr.f32.gmra.mxu0 %v1139
      %v1300 = vpop.f32.mrf.mxu0
      %v1301 = vadd.f32 0.0, %v1300
      %v1302 = vpop.f32.mrf.mxu0
      %1303 = vmatprep.mubr.f32.mxu0 0.0
      %1304 = vmatmul.mubr.f32.gmra.mxu0 %v1142
      %v1305 = vpop.f32.mrf.mxu0
      %v1306 = vadd.f32 0.0, %v1305
      %v1307 = vpop.f32.mrf.mxu0
      %1308 = vmatprep.mubr.f32.mxu0 0.0
      %1309 = vmatmul.mubr.f32.gmra.mxu0 %v1145
      %v1310 = vpop.f32.mrf.mxu0
      %v1311 = vadd.f32 0.0, %v1310
      %v1312 = vpop.f32.mrf.mxu0
      %1313 = vmatprep.mubr.f32.mxu0 0.0
      %1314 = vmatmul.mubr.f32.gmra.mxu0 %v1148
      %v1315 = vpop.f32.mrf.mxu0
      %v1316 = vadd.f32 0.0, %v1315
      %v1317 = vpop.f32.mrf.mxu0
      %1318 = vmatprep.mubr.f32.mxu0 0.0
      %1319 = vmatmul.mubr.f32.gmra.mxu0 %v1151
      %v1320 = vpop.f32.mrf.mxu0
      %v1321 = vadd.f32 0.0, %v1320
      %v1322 = vpop.f32.mrf.mxu0
      %1323 = vmatprep.mubr.f32.mxu0 0.0
      %1324 = vmatmul.mubr.f32.gmra.mxu0 %v1154
      %v1325 = vpop.f32.mrf.mxu0
      %v1326 = vadd.f32 0.0, %v1325
      %v1327 = vpop.f32.mrf.mxu0
      %1328 = vmatprep.mubr.f32.mxu0 0.0
      %1329 = vmatmul.mubr.f32.gmra.mxu0 %v1157
      %v1330 = vpop.f32.mrf.mxu0
      %v1331 = vadd.f32 0.0, %v1330
      %v1332 = vpop.f32.mrf.mxu0
      %1333 = vmatprep.mubr.f32.mxu0 0.0
      %1334 = vmatmul.mubr.f32.gmra.mxu0 %v1160
      %v1335 = vpop.f32.mrf.mxu0
      %v1336 = vadd.f32 0.0, %v1335
      %v1337 = vpop.f32.mrf.mxu0
      %1338 = vmatprep.mubr.f32.mxu0 0.0
      %1339 = vmatmul.mubr.f32.gmra.mxu0 %v1163
      %v1340 = vpop.f32.mrf.mxu0
      %v1341 = vadd.f32 0.0, %v1340
      %v1342 = vpop.f32.mrf.mxu0
      %1343 = vmatprep.mubr.f32.mxu0 0.0
      %1344 = vmatmul.mubr.f32.gmra.mxu0 %v1166
      %v1345 = vpop.f32.mrf.mxu0
      %v1346 = vadd.f32 0.0, %v1345
      %v1347 = vpop.f32.mrf.mxu0
      %1348 = vmatprep.mubr.f32.mxu0 0.0
      %1349 = vmatmul.mubr.f32.gmra.mxu0 %v1169
      %v1350 = vpop.f32.mrf.mxu0
      %v1351 = vadd.f32 0.0, %v1350
      %v1352 = vpop.f32.mrf.mxu0
      %1353 = vmatprep.mubr.f32.mxu0 0.0
      %1354 = vmatmul.mubr.f32.gmra.mxu0 %v1172
      %v1355 = vpop.f32.mrf.mxu0
      %v1356 = vadd.f32 0.0, %v1355
      %v1357 = vpop.f32.mrf.mxu0
      %1358 = vmatprep.mubr.f32.mxu0 0.0
      %1359 = vmatmul.mubr.f32.gmra.mxu0 %v1175
      %v1360 = vpop.f32.mrf.mxu0
      %v1361 = vadd.f32 0.0, %v1360
      %v1362 = vpop.f32.mrf.mxu0
      %1363 = vmatprep.mubr.f32.mxu0 0.0
      %1364 = vmatmul.mubr.f32.gmra.mxu0 %v1178
      %v1365 = vpop.f32.mrf.mxu0
      %v1366 = vadd.f32 0.0, %v1365
      %v1367 = vpop.f32.mrf.mxu0
      %1368 = vmatprep.mubr.f32.mxu0 0.0
      %1369 = vmatmul.mubr.f32.gmra.mxu0 %v1181
      %v1370 = vpop.f32.mrf.mxu0
      %v1371 = vadd.f32 0.0, %v1370
      %v1372 = vpop.f32.mrf.mxu0
      %1373 = vmatprep.mubr.f32.mxu0 0.0
      %1374 = vmatmul.mubr.f32.gmra.mxu0 %v1184
      %v1375 = vpop.f32.mrf.mxu0
      %v1376 = vadd.f32 0.0, %v1375
      %v1377 = vpop.f32.mrf.mxu0
      %1378 = vmatprep.mubr.f32.mxu0 0.0
      %1379 = vmatmul.mubr.f32.gmra.mxu0 %v1187
      %v1380 = vpop.f32.mrf.mxu0
      %v1381 = vadd.f32 0.0, %v1380
      %v1382 = vpop.f32.mrf.mxu0
      %1383 = vmatprep.mubr.f32.mxu0 0.0
      %1384 = vmatmul.mubr.f32.gmra.mxu0 %v1190
      %v1385 = vpop.f32.mrf.mxu0
      %v1386 = vadd.f32 0.0, %v1385
      %v1387 = vpop.f32.mrf.mxu0
      %1388 = vmatprep.mubr.f32.mxu0 0.0
      %1389 = vmatmul.mubr.f32.gmra.mxu0 %v1193
      %v1390 = vpop.f32.mrf.mxu0
      %v1391 = vadd.f32 0.0, %v1390
      %v1392 = vpop.f32.mrf.mxu0
      %1393 = vmatprep.mubr.f32.mxu0 0.0
      %1394 = vmatmul.mubr.f32.gmra.mxu0 %v1196
      %v1395 = vpop.f32.mrf.mxu0
      %v1396 = vadd.f32 0.0, %v1395
      %v1397 = vpop.f32.mrf.mxu0
      %1398 = vmatprep.mubr.f32.mxu0 0.0
      %1399 = vmatmul.mubr.f32.gmra.mxu0 %v1199
      %v1400 = vpop.f32.mrf.mxu0
      %v1401 = vadd.f32 0.0, %v1400
      %v1402 = vpop.f32.mrf.mxu0
      %1403 = vmatprep.mubr.f32.mxu0 0.0
      %1404 = vmatmul.mubr.f32.gmra.mxu0 %v1202
      %v1405 = vpop.f32.mrf.mxu0
      %v1406 = vadd.f32 0.0, %v1405
      %v1407 = vpop.f32.mrf.mxu0
      %1408 = vdwg.mxu0
      %v1409 = vld [vmem:[#allocation2 + $0x1] sm:$0xff]
      %v1410 = vld [vmem:[#allocation2 + $0x9] sm:$0xff]
      %v1411 = vld [vmem:[#allocation2 + $0x11] sm:$0xff]
      %v1412 = vld [vmem:[#allocation2 + $0x19] sm:$0xff]
      %v1413 = vld [vmem:[#allocation2 + $0x21] sm:$0xff]
      %v1414 = vld [vmem:[#allocation2 + $0x29] sm:$0xff]
      %v1415 = vld [vmem:[#allocation2 + $0x31] sm:$0xff]
      %v1416 = vld [vmem:[#allocation2 + $0x39] sm:$0xff]
      %v1417 = vld [vmem:[#allocation2 + $0x41] sm:$0xff]
      %v1418 = vld [vmem:[#allocation2 + $0x49] sm:$0xff]
      %v1419 = vld [vmem:[#allocation2 + $0x51] sm:$0xff]
      %v1420 = vld [vmem:[#allocation2 + $0x59] sm:$0xff]
      %v1421 = vld [vmem:[#allocation2 + $0x61] sm:$0xff]
      %v1422 = vld [vmem:[#allocation2 + $0x69] sm:$0xff]
      %v1423 = vld [vmem:[#allocation2 + $0x71] sm:$0xff]
      %v1424 = vld [vmem:[#allocation2 + $0x79] sm:$0xff]
      %v1425 = vld [vmem:[#allocation2 + $0x81] sm:$0xff]
      %v1426 = vld [vmem:[#allocation2 + $0x89] sm:$0xff]
      %v1427 = vld [vmem:[#allocation2 + $0x91] sm:$0xff]
      %v1428 = vld [vmem:[#allocation2 + $0x99] sm:$0xff]
      %v1429 = vld [vmem:[#allocation2 + $0xa1] sm:$0xff]
      %v1430 = vld [vmem:[#allocation2 + $0xa9] sm:$0xff]
      %v1431 = vld [vmem:[#allocation2 + $0xb1] sm:$0xff]
      %v1432 = vld [vmem:[#allocation2 + $0xb9] sm:$0xff]
      %v1433 = vld [vmem:[#allocation2 + $0xc1] sm:$0xff]
      %v1434 = vld [vmem:[#allocation2 + $0xc9] sm:$0xff]
      %v1435 = vld [vmem:[#allocation2 + $0xd1] sm:$0xff]
      %v1436 = vld [vmem:[#allocation2 + $0xd9] sm:$0xff]
      %v1437 = vadd.f32 %v1409, %v1271
      %v1438 = vadd.f32 %v1410, %v1276
      %v1439 = vadd.f32 %v1411, %v1281
      %v1440 = vadd.f32 %v1412, %v1286
      %v1441 = vadd.f32 %v1413, %v1291
      %v1442 = vadd.f32 %v1414, %v1296
      %v1443 = vadd.f32 %v1415, %v1301
      %v1444 = vadd.f32 %v1416, %v1306
      %v1445 = vadd.f32 %v1417, %v1311
      %v1446 = vadd.f32 %v1418, %v1316
      %v1447 = vadd.f32 %v1419, %v1321
      %v1448 = vadd.f32 %v1420, %v1326
      %v1449 = vadd.f32 %v1421, %v1331
      %v1450 = vadd.f32 %v1422, %v1336
      %v1451 = vadd.f32 %v1423, %v1341
      %v1452 = vadd.f32 %v1424, %v1346
      %v1453 = vadd.f32 %v1425, %v1351
      %v1454 = vadd.f32 %v1426, %v1356
      %v1455 = vadd.f32 %v1427, %v1361
      %v1456 = vadd.f32 %v1428, %v1366
      %v1457 = vadd.f32 %v1429, %v1371
      %v1458 = vadd.f32 %v1430, %v1376
      %v1459 = vadd.f32 %v1431, %v1381
      %v1460 = vadd.f32 %v1432, %v1386
      %v1461 = vadd.f32 %v1433, %v1391
      %v1462 = vadd.f32 %v1434, %v1396
      %v1463 = vadd.f32 %v1435, %v1401
      %v1464 = vadd.f32 %v1436, %v1406
      %1465 = vst.msk [vmem:[#allocation2 + $0x1] sm:$0xff] %vm292, %v1437
      %1466 = vst.msk [vmem:[#allocation2 + $0x9] sm:$0xff] %vm292, %v1438
      %1467 = vst.msk [vmem:[#allocation2 + $0x11] sm:$0xff] %vm292, %v1439
      %1468 = vst.msk [vmem:[#allocation2 + $0x19] sm:$0xff] %vm292, %v1440
      %1469 = vst.msk [vmem:[#allocation2 + $0x21] sm:$0xff] %vm292, %v1441
      %1470 = vst.msk [vmem:[#allocation2 + $0x29] sm:$0xff] %vm292, %v1442
      %1471 = vst.msk [vmem:[#allocation2 + $0x31] sm:$0xff] %vm292, %v1443
      %1472 = vst.msk [vmem:[#allocation2 + $0x39] sm:$0xff] %vm292, %v1444
      %1473 = vst.msk [vmem:[#allocation2 + $0x41] sm:$0xff] %vm292, %v1445
      %1474 = vst.msk [vmem:[#allocation2 + $0x49] sm:$0xff] %vm292, %v1446
      %1475 = vst.msk [vmem:[#allocation2 + $0x51] sm:$0xff] %vm292, %v1447
      %1476 = vst.msk [vmem:[#allocation2 + $0x59] sm:$0xff] %vm292, %v1448
      %1477 = vst.msk [vmem:[#allocation2 + $0x61] sm:$0xff] %vm292, %v1449
      %1478 = vst.msk [vmem:[#allocation2 + $0x69] sm:$0xff] %vm292, %v1450
      %1479 = vst.msk [vmem:[#allocation2 + $0x71] sm:$0xff] %vm292, %v1451
      %1480 = vst.msk [vmem:[#allocation2 + $0x79] sm:$0xff] %vm292, %v1452
      %1481 = vst.msk [vmem:[#allocation2 + $0x81] sm:$0xff] %vm292, %v1453
      %1482 = vst.msk [vmem:[#allocation2 + $0x89] sm:$0xff] %vm292, %v1454
      %1483 = vst.msk [vmem:[#allocation2 + $0x91] sm:$0xff] %vm292, %v1455
      %1484 = vst.msk [vmem:[#allocation2 + $0x99] sm:$0xff] %vm292, %v1456
      %1485 = vst.msk [vmem:[#allocation2 + $0xa1] sm:$0xff] %vm292, %v1457
      %1486 = vst.msk [vmem:[#allocation2 + $0xa9] sm:$0xff] %vm292, %v1458
      %1487 = vst.msk [vmem:[#allocation2 + $0xb1] sm:$0xff] %vm292, %v1459
      %1488 = vst.msk [vmem:[#allocation2 + $0xb9] sm:$0xff] %vm292, %v1460
      %1489 = vst.msk [vmem:[#allocation2 + $0xc1] sm:$0xff] %vm292, %v1461
      %1490 = vst.msk [vmem:[#allocation2 + $0xc9] sm:$0xff] %vm292, %v1462
      %1491 = vst.msk [vmem:[#allocation2 + $0xd1] sm:$0xff] %vm292, %v1463
      %1492 = vst.msk [vmem:[#allocation2 + $0xd9] sm:$0xff] %vm292, %v1464
      %v1493 = vld [vmem:[%s1] sm:$0xff]
      %v1494 = vld [vmem:[%s1 + $0x8] sm:$0xff]
      %v1495 = vld [vmem:[%s1 + $0x10] sm:$0xff]
      %v1496 = vld [vmem:[%s1 + $0x18] sm:$0xff]
      %v1497 = vld [vmem:[%s1 + $0x20] sm:$0xff]
      %v1498 = vld [vmem:[%s1 + $0x28] sm:$0xff]
      %v1499 = vld [vmem:[%s1 + $0x30] sm:$0xff]
      %v1500 = vld [vmem:[%s1 + $0x38] sm:$0xff]
      %vm1501 = vcmask 1045504
      %v1502 = vrot.slane %v259, 2
      %v1503 = vrot.slane %v260, 2
      %v1504 = vsel %vm1501, %v1502, %v1503
      %v1505 = vrot.slane %v261, 2
      %v1506 = vsel %vm1501, %v1503, %v1505
      %v1507 = vrot.slane %v262, 2
      %v1508 = vsel %vm1501, %v1505, %v1507
      %v1509 = vrot.slane %v263, 2
      %v1510 = vsel %vm1501, %v1507, %v1509
      %v1511 = vrot.slane %v264, 2
      %v1512 = vsel %vm1501, %v1509, %v1511
      %v1513 = vrot.slane %v265, 2
      %v1514 = vsel %vm1501, %v1511, %v1513
      %v1515 = vrot.slane %v266, 2
      %v1516 = vsel %vm1501, %v1513, %v1515
      %v1517 = vrot.slane %v267, 2
      %v1518 = vsel %vm1501, %v1515, %v1517
      %v1519 = vrot.slane %v268, 2
      %v1520 = vsel %vm1501, %v1517, %v1519
      %v1521 = vrot.slane %v269, 2
      %v1522 = vsel %vm1501, %v1519, %v1521
      %v1523 = vrot.slane %v270, 2
      %v1524 = vsel %vm1501, %v1521, %v1523
      %v1525 = vrot.slane %v271, 2
      %v1526 = vsel %vm1501, %v1523, %v1525
      %v1527 = vrot.slane %v272, 2
      %v1528 = vsel %vm1501, %v1525, %v1527
      %v1529 = vrot.slane %v273, 2
      %v1530 = vsel %vm1501, %v1527, %v1529
      %v1531 = vrot.slane %v274, 2
      %v1532 = vsel %vm1501, %v1529, %v1531
      %v1533 = vrot.slane %v275, 2
      %v1534 = vsel %vm1501, %v1531, %v1533
      %v1535 = vrot.slane %v276, 2
      %v1536 = vsel %vm1501, %v1533, %v1535
      %v1537 = vrot.slane %v277, 2
      %v1538 = vsel %vm1501, %v1535, %v1537
      %v1539 = vrot.slane %v278, 2
      %v1540 = vsel %vm1501, %v1537, %v1539
      %v1541 = vrot.slane %v279, 2
      %v1542 = vsel %vm1501, %v1539, %v1541
      %v1543 = vrot.slane %v280, 2
      %v1544 = vsel %vm1501, %v1541, %v1543
      %v1545 = vrot.slane %v281, 2
      %v1546 = vsel %vm1501, %v1543, %v1545
      %v1547 = vrot.slane %v282, 2
      %v1548 = vsel %vm1501, %v1545, %v1547
      %v1549 = vrot.slane %v283, 2
      %v1550 = vsel %vm1501, %v1547, %v1549
      %v1551 = vrot.slane %v284, 2
      %v1552 = vsel %vm1501, %v1549, %v1551
      %v1553 = vrot.slane %v285, 2
      %v1554 = vsel %vm1501, %v1551, %v1553
      %v1555 = vrot.slane %v286, 2
      %v1556 = vsel %vm1501, %v1553, %v1555
      %v1557 = vrot.slane %v287, 2
      %v1558 = vsel %vm1501, %v1555, %v1557
      %v1588 = vsel %vm372, %v1494, 0
      %v1591 = vsel %vm372, %v1496, 0
      %v1594 = vsel %vm372, %v1498, 0
      %v1597 = vsel %vm372, %v1500, 0
      %1599 = vmatprep.subr.mxu0 0.0
      %1600 = vmatpush1.msra.mxu0 %v1534
      %1601 = vmatprep.subr.mxu0 0.0
      %1602 = vmatpush1.msra.mxu0 %v1532
      %1603 = vmatprep.subr.mxu0 0.0
      %1604 = vmatpush1.msra.mxu0 %v1530
      %1605 = vmatprep.subr.mxu0 0.0
      %1606 = vmatpush1.msra.mxu0 %v1528
      %1607 = vmatprep.subr.mxu0 0.0
      %1608 = vmatpush1.msra.mxu0 %v1526
      %1609 = vmatprep.subr.mxu0 0.0
      %1610 = vmatpush1.msra.mxu0 %v1524
      %1611 = vmatprep.subr.mxu0 0.0
      %1612 = vmatpush1.msra.mxu0 %v1522
      %1613 = vmatprep.subr.mxu0 0.0
      %1614 = vmatpush1.msra.mxu0 %v1520
      %1615 = vmatprep.subr.mxu0 0.0
      %1616 = vmatpush1.msra.mxu0 %v1518
      %1617 = vmatprep.subr.mxu0 0.0
      %1618 = vmatpush1.msra.mxu0 %v1516
      %1619 = vmatprep.subr.mxu0 0.0
      %1620 = vmatpush1.msra.mxu0 %v1514
      %1621 = vmatprep.subr.mxu0 0.0
      %1622 = vmatpush1.msra.mxu0 %v1512
      %1623 = vmatprep.subr.mxu0 0.0
      %1624 = vmatpush1.msra.mxu0 %v1510
      %1625 = vmatprep.subr.mxu0 0.0
      %1626 = vmatpush1.msra.mxu0 %v1508
      %1627 = vmatprep.subr.mxu0 0.0
      %1628 = vmatpush1.msra.mxu0 %v1506
      %1629 = vmatprep.subr.mxu0 0.0
      %1630 = vmatpush1.msra.mxu0 %v1504
      %1631 = vmatprep.subr.mxu0 0.0
      %1632 = vmatpush2.msra.mxu0 0.0
      %1633 = vmatprep.subr.mxu0 0.0
      %1634 = vmatpush2.msra.mxu0 0.0
      %1635 = vmatprep.subr.mxu0 0.0
      %1636 = vmatpush2.msra.mxu0 0.0
      %1637 = vmatprep.subr.mxu0 0.0
      %1638 = vmatpush2.msra.mxu0 0.0
      %1639 = vmatprep.subr.mxu0 0.0
      %1640 = vmatpush2.msra.mxu0 %v1558
      %1641 = vmatprep.subr.mxu0 0.0
      %1642 = vmatpush2.msra.mxu0 %v1556
      %1643 = vmatprep.subr.mxu0 0.0
      %1644 = vmatpush2.msra.mxu0 %v1554
      %1645 = vmatprep.subr.mxu0 0.0
      %1646 = vmatpush2.msra.mxu0 %v1552
      %1647 = vmatprep.subr.mxu0 0.0
      %1648 = vmatpush2.msra.mxu0 %v1550
      %1649 = vmatprep.subr.mxu0 0.0
      %1650 = vmatpush2.msra.mxu0 %v1548
      %1651 = vmatprep.subr.mxu0 0.0
      %1652 = vmatpush2.msra.mxu0 %v1546
      %1653 = vmatprep.subr.mxu0 0.0
      %1654 = vmatpush2.msra.mxu0 %v1544
      %1655 = vmatprep.subr.mxu0 0.0
      %1656 = vmatpush2.msra.mxu0 %v1542
      %1657 = vmatprep.subr.mxu0 0.0
      %1658 = vmatpush2.msra.mxu0 %v1540
      %1659 = vmatprep.subr.mxu0 0.0
      %1660 = vmatpush2.msra.mxu0 %v1538
      %1661 = vmatprep.subr.mxu0 0.0
      %1662 = vmatpush2.msra.mxu0 %v1536
      %1663 = vmatprep.mubr.f32.mxu0 %v1588
      %1664 = vmatmul.mubr.f32.gmra.mxu0 %v1493
      %v1665 = vpop.f32.mrf.mxu0
      %v1666 = vadd.f32 0.0, %v1665
      %v1667 = vpop.f32.mrf.mxu0
      %1668 = vmatprep.mubr.f32.mxu0 %v1591
      %1669 = vmatmul.mubr.f32.gmra.mxu0 %v1495
      %v1670 = vpop.f32.mrf.mxu0
      %v1671 = vadd.f32 0.0, %v1670
      %v1672 = vpop.f32.mrf.mxu0
      %1673 = vmatprep.mubr.f32.mxu0 %v1594
      %1674 = vmatmul.mubr.f32.gmra.mxu0 %v1497
      %v1675 = vpop.f32.mrf.mxu0
      %v1676 = vadd.f32 0.0, %v1675
      %v1677 = vpop.f32.mrf.mxu0
      %1678 = vmatprep.mubr.f32.mxu0 %v1597
      %1679 = vmatmul.mubr.f32.gmra.mxu0 %v1499
      %v1680 = vpop.f32.mrf.mxu0
      %v1681 = vadd.f32 0.0, %v1680
      %v1682 = vpop.f32.mrf.mxu0
      %1683 = vdwg.mxu0
      %v1684 = vld [vmem:[%s2] sm:$0xff]
      %v1685 = vld [vmem:[%s2 + $0x8] sm:$0xff]
      %v1686 = vld [vmem:[%s2 + $0x10] sm:$0xff]
      %v1687 = vld [vmem:[%s2 + $0x18] sm:$0xff]
      %v1688 = vld [vmem:[%s2 + $0x20] sm:$0xff]
      %v1689 = vld [vmem:[%s2 + $0x28] sm:$0xff]
      %v1690 = vld [vmem:[%s2 + $0x30] sm:$0xff]
      %v1691 = vld [vmem:[%s2 + $0x38] sm:$0xff]
      %v1692 = vld [vmem:[%s2 + $0x40] sm:$0xff]
      %v1693 = vld [vmem:[%s2 + $0x48] sm:$0xff]
      %v1694 = vld [vmem:[%s2 + $0x50] sm:$0xff]
      %v1695 = vld [vmem:[%s2 + $0x58] sm:$0xff]
      %v1696 = vld [vmem:[%s2 + $0x60] sm:$0xff]
      %v1697 = vld [vmem:[%s2 + $0x68] sm:$0xff]
      %v1698 = vld [vmem:[%s2 + $0x70] sm:$0xff]
      %v1699 = vld [vmem:[%s2 + $0x78] sm:$0xff]
      %v1700 = vld [vmem:[%s2 + $0x80] sm:$0xff]
      %v1701 = vld [vmem:[%s2 + $0x88] sm:$0xff]
      %v1702 = vld [vmem:[%s2 + $0x90] sm:$0xff]
      %v1703 = vld [vmem:[%s2 + $0x98] sm:$0xff]
      %v1704 = vld [vmem:[%s2 + $0xa0] sm:$0xff]
      %v1705 = vld [vmem:[%s2 + $0xa8] sm:$0xff]
      %v1706 = vld [vmem:[%s2 + $0xb0] sm:$0xff]
      %v1707 = vld [vmem:[%s2 + $0xb8] sm:$0xff]
      %v1708 = vld [vmem:[%s2 + $0xc0] sm:$0xff]
      %v1709 = vld [vmem:[%s2 + $0xc8] sm:$0xff]
      %v1710 = vld [vmem:[%s2 + $0xd0] sm:$0xff]
      %v1711 = vld [vmem:[%s2 + $0xd8] sm:$0xff]
      %v1713 = vsel %vm498, %v1684, 0
      %v1716 = vsel %vm498, %v1685, 0
      %v1719 = vsel %vm498, %v1686, 0
      %v1722 = vsel %vm498, %v1687, 0
      %v1725 = vsel %vm498, %v1688, 0
      %v1728 = vsel %vm498, %v1689, 0
      %v1731 = vsel %vm498, %v1690, 0
      %v1734 = vsel %vm498, %v1691, 0
      %v1737 = vsel %vm498, %v1692, 0
      %v1740 = vsel %vm498, %v1693, 0
      %v1743 = vsel %vm498, %v1694, 0
      %v1746 = vsel %vm498, %v1695, 0
      %v1749 = vsel %vm498, %v1696, 0
      %v1752 = vsel %vm498, %v1697, 0
      %v1755 = vsel %vm498, %v1698, 0
      %v1758 = vsel %vm498, %v1699, 0
      %v1761 = vsel %vm498, %v1700, 0
      %v1764 = vsel %vm498, %v1701, 0
      %v1767 = vsel %vm498, %v1702, 0
      %v1770 = vsel %vm498, %v1703, 0
      %v1773 = vsel %vm498, %v1704, 0
      %v1776 = vsel %vm498, %v1705, 0
      %v1779 = vsel %vm498, %v1706, 0
      %v1782 = vsel %vm498, %v1707, 0
      %v1785 = vsel %vm498, %v1708, 0
      %v1788 = vsel %vm498, %v1709, 0
      %v1791 = vsel %vm498, %v1710, 0
      %v1794 = vsel %vm498, %v1711, 0
      %1796 = vmatprep.subr.mxu0 0.0
      %1797 = vmatpush1.msra.mxu0 0.0
      %1798 = vmatprep.subr.mxu0 0.0
      %1799 = vmatpush1.msra.mxu0 0.0
      %1800 = vmatprep.subr.mxu0 0.0
      %1801 = vmatpush1.msra.mxu0 0.0
      %1802 = vmatprep.subr.mxu0 0.0
      %1803 = vmatpush1.msra.mxu0 0.0
      %1804 = vmatprep.subr.mxu0 0.0
      %1805 = vmatpush1.msra.mxu0 0.0
      %1806 = vmatprep.subr.mxu0 0.0
      %1807 = vmatpush1.msra.mxu0 0.0
      %1808 = vmatprep.subr.mxu0 0.0
      %1809 = vmatpush1.msra.mxu0 0.0
      %1810 = vmatprep.subr.mxu0 0.0
      %1811 = vmatpush1.msra.mxu0 0.0
      %1812 = vmatprep.subr.mxu0 0.0
      %1813 = vmatpush1.msra.mxu0 0.0
      %1814 = vmatprep.subr.mxu0 0.0
      %1815 = vmatpush1.msra.mxu0 0.0
      %1816 = vmatprep.subr.mxu0 0.0
      %1817 = vmatpush1.msra.mxu0 0.0
      %1818 = vmatprep.subr.mxu0 0.0
      %1819 = vmatpush1.msra.mxu0 0.0
      %1820 = vmatprep.subr.mxu0 0.0
      %1821 = vmatpush1.msra.mxu0 %v1681
      %1822 = vmatprep.subr.mxu0 0.0
      %1823 = vmatpush1.msra.mxu0 %v1676
      %1824 = vmatprep.subr.mxu0 0.0
      %1825 = vmatpush1.msra.mxu0 %v1671
      %1826 = vmatprep.subr.mxu0 0.0
      %1827 = vmatpush1.msra.mxu0 %v1666
      %1828 = vmatprep.subr.mxu0 0.0
      %1829 = vmatpush2.msra.mxu0 0.0
      %1830 = vmatprep.subr.mxu0 0.0
      %1831 = vmatpush2.msra.mxu0 0.0
      %1832 = vmatprep.subr.mxu0 0.0
      %1833 = vmatpush2.msra.mxu0 0.0
      %1834 = vmatprep.subr.mxu0 0.0
      %1835 = vmatpush2.msra.mxu0 0.0
      %1836 = vmatprep.subr.mxu0 0.0
      %1837 = vmatpush2.msra.mxu0 0.0
      %1838 = vmatprep.subr.mxu0 0.0
      %1839 = vmatpush2.msra.mxu0 0.0
      %1840 = vmatprep.subr.mxu0 0.0
      %1841 = vmatpush2.msra.mxu0 0.0
      %1842 = vmatprep.subr.mxu0 0.0
      %1843 = vmatpush2.msra.mxu0 0.0
      %1844 = vmatprep.subr.mxu0 0.0
      %1845 = vmatpush2.msra.mxu0 0.0
      %1846 = vmatprep.subr.mxu0 0.0
      %1847 = vmatpush2.msra.mxu0 0.0
      %1848 = vmatprep.subr.mxu0 0.0
      %1849 = vmatpush2.msra.mxu0 0.0
      %1850 = vmatprep.subr.mxu0 0.0
      %1851 = vmatpush2.msra.mxu0 0.0
      %1852 = vmatprep.subr.mxu0 0.0
      %1853 = vmatpush2.msra.mxu0 0.0
      %1854 = vmatprep.subr.mxu0 0.0
      %1855 = vmatpush2.msra.mxu0 0.0
      %1856 = vmatprep.subr.mxu0 0.0
      %1857 = vmatpush2.msra.mxu0 0.0
      %1858 = vmatprep.subr.mxu0 0.0
      %1859 = vmatpush2.msra.mxu0 0.0
      %1860 = vmatprep.mubr.f32.mxu0 0.0
      %1861 = vmatmul.mubr.f32.gmra.mxu0 %v1713
      %v1862 = vpop.f32.mrf.mxu0
      %v1863 = vadd.f32 0.0, %v1862
      %v1864 = vpop.f32.mrf.mxu0
      %1865 = vmatprep.mubr.f32.mxu0 0.0
      %1866 = vmatmul.mubr.f32.gmra.mxu0 %v1716
      %v1867 = vpop.f32.mrf.mxu0
      %v1868 = vadd.f32 0.0, %v1867
      %v1869 = vpop.f32.mrf.mxu0
      %1870 = vmatprep.mubr.f32.mxu0 0.0
      %1871 = vmatmul.mubr.f32.gmra.mxu0 %v1719
      %v1872 = vpop.f32.mrf.mxu0
      %v1873 = vadd.f32 0.0, %v1872
      %v1874 = vpop.f32.mrf.mxu0
      %1875 = vmatprep.mubr.f32.mxu0 0.0
      %1876 = vmatmul.mubr.f32.gmra.mxu0 %v1722
      %v1877 = vpop.f32.mrf.mxu0
      %v1878 = vadd.f32 0.0, %v1877
      %v1879 = vpop.f32.mrf.mxu0
      %1880 = vmatprep.mubr.f32.mxu0 0.0
      %1881 = vmatmul.mubr.f32.gmra.mxu0 %v1725
      %v1882 = vpop.f32.mrf.mxu0
      %v1883 = vadd.f32 0.0, %v1882
      %v1884 = vpop.f32.mrf.mxu0
      %1885 = vmatprep.mubr.f32.mxu0 0.0
      %1886 = vmatmul.mubr.f32.gmra.mxu0 %v1728
      %v1887 = vpop.f32.mrf.mxu0
      %v1888 = vadd.f32 0.0, %v1887
      %v1889 = vpop.f32.mrf.mxu0
      %1890 = vmatprep.mubr.f32.mxu0 0.0
      %1891 = vmatmul.mubr.f32.gmra.mxu0 %v1731
      %v1892 = vpop.f32.mrf.mxu0
      %v1893 = vadd.f32 0.0, %v1892
      %v1894 = vpop.f32.mrf.mxu0
      %1895 = vmatprep.mubr.f32.mxu0 0.0
      %1896 = vmatmul.mubr.f32.gmra.mxu0 %v1734
      %v1897 = vpop.f32.mrf.mxu0
      %v1898 = vadd.f32 0.0, %v1897
      %v1899 = vpop.f32.mrf.mxu0
      %1900 = vmatprep.mubr.f32.mxu0 0.0
      %1901 = vmatmul.mubr.f32.gmra.mxu0 %v1737
      %v1902 = vpop.f32.mrf.mxu0
      %v1903 = vadd.f32 0.0, %v1902
      %v1904 = vpop.f32.mrf.mxu0
      %1905 = vmatprep.mubr.f32.mxu0 0.0
      %1906 = vmatmul.mubr.f32.gmra.mxu0 %v1740
      %v1907 = vpop.f32.mrf.mxu0
      %v1908 = vadd.f32 0.0, %v1907
      %v1909 = vpop.f32.mrf.mxu0
      %1910 = vmatprep.mubr.f32.mxu0 0.0
      %1911 = vmatmul.mubr.f32.gmra.mxu0 %v1743
      %v1912 = vpop.f32.mrf.mxu0
      %v1913 = vadd.f32 0.0, %v1912
      %v1914 = vpop.f32.mrf.mxu0
      %1915 = vmatprep.mubr.f32.mxu0 0.0
      %1916 = vmatmul.mubr.f32.gmra.mxu0 %v1746
      %v1917 = vpop.f32.mrf.mxu0
      %v1918 = vadd.f32 0.0, %v1917
      %v1919 = vpop.f32.mrf.mxu0
      %1920 = vmatprep.mubr.f32.mxu0 0.0
      %1921 = vmatmul.mubr.f32.gmra.mxu0 %v1749
      %v1922 = vpop.f32.mrf.mxu0
      %v1923 = vadd.f32 0.0, %v1922
      %v1924 = vpop.f32.mrf.mxu0
      %1925 = vmatprep.mubr.f32.mxu0 0.0
      %1926 = vmatmul.mubr.f32.gmra.mxu0 %v1752
      %v1927 = vpop.f32.mrf.mxu0
      %v1928 = vadd.f32 0.0, %v1927
      %v1929 = vpop.f32.mrf.mxu0
      %1930 = vmatprep.mubr.f32.mxu0 0.0
      %1931 = vmatmul.mubr.f32.gmra.mxu0 %v1755
      %v1932 = vpop.f32.mrf.mxu0
      %v1933 = vadd.f32 0.0, %v1932
      %v1934 = vpop.f32.mrf.mxu0
      %1935 = vmatprep.mubr.f32.mxu0 0.0
      %1936 = vmatmul.mubr.f32.gmra.mxu0 %v1758
      %v1937 = vpop.f32.mrf.mxu0
      %v1938 = vadd.f32 0.0, %v1937
      %v1939 = vpop.f32.mrf.mxu0
      %1940 = vmatprep.mubr.f32.mxu0 0.0
      %1941 = vmatmul.mubr.f32.gmra.mxu0 %v1761
      %v1942 = vpop.f32.mrf.mxu0
      %v1943 = vadd.f32 0.0, %v1942
      %v1944 = vpop.f32.mrf.mxu0
      %1945 = vmatprep.mubr.f32.mxu0 0.0
      %1946 = vmatmul.mubr.f32.gmra.mxu0 %v1764
      %v1947 = vpop.f32.mrf.mxu0
      %v1948 = vadd.f32 0.0, %v1947
      %v1949 = vpop.f32.mrf.mxu0
      %1950 = vmatprep.mubr.f32.mxu0 0.0
      %1951 = vmatmul.mubr.f32.gmra.mxu0 %v1767
      %v1952 = vpop.f32.mrf.mxu0
      %v1953 = vadd.f32 0.0, %v1952
      %v1954 = vpop.f32.mrf.mxu0
      %1955 = vmatprep.mubr.f32.mxu0 0.0
      %1956 = vmatmul.mubr.f32.gmra.mxu0 %v1770
      %v1957 = vpop.f32.mrf.mxu0
      %v1958 = vadd.f32 0.0, %v1957
      %v1959 = vpop.f32.mrf.mxu0
      %1960 = vmatprep.mubr.f32.mxu0 0.0
      %1961 = vmatmul.mubr.f32.gmra.mxu0 %v1773
      %v1962 = vpop.f32.mrf.mxu0
      %v1963 = vadd.f32 0.0, %v1962
      %v1964 = vpop.f32.mrf.mxu0
      %1965 = vmatprep.mubr.f32.mxu0 0.0
      %1966 = vmatmul.mubr.f32.gmra.mxu0 %v1776
      %v1967 = vpop.f32.mrf.mxu0
      %v1968 = vadd.f32 0.0, %v1967
      %v1969 = vpop.f32.mrf.mxu0
      %1970 = vmatprep.mubr.f32.mxu0 0.0
      %1971 = vmatmul.mubr.f32.gmra.mxu0 %v1779
      %v1972 = vpop.f32.mrf.mxu0
      %v1973 = vadd.f32 0.0, %v1972
      %v1974 = vpop.f32.mrf.mxu0
      %1975 = vmatprep.mubr.f32.mxu0 0.0
      %1976 = vmatmul.mubr.f32.gmra.mxu0 %v1782
      %v1977 = vpop.f32.mrf.mxu0
      %v1978 = vadd.f32 0.0, %v1977
      %v1979 = vpop.f32.mrf.mxu0
      %1980 = vmatprep.mubr.f32.mxu0 0.0
      %1981 = vmatmul.mubr.f32.gmra.mxu0 %v1785
      %v1982 = vpop.f32.mrf.mxu0
      %v1983 = vadd.f32 0.0, %v1982
      %v1984 = vpop.f32.mrf.mxu0
      %1985 = vmatprep.mubr.f32.mxu0 0.0
      %1986 = vmatmul.mubr.f32.gmra.mxu0 %v1788
      %v1987 = vpop.f32.mrf.mxu0
      %v1988 = vadd.f32 0.0, %v1987
      %v1989 = vpop.f32.mrf.mxu0
      %1990 = vmatprep.mubr.f32.mxu0 0.0
      %1991 = vmatmul.mubr.f32.gmra.mxu0 %v1791
      %v1992 = vpop.f32.mrf.mxu0
      %v1993 = vadd.f32 0.0, %v1992
      %v1994 = vpop.f32.mrf.mxu0
      %1995 = vmatprep.mubr.f32.mxu0 0.0
      %1996 = vmatmul.mubr.f32.gmra.mxu0 %v1794
      %v1997 = vpop.f32.mrf.mxu0
      %v1998 = vadd.f32 0.0, %v1997
      %v1999 = vpop.f32.mrf.mxu0
      %2000 = vdwg.mxu0
      %v2001 = vld [vmem:[#allocation2 + $0x2] sm:$0xff]
      %v2002 = vld [vmem:[#allocation2 + $0xa] sm:$0xff]
      %v2003 = vld [vmem:[#allocation2 + $0x12] sm:$0xff]
      %v2004 = vld [vmem:[#allocation2 + $0x1a] sm:$0xff]
      %v2005 = vld [vmem:[#allocation2 + $0x22] sm:$0xff]
      %v2006 = vld [vmem:[#allocation2 + $0x2a] sm:$0xff]
      %v2007 = vld [vmem:[#allocation2 + $0x32] sm:$0xff]
      %v2008 = vld [vmem:[#allocation2 + $0x3a] sm:$0xff]
      %v2009 = vld [vmem:[#allocation2 + $0x42] sm:$0xff]
      %v2010 = vld [vmem:[#allocation2 + $0x4a] sm:$0xff]
      %v2011 = vld [vmem:[#allocation2 + $0x52] sm:$0xff]
      %v2012 = vld [vmem:[#allocation2 + $0x5a] sm:$0xff]
      %v2013 = vld [vmem:[#allocation2 + $0x62] sm:$0xff]
      %v2014 = vld [vmem:[#allocation2 + $0x6a] sm:$0xff]
      %v2015 = vld [vmem:[#allocation2 + $0x72] sm:$0xff]
      %v2016 = vld [vmem:[#allocation2 + $0x7a] sm:$0xff]
      %v2017 = vld [vmem:[#allocation2 + $0x82] sm:$0xff]
      %v2018 = vld [vmem:[#allocation2 + $0x8a] sm:$0xff]
      %v2019 = vld [vmem:[#allocation2 + $0x92] sm:$0xff]
      %v2020 = vld [vmem:[#allocation2 + $0x9a] sm:$0xff]
      %v2021 = vld [vmem:[#allocation2 + $0xa2] sm:$0xff]
      %v2022 = vld [vmem:[#allocation2 + $0xaa] sm:$0xff]
      %v2023 = vld [vmem:[#allocation2 + $0xb2] sm:$0xff]
      %v2024 = vld [vmem:[#allocation2 + $0xba] sm:$0xff]
      %v2025 = vld [vmem:[#allocation2 + $0xc2] sm:$0xff]
      %v2026 = vld [vmem:[#allocation2 + $0xca] sm:$0xff]
      %v2027 = vld [vmem:[#allocation2 + $0xd2] sm:$0xff]
      %v2028 = vld [vmem:[#allocation2 + $0xda] sm:$0xff]
      %v2029 = vadd.f32 %v2001, %v1863
      %v2030 = vadd.f32 %v2002, %v1868
      %v2031 = vadd.f32 %v2003, %v1873
      %v2032 = vadd.f32 %v2004, %v1878
      %v2033 = vadd.f32 %v2005, %v1883
      %v2034 = vadd.f32 %v2006, %v1888
      %v2035 = vadd.f32 %v2007, %v1893
      %v2036 = vadd.f32 %v2008, %v1898
      %v2037 = vadd.f32 %v2009, %v1903
      %v2038 = vadd.f32 %v2010, %v1908
      %v2039 = vadd.f32 %v2011, %v1913
      %v2040 = vadd.f32 %v2012, %v1918
      %v2041 = vadd.f32 %v2013, %v1923
      %v2042 = vadd.f32 %v2014, %v1928
      %v2043 = vadd.f32 %v2015, %v1933
      %v2044 = vadd.f32 %v2016, %v1938
      %v2045 = vadd.f32 %v2017, %v1943
      %v2046 = vadd.f32 %v2018, %v1948
      %v2047 = vadd.f32 %v2019, %v1953
      %v2048 = vadd.f32 %v2020, %v1958
      %v2049 = vadd.f32 %v2021, %v1963
      %v2050 = vadd.f32 %v2022, %v1968
      %v2051 = vadd.f32 %v2023, %v1973
      %v2052 = vadd.f32 %v2024, %v1978
      %v2053 = vadd.f32 %v2025, %v1983
      %v2054 = vadd.f32 %v2026, %v1988
      %v2055 = vadd.f32 %v2027, %v1993
      %v2056 = vadd.f32 %v2028, %v1998
      %2057 = vst.msk [vmem:[#allocation2 + $0x2] sm:$0xff] %vm292, %v2029
      %2058 = vst.msk [vmem:[#allocation2 + $0xa] sm:$0xff] %vm292, %v2030
      %2059 = vst.msk [vmem:[#allocation2 + $0x12] sm:$0xff] %vm292, %v2031
      %2060 = vst.msk [vmem:[#allocation2 + $0x1a] sm:$0xff] %vm292, %v2032
      %2061 = vst.msk [vmem:[#allocation2 + $0x22] sm:$0xff] %vm292, %v2033
      %2062 = vst.msk [vmem:[#allocation2 + $0x2a] sm:$0xff] %vm292, %v2034
      %2063 = vst.msk [vmem:[#allocation2 + $0x32] sm:$0xff] %vm292, %v2035
      %2064 = vst.msk [vmem:[#allocation2 + $0x3a] sm:$0xff] %vm292, %v2036
      %2065 = vst.msk [vmem:[#allocation2 + $0x42] sm:$0xff] %vm292, %v2037
      %2066 = vst.msk [vmem:[#allocation2 + $0x4a] sm:$0xff] %vm292, %v2038
      %2067 = vst.msk [vmem:[#allocation2 + $0x52] sm:$0xff] %vm292, %v2039
      %2068 = vst.msk [vmem:[#allocation2 + $0x5a] sm:$0xff] %vm292, %v2040
      %2069 = vst.msk [vmem:[#allocation2 + $0x62] sm:$0xff] %vm292, %v2041
      %2070 = vst.msk [vmem:[#allocation2 + $0x6a] sm:$0xff] %vm292, %v2042
      %2071 = vst.msk [vmem:[#allocation2 + $0x72] sm:$0xff] %vm292, %v2043
      %2072 = vst.msk [vmem:[#allocation2 + $0x7a] sm:$0xff] %vm292, %v2044
      %2073 = vst.msk [vmem:[#allocation2 + $0x82] sm:$0xff] %vm292, %v2045
      %2074 = vst.msk [vmem:[#allocation2 + $0x8a] sm:$0xff] %vm292, %v2046
      %2075 = vst.msk [vmem:[#allocation2 + $0x92] sm:$0xff] %vm292, %v2047
      %2076 = vst.msk [vmem:[#allocation2 + $0x9a] sm:$0xff] %vm292, %v2048
      %2077 = vst.msk [vmem:[#allocation2 + $0xa2] sm:$0xff] %vm292, %v2049
      %2078 = vst.msk [vmem:[#allocation2 + $0xaa] sm:$0xff] %vm292, %v2050
      %2079 = vst.msk [vmem:[#allocation2 + $0xb2] sm:$0xff] %vm292, %v2051
      %2080 = vst.msk [vmem:[#allocation2 + $0xba] sm:$0xff] %vm292, %v2052
      %2081 = vst.msk [vmem:[#allocation2 + $0xc2] sm:$0xff] %vm292, %v2053
      %2082 = vst.msk [vmem:[#allocation2 + $0xca] sm:$0xff] %vm292, %v2054
      %2083 = vst.msk [vmem:[#allocation2 + $0xd2] sm:$0xff] %vm292, %v2055
      %2084 = vst.msk [vmem:[#allocation2 + $0xda] sm:$0xff] %vm292, %v2056
      %v2085 = vld [vmem:[%s1] sm:$0xff]
      %v2086 = vld [vmem:[%s1 + $0x8] sm:$0xff]
      %v2087 = vld [vmem:[%s1 + $0x10] sm:$0xff]
      %v2088 = vld [vmem:[%s1 + $0x18] sm:$0xff]
      %v2089 = vld [vmem:[%s1 + $0x20] sm:$0xff]
      %v2090 = vld [vmem:[%s1 + $0x28] sm:$0xff]
      %v2091 = vld [vmem:[%s1 + $0x30] sm:$0xff]
      %v2092 = vld [vmem:[%s1 + $0x38] sm:$0xff]
      %v2094 = vsel %vm372, %v2086, 0
      %v2097 = vsel %vm372, %v2088, 0
      %v2100 = vsel %vm372, %v2090, 0
      %v2103 = vsel %vm372, %v2092, 0
      %2105 = vmatprep.subr.mxu0 0.0
      %2106 = vmatpush1.msra.mxu0 %v276
      %2107 = vmatprep.subr.mxu0 0.0
      %2108 = vmatpush1.msra.mxu0 %v275
      %2109 = vmatprep.subr.mxu0 0.0
      %2110 = vmatpush1.msra.mxu0 %v274
      %2111 = vmatprep.subr.mxu0 0.0
      %2112 = vmatpush1.msra.mxu0 %v273
      %2113 = vmatprep.subr.mxu0 0.0
      %2114 = vmatpush1.msra.mxu0 %v272
      %2115 = vmatprep.subr.mxu0 0.0
      %2116 = vmatpush1.msra.mxu0 %v271
      %2117 = vmatprep.subr.mxu0 0.0
      %2118 = vmatpush1.msra.mxu0 %v270
      %2119 = vmatprep.subr.mxu0 0.0
      %2120 = vmatpush1.msra.mxu0 %v269
      %2121 = vmatprep.subr.mxu0 0.0
      %2122 = vmatpush1.msra.mxu0 %v268
      %2123 = vmatprep.subr.mxu0 0.0
      %2124 = vmatpush1.msra.mxu0 %v267
      %2125 = vmatprep.subr.mxu0 0.0
      %2126 = vmatpush1.msra.mxu0 %v266
      %2127 = vmatprep.subr.mxu0 0.0
      %2128 = vmatpush1.msra.mxu0 %v265
      %2129 = vmatprep.subr.mxu0 0.0
      %2130 = vmatpush1.msra.mxu0 %v264
      %2131 = vmatprep.subr.mxu0 0.0
      %2132 = vmatpush1.msra.mxu0 %v263
      %2133 = vmatprep.subr.mxu0 0.0
      %2134 = vmatpush1.msra.mxu0 %v262
      %2135 = vmatprep.subr.mxu0 0.0
      %2136 = vmatpush1.msra.mxu0 %v261
      %2137 = vmatprep.subr.mxu0 0.0
      %2138 = vmatpush2.msra.mxu0 0.0
      %2139 = vmatprep.subr.mxu0 0.0
      %2140 = vmatpush2.msra.mxu0 0.0
      %2141 = vmatprep.subr.mxu0 0.0
      %2142 = vmatpush2.msra.mxu0 0.0
      %2143 = vmatprep.subr.mxu0 0.0
      %2144 = vmatpush2.msra.mxu0 0.0
      %2145 = vmatprep.subr.mxu0 0.0
      %2146 = vmatpush2.msra.mxu0 %v288
      %2147 = vmatprep.subr.mxu0 0.0
      %2148 = vmatpush2.msra.mxu0 %v287
      %2149 = vmatprep.subr.mxu0 0.0
      %2150 = vmatpush2.msra.mxu0 %v286
      %2151 = vmatprep.subr.mxu0 0.0
      %2152 = vmatpush2.msra.mxu0 %v285
      %2153 = vmatprep.subr.mxu0 0.0
      %2154 = vmatpush2.msra.mxu0 %v284
      %2155 = vmatprep.subr.mxu0 0.0
      %2156 = vmatpush2.msra.mxu0 %v283
      %2157 = vmatprep.subr.mxu0 0.0
      %2158 = vmatpush2.msra.mxu0 %v282
      %2159 = vmatprep.subr.mxu0 0.0
      %2160 = vmatpush2.msra.mxu0 %v281
      %2161 = vmatprep.subr.mxu0 0.0
      %2162 = vmatpush2.msra.mxu0 %v280
      %2163 = vmatprep.subr.mxu0 0.0
      %2164 = vmatpush2.msra.mxu0 %v279
      %2165 = vmatprep.subr.mxu0 0.0
      %2166 = vmatpush2.msra.mxu0 %v278
      %2167 = vmatprep.subr.mxu0 0.0
      %2168 = vmatpush2.msra.mxu0 %v277
      %2169 = vmatprep.mubr.f32.mxu0 %v2094
      %2170 = vmatmul.mubr.f32.gmra.mxu0 %v2085
      %v2171 = vpop.f32.mrf.mxu0
      %v2172 = vadd.f32 0.0, %v2171
      %v2173 = vpop.f32.mrf.mxu0
      %2174 = vmatprep.mubr.f32.mxu0 %v2097
      %2175 = vmatmul.mubr.f32.gmra.mxu0 %v2087
      %v2176 = vpop.f32.mrf.mxu0
      %v2177 = vadd.f32 0.0, %v2176
      %v2178 = vpop.f32.mrf.mxu0
      %2179 = vmatprep.mubr.f32.mxu0 %v2100
      %2180 = vmatmul.mubr.f32.gmra.mxu0 %v2089
      %v2181 = vpop.f32.mrf.mxu0
      %v2182 = vadd.f32 0.0, %v2181
      %v2183 = vpop.f32.mrf.mxu0
      %2184 = vmatprep.mubr.f32.mxu0 %v2103
      %2185 = vmatmul.mubr.f32.gmra.mxu0 %v2091
      %v2186 = vpop.f32.mrf.mxu0
      %v2187 = vadd.f32 0.0, %v2186
      %v2188 = vpop.f32.mrf.mxu0
      %2189 = vdwg.mxu0
      %v2190 = vld [vmem:[%s2] sm:$0xff]
      %v2191 = vld [vmem:[%s2 + $0x8] sm:$0xff]
      %v2192 = vld [vmem:[%s2 + $0x10] sm:$0xff]
      %v2193 = vld [vmem:[%s2 + $0x18] sm:$0xff]
      %v2194 = vld [vmem:[%s2 + $0x20] sm:$0xff]
      %v2195 = vld [vmem:[%s2 + $0x28] sm:$0xff]
      %v2196 = vld [vmem:[%s2 + $0x30] sm:$0xff]
      %v2197 = vld [vmem:[%s2 + $0x38] sm:$0xff]
      %v2198 = vld [vmem:[%s2 + $0x40] sm:$0xff]
      %v2199 = vld [vmem:[%s2 + $0x48] sm:$0xff]
      %v2200 = vld [vmem:[%s2 + $0x50] sm:$0xff]
      %v2201 = vld [vmem:[%s2 + $0x58] sm:$0xff]
      %v2202 = vld [vmem:[%s2 + $0x60] sm:$0xff]
      %v2203 = vld [vmem:[%s2 + $0x68] sm:$0xff]
      %v2204 = vld [vmem:[%s2 + $0x70] sm:$0xff]
      %v2205 = vld [vmem:[%s2 + $0x78] sm:$0xff]
      %v2206 = vld [vmem:[%s2 + $0x80] sm:$0xff]
      %v2207 = vld [vmem:[%s2 + $0x88] sm:$0xff]
      %v2208 = vld [vmem:[%s2 + $0x90] sm:$0xff]
      %v2209 = vld [vmem:[%s2 + $0x98] sm:$0xff]
      %v2210 = vld [vmem:[%s2 + $0xa0] sm:$0xff]
      %v2211 = vld [vmem:[%s2 + $0xa8] sm:$0xff]
      %v2212 = vld [vmem:[%s2 + $0xb0] sm:$0xff]
      %v2213 = vld [vmem:[%s2 + $0xb8] sm:$0xff]
      %v2214 = vld [vmem:[%s2 + $0xc0] sm:$0xff]
      %v2215 = vld [vmem:[%s2 + $0xc8] sm:$0xff]
      %v2216 = vld [vmem:[%s2 + $0xd0] sm:$0xff]
      %v2217 = vld [vmem:[%s2 + $0xd8] sm:$0xff]
      %v2219 = vsel %vm498, %v2190, 0
      %v2222 = vsel %vm498, %v2191, 0
      %v2225 = vsel %vm498, %v2192, 0
      %v2228 = vsel %vm498, %v2193, 0
      %v2231 = vsel %vm498, %v2194, 0
      %v2234 = vsel %vm498, %v2195, 0
      %v2237 = vsel %vm498, %v2196, 0
      %v2240 = vsel %vm498, %v2197, 0
      %v2243 = vsel %vm498, %v2198, 0
      %v2246 = vsel %vm498, %v2199, 0
      %v2249 = vsel %vm498, %v2200, 0
      %v2252 = vsel %vm498, %v2201, 0
      %v2255 = vsel %vm498, %v2202, 0
      %v2258 = vsel %vm498, %v2203, 0
      %v2261 = vsel %vm498, %v2204, 0
      %v2264 = vsel %vm498, %v2205, 0
      %v2267 = vsel %vm498, %v2206, 0
      %v2270 = vsel %vm498, %v2207, 0
      %v2273 = vsel %vm498, %v2208, 0
      %v2276 = vsel %vm498, %v2209, 0
      %v2279 = vsel %vm498, %v2210, 0
      %v2282 = vsel %vm498, %v2211, 0
      %v2285 = vsel %vm498, %v2212, 0
      %v2288 = vsel %vm498, %v2213, 0
      %v2291 = vsel %vm498, %v2214, 0
      %v2294 = vsel %vm498, %v2215, 0
      %v2297 = vsel %vm498, %v2216, 0
      %v2300 = vsel %vm498, %v2217, 0
      %2302 = vmatprep.subr.mxu0 0.0
      %2303 = vmatpush1.msra.mxu0 0.0
      %2304 = vmatprep.subr.mxu0 0.0
      %2305 = vmatpush1.msra.mxu0 0.0
      %2306 = vmatprep.subr.mxu0 0.0
      %2307 = vmatpush1.msra.mxu0 0.0
      %2308 = vmatprep.subr.mxu0 0.0
      %2309 = vmatpush1.msra.mxu0 0.0
      %2310 = vmatprep.subr.mxu0 0.0
      %2311 = vmatpush1.msra.mxu0 0.0
      %2312 = vmatprep.subr.mxu0 0.0
      %2313 = vmatpush1.msra.mxu0 0.0
      %2314 = vmatprep.subr.mxu0 0.0
      %2315 = vmatpush1.msra.mxu0 0.0
      %2316 = vmatprep.subr.mxu0 0.0
      %2317 = vmatpush1.msra.mxu0 0.0
      %2318 = vmatprep.subr.mxu0 0.0
      %2319 = vmatpush1.msra.mxu0 0.0
      %2320 = vmatprep.subr.mxu0 0.0
      %2321 = vmatpush1.msra.mxu0 0.0
      %2322 = vmatprep.subr.mxu0 0.0
      %2323 = vmatpush1.msra.mxu0 0.0
      %2324 = vmatprep.subr.mxu0 0.0
      %2325 = vmatpush1.msra.mxu0 0.0
      %2326 = vmatprep.subr.mxu0 0.0
      %2327 = vmatpush1.msra.mxu0 %v2187
      %2328 = vmatprep.subr.mxu0 0.0
      %2329 = vmatpush1.msra.mxu0 %v2182
      %2330 = vmatprep.subr.mxu0 0.0
      %2331 = vmatpush1.msra.mxu0 %v2177
      %2332 = vmatprep.subr.mxu0 0.0
      %2333 = vmatpush1.msra.mxu0 %v2172
      %2334 = vmatprep.subr.mxu0 0.0
      %2335 = vmatpush2.msra.mxu0 0.0
      %2336 = vmatprep.subr.mxu0 0.0
      %2337 = vmatpush2.msra.mxu0 0.0
      %2338 = vmatprep.subr.mxu0 0.0
      %2339 = vmatpush2.msra.mxu0 0.0
      %2340 = vmatprep.subr.mxu0 0.0
      %2341 = vmatpush2.msra.mxu0 0.0
      %2342 = vmatprep.subr.mxu0 0.0
      %2343 = vmatpush2.msra.mxu0 0.0
      %2344 = vmatprep.subr.mxu0 0.0
      %2345 = vmatpush2.msra.mxu0 0.0
      %2346 = vmatprep.subr.mxu0 0.0
      %2347 = vmatpush2.msra.mxu0 0.0
      %2348 = vmatprep.subr.mxu0 0.0
      %2349 = vmatpush2.msra.mxu0 0.0
      %2350 = vmatprep.subr.mxu0 0.0
      %2351 = vmatpush2.msra.mxu0 0.0
      %2352 = vmatprep.subr.mxu0 0.0
      %2353 = vmatpush2.msra.mxu0 0.0
      %2354 = vmatprep.subr.mxu0 0.0
      %2355 = vmatpush2.msra.mxu0 0.0
      %2356 = vmatprep.subr.mxu0 0.0
      %2357 = vmatpush2.msra.mxu0 0.0
      %2358 = vmatprep.subr.mxu0 0.0
      %2359 = vmatpush2.msra.mxu0 0.0
      %2360 = vmatprep.subr.mxu0 0.0
      %2361 = vmatpush2.msra.mxu0 0.0
      %2362 = vmatprep.subr.mxu0 0.0
      %2363 = vmatpush2.msra.mxu0 0.0
      %2364 = vmatprep.subr.mxu0 0.0
      %2365 = vmatpush2.msra.mxu0 0.0
      %2366 = vmatprep.mubr.f32.mxu0 0.0
      %2367 = vmatmul.mubr.f32.gmra.mxu0 %v2219
      %v2368 = vpop.f32.mrf.mxu0
      %v2369 = vadd.f32 0.0, %v2368
      %v2370 = vpop.f32.mrf.mxu0
      %2371 = vmatprep.mubr.f32.mxu0 0.0
      %2372 = vmatmul.mubr.f32.gmra.mxu0 %v2222
      %v2373 = vpop.f32.mrf.mxu0
      %v2374 = vadd.f32 0.0, %v2373
      %v2375 = vpop.f32.mrf.mxu0
      %2376 = vmatprep.mubr.f32.mxu0 0.0
      %2377 = vmatmul.mubr.f32.gmra.mxu0 %v2225
      %v2378 = vpop.f32.mrf.mxu0
      %v2379 = vadd.f32 0.0, %v2378
      %v2380 = vpop.f32.mrf.mxu0
      %2381 = vmatprep.mubr.f32.mxu0 0.0
      %2382 = vmatmul.mubr.f32.gmra.mxu0 %v2228
      %v2383 = vpop.f32.mrf.mxu0
      %v2384 = vadd.f32 0.0, %v2383
      %v2385 = vpop.f32.mrf.mxu0
      %2386 = vmatprep.mubr.f32.mxu0 0.0
      %2387 = vmatmul.mubr.f32.gmra.mxu0 %v2231
      %v2388 = vpop.f32.mrf.mxu0
      %v2389 = vadd.f32 0.0, %v2388
      %v2390 = vpop.f32.mrf.mxu0
      %2391 = vmatprep.mubr.f32.mxu0 0.0
      %2392 = vmatmul.mubr.f32.gmra.mxu0 %v2234
      %v2393 = vpop.f32.mrf.mxu0
      %v2394 = vadd.f32 0.0, %v2393
      %v2395 = vpop.f32.mrf.mxu0
      %2396 = vmatprep.mubr.f32.mxu0 0.0
      %2397 = vmatmul.mubr.f32.gmra.mxu0 %v2237
      %v2398 = vpop.f32.mrf.mxu0
      %v2399 = vadd.f32 0.0, %v2398
      %v2400 = vpop.f32.mrf.mxu0
      %2401 = vmatprep.mubr.f32.mxu0 0.0
      %2402 = vmatmul.mubr.f32.gmra.mxu0 %v2240
      %v2403 = vpop.f32.mrf.mxu0
      %v2404 = vadd.f32 0.0, %v2403
      %v2405 = vpop.f32.mrf.mxu0
      %2406 = vmatprep.mubr.f32.mxu0 0.0
      %2407 = vmatmul.mubr.f32.gmra.mxu0 %v2243
      %v2408 = vpop.f32.mrf.mxu0
      %v2409 = vadd.f32 0.0, %v2408
      %v2410 = vpop.f32.mrf.mxu0
      %2411 = vmatprep.mubr.f32.mxu0 0.0
      %2412 = vmatmul.mubr.f32.gmra.mxu0 %v2246
      %v2413 = vpop.f32.mrf.mxu0
      %v2414 = vadd.f32 0.0, %v2413
      %v2415 = vpop.f32.mrf.mxu0
      %2416 = vmatprep.mubr.f32.mxu0 0.0
      %2417 = vmatmul.mubr.f32.gmra.mxu0 %v2249
      %v2418 = vpop.f32.mrf.mxu0
      %v2419 = vadd.f32 0.0, %v2418
      %v2420 = vpop.f32.mrf.mxu0
      %2421 = vmatprep.mubr.f32.mxu0 0.0
      %2422 = vmatmul.mubr.f32.gmra.mxu0 %v2252
      %v2423 = vpop.f32.mrf.mxu0
      %v2424 = vadd.f32 0.0, %v2423
      %v2425 = vpop.f32.mrf.mxu0
      %2426 = vmatprep.mubr.f32.mxu0 0.0
      %2427 = vmatmul.mubr.f32.gmra.mxu0 %v2255
      %v2428 = vpop.f32.mrf.mxu0
      %v2429 = vadd.f32 0.0, %v2428
      %v2430 = vpop.f32.mrf.mxu0
      %2431 = vmatprep.mubr.f32.mxu0 0.0
      %2432 = vmatmul.mubr.f32.gmra.mxu0 %v2258
      %v2433 = vpop.f32.mrf.mxu0
      %v2434 = vadd.f32 0.0, %v2433
      %v2435 = vpop.f32.mrf.mxu0
      %2436 = vmatprep.mubr.f32.mxu0 0.0
      %2437 = vmatmul.mubr.f32.gmra.mxu0 %v2261
      %v2438 = vpop.f32.mrf.mxu0
      %v2439 = vadd.f32 0.0, %v2438
      %v2440 = vpop.f32.mrf.mxu0
      %2441 = vmatprep.mubr.f32.mxu0 0.0
      %2442 = vmatmul.mubr.f32.gmra.mxu0 %v2264
      %v2443 = vpop.f32.mrf.mxu0
      %v2444 = vadd.f32 0.0, %v2443
      %v2445 = vpop.f32.mrf.mxu0
      %2446 = vmatprep.mubr.f32.mxu0 0.0
      %2447 = vmatmul.mubr.f32.gmra.mxu0 %v2267
      %v2448 = vpop.f32.mrf.mxu0
      %v2449 = vadd.f32 0.0, %v2448
      %v2450 = vpop.f32.mrf.mxu0
      %2451 = vmatprep.mubr.f32.mxu0 0.0
      %2452 = vmatmul.mubr.f32.gmra.mxu0 %v2270
      %v2453 = vpop.f32.mrf.mxu0
      %v2454 = vadd.f32 0.0, %v2453
      %v2455 = vpop.f32.mrf.mxu0
      %2456 = vmatprep.mubr.f32.mxu0 0.0
      %2457 = vmatmul.mubr.f32.gmra.mxu0 %v2273
      %v2458 = vpop.f32.mrf.mxu0
      %v2459 = vadd.f32 0.0, %v2458
      %v2460 = vpop.f32.mrf.mxu0
      %2461 = vmatprep.mubr.f32.mxu0 0.0
      %2462 = vmatmul.mubr.f32.gmra.mxu0 %v2276
      %v2463 = vpop.f32.mrf.mxu0
      %v2464 = vadd.f32 0.0, %v2463
      %v2465 = vpop.f32.mrf.mxu0
      %2466 = vmatprep.mubr.f32.mxu0 0.0
      %2467 = vmatmul.mubr.f32.gmra.mxu0 %v2279
      %v2468 = vpop.f32.mrf.mxu0
      %v2469 = vadd.f32 0.0, %v2468
      %v2470 = vpop.f32.mrf.mxu0
      %2471 = vmatprep.mubr.f32.mxu0 0.0
      %2472 = vmatmul.mubr.f32.gmra.mxu0 %v2282
      %v2473 = vpop.f32.mrf.mxu0
      %v2474 = vadd.f32 0.0, %v2473
      %v2475 = vpop.f32.mrf.mxu0
      %2476 = vmatprep.mubr.f32.mxu0 0.0
      %2477 = vmatmul.mubr.f32.gmra.mxu0 %v2285
      %v2478 = vpop.f32.mrf.mxu0
      %v2479 = vadd.f32 0.0, %v2478
      %v2480 = vpop.f32.mrf.mxu0
      %2481 = vmatprep.mubr.f32.mxu0 0.0
      %2482 = vmatmul.mubr.f32.gmra.mxu0 %v2288
      %v2483 = vpop.f32.mrf.mxu0
      %v2484 = vadd.f32 0.0, %v2483
      %v2485 = vpop.f32.mrf.mxu0
      %2486 = vmatprep.mubr.f32.mxu0 0.0
      %2487 = vmatmul.mubr.f32.gmra.mxu0 %v2291
      %v2488 = vpop.f32.mrf.mxu0
      %v2489 = vadd.f32 0.0, %v2488
      %v2490 = vpop.f32.mrf.mxu0
      %2491 = vmatprep.mubr.f32.mxu0 0.0
      %2492 = vmatmul.mubr.f32.gmra.mxu0 %v2294
      %v2493 = vpop.f32.mrf.mxu0
      %v2494 = vadd.f32 0.0, %v2493
      %v2495 = vpop.f32.mrf.mxu0
      %2496 = vmatprep.mubr.f32.mxu0 0.0
      %2497 = vmatmul.mubr.f32.gmra.mxu0 %v2297
      %v2498 = vpop.f32.mrf.mxu0
      %v2499 = vadd.f32 0.0, %v2498
      %v2500 = vpop.f32.mrf.mxu0
      %2501 = vmatprep.mubr.f32.mxu0 0.0
      %2502 = vmatmul.mubr.f32.gmra.mxu0 %v2300
      %v2503 = vpop.f32.mrf.mxu0
      %v2504 = vadd.f32 0.0, %v2503
      %v2505 = vpop.f32.mrf.mxu0
      %2506 = vdwg.mxu0
      %v2507 = vld [vmem:[#allocation2 + $0x10] sm:$0xff]
      %v2508 = vld [vmem:[#allocation2 + $0x18] sm:$0xff]
      %v2509 = vld [vmem:[#allocation2 + $0x20] sm:$0xff]
      %v2510 = vld [vmem:[#allocation2 + $0x28] sm:$0xff]
      %v2511 = vld [vmem:[#allocation2 + $0x30] sm:$0xff]
      %v2512 = vld [vmem:[#allocation2 + $0x38] sm:$0xff]
      %v2513 = vld [vmem:[#allocation2 + $0x40] sm:$0xff]
      %v2514 = vld [vmem:[#allocation2 + $0x48] sm:$0xff]
      %v2515 = vld [vmem:[#allocation2 + $0x50] sm:$0xff]
      %v2516 = vld [vmem:[#allocation2 + $0x58] sm:$0xff]
      %v2517 = vld [vmem:[#allocation2 + $0x60] sm:$0xff]
      %v2518 = vld [vmem:[#allocation2 + $0x68] sm:$0xff]
      %v2519 = vld [vmem:[#allocation2 + $0x70] sm:$0xff]
      %v2520 = vld [vmem:[#allocation2 + $0x78] sm:$0xff]
      %v2521 = vld [vmem:[#allocation2 + $0x80] sm:$0xff]
      %v2522 = vld [vmem:[#allocation2 + $0x88] sm:$0xff]
      %v2523 = vld [vmem:[#allocation2 + $0x90] sm:$0xff]
      %v2524 = vld [vmem:[#allocation2 + $0x98] sm:$0xff]
      %v2525 = vld [vmem:[#allocation2 + $0xa0] sm:$0xff]
      %v2526 = vld [vmem:[#allocation2 + $0xa8] sm:$0xff]
      %v2527 = vld [vmem:[#allocation2 + $0xb0] sm:$0xff]
      %v2528 = vld [vmem:[#allocation2 + $0xb8] sm:$0xff]
      %v2529 = vld [vmem:[#allocation2 + $0xc0] sm:$0xff]
      %v2530 = vld [vmem:[#allocation2 + $0xc8] sm:$0xff]
      %v2531 = vld [vmem:[#allocation2 + $0xd0] sm:$0xff]
      %v2532 = vld [vmem:[#allocation2 + $0xd8] sm:$0xff]
      %v2533 = vld [vmem:[#allocation2 + $0xe0] sm:$0xff]
      %v2534 = vld [vmem:[#allocation2 + $0xe8] sm:$0xff]
      %v2535 = vadd.f32 %v2507, %v2369
      %v2536 = vadd.f32 %v2508, %v2374
      %v2537 = vadd.f32 %v2509, %v2379
      %v2538 = vadd.f32 %v2510, %v2384
      %v2539 = vadd.f32 %v2511, %v2389
      %v2540 = vadd.f32 %v2512, %v2394
      %v2541 = vadd.f32 %v2513, %v2399
      %v2542 = vadd.f32 %v2514, %v2404
      %v2543 = vadd.f32 %v2515, %v2409
      %v2544 = vadd.f32 %v2516, %v2414
      %v2545 = vadd.f32 %v2517, %v2419
      %v2546 = vadd.f32 %v2518, %v2424
      %v2547 = vadd.f32 %v2519, %v2429
      %v2548 = vadd.f32 %v2520, %v2434
      %v2549 = vadd.f32 %v2521, %v2439
      %v2550 = vadd.f32 %v2522, %v2444
      %v2551 = vadd.f32 %v2523, %v2449
      %v2552 = vadd.f32 %v2524, %v2454
      %v2553 = vadd.f32 %v2525, %v2459
      %v2554 = vadd.f32 %v2526, %v2464
      %v2555 = vadd.f32 %v2527, %v2469
      %v2556 = vadd.f32 %v2528, %v2474
      %v2557 = vadd.f32 %v2529, %v2479
      %v2558 = vadd.f32 %v2530, %v2484
      %v2559 = vadd.f32 %v2531, %v2489
      %v2560 = vadd.f32 %v2532, %v2494
      %v2561 = vadd.f32 %v2533, %v2499
      %v2562 = vadd.f32 %v2534, %v2504
      %2563 = vst.msk [vmem:[#allocation2 + $0x10] sm:$0xff] %vm292, %v2535
      %2564 = vst.msk [vmem:[#allocation2 + $0x18] sm:$0xff] %vm292, %v2536
      %2565 = vst.msk [vmem:[#allocation2 + $0x20] sm:$0xff] %vm292, %v2537
      %2566 = vst.msk [vmem:[#allocation2 + $0x28] sm:$0xff] %vm292, %v2538
      %2567 = vst.msk [vmem:[#allocation2 + $0x30] sm:$0xff] %vm292, %v2539
      %2568 = vst.msk [vmem:[#allocation2 + $0x38] sm:$0xff] %vm292, %v2540
      %2569 = vst.msk [vmem:[#allocation2 + $0x40] sm:$0xff] %vm292, %v2541
      %2570 = vst.msk [vmem:[#allocation2 + $0x48] sm:$0xff] %vm292, %v2542
      %2571 = vst.msk [vmem:[#allocation2 + $0x50] sm:$0xff] %vm292, %v2543
      %2572 = vst.msk [vmem:[#allocation2 + $0x58] sm:$0xff] %vm292, %v2544
      %2573 = vst.msk [vmem:[#allocation2 + $0x60] sm:$0xff] %vm292, %v2545
      %2574 = vst.msk [vmem:[#allocation2 + $0x68] sm:$0xff] %vm292, %v2546
      %2575 = vst.msk [vmem:[#allocation2 + $0x70] sm:$0xff] %vm292, %v2547
      %2576 = vst.msk [vmem:[#allocation2 + $0x78] sm:$0xff] %vm292, %v2548
      %2577 = vst.msk [vmem:[#allocation2 + $0x80] sm:$0xff] %vm292, %v2549
      %2578 = vst.msk [vmem:[#allocation2 + $0x88] sm:$0xff] %vm292, %v2550
      %2579 = vst.msk [vmem:[#allocation2 + $0x90] sm:$0xff] %vm292, %v2551
      %2580 = vst.msk [vmem:[#allocation2 + $0x98] sm:$0xff] %vm292, %v2552
      %2581 = vst.msk [vmem:[#allocation2 + $0xa0] sm:$0xff] %vm292, %v2553
      %2582 = vst.msk [vmem:[#allocation2 + $0xa8] sm:$0xff] %vm292, %v2554
      %2583 = vst.msk [vmem:[#allocation2 + $0xb0] sm:$0xff] %vm292, %v2555
      %2584 = vst.msk [vmem:[#allocation2 + $0xb8] sm:$0xff] %vm292, %v2556
      %2585 = vst.msk [vmem:[#allocation2 + $0xc0] sm:$0xff] %vm292, %v2557
      %2586 = vst.msk [vmem:[#allocation2 + $0xc8] sm:$0xff] %vm292, %v2558
      %2587 = vst.msk [vmem:[#allocation2 + $0xd0] sm:$0xff] %vm292, %v2559
      %2588 = vst.msk [vmem:[#allocation2 + $0xd8] sm:$0xff] %vm292, %v2560
      %2589 = vst.msk [vmem:[#allocation2 + $0xe0] sm:$0xff] %vm292, %v2561
      %2590 = vst.msk [vmem:[#allocation2 + $0xe8] sm:$0xff] %vm292, %v2562
      %v2591 = vld [vmem:[%s1] sm:$0xff]
      %v2592 = vld [vmem:[%s1 + $0x8] sm:$0xff]
      %v2593 = vld [vmem:[%s1 + $0x10] sm:$0xff]
      %v2594 = vld [vmem:[%s1 + $0x18] sm:$0xff]
      %v2595 = vld [vmem:[%s1 + $0x20] sm:$0xff]
      %v2596 = vld [vmem:[%s1 + $0x28] sm:$0xff]
      %v2597 = vld [vmem:[%s1 + $0x30] sm:$0xff]
      %v2598 = vld [vmem:[%s1 + $0x38] sm:$0xff]
      %v2601 = vrot.slane %v288, 1
      %v2602 = vsel %vm909, %v965, %v2601
      %v2603 = vrot.slane %v289, 1
      %v2604 = vsel %vm909, %v2601, %v2603
      %v2608 = vsel %vm372, %v2592, 0
      %v2611 = vsel %vm372, %v2594, 0
      %v2614 = vsel %vm372, %v2596, 0
      %v2617 = vsel %vm372, %v2598, 0
      %2619 = vmatprep.subr.mxu0 0.0
      %2620 = vmatpush1.msra.mxu0 %v946
      %2621 = vmatprep.subr.mxu0 0.0
      %2622 = vmatpush1.msra.mxu0 %v944
      %2623 = vmatprep.subr.mxu0 0.0
      %2624 = vmatpush1.msra.mxu0 %v942
      %2625 = vmatprep.subr.mxu0 0.0
      %2626 = vmatpush1.msra.mxu0 %v940
      %2627 = vmatprep.subr.mxu0 0.0
      %2628 = vmatpush1.msra.mxu0 %v938
      %2629 = vmatprep.subr.mxu0 0.0
      %2630 = vmatpush1.msra.mxu0 %v936
      %2631 = vmatprep.subr.mxu0 0.0
      %2632 = vmatpush1.msra.mxu0 %v934
      %2633 = vmatprep.subr.mxu0 0.0
      %2634 = vmatpush1.msra.mxu0 %v932
      %2635 = vmatprep.subr.mxu0 0.0
      %2636 = vmatpush1.msra.mxu0 %v930
      %2637 = vmatprep.subr.mxu0 0.0
      %2638 = vmatpush1.msra.mxu0 %v928
      %2639 = vmatprep.subr.mxu0 0.0
      %2640 = vmatpush1.msra.mxu0 %v926
      %2641 = vmatprep.subr.mxu0 0.0
      %2642 = vmatpush1.msra.mxu0 %v924
      %2643 = vmatprep.subr.mxu0 0.0
      %2644 = vmatpush1.msra.mxu0 %v922
      %2645 = vmatprep.subr.mxu0 0.0
      %2646 = vmatpush1.msra.mxu0 %v920
      %2647 = vmatprep.subr.mxu0 0.0
      %2648 = vmatpush1.msra.mxu0 %v918
      %2649 = vmatprep.subr.mxu0 0.0
      %2650 = vmatpush1.msra.mxu0 %v916
      %2651 = vmatprep.subr.mxu0 0.0
      %2652 = vmatpush2.msra.mxu0 0.0
      %2653 = vmatprep.subr.mxu0 0.0
      %2654 = vmatpush2.msra.mxu0 0.0
      %2655 = vmatprep.subr.mxu0 0.0
      %2656 = vmatpush2.msra.mxu0 0.0
      %2657 = vmatprep.subr.mxu0 0.0
      %2658 = vmatpush2.msra.mxu0 0.0
      %2659 = vmatprep.subr.mxu0 0.0
      %2660 = vmatpush2.msra.mxu0 %v2604
      %2661 = vmatprep.subr.mxu0 0.0
      %2662 = vmatpush2.msra.mxu0 %v2602
      %2663 = vmatprep.subr.mxu0 0.0
      %2664 = vmatpush2.msra.mxu0 %v966
      %2665 = vmatprep.subr.mxu0 0.0
      %2666 = vmatpush2.msra.mxu0 %v964
      %2667 = vmatprep.subr.mxu0 0.0
      %2668 = vmatpush2.msra.mxu0 %v962
      %2669 = vmatprep.subr.mxu0 0.0
      %2670 = vmatpush2.msra.mxu0 %v960
      %2671 = vmatprep.subr.mxu0 0.0
      %2672 = vmatpush2.msra.mxu0 %v958
      %2673 = vmatprep.subr.mxu0 0.0
      %2674 = vmatpush2.msra.mxu0 %v956
      %2675 = vmatprep.subr.mxu0 0.0
      %2676 = vmatpush2.msra.mxu0 %v954
      %2677 = vmatprep.subr.mxu0 0.0
      %2678 = vmatpush2.msra.mxu0 %v952
      %2679 = vmatprep.subr.mxu0 0.0
      %2680 = vmatpush2.msra.mxu0 %v950
      %2681 = vmatprep.subr.mxu0 0.0
      %2682 = vmatpush2.msra.mxu0 %v948
      %2683 = vmatprep.mubr.f32.mxu0 %v2608
      %2684 = vmatmul.mubr.f32.gmra.mxu0 %v2591
      %v2685 = vpop.f32.mrf.mxu0
      %v2686 = vadd.f32 0.0, %v2685
      %v2687 = vpop.f32.mrf.mxu0
      %2688 = vmatprep.mubr.f32.mxu0 %v2611
      %2689 = vmatmul.mubr.f32.gmra.mxu0 %v2593
      %v2690 = vpop.f32.mrf.mxu0
      %v2691 = vadd.f32 0.0, %v2690
      %v2692 = vpop.f32.mrf.mxu0
      %2693 = vmatprep.mubr.f32.mxu0 %v2614
      %2694 = vmatmul.mubr.f32.gmra.mxu0 %v2595
      %v2695 = vpop.f32.mrf.mxu0
      %v2696 = vadd.f32 0.0, %v2695
      %v2697 = vpop.f32.mrf.mxu0
      %2698 = vmatprep.mubr.f32.mxu0 %v2617
      %2699 = vmatmul.mubr.f32.gmra.mxu0 %v2597
      %v2700 = vpop.f32.mrf.mxu0
      %v2701 = vadd.f32 0.0, %v2700
      %v2702 = vpop.f32.mrf.mxu0
      %2703 = vdwg.mxu0
      %v2704 = vld [vmem:[%s2] sm:$0xff]
      %v2705 = vld [vmem:[%s2 + $0x8] sm:$0xff]
      %v2706 = vld [vmem:[%s2 + $0x10] sm:$0xff]
      %v2707 = vld [vmem:[%s2 + $0x18] sm:$0xff]
      %v2708 = vld [vmem:[%s2 + $0x20] sm:$0xff]
      %v2709 = vld [vmem:[%s2 + $0x28] sm:$0xff]
      %v2710 = vld [vmem:[%s2 + $0x30] sm:$0xff]
      %v2711 = vld [vmem:[%s2 + $0x38] sm:$0xff]
      %v2712 = vld [vmem:[%s2 + $0x40] sm:$0xff]
      %v2713 = vld [vmem:[%s2 + $0x48] sm:$0xff]
      %v2714 = vld [vmem:[%s2 + $0x50] sm:$0xff]
      %v2715 = vld [vmem:[%s2 + $0x58] sm:$0xff]
      %v2716 = vld [vmem:[%s2 + $0x60] sm:$0xff]
      %v2717 = vld [vmem:[%s2 + $0x68] sm:$0xff]
      %v2718 = vld [vmem:[%s2 + $0x70] sm:$0xff]
      %v2719 = vld [vmem:[%s2 + $0x78] sm:$0xff]
      %v2720 = vld [vmem:[%s2 + $0x80] sm:$0xff]
      %v2721 = vld [vmem:[%s2 + $0x88] sm:$0xff]
      %v2722 = vld [vmem:[%s2 + $0x90] sm:$0xff]
      %v2723 = vld [vmem:[%s2 + $0x98] sm:$0xff]
      %v2724 = vld [vmem:[%s2 + $0xa0] sm:$0xff]
      %v2725 = vld [vmem:[%s2 + $0xa8] sm:$0xff]
      %v2726 = vld [vmem:[%s2 + $0xb0] sm:$0xff]
      %v2727 = vld [vmem:[%s2 + $0xb8] sm:$0xff]
      %v2728 = vld [vmem:[%s2 + $0xc0] sm:$0xff]
      %v2729 = vld [vmem:[%s2 + $0xc8] sm:$0xff]
      %v2730 = vld [vmem:[%s2 + $0xd0] sm:$0xff]
      %v2731 = vld [vmem:[%s2 + $0xd8] sm:$0xff]
      %v2733 = vsel %vm498, %v2704, 0
      %v2736 = vsel %vm498, %v2705, 0
      %v2739 = vsel %vm498, %v2706, 0
      %v2742 = vsel %vm498, %v2707, 0
      %v2745 = vsel %vm498, %v2708, 0
      %v2748 = vsel %vm498, %v2709, 0
      %v2751 = vsel %vm498, %v2710, 0
      %v2754 = vsel %vm498, %v2711, 0
      %v2757 = vsel %vm498, %v2712, 0
      %v2760 = vsel %vm498, %v2713, 0
      %v2763 = vsel %vm498, %v2714, 0
      %v2766 = vsel %vm498, %v2715, 0
      %v2769 = vsel %vm498, %v2716, 0
      %v2772 = vsel %vm498, %v2717, 0
      %v2775 = vsel %vm498, %v2718, 0
      %v2778 = vsel %vm498, %v2719, 0
      %v2781 = vsel %vm498, %v2720, 0
      %v2784 = vsel %vm498, %v2721, 0
      %v2787 = vsel %vm498, %v2722, 0
      %v2790 = vsel %vm498, %v2723, 0
      %v2793 = vsel %vm498, %v2724, 0
      %v2796 = vsel %vm498, %v2725, 0
      %v2799 = vsel %vm498, %v2726, 0
      %v2802 = vsel %vm498, %v2727, 0
      %v2805 = vsel %vm498, %v2728, 0
      %v2808 = vsel %vm498, %v2729, 0
      %v2811 = vsel %vm498, %v2730, 0
      %v2814 = vsel %vm498, %v2731, 0
      %2816 = vmatprep.subr.mxu0 0.0
      %2817 = vmatpush1.msra.mxu0 0.0
      %2818 = vmatprep.subr.mxu0 0.0
      %2819 = vmatpush1.msra.mxu0 0.0
      %2820 = vmatprep.subr.mxu0 0.0
      %2821 = vmatpush1.msra.mxu0 0.0
      %2822 = vmatprep.subr.mxu0 0.0
      %2823 = vmatpush1.msra.mxu0 0.0
      %2824 = vmatprep.subr.mxu0 0.0
      %2825 = vmatpush1.msra.mxu0 0.0
      %2826 = vmatprep.subr.mxu0 0.0
      %2827 = vmatpush1.msra.mxu0 0.0
      %2828 = vmatprep.subr.mxu0 0.0
      %2829 = vmatpush1.msra.mxu0 0.0
      %2830 = vmatprep.subr.mxu0 0.0
      %2831 = vmatpush1.msra.mxu0 0.0
      %2832 = vmatprep.subr.mxu0 0.0
      %2833 = vmatpush1.msra.mxu0 0.0
      %2834 = vmatprep.subr.mxu0 0.0
      %2835 = vmatpush1.msra.mxu0 0.0
      %2836 = vmatprep.subr.mxu0 0.0
      %2837 = vmatpush1.msra.mxu0 0.0
      %2838 = vmatprep.subr.mxu0 0.0
      %2839 = vmatpush1.msra.mxu0 0.0
      %2840 = vmatprep.subr.mxu0 0.0
      %2841 = vmatpush1.msra.mxu0 %v2701
      %2842 = vmatprep.subr.mxu0 0.0
      %2843 = vmatpush1.msra.mxu0 %v2696
      %2844 = vmatprep.subr.mxu0 0.0
      %2845 = vmatpush1.msra.mxu0 %v2691
      %2846 = vmatprep.subr.mxu0 0.0
      %2847 = vmatpush1.msra.mxu0 %v2686
      %2848 = vmatprep.subr.mxu0 0.0
      %2849 = vmatpush2.msra.mxu0 0.0
      %2850 = vmatprep.subr.mxu0 0.0
      %2851 = vmatpush2.msra.mxu0 0.0
      %2852 = vmatprep.subr.mxu0 0.0
      %2853 = vmatpush2.msra.mxu0 0.0
      %2854 = vmatprep.subr.mxu0 0.0
      %2855 = vmatpush2.msra.mxu0 0.0
      %2856 = vmatprep.subr.mxu0 0.0
      %2857 = vmatpush2.msra.mxu0 0.0
      %2858 = vmatprep.subr.mxu0 0.0
      %2859 = vmatpush2.msra.mxu0 0.0
      %2860 = vmatprep.subr.mxu0 0.0
      %2861 = vmatpush2.msra.mxu0 0.0
      %2862 = vmatprep.subr.mxu0 0.0
      %2863 = vmatpush2.msra.mxu0 0.0
      %2864 = vmatprep.subr.mxu0 0.0
      %2865 = vmatpush2.msra.mxu0 0.0
      %2866 = vmatprep.subr.mxu0 0.0
      %2867 = vmatpush2.msra.mxu0 0.0
      %2868 = vmatprep.subr.mxu0 0.0
      %2869 = vmatpush2.msra.mxu0 0.0
      %2870 = vmatprep.subr.mxu0 0.0
      %2871 = vmatpush2.msra.mxu0 0.0
      %2872 = vmatprep.subr.mxu0 0.0
      %2873 = vmatpush2.msra.mxu0 0.0
      %2874 = vmatprep.subr.mxu0 0.0
      %2875 = vmatpush2.msra.mxu0 0.0
      %2876 = vmatprep.subr.mxu0 0.0
      %2877 = vmatpush2.msra.mxu0 0.0
      %2878 = vmatprep.subr.mxu0 0.0
      %2879 = vmatpush2.msra.mxu0 0.0
      %2880 = vmatprep.mubr.f32.mxu0 0.0
      %2881 = vmatmul.mubr.f32.gmra.mxu0 %v2733
      %v2882 = vpop.f32.mrf.mxu0
      %v2883 = vadd.f32 0.0, %v2882
      %v2884 = vpop.f32.mrf.mxu0
      %2885 = vmatprep.mubr.f32.mxu0 0.0
      %2886 = vmatmul.mubr.f32.gmra.mxu0 %v2736
      %v2887 = vpop.f32.mrf.mxu0
      %v2888 = vadd.f32 0.0, %v2887
      %v2889 = vpop.f32.mrf.mxu0
      %2890 = vmatprep.mubr.f32.mxu0 0.0
      %2891 = vmatmul.mubr.f32.gmra.mxu0 %v2739
      %v2892 = vpop.f32.mrf.mxu0
      %v2893 = vadd.f32 0.0, %v2892
      %v2894 = vpop.f32.mrf.mxu0
      %2895 = vmatprep.mubr.f32.mxu0 0.0
      %2896 = vmatmul.mubr.f32.gmra.mxu0 %v2742
      %v2897 = vpop.f32.mrf.mxu0
      %v2898 = vadd.f32 0.0, %v2897
      %v2899 = vpop.f32.mrf.mxu0
      %2900 = vmatprep.mubr.f32.mxu0 0.0
      %2901 = vmatmul.mubr.f32.gmra.mxu0 %v2745
      %v2902 = vpop.f32.mrf.mxu0
      %v2903 = vadd.f32 0.0, %v2902
      %v2904 = vpop.f32.mrf.mxu0
      %2905 = vmatprep.mubr.f32.mxu0 0.0
      %2906 = vmatmul.mubr.f32.gmra.mxu0 %v2748
      %v2907 = vpop.f32.mrf.mxu0
      %v2908 = vadd.f32 0.0, %v2907
      %v2909 = vpop.f32.mrf.mxu0
      %2910 = vmatprep.mubr.f32.mxu0 0.0
      %2911 = vmatmul.mubr.f32.gmra.mxu0 %v2751
      %v2912 = vpop.f32.mrf.mxu0
      %v2913 = vadd.f32 0.0, %v2912
      %v2914 = vpop.f32.mrf.mxu0
      %2915 = vmatprep.mubr.f32.mxu0 0.0
      %2916 = vmatmul.mubr.f32.gmra.mxu0 %v2754
      %v2917 = vpop.f32.mrf.mxu0
      %v2918 = vadd.f32 0.0, %v2917
      %v2919 = vpop.f32.mrf.mxu0
      %2920 = vmatprep.mubr.f32.mxu0 0.0
      %2921 = vmatmul.mubr.f32.gmra.mxu0 %v2757
      %v2922 = vpop.f32.mrf.mxu0
      %v2923 = vadd.f32 0.0, %v2922
      %v2924 = vpop.f32.mrf.mxu0
      %2925 = vmatprep.mubr.f32.mxu0 0.0
      %2926 = vmatmul.mubr.f32.gmra.mxu0 %v2760
      %v2927 = vpop.f32.mrf.mxu0
      %v2928 = vadd.f32 0.0, %v2927
      %v2929 = vpop.f32.mrf.mxu0
      %2930 = vmatprep.mubr.f32.mxu0 0.0
      %2931 = vmatmul.mubr.f32.gmra.mxu0 %v2763
      %v2932 = vpop.f32.mrf.mxu0
      %v2933 = vadd.f32 0.0, %v2932
      %v2934 = vpop.f32.mrf.mxu0
      %2935 = vmatprep.mubr.f32.mxu0 0.0
      %2936 = vmatmul.mubr.f32.gmra.mxu0 %v2766
      %v2937 = vpop.f32.mrf.mxu0
      %v2938 = vadd.f32 0.0, %v2937
      %v2939 = vpop.f32.mrf.mxu0
      %2940 = vmatprep.mubr.f32.mxu0 0.0
      %2941 = vmatmul.mubr.f32.gmra.mxu0 %v2769
      %v2942 = vpop.f32.mrf.mxu0
      %v2943 = vadd.f32 0.0, %v2942
      %v2944 = vpop.f32.mrf.mxu0
      %2945 = vmatprep.mubr.f32.mxu0 0.0
      %2946 = vmatmul.mubr.f32.gmra.mxu0 %v2772
      %v2947 = vpop.f32.mrf.mxu0
      %v2948 = vadd.f32 0.0, %v2947
      %v2949 = vpop.f32.mrf.mxu0
      %2950 = vmatprep.mubr.f32.mxu0 0.0
      %2951 = vmatmul.mubr.f32.gmra.mxu0 %v2775
      %v2952 = vpop.f32.mrf.mxu0
      %v2953 = vadd.f32 0.0, %v2952
      %v2954 = vpop.f32.mrf.mxu0
      %2955 = vmatprep.mubr.f32.mxu0 0.0
      %2956 = vmatmul.mubr.f32.gmra.mxu0 %v2778
      %v2957 = vpop.f32.mrf.mxu0
      %v2958 = vadd.f32 0.0, %v2957
      %v2959 = vpop.f32.mrf.mxu0
      %2960 = vmatprep.mubr.f32.mxu0 0.0
      %2961 = vmatmul.mubr.f32.gmra.mxu0 %v2781
      %v2962 = vpop.f32.mrf.mxu0
      %v2963 = vadd.f32 0.0, %v2962
      %v2964 = vpop.f32.mrf.mxu0
      %2965 = vmatprep.mubr.f32.mxu0 0.0
      %2966 = vmatmul.mubr.f32.gmra.mxu0 %v2784
      %v2967 = vpop.f32.mrf.mxu0
      %v2968 = vadd.f32 0.0, %v2967
      %v2969 = vpop.f32.mrf.mxu0
      %2970 = vmatprep.mubr.f32.mxu0 0.0
      %2971 = vmatmul.mubr.f32.gmra.mxu0 %v2787
      %v2972 = vpop.f32.mrf.mxu0
      %v2973 = vadd.f32 0.0, %v2972
      %v2974 = vpop.f32.mrf.mxu0
      %2975 = vmatprep.mubr.f32.mxu0 0.0
      %2976 = vmatmul.mubr.f32.gmra.mxu0 %v2790
      %v2977 = vpop.f32.mrf.mxu0
      %v2978 = vadd.f32 0.0, %v2977
      %v2979 = vpop.f32.mrf.mxu0
      %2980 = vmatprep.mubr.f32.mxu0 0.0
      %2981 = vmatmul.mubr.f32.gmra.mxu0 %v2793
      %v2982 = vpop.f32.mrf.mxu0
      %v2983 = vadd.f32 0.0, %v2982
      %v2984 = vpop.f32.mrf.mxu0
      %2985 = vmatprep.mubr.f32.mxu0 0.0
      %2986 = vmatmul.mubr.f32.gmra.mxu0 %v2796
      %v2987 = vpop.f32.mrf.mxu0
      %v2988 = vadd.f32 0.0, %v2987
      %v2989 = vpop.f32.mrf.mxu0
      %2990 = vmatprep.mubr.f32.mxu0 0.0
      %2991 = vmatmul.mubr.f32.gmra.mxu0 %v2799
      %v2992 = vpop.f32.mrf.mxu0
      %v2993 = vadd.f32 0.0, %v2992
      %v2994 = vpop.f32.mrf.mxu0
      %2995 = vmatprep.mubr.f32.mxu0 0.0
      %2996 = vmatmul.mubr.f32.gmra.mxu0 %v2802
      %v2997 = vpop.f32.mrf.mxu0
      %v2998 = vadd.f32 0.0, %v2997
      %v2999 = vpop.f32.mrf.mxu0
      %3000 = vmatprep.mubr.f32.mxu0 0.0
      %3001 = vmatmul.mubr.f32.gmra.mxu0 %v2805
      %v3002 = vpop.f32.mrf.mxu0
      %v3003 = vadd.f32 0.0, %v3002
      %v3004 = vpop.f32.mrf.mxu0
      %3005 = vmatprep.mubr.f32.mxu0 0.0
      %3006 = vmatmul.mubr.f32.gmra.mxu0 %v2808
      %v3007 = vpop.f32.mrf.mxu0
      %v3008 = vadd.f32 0.0, %v3007
      %v3009 = vpop.f32.mrf.mxu0
      %3010 = vmatprep.mubr.f32.mxu0 0.0
      %3011 = vmatmul.mubr.f32.gmra.mxu0 %v2811
      %v3012 = vpop.f32.mrf.mxu0
      %v3013 = vadd.f32 0.0, %v3012
      %v3014 = vpop.f32.mrf.mxu0
      %3015 = vmatprep.mubr.f32.mxu0 0.0
      %3016 = vmatmul.mubr.f32.gmra.mxu0 %v2814
      %v3017 = vpop.f32.mrf.mxu0
      %v3018 = vadd.f32 0.0, %v3017
      %v3019 = vpop.f32.mrf.mxu0
      %3020 = vdwg.mxu0
      %v3021 = vld [vmem:[#allocation2 + $0x11] sm:$0xff]
      %v3022 = vld [vmem:[#allocation2 + $0x19] sm:$0xff]
      %v3023 = vld [vmem:[#allocation2 + $0x21] sm:$0xff]
      %v3024 = vld [vmem:[#allocation2 + $0x29] sm:$0xff]
      %v3025 = vld [vmem:[#allocation2 + $0x31] sm:$0xff]
      %v3026 = vld [vmem:[#allocation2 + $0x39] sm:$0xff]
      %v3027 = vld [vmem:[#allocation2 + $0x41] sm:$0xff]
      %v3028 = vld [vmem:[#allocation2 + $0x49] sm:$0xff]
      %v3029 = vld [vmem:[#allocation2 + $0x51] sm:$0xff]
      %v3030 = vld [vmem:[#allocation2 + $0x59] sm:$0xff]
      %v3031 = vld [vmem:[#allocation2 + $0x61] sm:$0xff]
      %v3032 = vld [vmem:[#allocation2 + $0x69] sm:$0xff]
      %v3033 = vld [vmem:[#allocation2 + $0x71] sm:$0xff]
      %v3034 = vld [vmem:[#allocation2 + $0x79] sm:$0xff]
      %v3035 = vld [vmem:[#allocation2 + $0x81] sm:$0xff]
      %v3036 = vld [vmem:[#allocation2 + $0x89] sm:$0xff]
      %v3037 = vld [vmem:[#allocation2 + $0x91] sm:$0xff]
      %v3038 = vld [vmem:[#allocation2 + $0x99] sm:$0xff]
      %v3039 = vld [vmem:[#allocation2 + $0xa1] sm:$0xff]
      %v3040 = vld [vmem:[#allocation2 + $0xa9] sm:$0xff]
      %v3041 = vld [vmem:[#allocation2 + $0xb1] sm:$0xff]
      %v3042 = vld [vmem:[#allocation2 + $0xb9] sm:$0xff]
      %v3043 = vld [vmem:[#allocation2 + $0xc1] sm:$0xff]
      %v3044 = vld [vmem:[#allocation2 + $0xc9] sm:$0xff]
      %v3045 = vld [vmem:[#allocation2 + $0xd1] sm:$0xff]
      %v3046 = vld [vmem:[#allocation2 + $0xd9] sm:$0xff]
      %v3047 = vld [vmem:[#allocation2 + $0xe1] sm:$0xff]
      %v3048 = vld [vmem:[#allocation2 + $0xe9] sm:$0xff]
      %v3049 = vadd.f32 %v3021, %v2883
      %v3050 = vadd.f32 %v3022, %v2888
      %v3051 = vadd.f32 %v3023, %v2893
      %v3052 = vadd.f32 %v3024, %v2898
      %v3053 = vadd.f32 %v3025, %v2903
      %v3054 = vadd.f32 %v3026, %v2908
      %v3055 = vadd.f32 %v3027, %v2913
      %v3056 = vadd.f32 %v3028, %v2918
      %v3057 = vadd.f32 %v3029, %v2923
      %v3058 = vadd.f32 %v3030, %v2928
      %v3059 = vadd.f32 %v3031, %v2933
      %v3060 = vadd.f32 %v3032, %v2938
      %v3061 = vadd.f32 %v3033, %v2943
      %v3062 = vadd.f32 %v3034, %v2948
      %v3063 = vadd.f32 %v3035, %v2953
      %v3064 = vadd.f32 %v3036, %v2958
      %v3065 = vadd.f32 %v3037, %v2963
      %v3066 = vadd.f32 %v3038, %v2968
      %v3067 = vadd.f32 %v3039, %v2973
      %v3068 = vadd.f32 %v3040, %v2978
      %v3069 = vadd.f32 %v3041, %v2983
      %v3070 = vadd.f32 %v3042, %v2988
      %v3071 = vadd.f32 %v3043, %v2993
      %v3072 = vadd.f32 %v3044, %v2998
      %v3073 = vadd.f32 %v3045, %v3003
      %v3074 = vadd.f32 %v3046, %v3008
      %v3075 = vadd.f32 %v3047, %v3013
      %v3076 = vadd.f32 %v3048, %v3018
      %3077 = vst.msk [vmem:[#allocation2 + $0x11] sm:$0xff] %vm292, %v3049
      %3078 = vst.msk [vmem:[#allocation2 + $0x19] sm:$0xff] %vm292, %v3050
      %3079 = vst.msk [vmem:[#allocation2 + $0x21] sm:$0xff] %vm292, %v3051
      %3080 = vst.msk [vmem:[#allocation2 + $0x29] sm:$0xff] %vm292, %v3052
      %3081 = vst.msk [vmem:[#allocation2 + $0x31] sm:$0xff] %vm292, %v3053
      %3082 = vst.msk [vmem:[#allocation2 + $0x39] sm:$0xff] %vm292, %v3054
      %3083 = vst.msk [vmem:[#allocation2 + $0x41] sm:$0xff] %vm292, %v3055
      %3084 = vst.msk [vmem:[#allocation2 + $0x49] sm:$0xff] %vm292, %v3056
      %3085 = vst.msk [vmem:[#allocation2 + $0x51] sm:$0xff] %vm292, %v3057
      %3086 = vst.msk [vmem:[#allocation2 + $0x59] sm:$0xff] %vm292, %v3058
      %3087 = vst.msk [vmem:[#allocation2 + $0x61] sm:$0xff] %vm292, %v3059
      %3088 = vst.msk [vmem:[#allocation2 + $0x69] sm:$0xff] %vm292, %v3060
      %3089 = vst.msk [vmem:[#allocation2 + $0x71] sm:$0xff] %vm292, %v3061
      %3090 = vst.msk [vmem:[#allocation2 + $0x79] sm:$0xff] %vm292, %v3062
      %3091 = vst.msk [vmem:[#allocation2 + $0x81] sm:$0xff] %vm292, %v3063
      %3092 = vst.msk [vmem:[#allocation2 + $0x89] sm:$0xff] %vm292, %v3064
      %3093 = vst.msk [vmem:[#allocation2 + $0x91] sm:$0xff] %vm292, %v3065
      %3094 = vst.msk [vmem:[#allocation2 + $0x99] sm:$0xff] %vm292, %v3066
      %3095 = vst.msk [vmem:[#allocation2 + $0xa1] sm:$0xff] %vm292, %v3067
      %3096 = vst.msk [vmem:[#allocation2 + $0xa9] sm:$0xff] %vm292, %v3068
      %3097 = vst.msk [vmem:[#allocation2 + $0xb1] sm:$0xff] %vm292, %v3069
      %3098 = vst.msk [vmem:[#allocation2 + $0xb9] sm:$0xff] %vm292, %v3070
      %3099 = vst.msk [vmem:[#allocation2 + $0xc1] sm:$0xff] %vm292, %v3071
      %3100 = vst.msk [vmem:[#allocation2 + $0xc9] sm:$0xff] %vm292, %v3072
      %3101 = vst.msk [vmem:[#allocation2 + $0xd1] sm:$0xff] %vm292, %v3073
      %3102 = vst.msk [vmem:[#allocation2 + $0xd9] sm:$0xff] %vm292, %v3074
      %3103 = vst.msk [vmem:[#allocation2 + $0xe1] sm:$0xff] %vm292, %v3075
      %3104 = vst.msk [vmem:[#allocation2 + $0xe9] sm:$0xff] %vm292, %v3076
      %v3105 = vld [vmem:[%s1] sm:$0xff]
      %v3106 = vld [vmem:[%s1 + $0x8] sm:$0xff]
      %v3107 = vld [vmem:[%s1 + $0x10] sm:$0xff]
      %v3108 = vld [vmem:[%s1 + $0x18] sm:$0xff]
      %v3109 = vld [vmem:[%s1 + $0x20] sm:$0xff]
      %v3110 = vld [vmem:[%s1 + $0x28] sm:$0xff]
      %v3111 = vld [vmem:[%s1 + $0x30] sm:$0xff]
      %v3112 = vld [vmem:[%s1 + $0x38] sm:$0xff]
      %v3113 = vrot.slane %v288, 2
      %v3114 = vsel %vm1501, %v1557, %v3113
      %v3115 = vrot.slane %v289, 2
      %v3116 = vsel %vm1501, %v3113, %v3115
      %v3120 = vsel %vm372, %v3106, 0
      %v3123 = vsel %vm372, %v3108, 0
      %v3126 = vsel %vm372, %v3110, 0
      %v3129 = vsel %vm372, %v3112, 0
      %3131 = vmatprep.subr.mxu0 0.0
      %3132 = vmatpush1.msra.mxu0 %v1538
      %3133 = vmatprep.subr.mxu0 0.0
      %3134 = vmatpush1.msra.mxu0 %v1536
      %3135 = vmatprep.subr.mxu0 0.0
      %3136 = vmatpush1.msra.mxu0 %v1534
      %3137 = vmatprep.subr.mxu0 0.0
      %3138 = vmatpush1.msra.mxu0 %v1532
      %3139 = vmatprep.subr.mxu0 0.0
      %3140 = vmatpush1.msra.mxu0 %v1530
      %3141 = vmatprep.subr.mxu0 0.0
      %3142 = vmatpush1.msra.mxu0 %v1528
      %3143 = vmatprep.subr.mxu0 0.0
      %3144 = vmatpush1.msra.mxu0 %v1526
      %3145 = vmatprep.subr.mxu0 0.0
      %3146 = vmatpush1.msra.mxu0 %v1524
      %3147 = vmatprep.subr.mxu0 0.0
      %3148 = vmatpush1.msra.mxu0 %v1522
      %3149 = vmatprep.subr.mxu0 0.0
      %3150 = vmatpush1.msra.mxu0 %v1520
      %3151 = vmatprep.subr.mxu0 0.0
      %3152 = vmatpush1.msra.mxu0 %v1518
      %3153 = vmatprep.subr.mxu0 0.0
      %3154 = vmatpush1.msra.mxu0 %v1516
      %3155 = vmatprep.subr.mxu0 0.0
      %3156 = vmatpush1.msra.mxu0 %v1514
      %3157 = vmatprep.subr.mxu0 0.0
      %3158 = vmatpush1.msra.mxu0 %v1512
      %3159 = vmatprep.subr.mxu0 0.0
      %3160 = vmatpush1.msra.mxu0 %v1510
      %3161 = vmatprep.subr.mxu0 0.0
      %3162 = vmatpush1.msra.mxu0 %v1508
      %3163 = vmatprep.subr.mxu0 0.0
      %3164 = vmatpush2.msra.mxu0 0.0
      %3165 = vmatprep.subr.mxu0 0.0
      %3166 = vmatpush2.msra.mxu0 0.0
      %3167 = vmatprep.subr.mxu0 0.0
      %3168 = vmatpush2.msra.mxu0 0.0
      %3169 = vmatprep.subr.mxu0 0.0
      %3170 = vmatpush2.msra.mxu0 0.0
      %3171 = vmatprep.subr.mxu0 0.0
      %3172 = vmatpush2.msra.mxu0 %v3116
      %3173 = vmatprep.subr.mxu0 0.0
      %3174 = vmatpush2.msra.mxu0 %v3114
      %3175 = vmatprep.subr.mxu0 0.0
      %3176 = vmatpush2.msra.mxu0 %v1558
      %3177 = vmatprep.subr.mxu0 0.0
      %3178 = vmatpush2.msra.mxu0 %v1556
      %3179 = vmatprep.subr.mxu0 0.0
      %3180 = vmatpush2.msra.mxu0 %v1554
      %3181 = vmatprep.subr.mxu0 0.0
      %3182 = vmatpush2.msra.mxu0 %v1552
      %3183 = vmatprep.subr.mxu0 0.0
      %3184 = vmatpush2.msra.mxu0 %v1550
      %3185 = vmatprep.subr.mxu0 0.0
      %3186 = vmatpush2.msra.mxu0 %v1548
      %3187 = vmatprep.subr.mxu0 0.0
      %3188 = vmatpush2.msra.mxu0 %v1546
      %3189 = vmatprep.subr.mxu0 0.0
      %3190 = vmatpush2.msra.mxu0 %v1544
      %3191 = vmatprep.subr.mxu0 0.0
      %3192 = vmatpush2.msra.mxu0 %v1542
      %3193 = vmatprep.subr.mxu0 0.0
      %3194 = vmatpush2.msra.mxu0 %v1540
      %3195 = vmatprep.mubr.f32.mxu0 %v3120
      %3196 = vmatmul.mubr.f32.gmra.mxu0 %v3105
      %v3197 = vpop.f32.mrf.mxu0
      %v3198 = vadd.f32 0.0, %v3197
      %v3199 = vpop.f32.mrf.mxu0
      %3200 = vmatprep.mubr.f32.mxu0 %v3123
      %3201 = vmatmul.mubr.f32.gmra.mxu0 %v3107
      %v3202 = vpop.f32.mrf.mxu0
      %v3203 = vadd.f32 0.0, %v3202
      %v3204 = vpop.f32.mrf.mxu0
      %3205 = vmatprep.mubr.f32.mxu0 %v3126
      %3206 = vmatmul.mubr.f32.gmra.mxu0 %v3109
      %v3207 = vpop.f32.mrf.mxu0
      %v3208 = vadd.f32 0.0, %v3207
      %v3209 = vpop.f32.mrf.mxu0
      %3210 = vmatprep.mubr.f32.mxu0 %v3129
      %3211 = vmatmul.mubr.f32.gmra.mxu0 %v3111
      %v3212 = vpop.f32.mrf.mxu0
      %v3213 = vadd.f32 0.0, %v3212
      %v3214 = vpop.f32.mrf.mxu0
      %3215 = vdwg.mxu0
      %v3216 = vld [vmem:[%s2] sm:$0xff]
      %v3217 = vld [vmem:[%s2 + $0x8] sm:$0xff]
      %v3218 = vld [vmem:[%s2 + $0x10] sm:$0xff]
      %v3219 = vld [vmem:[%s2 + $0x18] sm:$0xff]
      %v3220 = vld [vmem:[%s2 + $0x20] sm:$0xff]
      %v3221 = vld [vmem:[%s2 + $0x28] sm:$0xff]
      %v3222 = vld [vmem:[%s2 + $0x30] sm:$0xff]
      %v3223 = vld [vmem:[%s2 + $0x38] sm:$0xff]
      %v3224 = vld [vmem:[%s2 + $0x40] sm:$0xff]
      %v3225 = vld [vmem:[%s2 + $0x48] sm:$0xff]
      %v3226 = vld [vmem:[%s2 + $0x50] sm:$0xff]
      %v3227 = vld [vmem:[%s2 + $0x58] sm:$0xff]
      %v3228 = vld [vmem:[%s2 + $0x60] sm:$0xff]
      %v3229 = vld [vmem:[%s2 + $0x68] sm:$0xff]
      %v3230 = vld [vmem:[%s2 + $0x70] sm:$0xff]
      %v3231 = vld [vmem:[%s2 + $0x78] sm:$0xff]
      %v3232 = vld [vmem:[%s2 + $0x80] sm:$0xff]
      %v3233 = vld [vmem:[%s2 + $0x88] sm:$0xff]
      %v3234 = vld [vmem:[%s2 + $0x90] sm:$0xff]
      %v3235 = vld [vmem:[%s2 + $0x98] sm:$0xff]
      %v3236 = vld [vmem:[%s2 + $0xa0] sm:$0xff]
      %v3237 = vld [vmem:[%s2 + $0xa8] sm:$0xff]
      %v3238 = vld [vmem:[%s2 + $0xb0] sm:$0xff]
      %v3239 = vld [vmem:[%s2 + $0xb8] sm:$0xff]
      %v3240 = vld [vmem:[%s2 + $0xc0] sm:$0xff]
      %v3241 = vld [vmem:[%s2 + $0xc8] sm:$0xff]
      %v3242 = vld [vmem:[%s2 + $0xd0] sm:$0xff]
      %v3243 = vld [vmem:[%s2 + $0xd8] sm:$0xff]
      %v3245 = vsel %vm498, %v3216, 0
      %v3248 = vsel %vm498, %v3217, 0
      %v3251 = vsel %vm498, %v3218, 0
      %v3254 = vsel %vm498, %v3219, 0
      %v3257 = vsel %vm498, %v3220, 0
      %v3260 = vsel %vm498, %v3221, 0
      %v3263 = vsel %vm498, %v3222, 0
      %v3266 = vsel %vm498, %v3223, 0
      %v3269 = vsel %vm498, %v3224, 0
      %v3272 = vsel %vm498, %v3225, 0
      %v3275 = vsel %vm498, %v3226, 0
      %v3278 = vsel %vm498, %v3227, 0
      %v3281 = vsel %vm498, %v3228, 0
      %v3284 = vsel %vm498, %v3229, 0
      %v3287 = vsel %vm498, %v3230, 0
      %v3290 = vsel %vm498, %v3231, 0
      %v3293 = vsel %vm498, %v3232, 0
      %v3296 = vsel %vm498, %v3233, 0
      %v3299 = vsel %vm498, %v3234, 0
      %v3302 = vsel %vm498, %v3235, 0
      %v3305 = vsel %vm498, %v3236, 0
      %v3308 = vsel %vm498, %v3237, 0
      %v3311 = vsel %vm498, %v3238, 0
      %v3314 = vsel %vm498, %v3239, 0
      %v3317 = vsel %vm498, %v3240, 0
      %v3320 = vsel %vm498, %v3241, 0
      %v3323 = vsel %vm498, %v3242, 0
      %v3326 = vsel %vm498, %v3243, 0
      %3328 = vmatprep.subr.mxu0 0.0
      %3329 = vmatpush1.msra.mxu0 0.0
      %3330 = vmatprep.subr.mxu0 0.0
      %3331 = vmatpush1.msra.mxu0 0.0
      %3332 = vmatprep.subr.mxu0 0.0
      %3333 = vmatpush1.msra.mxu0 0.0
      %3334 = vmatprep.subr.mxu0 0.0
      %3335 = vmatpush1.msra.mxu0 0.0
      %3336 = vmatprep.subr.mxu0 0.0
      %3337 = vmatpush1.msra.mxu0 0.0
      %3338 = vmatprep.subr.mxu0 0.0
      %3339 = vmatpush1.msra.mxu0 0.0
      %3340 = vmatprep.subr.mxu0 0.0
      %3341 = vmatpush1.msra.mxu0 0.0
      %3342 = vmatprep.subr.mxu0 0.0
      %3343 = vmatpush1.msra.mxu0 0.0
      %3344 = vmatprep.subr.mxu0 0.0
      %3345 = vmatpush1.msra.mxu0 0.0
      %3346 = vmatprep.subr.mxu0 0.0
      %3347 = vmatpush1.msra.mxu0 0.0
      %3348 = vmatprep.subr.mxu0 0.0
      %3349 = vmatpush1.msra.mxu0 0.0
      %3350 = vmatprep.subr.mxu0 0.0
      %3351 = vmatpush1.msra.mxu0 0.0
      %3352 = vmatprep.subr.mxu0 0.0
      %3353 = vmatpush1.msra.mxu0 %v3213
      %3354 = vmatprep.subr.mxu0 0.0
      %3355 = vmatpush1.msra.mxu0 %v3208
      %3356 = vmatprep.subr.mxu0 0.0
      %3357 = vmatpush1.msra.mxu0 %v3203
      %3358 = vmatprep.subr.mxu0 0.0
      %3359 = vmatpush1.msra.mxu0 %v3198
      %3360 = vmatprep.subr.mxu0 0.0
      %3361 = vmatpush2.msra.mxu0 0.0
      %3362 = vmatprep.subr.mxu0 0.0
      %3363 = vmatpush2.msra.mxu0 0.0
      %3364 = vmatprep.subr.mxu0 0.0
      %3365 = vmatpush2.msra.mxu0 0.0
      %3366 = vmatprep.subr.mxu0 0.0
      %3367 = vmatpush2.msra.mxu0 0.0
      %3368 = vmatprep.subr.mxu0 0.0
      %3369 = vmatpush2.msra.mxu0 0.0
      %3370 = vmatprep.subr.mxu0 0.0
      %3371 = vmatpush2.msra.mxu0 0.0
      %3372 = vmatprep.subr.mxu0 0.0
      %3373 = vmatpush2.msra.mxu0 0.0
      %3374 = vmatprep.subr.mxu0 0.0
      %3375 = vmatpush2.msra.mxu0 0.0
      %3376 = vmatprep.subr.mxu0 0.0
      %3377 = vmatpush2.msra.mxu0 0.0
      %3378 = vmatprep.subr.mxu0 0.0
      %3379 = vmatpush2.msra.mxu0 0.0
      %3380 = vmatprep.subr.mxu0 0.0
      %3381 = vmatpush2.msra.mxu0 0.0
      %3382 = vmatprep.subr.mxu0 0.0
      %3383 = vmatpush2.msra.mxu0 0.0
      %3384 = vmatprep.subr.mxu0 0.0
      %3385 = vmatpush2.msra.mxu0 0.0
      %3386 = vmatprep.subr.mxu0 0.0
      %3387 = vmatpush2.msra.mxu0 0.0
      %3388 = vmatprep.subr.mxu0 0.0
      %3389 = vmatpush2.msra.mxu0 0.0
      %3390 = vmatprep.subr.mxu0 0.0
      %3391 = vmatpush2.msra.mxu0 0.0
      %3392 = vmatprep.mubr.f32.mxu0 0.0
      %3393 = vmatmul.mubr.f32.gmra.mxu0 %v3245
      %v3394 = vpop.f32.mrf.mxu0
      %v3395 = vadd.f32 0.0, %v3394
      %v3396 = vpop.f32.mrf.mxu0
      %3397 = vmatprep.mubr.f32.mxu0 0.0
      %3398 = vmatmul.mubr.f32.gmra.mxu0 %v3248
      %v3399 = vpop.f32.mrf.mxu0
      %v3400 = vadd.f32 0.0, %v3399
      %v3401 = vpop.f32.mrf.mxu0
      %3402 = vmatprep.mubr.f32.mxu0 0.0
      %3403 = vmatmul.mubr.f32.gmra.mxu0 %v3251
      %v3404 = vpop.f32.mrf.mxu0
      %v3405 = vadd.f32 0.0, %v3404
      %v3406 = vpop.f32.mrf.mxu0
      %3407 = vmatprep.mubr.f32.mxu0 0.0
      %3408 = vmatmul.mubr.f32.gmra.mxu0 %v3254
      %v3409 = vpop.f32.mrf.mxu0
      %v3410 = vadd.f32 0.0, %v3409
      %v3411 = vpop.f32.mrf.mxu0
      %3412 = vmatprep.mubr.f32.mxu0 0.0
      %3413 = vmatmul.mubr.f32.gmra.mxu0 %v3257
      %v3414 = vpop.f32.mrf.mxu0
      %v3415 = vadd.f32 0.0, %v3414
      %v3416 = vpop.f32.mrf.mxu0
      %3417 = vmatprep.mubr.f32.mxu0 0.0
      %3418 = vmatmul.mubr.f32.gmra.mxu0 %v3260
      %v3419 = vpop.f32.mrf.mxu0
      %v3420 = vadd.f32 0.0, %v3419
      %v3421 = vpop.f32.mrf.mxu0
      %3422 = vmatprep.mubr.f32.mxu0 0.0
      %3423 = vmatmul.mubr.f32.gmra.mxu0 %v3263
      %v3424 = vpop.f32.mrf.mxu0
      %v3425 = vadd.f32 0.0, %v3424
      %v3426 = vpop.f32.mrf.mxu0
      %3427 = vmatprep.mubr.f32.mxu0 0.0
      %3428 = vmatmul.mubr.f32.gmra.mxu0 %v3266
      %v3429 = vpop.f32.mrf.mxu0
      %v3430 = vadd.f32 0.0, %v3429
      %v3431 = vpop.f32.mrf.mxu0
      %3432 = vmatprep.mubr.f32.mxu0 0.0
      %3433 = vmatmul.mubr.f32.gmra.mxu0 %v3269
      %v3434 = vpop.f32.mrf.mxu0
      %v3435 = vadd.f32 0.0, %v3434
      %v3436 = vpop.f32.mrf.mxu0
      %3437 = vmatprep.mubr.f32.mxu0 0.0
      %3438 = vmatmul.mubr.f32.gmra.mxu0 %v3272
      %v3439 = vpop.f32.mrf.mxu0
      %v3440 = vadd.f32 0.0, %v3439
      %v3441 = vpop.f32.mrf.mxu0
      %3442 = vmatprep.mubr.f32.mxu0 0.0
      %3443 = vmatmul.mubr.f32.gmra.mxu0 %v3275
      %v3444 = vpop.f32.mrf.mxu0
      %v3445 = vadd.f32 0.0, %v3444
      %v3446 = vpop.f32.mrf.mxu0
      %3447 = vmatprep.mubr.f32.mxu0 0.0
      %3448 = vmatmul.mubr.f32.gmra.mxu0 %v3278
      %v3449 = vpop.f32.mrf.mxu0
      %v3450 = vadd.f32 0.0, %v3449
      %v3451 = vpop.f32.mrf.mxu0
      %3452 = vmatprep.mubr.f32.mxu0 0.0
      %3453 = vmatmul.mubr.f32.gmra.mxu0 %v3281
      %v3454 = vpop.f32.mrf.mxu0
      %v3455 = vadd.f32 0.0, %v3454
      %v3456 = vpop.f32.mrf.mxu0
      %3457 = vmatprep.mubr.f32.mxu0 0.0
      %3458 = vmatmul.mubr.f32.gmra.mxu0 %v3284
      %v3459 = vpop.f32.mrf.mxu0
      %v3460 = vadd.f32 0.0, %v3459
      %v3461 = vpop.f32.mrf.mxu0
      %3462 = vmatprep.mubr.f32.mxu0 0.0
      %3463 = vmatmul.mubr.f32.gmra.mxu0 %v3287
      %v3464 = vpop.f32.mrf.mxu0
      %v3465 = vadd.f32 0.0, %v3464
      %v3466 = vpop.f32.mrf.mxu0
      %3467 = vmatprep.mubr.f32.mxu0 0.0
      %3468 = vmatmul.mubr.f32.gmra.mxu0 %v3290
      %v3469 = vpop.f32.mrf.mxu0
      %v3470 = vadd.f32 0.0, %v3469
      %v3471 = vpop.f32.mrf.mxu0
      %3472 = vmatprep.mubr.f32.mxu0 0.0
      %3473 = vmatmul.mubr.f32.gmra.mxu0 %v3293
      %v3474 = vpop.f32.mrf.mxu0
      %v3475 = vadd.f32 0.0, %v3474
      %v3476 = vpop.f32.mrf.mxu0
      %3477 = vmatprep.mubr.f32.mxu0 0.0
      %3478 = vmatmul.mubr.f32.gmra.mxu0 %v3296
      %v3479 = vpop.f32.mrf.mxu0
      %v3480 = vadd.f32 0.0, %v3479
      %v3481 = vpop.f32.mrf.mxu0
      %3482 = vmatprep.mubr.f32.mxu0 0.0
      %3483 = vmatmul.mubr.f32.gmra.mxu0 %v3299
      %v3484 = vpop.f32.mrf.mxu0
      %v3485 = vadd.f32 0.0, %v3484
      %v3486 = vpop.f32.mrf.mxu0
      %3487 = vmatprep.mubr.f32.mxu0 0.0
      %3488 = vmatmul.mubr.f32.gmra.mxu0 %v3302
      %v3489 = vpop.f32.mrf.mxu0
      %v3490 = vadd.f32 0.0, %v3489
      %v3491 = vpop.f32.mrf.mxu0
      %3492 = vmatprep.mubr.f32.mxu0 0.0
      %3493 = vmatmul.mubr.f32.gmra.mxu0 %v3305
      %v3494 = vpop.f32.mrf.mxu0
      %v3495 = vadd.f32 0.0, %v3494
      %v3496 = vpop.f32.mrf.mxu0
      %3497 = vmatprep.mubr.f32.mxu0 0.0
      %3498 = vmatmul.mubr.f32.gmra.mxu0 %v3308
      %v3499 = vpop.f32.mrf.mxu0
      %v3500 = vadd.f32 0.0, %v3499
      %v3501 = vpop.f32.mrf.mxu0
      %3502 = vmatprep.mubr.f32.mxu0 0.0
      %3503 = vmatmul.mubr.f32.gmra.mxu0 %v3311
      %v3504 = vpop.f32.mrf.mxu0
      %v3505 = vadd.f32 0.0, %v3504
      %v3506 = vpop.f32.mrf.mxu0
      %3507 = vmatprep.mubr.f32.mxu0 0.0
      %3508 = vmatmul.mubr.f32.gmra.mxu0 %v3314
      %v3509 = vpop.f32.mrf.mxu0
      %v3510 = vadd.f32 0.0, %v3509
      %v3511 = vpop.f32.mrf.mxu0
      %3512 = vmatprep.mubr.f32.mxu0 0.0
      %3513 = vmatmul.mubr.f32.gmra.mxu0 %v3317
      %v3514 = vpop.f32.mrf.mxu0
      %v3515 = vadd.f32 0.0, %v3514
      %v3516 = vpop.f32.mrf.mxu0
      %3517 = vmatprep.mubr.f32.mxu0 0.0
      %3518 = vmatmul.mubr.f32.gmra.mxu0 %v3320
      %v3519 = vpop.f32.mrf.mxu0
      %v3520 = vadd.f32 0.0, %v3519
      %v3521 = vpop.f32.mrf.mxu0
      %3522 = vmatprep.mubr.f32.mxu0 0.0
      %3523 = vmatmul.mubr.f32.gmra.mxu0 %v3323
      %v3524 = vpop.f32.mrf.mxu0
      %v3525 = vadd.f32 0.0, %v3524
      %v3526 = vpop.f32.mrf.mxu0
      %3527 = vmatprep.mubr.f32.mxu0 0.0
      %3528 = vmatmul.mubr.f32.gmra.mxu0 %v3326
      %v3529 = vpop.f32.mrf.mxu0
      %v3530 = vadd.f32 0.0, %v3529
      %v3531 = vpop.f32.mrf.mxu0
      %3532 = vdwg.mxu0
      %v3533 = vld [vmem:[#allocation2 + $0x12] sm:$0xff]
      %v3534 = vld [vmem:[#allocation2 + $0x1a] sm:$0xff]
      %v3535 = vld [vmem:[#allocation2 + $0x22] sm:$0xff]
      %v3536 = vld [vmem:[#allocation2 + $0x2a] sm:$0xff]
      %v3537 = vld [vmem:[#allocation2 + $0x32] sm:$0xff]
      %v3538 = vld [vmem:[#allocation2 + $0x3a] sm:$0xff]
      %v3539 = vld [vmem:[#allocation2 + $0x42] sm:$0xff]
      %v3540 = vld [vmem:[#allocation2 + $0x4a] sm:$0xff]
      %v3541 = vld [vmem:[#allocation2 + $0x52] sm:$0xff]
      %v3542 = vld [vmem:[#allocation2 + $0x5a] sm:$0xff]
      %v3543 = vld [vmem:[#allocation2 + $0x62] sm:$0xff]
      %v3544 = vld [vmem:[#allocation2 + $0x6a] sm:$0xff]
      %v3545 = vld [vmem:[#allocation2 + $0x72] sm:$0xff]
      %v3546 = vld [vmem:[#allocation2 + $0x7a] sm:$0xff]
      %v3547 = vld [vmem:[#allocation2 + $0x82] sm:$0xff]
      %v3548 = vld [vmem:[#allocation2 + $0x8a] sm:$0xff]
      %v3549 = vld [vmem:[#allocation2 + $0x92] sm:$0xff]
      %v3550 = vld [vmem:[#allocation2 + $0x9a] sm:$0xff]
      %v3551 = vld [vmem:[#allocation2 + $0xa2] sm:$0xff]
      %v3552 = vld [vmem:[#allocation2 + $0xaa] sm:$0xff]
      %v3553 = vld [vmem:[#allocation2 + $0xb2] sm:$0xff]
      %v3554 = vld [vmem:[#allocation2 + $0xba] sm:$0xff]
      %v3555 = vld [vmem:[#allocation2 + $0xc2] sm:$0xff]
      %v3556 = vld [vmem:[#allocation2 + $0xca] sm:$0xff]
      %v3557 = vld [vmem:[#allocation2 + $0xd2] sm:$0xff]
      %v3558 = vld [vmem:[#allocation2 + $0xda] sm:$0xff]
      %v3559 = vld [vmem:[#allocation2 + $0xe2] sm:$0xff]
      %v3560 = vld [vmem:[#allocation2 + $0xea] sm:$0xff]
      %v3561 = vadd.f32 %v3533, %v3395
      %v3562 = vadd.f32 %v3534, %v3400
      %v3563 = vadd.f32 %v3535, %v3405
      %v3564 = vadd.f32 %v3536, %v3410
      %v3565 = vadd.f32 %v3537, %v3415
      %v3566 = vadd.f32 %v3538, %v3420
      %v3567 = vadd.f32 %v3539, %v3425
      %v3568 = vadd.f32 %v3540, %v3430
      %v3569 = vadd.f32 %v3541, %v3435
      %v3570 = vadd.f32 %v3542, %v3440
      %v3571 = vadd.f32 %v3543, %v3445
      %v3572 = vadd.f32 %v3544, %v3450
      %v3573 = vadd.f32 %v3545, %v3455
      %v3574 = vadd.f32 %v3546, %v3460
      %v3575 = vadd.f32 %v3547, %v3465
      %v3576 = vadd.f32 %v3548, %v3470
      %v3577 = vadd.f32 %v3549, %v3475
      %v3578 = vadd.f32 %v3550, %v3480
      %v3579 = vadd.f32 %v3551, %v3485
      %v3580 = vadd.f32 %v3552, %v3490
      %v3581 = vadd.f32 %v3553, %v3495
      %v3582 = vadd.f32 %v3554, %v3500
      %v3583 = vadd.f32 %v3555, %v3505
      %v3584 = vadd.f32 %v3556, %v3510
      %v3585 = vadd.f32 %v3557, %v3515
      %v3586 = vadd.f32 %v3558, %v3520
      %v3587 = vadd.f32 %v3559, %v3525
      %v3588 = vadd.f32 %v3560, %v3530
      %3589 = vst.msk [vmem:[#allocation2 + $0x12] sm:$0xff] %vm292, %v3561
      %3590 = vst.msk [vmem:[#allocation2 + $0x1a] sm:$0xff] %vm292, %v3562
      %3591 = vst.msk [vmem:[#allocation2 + $0x22] sm:$0xff] %vm292, %v3563
      %3592 = vst.msk [vmem:[#allocation2 + $0x2a] sm:$0xff] %vm292, %v3564
      %3593 = vst.msk [vmem:[#allocation2 + $0x32] sm:$0xff] %vm292, %v3565
      %3594 = vst.msk [vmem:[#allocation2 + $0x3a] sm:$0xff] %vm292, %v3566
      %3595 = vst.msk [vmem:[#allocation2 + $0x42] sm:$0xff] %vm292, %v3567
      %3596 = vst.msk [vmem:[#allocation2 + $0x4a] sm:$0xff] %vm292, %v3568
      %3597 = vst.msk [vmem:[#allocation2 + $0x52] sm:$0xff] %vm292, %v3569
      %3598 = vst.msk [vmem:[#allocation2 + $0x5a] sm:$0xff] %vm292, %v3570
      %3599 = vst.msk [vmem:[#allocation2 + $0x62] sm:$0xff] %vm292, %v3571
      %3600 = vst.msk [vmem:[#allocation2 + $0x6a] sm:$0xff] %vm292, %v3572
      %3601 = vst.msk [vmem:[#allocation2 + $0x72] sm:$0xff] %vm292, %v3573
      %3602 = vst.msk [vmem:[#allocation2 + $0x7a] sm:$0xff] %vm292, %v3574
      %3603 = vst.msk [vmem:[#allocation2 + $0x82] sm:$0xff] %vm292, %v3575
      %3604 = vst.msk [vmem:[#allocation2 + $0x8a] sm:$0xff] %vm292, %v3576
      %3605 = vst.msk [vmem:[#allocation2 + $0x92] sm:$0xff] %vm292, %v3577
      %3606 = vst.msk [vmem:[#allocation2 + $0x9a] sm:$0xff] %vm292, %v3578
      %3607 = vst.msk [vmem:[#allocation2 + $0xa2] sm:$0xff] %vm292, %v3579
      %3608 = vst.msk [vmem:[#allocation2 + $0xaa] sm:$0xff] %vm292, %v3580
      %3609 = vst.msk [vmem:[#allocation2 + $0xb2] sm:$0xff] %vm292, %v3581
      %3610 = vst.msk [vmem:[#allocation2 + $0xba] sm:$0xff] %vm292, %v3582
      %3611 = vst.msk [vmem:[#allocation2 + $0xc2] sm:$0xff] %vm292, %v3583
      %3612 = vst.msk [vmem:[#allocation2 + $0xca] sm:$0xff] %vm292, %v3584
      %3613 = vst.msk [vmem:[#allocation2 + $0xd2] sm:$0xff] %vm292, %v3585
      %3614 = vst.msk [vmem:[#allocation2 + $0xda] sm:$0xff] %vm292, %v3586
      %3615 = vst.msk [vmem:[#allocation2 + $0xe2] sm:$0xff] %vm292, %v3587
      %3616 = vst.msk [vmem:[#allocation2 + $0xea] sm:$0xff] %vm292, %v3588
      %v3617 = vld [vmem:[%s1] sm:$0xff]
      %v3618 = vld [vmem:[%s1 + $0x8] sm:$0xff]
      %v3619 = vld [vmem:[%s1 + $0x10] sm:$0xff]
      %v3620 = vld [vmem:[%s1 + $0x18] sm:$0xff]
      %v3621 = vld [vmem:[%s1 + $0x20] sm:$0xff]
      %v3622 = vld [vmem:[%s1 + $0x28] sm:$0xff]
      %v3623 = vld [vmem:[%s1 + $0x30] sm:$0xff]
      %v3624 = vld [vmem:[%s1 + $0x38] sm:$0xff]
      %v3626 = vsel %vm372, %v3618, 0
      %v3629 = vsel %vm372, %v3620, 0
      %v3632 = vsel %vm372, %v3622, 0
      %v3635 = vsel %vm372, %v3624, 0
      %3637 = vmatprep.subr.mxu0 0.0
      %3638 = vmatpush1.msra.mxu0 %v278
      %3639 = vmatprep.subr.mxu0 0.0
      %3640 = vmatpush1.msra.mxu0 %v277
      %3641 = vmatprep.subr.mxu0 0.0
      %3642 = vmatpush1.msra.mxu0 %v276
      %3643 = vmatprep.subr.mxu0 0.0
      %3644 = vmatpush1.msra.mxu0 %v275
      %3645 = vmatprep.subr.mxu0 0.0
      %3646 = vmatpush1.msra.mxu0 %v274
      %3647 = vmatprep.subr.mxu0 0.0
      %3648 = vmatpush1.msra.mxu0 %v273
      %3649 = vmatprep.subr.mxu0 0.0
      %3650 = vmatpush1.msra.mxu0 %v272
      %3651 = vmatprep.subr.mxu0 0.0
      %3652 = vmatpush1.msra.mxu0 %v271
      %3653 = vmatprep.subr.mxu0 0.0
      %3654 = vmatpush1.msra.mxu0 %v270
      %3655 = vmatprep.subr.mxu0 0.0
      %3656 = vmatpush1.msra.mxu0 %v269
      %3657 = vmatprep.subr.mxu0 0.0
      %3658 = vmatpush1.msra.mxu0 %v268
      %3659 = vmatprep.subr.mxu0 0.0
      %3660 = vmatpush1.msra.mxu0 %v267
      %3661 = vmatprep.subr.mxu0 0.0
      %3662 = vmatpush1.msra.mxu0 %v266
      %3663 = vmatprep.subr.mxu0 0.0
      %3664 = vmatpush1.msra.mxu0 %v265
      %3665 = vmatprep.subr.mxu0 0.0
      %3666 = vmatpush1.msra.mxu0 %v264
      %3667 = vmatprep.subr.mxu0 0.0
      %3668 = vmatpush1.msra.mxu0 %v263
      %3669 = vmatprep.subr.mxu0 0.0
      %3670 = vmatpush2.msra.mxu0 0.0
      %3671 = vmatprep.subr.mxu0 0.0
      %3672 = vmatpush2.msra.mxu0 0.0
      %3673 = vmatprep.subr.mxu0 0.0
      %3674 = vmatpush2.msra.mxu0 0.0
      %3675 = vmatprep.subr.mxu0 0.0
      %3676 = vmatpush2.msra.mxu0 0.0
      %3677 = vmatprep.subr.mxu0 0.0
      %3678 = vmatpush2.msra.mxu0 %v290
      %3679 = vmatprep.subr.mxu0 0.0
      %3680 = vmatpush2.msra.mxu0 %v289
      %3681 = vmatprep.subr.mxu0 0.0
      %3682 = vmatpush2.msra.mxu0 %v288
      %3683 = vmatprep.subr.mxu0 0.0
      %3684 = vmatpush2.msra.mxu0 %v287
      %3685 = vmatprep.subr.mxu0 0.0
      %3686 = vmatpush2.msra.mxu0 %v286
      %3687 = vmatprep.subr.mxu0 0.0
      %3688 = vmatpush2.msra.mxu0 %v285
      %3689 = vmatprep.subr.mxu0 0.0
      %3690 = vmatpush2.msra.mxu0 %v284
      %3691 = vmatprep.subr.mxu0 0.0
      %3692 = vmatpush2.msra.mxu0 %v283
      %3693 = vmatprep.subr.mxu0 0.0
      %3694 = vmatpush2.msra.mxu0 %v282
      %3695 = vmatprep.subr.mxu0 0.0
      %3696 = vmatpush2.msra.mxu0 %v281
      %3697 = vmatprep.subr.mxu0 0.0
      %3698 = vmatpush2.msra.mxu0 %v280
      %3699 = vmatprep.subr.mxu0 0.0
      %3700 = vmatpush2.msra.mxu0 %v279
      %3701 = vmatprep.mubr.f32.mxu0 %v3626
      %3702 = vmatmul.mubr.f32.gmra.mxu0 %v3617
      %v3703 = vpop.f32.mrf.mxu0
      %v3704 = vadd.f32 0.0, %v3703
      %v3705 = vpop.f32.mrf.mxu0
      %3706 = vmatprep.mubr.f32.mxu0 %v3629
      %3707 = vmatmul.mubr.f32.gmra.mxu0 %v3619
      %v3708 = vpop.f32.mrf.mxu0
      %v3709 = vadd.f32 0.0, %v3708
      %v3710 = vpop.f32.mrf.mxu0
      %3711 = vmatprep.mubr.f32.mxu0 %v3632
      %3712 = vmatmul.mubr.f32.gmra.mxu0 %v3621
      %v3713 = vpop.f32.mrf.mxu0
      %v3714 = vadd.f32 0.0, %v3713
      %v3715 = vpop.f32.mrf.mxu0
      %3716 = vmatprep.mubr.f32.mxu0 %v3635
      %3717 = vmatmul.mubr.f32.gmra.mxu0 %v3623
      %v3718 = vpop.f32.mrf.mxu0
      %v3719 = vadd.f32 0.0, %v3718
      %v3720 = vpop.f32.mrf.mxu0
      %3721 = vdwg.mxu0
      %v3722 = vld [vmem:[%s2] sm:$0xff]
      %v3723 = vld [vmem:[%s2 + $0x8] sm:$0xff]
      %v3724 = vld [vmem:[%s2 + $0x10] sm:$0xff]
      %v3725 = vld [vmem:[%s2 + $0x18] sm:$0xff]
      %v3726 = vld [vmem:[%s2 + $0x20] sm:$0xff]
      %v3727 = vld [vmem:[%s2 + $0x28] sm:$0xff]
      %v3728 = vld [vmem:[%s2 + $0x30] sm:$0xff]
      %v3729 = vld [vmem:[%s2 + $0x38] sm:$0xff]
      %v3730 = vld [vmem:[%s2 + $0x40] sm:$0xff]
      %v3731 = vld [vmem:[%s2 + $0x48] sm:$0xff]
      %v3732 = vld [vmem:[%s2 + $0x50] sm:$0xff]
      %v3733 = vld [vmem:[%s2 + $0x58] sm:$0xff]
      %v3734 = vld [vmem:[%s2 + $0x60] sm:$0xff]
      %v3735 = vld [vmem:[%s2 + $0x68] sm:$0xff]
      %v3736 = vld [vmem:[%s2 + $0x70] sm:$0xff]
      %v3737 = vld [vmem:[%s2 + $0x78] sm:$0xff]
      %v3738 = vld [vmem:[%s2 + $0x80] sm:$0xff]
      %v3739 = vld [vmem:[%s2 + $0x88] sm:$0xff]
      %v3740 = vld [vmem:[%s2 + $0x90] sm:$0xff]
      %v3741 = vld [vmem:[%s2 + $0x98] sm:$0xff]
      %v3742 = vld [vmem:[%s2 + $0xa0] sm:$0xff]
      %v3743 = vld [vmem:[%s2 + $0xa8] sm:$0xff]
      %v3744 = vld [vmem:[%s2 + $0xb0] sm:$0xff]
      %v3745 = vld [vmem:[%s2 + $0xb8] sm:$0xff]
      %v3746 = vld [vmem:[%s2 + $0xc0] sm:$0xff]
      %v3747 = vld [vmem:[%s2 + $0xc8] sm:$0xff]
      %v3748 = vld [vmem:[%s2 + $0xd0] sm:$0xff]
      %v3749 = vld [vmem:[%s2 + $0xd8] sm:$0xff]
      %v3751 = vsel %vm498, %v3722, 0
      %v3754 = vsel %vm498, %v3723, 0
      %v3757 = vsel %vm498, %v3724, 0
      %v3760 = vsel %vm498, %v3725, 0
      %v3763 = vsel %vm498, %v3726, 0
      %v3766 = vsel %vm498, %v3727, 0
      %v3769 = vsel %vm498, %v3728, 0
      %v3772 = vsel %vm498, %v3729, 0
      %v3775 = vsel %vm498, %v3730, 0
      %v3778 = vsel %vm498, %v3731, 0
      %v3781 = vsel %vm498, %v3732, 0
      %v3784 = vsel %vm498, %v3733, 0
      %v3787 = vsel %vm498, %v3734, 0
      %v3790 = vsel %vm498, %v3735, 0
      %v3793 = vsel %vm498, %v3736, 0
      %v3796 = vsel %vm498, %v3737, 0
      %v3799 = vsel %vm498, %v3738, 0
      %v3802 = vsel %vm498, %v3739, 0
      %v3805 = vsel %vm498, %v3740, 0
      %v3808 = vsel %vm498, %v3741, 0
      %v3811 = vsel %vm498, %v3742, 0
      %v3814 = vsel %vm498, %v3743, 0
      %v3817 = vsel %vm498, %v3744, 0
      %v3820 = vsel %vm498, %v3745, 0
      %v3823 = vsel %vm498, %v3746, 0
      %v3826 = vsel %vm498, %v3747, 0
      %v3829 = vsel %vm498, %v3748, 0
      %v3832 = vsel %vm498, %v3749, 0
      %3834 = vmatprep.subr.mxu0 0.0
      %3835 = vmatpush1.msra.mxu0 0.0
      %3836 = vmatprep.subr.mxu0 0.0
      %3837 = vmatpush1.msra.mxu0 0.0
      %3838 = vmatprep.subr.mxu0 0.0
      %3839 = vmatpush1.msra.mxu0 0.0
      %3840 = vmatprep.subr.mxu0 0.0
      %3841 = vmatpush1.msra.mxu0 0.0
      %3842 = vmatprep.subr.mxu0 0.0
      %3843 = vmatpush1.msra.mxu0 0.0
      %3844 = vmatprep.subr.mxu0 0.0
      %3845 = vmatpush1.msra.mxu0 0.0
      %3846 = vmatprep.subr.mxu0 0.0
      %3847 = vmatpush1.msra.mxu0 0.0
      %3848 = vmatprep.subr.mxu0 0.0
      %3849 = vmatpush1.msra.mxu0 0.0
      %3850 = vmatprep.subr.mxu0 0.0
      %3851 = vmatpush1.msra.mxu0 0.0
      %3852 = vmatprep.subr.mxu0 0.0
      %3853 = vmatpush1.msra.mxu0 0.0
      %3854 = vmatprep.subr.mxu0 0.0
      %3855 = vmatpush1.msra.mxu0 0.0
      %3856 = vmatprep.subr.mxu0 0.0
      %3857 = vmatpush1.msra.mxu0 0.0
      %3858 = vmatprep.subr.mxu0 0.0
      %3859 = vmatpush1.msra.mxu0 %v3719
      %3860 = vmatprep.subr.mxu0 0.0
      %3861 = vmatpush1.msra.mxu0 %v3714
      %3862 = vmatprep.subr.mxu0 0.0
      %3863 = vmatpush1.msra.mxu0 %v3709
      %3864 = vmatprep.subr.mxu0 0.0
      %3865 = vmatpush1.msra.mxu0 %v3704
      %3866 = vmatprep.subr.mxu0 0.0
      %3867 = vmatpush2.msra.mxu0 0.0
      %3868 = vmatprep.subr.mxu0 0.0
      %3869 = vmatpush2.msra.mxu0 0.0
      %3870 = vmatprep.subr.mxu0 0.0
      %3871 = vmatpush2.msra.mxu0 0.0
      %3872 = vmatprep.subr.mxu0 0.0
      %3873 = vmatpush2.msra.mxu0 0.0
      %3874 = vmatprep.subr.mxu0 0.0
      %3875 = vmatpush2.msra.mxu0 0.0
      %3876 = vmatprep.subr.mxu0 0.0
      %3877 = vmatpush2.msra.mxu0 0.0
      %3878 = vmatprep.subr.mxu0 0.0
      %3879 = vmatpush2.msra.mxu0 0.0
      %3880 = vmatprep.subr.mxu0 0.0
      %3881 = vmatpush2.msra.mxu0 0.0
      %3882 = vmatprep.subr.mxu0 0.0
      %3883 = vmatpush2.msra.mxu0 0.0
      %3884 = vmatprep.subr.mxu0 0.0
      %3885 = vmatpush2.msra.mxu0 0.0
      %3886 = vmatprep.subr.mxu0 0.0
      %3887 = vmatpush2.msra.mxu0 0.0
      %3888 = vmatprep.subr.mxu0 0.0
      %3889 = vmatpush2.msra.mxu0 0.0
      %3890 = vmatprep.subr.mxu0 0.0
      %3891 = vmatpush2.msra.mxu0 0.0
      %3892 = vmatprep.subr.mxu0 0.0
      %3893 = vmatpush2.msra.mxu0 0.0
      %3894 = vmatprep.subr.mxu0 0.0
      %3895 = vmatpush2.msra.mxu0 0.0
      %3896 = vmatprep.subr.mxu0 0.0
      %3897 = vmatpush2.msra.mxu0 0.0
      %3898 = vmatprep.mubr.f32.mxu0 0.0
      %3899 = vmatmul.mubr.f32.gmra.mxu0 %v3751
      %v3900 = vpop.f32.mrf.mxu0
      %v3901 = vadd.f32 0.0, %v3900
      %v3902 = vpop.f32.mrf.mxu0
      %3903 = vmatprep.mubr.f32.mxu0 0.0
      %3904 = vmatmul.mubr.f32.gmra.mxu0 %v3754
      %v3905 = vpop.f32.mrf.mxu0
      %v3906 = vadd.f32 0.0, %v3905
      %v3907 = vpop.f32.mrf.mxu0
      %3908 = vmatprep.mubr.f32.mxu0 0.0
      %3909 = vmatmul.mubr.f32.gmra.mxu0 %v3757
      %v3910 = vpop.f32.mrf.mxu0
      %v3911 = vadd.f32 0.0, %v3910
      %v3912 = vpop.f32.mrf.mxu0
      %3913 = vmatprep.mubr.f32.mxu0 0.0
      %3914 = vmatmul.mubr.f32.gmra.mxu0 %v3760
      %v3915 = vpop.f32.mrf.mxu0
      %v3916 = vadd.f32 0.0, %v3915
      %v3917 = vpop.f32.mrf.mxu0
      %3918 = vmatprep.mubr.f32.mxu0 0.0
      %3919 = vmatmul.mubr.f32.gmra.mxu0 %v3763
      %v3920 = vpop.f32.mrf.mxu0
      %v3921 = vadd.f32 0.0, %v3920
      %v3922 = vpop.f32.mrf.mxu0
      %3923 = vmatprep.mubr.f32.mxu0 0.0
      %3924 = vmatmul.mubr.f32.gmra.mxu0 %v3766
      %v3925 = vpop.f32.mrf.mxu0
      %v3926 = vadd.f32 0.0, %v3925
      %v3927 = vpop.f32.mrf.mxu0
      %3928 = vmatprep.mubr.f32.mxu0 0.0
      %3929 = vmatmul.mubr.f32.gmra.mxu0 %v3769
      %v3930 = vpop.f32.mrf.mxu0
      %v3931 = vadd.f32 0.0, %v3930
      %v3932 = vpop.f32.mrf.mxu0
      %3933 = vmatprep.mubr.f32.mxu0 0.0
      %3934 = vmatmul.mubr.f32.gmra.mxu0 %v3772
      %v3935 = vpop.f32.mrf.mxu0
      %v3936 = vadd.f32 0.0, %v3935
      %v3937 = vpop.f32.mrf.mxu0
      %3938 = vmatprep.mubr.f32.mxu0 0.0
      %3939 = vmatmul.mubr.f32.gmra.mxu0 %v3775
      %v3940 = vpop.f32.mrf.mxu0
      %v3941 = vadd.f32 0.0, %v3940
      %v3942 = vpop.f32.mrf.mxu0
      %3943 = vmatprep.mubr.f32.mxu0 0.0
      %3944 = vmatmul.mubr.f32.gmra.mxu0 %v3778
      %v3945 = vpop.f32.mrf.mxu0
      %v3946 = vadd.f32 0.0, %v3945
      %v3947 = vpop.f32.mrf.mxu0
      %3948 = vmatprep.mubr.f32.mxu0 0.0
      %3949 = vmatmul.mubr.f32.gmra.mxu0 %v3781
      %v3950 = vpop.f32.mrf.mxu0
      %v3951 = vadd.f32 0.0, %v3950
      %v3952 = vpop.f32.mrf.mxu0
      %3953 = vmatprep.mubr.f32.mxu0 0.0
      %3954 = vmatmul.mubr.f32.gmra.mxu0 %v3784
      %v3955 = vpop.f32.mrf.mxu0
      %v3956 = vadd.f32 0.0, %v3955
      %v3957 = vpop.f32.mrf.mxu0
      %3958 = vmatprep.mubr.f32.mxu0 0.0
      %3959 = vmatmul.mubr.f32.gmra.mxu0 %v3787
      %v3960 = vpop.f32.mrf.mxu0
      %v3961 = vadd.f32 0.0, %v3960
      %v3962 = vpop.f32.mrf.mxu0
      %3963 = vmatprep.mubr.f32.mxu0 0.0
      %3964 = vmatmul.mubr.f32.gmra.mxu0 %v3790
      %v3965 = vpop.f32.mrf.mxu0
      %v3966 = vadd.f32 0.0, %v3965
      %v3967 = vpop.f32.mrf.mxu0
      %3968 = vmatprep.mubr.f32.mxu0 0.0
      %3969 = vmatmul.mubr.f32.gmra.mxu0 %v3793
      %v3970 = vpop.f32.mrf.mxu0
      %v3971 = vadd.f32 0.0, %v3970
      %v3972 = vpop.f32.mrf.mxu0
      %3973 = vmatprep.mubr.f32.mxu0 0.0
      %3974 = vmatmul.mubr.f32.gmra.mxu0 %v3796
      %v3975 = vpop.f32.mrf.mxu0
      %v3976 = vadd.f32 0.0, %v3975
      %v3977 = vpop.f32.mrf.mxu0
      %3978 = vmatprep.mubr.f32.mxu0 0.0
      %3979 = vmatmul.mubr.f32.gmra.mxu0 %v3799
      %v3980 = vpop.f32.mrf.mxu0
      %v3981 = vadd.f32 0.0, %v3980
      %v3982 = vpop.f32.mrf.mxu0
      %3983 = vmatprep.mubr.f32.mxu0 0.0
      %3984 = vmatmul.mubr.f32.gmra.mxu0 %v3802
      %v3985 = vpop.f32.mrf.mxu0
      %v3986 = vadd.f32 0.0, %v3985
      %v3987 = vpop.f32.mrf.mxu0
      %3988 = vmatprep.mubr.f32.mxu0 0.0
      %3989 = vmatmul.mubr.f32.gmra.mxu0 %v3805
      %v3990 = vpop.f32.mrf.mxu0
      %v3991 = vadd.f32 0.0, %v3990
      %v3992 = vpop.f32.mrf.mxu0
      %3993 = vmatprep.mubr.f32.mxu0 0.0
      %3994 = vmatmul.mubr.f32.gmra.mxu0 %v3808
      %v3995 = vpop.f32.mrf.mxu0
      %v3996 = vadd.f32 0.0, %v3995
      %v3997 = vpop.f32.mrf.mxu0
      %3998 = vmatprep.mubr.f32.mxu0 0.0
      %3999 = vmatmul.mubr.f32.gmra.mxu0 %v3811
      %v4000 = vpop.f32.mrf.mxu0
      %v4001 = vadd.f32 0.0, %v4000
      %v4002 = vpop.f32.mrf.mxu0
      %4003 = vmatprep.mubr.f32.mxu0 0.0
      %4004 = vmatmul.mubr.f32.gmra.mxu0 %v3814
      %v4005 = vpop.f32.mrf.mxu0
      %v4006 = vadd.f32 0.0, %v4005
      %v4007 = vpop.f32.mrf.mxu0
      %4008 = vmatprep.mubr.f32.mxu0 0.0
      %4009 = vmatmul.mubr.f32.gmra.mxu0 %v3817
      %v4010 = vpop.f32.mrf.mxu0
      %v4011 = vadd.f32 0.0, %v4010
      %v4012 = vpop.f32.mrf.mxu0
      %4013 = vmatprep.mubr.f32.mxu0 0.0
      %4014 = vmatmul.mubr.f32.gmra.mxu0 %v3820
      %v4015 = vpop.f32.mrf.mxu0
      %v4016 = vadd.f32 0.0, %v4015
      %v4017 = vpop.f32.mrf.mxu0
      %4018 = vmatprep.mubr.f32.mxu0 0.0
      %4019 = vmatmul.mubr.f32.gmra.mxu0 %v3823
      %v4020 = vpop.f32.mrf.mxu0
      %v4021 = vadd.f32 0.0, %v4020
      %v4022 = vpop.f32.mrf.mxu0
      %4023 = vmatprep.mubr.f32.mxu0 0.0
      %4024 = vmatmul.mubr.f32.gmra.mxu0 %v3826
      %v4025 = vpop.f32.mrf.mxu0
      %v4026 = vadd.f32 0.0, %v4025
      %v4027 = vpop.f32.mrf.mxu0
      %4028 = vmatprep.mubr.f32.mxu0 0.0
      %4029 = vmatmul.mubr.f32.gmra.mxu0 %v3829
      %v4030 = vpop.f32.mrf.mxu0
      %v4031 = vadd.f32 0.0, %v4030
      %v4032 = vpop.f32.mrf.mxu0
      %4033 = vmatprep.mubr.f32.mxu0 0.0
      %4034 = vmatmul.mubr.f32.gmra.mxu0 %v3832
      %v4035 = vpop.f32.mrf.mxu0
      %v4036 = vadd.f32 0.0, %v4035
      %v4037 = vpop.f32.mrf.mxu0
      %4038 = vdwg.mxu0
      %v4039 = vld [vmem:[#allocation2 + $0x20] sm:$0xff]
      %v4040 = vld [vmem:[#allocation2 + $0x28] sm:$0xff]
      %v4041 = vld [vmem:[#allocation2 + $0x30] sm:$0xff]
      %v4042 = vld [vmem:[#allocation2 + $0x38] sm:$0xff]
      %v4043 = vld [vmem:[#allocation2 + $0x40] sm:$0xff]
      %v4044 = vld [vmem:[#allocation2 + $0x48] sm:$0xff]
      %v4045 = vld [vmem:[#allocation2 + $0x50] sm:$0xff]
      %v4046 = vld [vmem:[#allocation2 + $0x58] sm:$0xff]
      %v4047 = vld [vmem:[#allocation2 + $0x60] sm:$0xff]
      %v4048 = vld [vmem:[#allocation2 + $0x68] sm:$0xff]
      %v4049 = vld [vmem:[#allocation2 + $0x70] sm:$0xff]
      %v4050 = vld [vmem:[#allocation2 + $0x78] sm:$0xff]
      %v4051 = vld [vmem:[#allocation2 + $0x80] sm:$0xff]
      %v4052 = vld [vmem:[#allocation2 + $0x88] sm:$0xff]
      %v4053 = vld [vmem:[#allocation2 + $0x90] sm:$0xff]
      %v4054 = vld [vmem:[#allocation2 + $0x98] sm:$0xff]
      %v4055 = vld [vmem:[#allocation2 + $0xa0] sm:$0xff]
      %v4056 = vld [vmem:[#allocation2 + $0xa8] sm:$0xff]
      %v4057 = vld [vmem:[#allocation2 + $0xb0] sm:$0xff]
      %v4058 = vld [vmem:[#allocation2 + $0xb8] sm:$0xff]
      %v4059 = vld [vmem:[#allocation2 + $0xc0] sm:$0xff]
      %v4060 = vld [vmem:[#allocation2 + $0xc8] sm:$0xff]
      %v4061 = vld [vmem:[#allocation2 + $0xd0] sm:$0xff]
      %v4062 = vld [vmem:[#allocation2 + $0xd8] sm:$0xff]
      %v4063 = vld [vmem:[#allocation2 + $0xe0] sm:$0xff]
      %v4064 = vld [vmem:[#allocation2 + $0xe8] sm:$0xff]
      %v4065 = vld [vmem:[#allocation2 + $0xf0] sm:$0xff]
      %v4066 = vld [vmem:[#allocation2 + $0xf8] sm:$0xff]
      %v4067 = vadd.f32 %v4039, %v3901
      %v4068 = vadd.f32 %v4040, %v3906
      %v4069 = vadd.f32 %v4041, %v3911
      %v4070 = vadd.f32 %v4042, %v3916
      %v4071 = vadd.f32 %v4043, %v3921
      %v4072 = vadd.f32 %v4044, %v3926
      %v4073 = vadd.f32 %v4045, %v3931
      %v4074 = vadd.f32 %v4046, %v3936
      %v4075 = vadd.f32 %v4047, %v3941
      %v4076 = vadd.f32 %v4048, %v3946
      %v4077 = vadd.f32 %v4049, %v3951
      %v4078 = vadd.f32 %v4050, %v3956
      %v4079 = vadd.f32 %v4051, %v3961
      %v4080 = vadd.f32 %v4052, %v3966
      %v4081 = vadd.f32 %v4053, %v3971
      %v4082 = vadd.f32 %v4054, %v3976
      %v4083 = vadd.f32 %v4055, %v3981
      %v4084 = vadd.f32 %v4056, %v3986
      %v4085 = vadd.f32 %v4057, %v3991
      %v4086 = vadd.f32 %v4058, %v3996
      %v4087 = vadd.f32 %v4059, %v4001
      %v4088 = vadd.f32 %v4060, %v4006
      %v4089 = vadd.f32 %v4061, %v4011
      %v4090 = vadd.f32 %v4062, %v4016
      %v4091 = vadd.f32 %v4063, %v4021
      %v4092 = vadd.f32 %v4064, %v4026
      %v4093 = vadd.f32 %v4065, %v4031
      %v4094 = vadd.f32 %v4066, %v4036
      %4095 = vst.msk [vmem:[#allocation2 + $0x20] sm:$0xff] %vm292, %v4067
      %4096 = vst.msk [vmem:[#allocation2 + $0x28] sm:$0xff] %vm292, %v4068
      %4097 = vst.msk [vmem:[#allocation2 + $0x30] sm:$0xff] %vm292, %v4069
      %4098 = vst.msk [vmem:[#allocation2 + $0x38] sm:$0xff] %vm292, %v4070
      %4099 = vst.msk [vmem:[#allocation2 + $0x40] sm:$0xff] %vm292, %v4071
      %4100 = vst.msk [vmem:[#allocation2 + $0x48] sm:$0xff] %vm292, %v4072
      %4101 = vst.msk [vmem:[#allocation2 + $0x50] sm:$0xff] %vm292, %v4073
      %4102 = vst.msk [vmem:[#allocation2 + $0x58] sm:$0xff] %vm292, %v4074
      %4103 = vst.msk [vmem:[#allocation2 + $0x60] sm:$0xff] %vm292, %v4075
      %4104 = vst.msk [vmem:[#allocation2 + $0x68] sm:$0xff] %vm292, %v4076
      %4105 = vst.msk [vmem:[#allocation2 + $0x70] sm:$0xff] %vm292, %v4077
      %4106 = vst.msk [vmem:[#allocation2 + $0x78] sm:$0xff] %vm292, %v4078
      %4107 = vst.msk [vmem:[#allocation2 + $0x80] sm:$0xff] %vm292, %v4079
      %4108 = vst.msk [vmem:[#allocation2 + $0x88] sm:$0xff] %vm292, %v4080
      %4109 = vst.msk [vmem:[#allocation2 + $0x90] sm:$0xff] %vm292, %v4081
      %4110 = vst.msk [vmem:[#allocation2 + $0x98] sm:$0xff] %vm292, %v4082
      %4111 = vst.msk [vmem:[#allocation2 + $0xa0] sm:$0xff] %vm292, %v4083
      %4112 = vst.msk [vmem:[#allocation2 + $0xa8] sm:$0xff] %vm292, %v4084
      %4113 = vst.msk [vmem:[#allocation2 + $0xb0] sm:$0xff] %vm292, %v4085
      %4114 = vst.msk [vmem:[#allocation2 + $0xb8] sm:$0xff] %vm292, %v4086
      %4115 = vst.msk [vmem:[#allocation2 + $0xc0] sm:$0xff] %vm292, %v4087
      %4116 = vst.msk [vmem:[#allocation2 + $0xc8] sm:$0xff] %vm292, %v4088
      %4117 = vst.msk [vmem:[#allocation2 + $0xd0] sm:$0xff] %vm292, %v4089
      %4118 = vst.msk [vmem:[#allocation2 + $0xd8] sm:$0xff] %vm292, %v4090
      %4119 = vst.msk [vmem:[#allocation2 + $0xe0] sm:$0xff] %vm292, %v4091
      %4120 = vst.msk [vmem:[#allocation2 + $0xe8] sm:$0xff] %vm292, %v4092
      %4121 = vst.msk [vmem:[#allocation2 + $0xf0] sm:$0xff] %vm292, %v4093
      %4122 = vst.msk [vmem:[#allocation2 + $0xf8] sm:$0xff] %vm292, %v4094
      %v4123 = vld [vmem:[%s1] sm:$0xff]
      %v4124 = vld [vmem:[%s1 + $0x8] sm:$0xff]
      %v4125 = vld [vmem:[%s1 + $0x10] sm:$0xff]
      %v4126 = vld [vmem:[%s1 + $0x18] sm:$0xff]
      %v4127 = vld [vmem:[%s1 + $0x20] sm:$0xff]
      %v4128 = vld [vmem:[%s1 + $0x28] sm:$0xff]
      %v4129 = vld [vmem:[%s1 + $0x30] sm:$0xff]
      %v4130 = vld [vmem:[%s1 + $0x38] sm:$0xff]
      %v4133 = vrot.slane %v290, 1
      %v4134 = vsel %vm909, %v2603, %v4133
      %v4135 = vrot.slane %v291, 1
      %v4136 = vsel %vm909, %v4133, %v4135
      %v4140 = vsel %vm372, %v4124, 0
      %v4143 = vsel %vm372, %v4126, 0
      %v4146 = vsel %vm372, %v4128, 0
      %v4149 = vsel %vm372, %v4130, 0
      %4151 = vmatprep.subr.mxu0 0.0
      %4152 = vmatpush1.msra.mxu0 %v950
      %4153 = vmatprep.subr.mxu0 0.0
      %4154 = vmatpush1.msra.mxu0 %v948
      %4155 = vmatprep.subr.mxu0 0.0
      %4156 = vmatpush1.msra.mxu0 %v946
      %4157 = vmatprep.subr.mxu0 0.0
      %4158 = vmatpush1.msra.mxu0 %v944
      %4159 = vmatprep.subr.mxu0 0.0
      %4160 = vmatpush1.msra.mxu0 %v942
      %4161 = vmatprep.subr.mxu0 0.0
      %4162 = vmatpush1.msra.mxu0 %v940
      %4163 = vmatprep.subr.mxu0 0.0
      %4164 = vmatpush1.msra.mxu0 %v938
      %4165 = vmatprep.subr.mxu0 0.0
      %4166 = vmatpush1.msra.mxu0 %v936
      %4167 = vmatprep.subr.mxu0 0.0
      %4168 = vmatpush1.msra.mxu0 %v934
      %4169 = vmatprep.subr.mxu0 0.0
      %4170 = vmatpush1.msra.mxu0 %v932
      %4171 = vmatprep.subr.mxu0 0.0
      %4172 = vmatpush1.msra.mxu0 %v930
      %4173 = vmatprep.subr.mxu0 0.0
      %4174 = vmatpush1.msra.mxu0 %v928
      %4175 = vmatprep.subr.mxu0 0.0
      %4176 = vmatpush1.msra.mxu0 %v926
      %4177 = vmatprep.subr.mxu0 0.0
      %4178 = vmatpush1.msra.mxu0 %v924
      %4179 = vmatprep.subr.mxu0 0.0
      %4180 = vmatpush1.msra.mxu0 %v922
      %4181 = vmatprep.subr.mxu0 0.0
      %4182 = vmatpush1.msra.mxu0 %v920
      %4183 = vmatprep.subr.mxu0 0.0
      %4184 = vmatpush2.msra.mxu0 0.0
      %4185 = vmatprep.subr.mxu0 0.0
      %4186 = vmatpush2.msra.mxu0 0.0
      %4187 = vmatprep.subr.mxu0 0.0
      %4188 = vmatpush2.msra.mxu0 0.0
      %4189 = vmatprep.subr.mxu0 0.0
      %4190 = vmatpush2.msra.mxu0 0.0
      %4191 = vmatprep.subr.mxu0 0.0
      %4192 = vmatpush2.msra.mxu0 %v4136
      %4193 = vmatprep.subr.mxu0 0.0
      %4194 = vmatpush2.msra.mxu0 %v4134
      %4195 = vmatprep.subr.mxu0 0.0
      %4196 = vmatpush2.msra.mxu0 %v2604
      %4197 = vmatprep.subr.mxu0 0.0
      %4198 = vmatpush2.msra.mxu0 %v2602
      %4199 = vmatprep.subr.mxu0 0.0
      %4200 = vmatpush2.msra.mxu0 %v966
      %4201 = vmatprep.subr.mxu0 0.0
      %4202 = vmatpush2.msra.mxu0 %v964
      %4203 = vmatprep.subr.mxu0 0.0
      %4204 = vmatpush2.msra.mxu0 %v962
      %4205 = vmatprep.subr.mxu0 0.0
      %4206 = vmatpush2.msra.mxu0 %v960
      %4207 = vmatprep.subr.mxu0 0.0
      %4208 = vmatpush2.msra.mxu0 %v958
      %4209 = vmatprep.subr.mxu0 0.0
      %4210 = vmatpush2.msra.mxu0 %v956
      %4211 = vmatprep.subr.mxu0 0.0
      %4212 = vmatpush2.msra.mxu0 %v954
      %4213 = vmatprep.subr.mxu0 0.0
      %4214 = vmatpush2.msra.mxu0 %v952
      %4215 = vmatprep.mubr.f32.mxu0 %v4140
      %4216 = vmatmul.mubr.f32.gmra.mxu0 %v4123
      %v4217 = vpop.f32.mrf.mxu0
      %v4218 = vadd.f32 0.0, %v4217
      %v4219 = vpop.f32.mrf.mxu0
      %4220 = vmatprep.mubr.f32.mxu0 %v4143
      %4221 = vmatmul.mubr.f32.gmra.mxu0 %v4125
      %v4222 = vpop.f32.mrf.mxu0
      %v4223 = vadd.f32 0.0, %v4222
      %v4224 = vpop.f32.mrf.mxu0
      %4225 = vmatprep.mubr.f32.mxu0 %v4146
      %4226 = vmatmul.mubr.f32.gmra.mxu0 %v4127
      %v4227 = vpop.f32.mrf.mxu0
      %v4228 = vadd.f32 0.0, %v4227
      %v4229 = vpop.f32.mrf.mxu0
      %4230 = vmatprep.mubr.f32.mxu0 %v4149
      %4231 = vmatmul.mubr.f32.gmra.mxu0 %v4129
      %v4232 = vpop.f32.mrf.mxu0
      %v4233 = vadd.f32 0.0, %v4232
      %v4234 = vpop.f32.mrf.mxu0
      %4235 = vdwg.mxu0
      %v4236 = vld [vmem:[%s2] sm:$0xff]
      %v4237 = vld [vmem:[%s2 + $0x8] sm:$0xff]
      %v4238 = vld [vmem:[%s2 + $0x10] sm:$0xff]
      %v4239 = vld [vmem:[%s2 + $0x18] sm:$0xff]
      %v4240 = vld [vmem:[%s2 + $0x20] sm:$0xff]
      %v4241 = vld [vmem:[%s2 + $0x28] sm:$0xff]
      %v4242 = vld [vmem:[%s2 + $0x30] sm:$0xff]
      %v4243 = vld [vmem:[%s2 + $0x38] sm:$0xff]
      %v4244 = vld [vmem:[%s2 + $0x40] sm:$0xff]
      %v4245 = vld [vmem:[%s2 + $0x48] sm:$0xff]
      %v4246 = vld [vmem:[%s2 + $0x50] sm:$0xff]
      %v4247 = vld [vmem:[%s2 + $0x58] sm:$0xff]
      %v4248 = vld [vmem:[%s2 + $0x60] sm:$0xff]
      %v4249 = vld [vmem:[%s2 + $0x68] sm:$0xff]
      %v4250 = vld [vmem:[%s2 + $0x70] sm:$0xff]
      %v4251 = vld [vmem:[%s2 + $0x78] sm:$0xff]
      %v4252 = vld [vmem:[%s2 + $0x80] sm:$0xff]
      %v4253 = vld [vmem:[%s2 + $0x88] sm:$0xff]
      %v4254 = vld [vmem:[%s2 + $0x90] sm:$0xff]
      %v4255 = vld [vmem:[%s2 + $0x98] sm:$0xff]
      %v4256 = vld [vmem:[%s2 + $0xa0] sm:$0xff]
      %v4257 = vld [vmem:[%s2 + $0xa8] sm:$0xff]
      %v4258 = vld [vmem:[%s2 + $0xb0] sm:$0xff]
      %v4259 = vld [vmem:[%s2 + $0xb8] sm:$0xff]
      %v4260 = vld [vmem:[%s2 + $0xc0] sm:$0xff]
      %v4261 = vld [vmem:[%s2 + $0xc8] sm:$0xff]
      %v4262 = vld [vmem:[%s2 + $0xd0] sm:$0xff]
      %v4263 = vld [vmem:[%s2 + $0xd8] sm:$0xff]
      %v4265 = vsel %vm498, %v4236, 0
      %v4268 = vsel %vm498, %v4237, 0
      %v4271 = vsel %vm498, %v4238, 0
      %v4274 = vsel %vm498, %v4239, 0
      %v4277 = vsel %vm498, %v4240, 0
      %v4280 = vsel %vm498, %v4241, 0
      %v4283 = vsel %vm498, %v4242, 0
      %v4286 = vsel %vm498, %v4243, 0
      %v4289 = vsel %vm498, %v4244, 0
      %v4292 = vsel %vm498, %v4245, 0
      %v4295 = vsel %vm498, %v4246, 0
      %v4298 = vsel %vm498, %v4247, 0
      %v4301 = vsel %vm498, %v4248, 0
      %v4304 = vsel %vm498, %v4249, 0
      %v4307 = vsel %vm498, %v4250, 0
      %v4310 = vsel %vm498, %v4251, 0
      %v4313 = vsel %vm498, %v4252, 0
      %v4316 = vsel %vm498, %v4253, 0
      %v4319 = vsel %vm498, %v4254, 0
      %v4322 = vsel %vm498, %v4255, 0
      %v4325 = vsel %vm498, %v4256, 0
      %v4328 = vsel %vm498, %v4257, 0
      %v4331 = vsel %vm498, %v4258, 0
      %v4334 = vsel %vm498, %v4259, 0
      %v4337 = vsel %vm498, %v4260, 0
      %v4340 = vsel %vm498, %v4261, 0
      %v4343 = vsel %vm498, %v4262, 0
      %v4346 = vsel %vm498, %v4263, 0
      %4348 = vmatprep.subr.mxu0 0.0
      %4349 = vmatpush1.msra.mxu0 0.0
      %4350 = vmatprep.subr.mxu0 0.0
      %4351 = vmatpush1.msra.mxu0 0.0
      %4352 = vmatprep.subr.mxu0 0.0
      %4353 = vmatpush1.msra.mxu0 0.0
      %4354 = vmatprep.subr.mxu0 0.0
      %4355 = vmatpush1.msra.mxu0 0.0
      %4356 = vmatprep.subr.mxu0 0.0
      %4357 = vmatpush1.msra.mxu0 0.0
      %4358 = vmatprep.subr.mxu0 0.0
      %4359 = vmatpush1.msra.mxu0 0.0
      %4360 = vmatprep.subr.mxu0 0.0
      %4361 = vmatpush1.msra.mxu0 0.0
      %4362 = vmatprep.subr.mxu0 0.0
      %4363 = vmatpush1.msra.mxu0 0.0
      %4364 = vmatprep.subr.mxu0 0.0
      %4365 = vmatpush1.msra.mxu0 0.0
      %4366 = vmatprep.subr.mxu0 0.0
      %4367 = vmatpush1.msra.mxu0 0.0
      %4368 = vmatprep.subr.mxu0 0.0
      %4369 = vmatpush1.msra.mxu0 0.0
      %4370 = vmatprep.subr.mxu0 0.0
      %4371 = vmatpush1.msra.mxu0 0.0
      %4372 = vmatprep.subr.mxu0 0.0
      %4373 = vmatpush1.msra.mxu0 %v4233
      %4374 = vmatprep.subr.mxu0 0.0
      %4375 = vmatpush1.msra.mxu0 %v4228
      %4376 = vmatprep.subr.mxu0 0.0
      %4377 = vmatpush1.msra.mxu0 %v4223
      %4378 = vmatprep.subr.mxu0 0.0
      %4379 = vmatpush1.msra.mxu0 %v4218
      %4380 = vmatprep.subr.mxu0 0.0
      %4381 = vmatpush2.msra.mxu0 0.0
      %4382 = vmatprep.subr.mxu0 0.0
      %4383 = vmatpush2.msra.mxu0 0.0
      %4384 = vmatprep.subr.mxu0 0.0
      %4385 = vmatpush2.msra.mxu0 0.0
      %4386 = vmatprep.subr.mxu0 0.0
      %4387 = vmatpush2.msra.mxu0 0.0
      %4388 = vmatprep.subr.mxu0 0.0
      %4389 = vmatpush2.msra.mxu0 0.0
      %4390 = vmatprep.subr.mxu0 0.0
      %4391 = vmatpush2.msra.mxu0 0.0
      %4392 = vmatprep.subr.mxu0 0.0
      %4393 = vmatpush2.msra.mxu0 0.0
      %4394 = vmatprep.subr.mxu0 0.0
      %4395 = vmatpush2.msra.mxu0 0.0
      %4396 = vmatprep.subr.mxu0 0.0
      %4397 = vmatpush2.msra.mxu0 0.0
      %4398 = vmatprep.subr.mxu0 0.0
      %4399 = vmatpush2.msra.mxu0 0.0
      %4400 = vmatprep.subr.mxu0 0.0
      %4401 = vmatpush2.msra.mxu0 0.0
      %4402 = vmatprep.subr.mxu0 0.0
      %4403 = vmatpush2.msra.mxu0 0.0
      %4404 = vmatprep.subr.mxu0 0.0
      %4405 = vmatpush2.msra.mxu0 0.0
      %4406 = vmatprep.subr.mxu0 0.0
      %4407 = vmatpush2.msra.mxu0 0.0
      %4408 = vmatprep.subr.mxu0 0.0
      %4409 = vmatpush2.msra.mxu0 0.0
      %4410 = vmatprep.subr.mxu0 0.0
      %4411 = vmatpush2.msra.mxu0 0.0
      %4412 = vmatprep.mubr.f32.mxu0 0.0
      %4413 = vmatmul.mubr.f32.gmra.mxu0 %v4265
      %v4414 = vpop.f32.mrf.mxu0
      %v4415 = vadd.f32 0.0, %v4414
      %v4416 = vpop.f32.mrf.mxu0
      %4417 = vmatprep.mubr.f32.mxu0 0.0
      %4418 = vmatmul.mubr.f32.gmra.mxu0 %v4268
      %v4419 = vpop.f32.mrf.mxu0
      %v4420 = vadd.f32 0.0, %v4419
      %v4421 = vpop.f32.mrf.mxu0
      %4422 = vmatprep.mubr.f32.mxu0 0.0
      %4423 = vmatmul.mubr.f32.gmra.mxu0 %v4271
      %v4424 = vpop.f32.mrf.mxu0
      %v4425 = vadd.f32 0.0, %v4424
      %v4426 = vpop.f32.mrf.mxu0
      %4427 = vmatprep.mubr.f32.mxu0 0.0
      %4428 = vmatmul.mubr.f32.gmra.mxu0 %v4274
      %v4429 = vpop.f32.mrf.mxu0
      %v4430 = vadd.f32 0.0, %v4429
      %v4431 = vpop.f32.mrf.mxu0
      %4432 = vmatprep.mubr.f32.mxu0 0.0
      %4433 = vmatmul.mubr.f32.gmra.mxu0 %v4277
      %v4434 = vpop.f32.mrf.mxu0
      %v4435 = vadd.f32 0.0, %v4434
      %v4436 = vpop.f32.mrf.mxu0
      %4437 = vmatprep.mubr.f32.mxu0 0.0
      %4438 = vmatmul.mubr.f32.gmra.mxu0 %v4280
      %v4439 = vpop.f32.mrf.mxu0
      %v4440 = vadd.f32 0.0, %v4439
      %v4441 = vpop.f32.mrf.mxu0
      %4442 = vmatprep.mubr.f32.mxu0 0.0
      %4443 = vmatmul.mubr.f32.gmra.mxu0 %v4283
      %v4444 = vpop.f32.mrf.mxu0
      %v4445 = vadd.f32 0.0, %v4444
      %v4446 = vpop.f32.mrf.mxu0
      %4447 = vmatprep.mubr.f32.mxu0 0.0
      %4448 = vmatmul.mubr.f32.gmra.mxu0 %v4286
      %v4449 = vpop.f32.mrf.mxu0
      %v4450 = vadd.f32 0.0, %v4449
      %v4451 = vpop.f32.mrf.mxu0
      %4452 = vmatprep.mubr.f32.mxu0 0.0
      %4453 = vmatmul.mubr.f32.gmra.mxu0 %v4289
      %v4454 = vpop.f32.mrf.mxu0
      %v4455 = vadd.f32 0.0, %v4454
      %v4456 = vpop.f32.mrf.mxu0
      %4457 = vmatprep.mubr.f32.mxu0 0.0
      %4458 = vmatmul.mubr.f32.gmra.mxu0 %v4292
      %v4459 = vpop.f32.mrf.mxu0
      %v4460 = vadd.f32 0.0, %v4459
      %v4461 = vpop.f32.mrf.mxu0
      %4462 = vmatprep.mubr.f32.mxu0 0.0
      %4463 = vmatmul.mubr.f32.gmra.mxu0 %v4295
      %v4464 = vpop.f32.mrf.mxu0
      %v4465 = vadd.f32 0.0, %v4464
      %v4466 = vpop.f32.mrf.mxu0
      %4467 = vmatprep.mubr.f32.mxu0 0.0
      %4468 = vmatmul.mubr.f32.gmra.mxu0 %v4298
      %v4469 = vpop.f32.mrf.mxu0
      %v4470 = vadd.f32 0.0, %v4469
      %v4471 = vpop.f32.mrf.mxu0
      %4472 = vmatprep.mubr.f32.mxu0 0.0
      %4473 = vmatmul.mubr.f32.gmra.mxu0 %v4301
      %v4474 = vpop.f32.mrf.mxu0
      %v4475 = vadd.f32 0.0, %v4474
      %v4476 = vpop.f32.mrf.mxu0
      %4477 = vmatprep.mubr.f32.mxu0 0.0
      %4478 = vmatmul.mubr.f32.gmra.mxu0 %v4304
      %v4479 = vpop.f32.mrf.mxu0
      %v4480 = vadd.f32 0.0, %v4479
      %v4481 = vpop.f32.mrf.mxu0
      %4482 = vmatprep.mubr.f32.mxu0 0.0
      %4483 = vmatmul.mubr.f32.gmra.mxu0 %v4307
      %v4484 = vpop.f32.mrf.mxu0
      %v4485 = vadd.f32 0.0, %v4484
      %v4486 = vpop.f32.mrf.mxu0
      %4487 = vmatprep.mubr.f32.mxu0 0.0
      %4488 = vmatmul.mubr.f32.gmra.mxu0 %v4310
      %v4489 = vpop.f32.mrf.mxu0
      %v4490 = vadd.f32 0.0, %v4489
      %v4491 = vpop.f32.mrf.mxu0
      %4492 = vmatprep.mubr.f32.mxu0 0.0
      %4493 = vmatmul.mubr.f32.gmra.mxu0 %v4313
      %v4494 = vpop.f32.mrf.mxu0
      %v4495 = vadd.f32 0.0, %v4494
      %v4496 = vpop.f32.mrf.mxu0
      %4497 = vmatprep.mubr.f32.mxu0 0.0
      %4498 = vmatmul.mubr.f32.gmra.mxu0 %v4316
      %v4499 = vpop.f32.mrf.mxu0
      %v4500 = vadd.f32 0.0, %v4499
      %v4501 = vpop.f32.mrf.mxu0
      %4502 = vmatprep.mubr.f32.mxu0 0.0
      %4503 = vmatmul.mubr.f32.gmra.mxu0 %v4319
      %v4504 = vpop.f32.mrf.mxu0
      %v4505 = vadd.f32 0.0, %v4504
      %v4506 = vpop.f32.mrf.mxu0
      %4507 = vmatprep.mubr.f32.mxu0 0.0
      %4508 = vmatmul.mubr.f32.gmra.mxu0 %v4322
      %v4509 = vpop.f32.mrf.mxu0
      %v4510 = vadd.f32 0.0, %v4509
      %v4511 = vpop.f32.mrf.mxu0
      %4512 = vmatprep.mubr.f32.mxu0 0.0
      %4513 = vmatmul.mubr.f32.gmra.mxu0 %v4325
      %v4514 = vpop.f32.mrf.mxu0
      %v4515 = vadd.f32 0.0, %v4514
      %v4516 = vpop.f32.mrf.mxu0
      %4517 = vmatprep.mubr.f32.mxu0 0.0
      %4518 = vmatmul.mubr.f32.gmra.mxu0 %v4328
      %v4519 = vpop.f32.mrf.mxu0
      %v4520 = vadd.f32 0.0, %v4519
      %v4521 = vpop.f32.mrf.mxu0
      %4522 = vmatprep.mubr.f32.mxu0 0.0
      %4523 = vmatmul.mubr.f32.gmra.mxu0 %v4331
      %v4524 = vpop.f32.mrf.mxu0
      %v4525 = vadd.f32 0.0, %v4524
      %v4526 = vpop.f32.mrf.mxu0
      %4527 = vmatprep.mubr.f32.mxu0 0.0
      %4528 = vmatmul.mubr.f32.gmra.mxu0 %v4334
      %v4529 = vpop.f32.mrf.mxu0
      %v4530 = vadd.f32 0.0, %v4529
      %v4531 = vpop.f32.mrf.mxu0
      %4532 = vmatprep.mubr.f32.mxu0 0.0
      %4533 = vmatmul.mubr.f32.gmra.mxu0 %v4337
      %v4534 = vpop.f32.mrf.mxu0
      %v4535 = vadd.f32 0.0, %v4534
      %v4536 = vpop.f32.mrf.mxu0
      %4537 = vmatprep.mubr.f32.mxu0 0.0
      %4538 = vmatmul.mubr.f32.gmra.mxu0 %v4340
      %v4539 = vpop.f32.mrf.mxu0
      %v4540 = vadd.f32 0.0, %v4539
      %v4541 = vpop.f32.mrf.mxu0
      %4542 = vmatprep.mubr.f32.mxu0 0.0
      %4543 = vmatmul.mubr.f32.gmra.mxu0 %v4343
      %v4544 = vpop.f32.mrf.mxu0
      %v4545 = vadd.f32 0.0, %v4544
      %v4546 = vpop.f32.mrf.mxu0
      %4547 = vmatprep.mubr.f32.mxu0 0.0
      %4548 = vmatmul.mubr.f32.gmra.mxu0 %v4346
      %v4549 = vpop.f32.mrf.mxu0
      %v4550 = vadd.f32 0.0, %v4549
      %v4551 = vpop.f32.mrf.mxu0
      %4552 = vdwg.mxu0
      %v4553 = vld [vmem:[#allocation2 + $0x21] sm:$0xff]
      %v4554 = vld [vmem:[#allocation2 + $0x29] sm:$0xff]
      %v4555 = vld [vmem:[#allocation2 + $0x31] sm:$0xff]
      %v4556 = vld [vmem:[#allocation2 + $0x39] sm:$0xff]
      %v4557 = vld [vmem:[#allocation2 + $0x41] sm:$0xff]
      %v4558 = vld [vmem:[#allocation2 + $0x49] sm:$0xff]
      %v4559 = vld [vmem:[#allocation2 + $0x51] sm:$0xff]
      %v4560 = vld [vmem:[#allocation2 + $0x59] sm:$0xff]
      %v4561 = vld [vmem:[#allocation2 + $0x61] sm:$0xff]
      %v4562 = vld [vmem:[#allocation2 + $0x69] sm:$0xff]
      %v4563 = vld [vmem:[#allocation2 + $0x71] sm:$0xff]
      %v4564 = vld [vmem:[#allocation2 + $0x79] sm:$0xff]
      %v4565 = vld [vmem:[#allocation2 + $0x81] sm:$0xff]
      %v4566 = vld [vmem:[#allocation2 + $0x89] sm:$0xff]
      %v4567 = vld [vmem:[#allocation2 + $0x91] sm:$0xff]
      %v4568 = vld [vmem:[#allocation2 + $0x99] sm:$0xff]
      %v4569 = vld [vmem:[#allocation2 + $0xa1] sm:$0xff]
      %v4570 = vld [vmem:[#allocation2 + $0xa9] sm:$0xff]
      %v4571 = vld [vmem:[#allocation2 + $0xb1] sm:$0xff]
      %v4572 = vld [vmem:[#allocation2 + $0xb9] sm:$0xff]
      %v4573 = vld [vmem:[#allocation2 + $0xc1] sm:$0xff]
      %v4574 = vld [vmem:[#allocation2 + $0xc9] sm:$0xff]
      %v4575 = vld [vmem:[#allocation2 + $0xd1] sm:$0xff]
      %v4576 = vld [vmem:[#allocation2 + $0xd9] sm:$0xff]
      %v4577 = vld [vmem:[#allocation2 + $0xe1] sm:$0xff]
      %v4578 = vld [vmem:[#allocation2 + $0xe9] sm:$0xff]
      %v4579 = vld [vmem:[#allocation2 + $0xf1] sm:$0xff]
      %v4580 = vld [vmem:[#allocation2 + $0xf9] sm:$0xff]
      %v4581 = vadd.f32 %v4553, %v4415
      %v4582 = vadd.f32 %v4554, %v4420
      %v4583 = vadd.f32 %v4555, %v4425
      %v4584 = vadd.f32 %v4556, %v4430
      %v4585 = vadd.f32 %v4557, %v4435
      %v4586 = vadd.f32 %v4558, %v4440
      %v4587 = vadd.f32 %v4559, %v4445
      %v4588 = vadd.f32 %v4560, %v4450
      %v4589 = vadd.f32 %v4561, %v4455
      %v4590 = vadd.f32 %v4562, %v4460
      %v4591 = vadd.f32 %v4563, %v4465
      %v4592 = vadd.f32 %v4564, %v4470
      %v4593 = vadd.f32 %v4565, %v4475
      %v4594 = vadd.f32 %v4566, %v4480
      %v4595 = vadd.f32 %v4567, %v4485
      %v4596 = vadd.f32 %v4568, %v4490
      %v4597 = vadd.f32 %v4569, %v4495
      %v4598 = vadd.f32 %v4570, %v4500
      %v4599 = vadd.f32 %v4571, %v4505
      %v4600 = vadd.f32 %v4572, %v4510
      %v4601 = vadd.f32 %v4573, %v4515
      %v4602 = vadd.f32 %v4574, %v4520
      %v4603 = vadd.f32 %v4575, %v4525
      %v4604 = vadd.f32 %v4576, %v4530
      %v4605 = vadd.f32 %v4577, %v4535
      %v4606 = vadd.f32 %v4578, %v4540
      %v4607 = vadd.f32 %v4579, %v4545
      %v4608 = vadd.f32 %v4580, %v4550
      %4609 = vst.msk [vmem:[#allocation2 + $0x21] sm:$0xff] %vm292, %v4581
      %4610 = vst.msk [vmem:[#allocation2 + $0x29] sm:$0xff] %vm292, %v4582
      %4611 = vst.msk [vmem:[#allocation2 + $0x31] sm:$0xff] %vm292, %v4583
      %4612 = vst.msk [vmem:[#allocation2 + $0x39] sm:$0xff] %vm292, %v4584
      %4613 = vst.msk [vmem:[#allocation2 + $0x41] sm:$0xff] %vm292, %v4585
      %4614 = vst.msk [vmem:[#allocation2 + $0x49] sm:$0xff] %vm292, %v4586
      %4615 = vst.msk [vmem:[#allocation2 + $0x51] sm:$0xff] %vm292, %v4587
      %4616 = vst.msk [vmem:[#allocation2 + $0x59] sm:$0xff] %vm292, %v4588
      %4617 = vst.msk [vmem:[#allocation2 + $0x61] sm:$0xff] %vm292, %v4589
      %4618 = vst.msk [vmem:[#allocation2 + $0x69] sm:$0xff] %vm292, %v4590
      %4619 = vst.msk [vmem:[#allocation2 + $0x71] sm:$0xff] %vm292, %v4591
      %4620 = vst.msk [vmem:[#allocation2 + $0x79] sm:$0xff] %vm292, %v4592
      %4621 = vst.msk [vmem:[#allocation2 + $0x81] sm:$0xff] %vm292, %v4593
      %4622 = vst.msk [vmem:[#allocation2 + $0x89] sm:$0xff] %vm292, %v4594
      %4623 = vst.msk [vmem:[#allocation2 + $0x91] sm:$0xff] %vm292, %v4595
      %4624 = vst.msk [vmem:[#allocation2 + $0x99] sm:$0xff] %vm292, %v4596
      %4625 = vst.msk [vmem:[#allocation2 + $0xa1] sm:$0xff] %vm292, %v4597
      %4626 = vst.msk [vmem:[#allocation2 + $0xa9] sm:$0xff] %vm292, %v4598
      %4627 = vst.msk [vmem:[#allocation2 + $0xb1] sm:$0xff] %vm292, %v4599
      %4628 = vst.msk [vmem:[#allocation2 + $0xb9] sm:$0xff] %vm292, %v4600
      %4629 = vst.msk [vmem:[#allocation2 + $0xc1] sm:$0xff] %vm292, %v4601
      %4630 = vst.msk [vmem:[#allocation2 + $0xc9] sm:$0xff] %vm292, %v4602
      %4631 = vst.msk [vmem:[#allocation2 + $0xd1] sm:$0xff] %vm292, %v4603
      %4632 = vst.msk [vmem:[#allocation2 + $0xd9] sm:$0xff] %vm292, %v4604
      %4633 = vst.msk [vmem:[#allocation2 + $0xe1] sm:$0xff] %vm292, %v4605
      %4634 = vst.msk [vmem:[#allocation2 + $0xe9] sm:$0xff] %vm292, %v4606
      %4635 = vst.msk [vmem:[#allocation2 + $0xf1] sm:$0xff] %vm292, %v4607
      %4636 = vst.msk [vmem:[#allocation2 + $0xf9] sm:$0xff] %vm292, %v4608
      %v4637 = vld [vmem:[%s1] sm:$0xff]
      %v4638 = vld [vmem:[%s1 + $0x8] sm:$0xff]
      %v4639 = vld [vmem:[%s1 + $0x10] sm:$0xff]
      %v4640 = vld [vmem:[%s1 + $0x18] sm:$0xff]
      %v4641 = vld [vmem:[%s1 + $0x20] sm:$0xff]
      %v4642 = vld [vmem:[%s1 + $0x28] sm:$0xff]
      %v4643 = vld [vmem:[%s1 + $0x30] sm:$0xff]
      %v4644 = vld [vmem:[%s1 + $0x38] sm:$0xff]
      %v4645 = vrot.slane %v290, 2
      %v4646 = vsel %vm1501, %v3115, %v4645
      %v4647 = vrot.slane %v291, 2
      %v4648 = vsel %vm1501, %v4645, %v4647
      %v4652 = vsel %vm372, %v4638, 0
      %v4655 = vsel %vm372, %v4640, 0
      %v4658 = vsel %vm372, %v4642, 0
      %v4661 = vsel %vm372, %v4644, 0
      %4663 = vmatprep.subr.mxu0 0.0
      %4664 = vmatpush1.msra.mxu0 %v1542
      %4665 = vmatprep.subr.mxu0 0.0
      %4666 = vmatpush1.msra.mxu0 %v1540
      %4667 = vmatprep.subr.mxu0 0.0
      %4668 = vmatpush1.msra.mxu0 %v1538
      %4669 = vmatprep.subr.mxu0 0.0
      %4670 = vmatpush1.msra.mxu0 %v1536
      %4671 = vmatprep.subr.mxu0 0.0
      %4672 = vmatpush1.msra.mxu0 %v1534
      %4673 = vmatprep.subr.mxu0 0.0
      %4674 = vmatpush1.msra.mxu0 %v1532
      %4675 = vmatprep.subr.mxu0 0.0
      %4676 = vmatpush1.msra.mxu0 %v1530
      %4677 = vmatprep.subr.mxu0 0.0
      %4678 = vmatpush1.msra.mxu0 %v1528
      %4679 = vmatprep.subr.mxu0 0.0
      %4680 = vmatpush1.msra.mxu0 %v1526
      %4681 = vmatprep.subr.mxu0 0.0
      %4682 = vmatpush1.msra.mxu0 %v1524
      %4683 = vmatprep.subr.mxu0 0.0
      %4684 = vmatpush1.msra.mxu0 %v1522
      %4685 = vmatprep.subr.mxu0 0.0
      %4686 = vmatpush1.msra.mxu0 %v1520
      %4687 = vmatprep.subr.mxu0 0.0
      %4688 = vmatpush1.msra.mxu0 %v1518
      %4689 = vmatprep.subr.mxu0 0.0
      %4690 = vmatpush1.msra.mxu0 %v1516
      %4691 = vmatprep.subr.mxu0 0.0
      %4692 = vmatpush1.msra.mxu0 %v1514
      %4693 = vmatprep.subr.mxu0 0.0
      %4694 = vmatpush1.msra.mxu0 %v1512
      %4695 = vmatprep.subr.mxu0 0.0
      %4696 = vmatpush2.msra.mxu0 0.0
      %4697 = vmatprep.subr.mxu0 0.0
      %4698 = vmatpush2.msra.mxu0 0.0
      %4699 = vmatprep.subr.mxu0 0.0
      %4700 = vmatpush2.msra.mxu0 0.0
      %4701 = vmatprep.subr.mxu0 0.0
      %4702 = vmatpush2.msra.mxu0 0.0
      %4703 = vmatprep.subr.mxu0 0.0
      %4704 = vmatpush2.msra.mxu0 %v4648
      %4705 = vmatprep.subr.mxu0 0.0
      %4706 = vmatpush2.msra.mxu0 %v4646
      %4707 = vmatprep.subr.mxu0 0.0
      %4708 = vmatpush2.msra.mxu0 %v3116
      %4709 = vmatprep.subr.mxu0 0.0
      %4710 = vmatpush2.msra.mxu0 %v3114
      %4711 = vmatprep.subr.mxu0 0.0
      %4712 = vmatpush2.msra.mxu0 %v1558
      %4713 = vmatprep.subr.mxu0 0.0
      %4714 = vmatpush2.msra.mxu0 %v1556
      %4715 = vmatprep.subr.mxu0 0.0
      %4716 = vmatpush2.msra.mxu0 %v1554
      %4717 = vmatprep.subr.mxu0 0.0
      %4718 = vmatpush2.msra.mxu0 %v1552
      %4719 = vmatprep.subr.mxu0 0.0
      %4720 = vmatpush2.msra.mxu0 %v1550
      %4721 = vmatprep.subr.mxu0 0.0
      %4722 = vmatpush2.msra.mxu0 %v1548
      %4723 = vmatprep.subr.mxu0 0.0
      %4724 = vmatpush2.msra.mxu0 %v1546
      %4725 = vmatprep.subr.mxu0 0.0
      %4726 = vmatpush2.msra.mxu0 %v1544
      %4727 = vmatprep.mubr.f32.mxu0 %v4652
      %4728 = vmatmul.mubr.f32.gmra.mxu0 %v4637
      %v4729 = vpop.f32.mrf.mxu0
      %v4730 = vadd.f32 0.0, %v4729
      %v4731 = vpop.f32.mrf.mxu0
      %4732 = vmatprep.mubr.f32.mxu0 %v4655
      %4733 = vmatmul.mubr.f32.gmra.mxu0 %v4639
      %v4734 = vpop.f32.mrf.mxu0
      %v4735 = vadd.f32 0.0, %v4734
      %v4736 = vpop.f32.mrf.mxu0
      %4737 = vmatprep.mubr.f32.mxu0 %v4658
      %4738 = vmatmul.mubr.f32.gmra.mxu0 %v4641
      %v4739 = vpop.f32.mrf.mxu0
      %v4740 = vadd.f32 0.0, %v4739
      %v4741 = vpop.f32.mrf.mxu0
      %4742 = vmatprep.mubr.f32.mxu0 %v4661
      %4743 = vmatmul.mubr.f32.gmra.mxu0 %v4643
      %v4744 = vpop.f32.mrf.mxu0
      %v4745 = vadd.f32 0.0, %v4744
      %v4746 = vpop.f32.mrf.mxu0
      %4747 = vdwg.mxu0
      %v4748 = vld [vmem:[%s2] sm:$0xff]
      %v4749 = vld [vmem:[%s2 + $0x8] sm:$0xff]
      %v4750 = vld [vmem:[%s2 + $0x10] sm:$0xff]
      %v4751 = vld [vmem:[%s2 + $0x18] sm:$0xff]
      %v4752 = vld [vmem:[%s2 + $0x20] sm:$0xff]
      %v4753 = vld [vmem:[%s2 + $0x28] sm:$0xff]
      %v4754 = vld [vmem:[%s2 + $0x30] sm:$0xff]
      %v4755 = vld [vmem:[%s2 + $0x38] sm:$0xff]
      %v4756 = vld [vmem:[%s2 + $0x40] sm:$0xff]
      %v4757 = vld [vmem:[%s2 + $0x48] sm:$0xff]
      %v4758 = vld [vmem:[%s2 + $0x50] sm:$0xff]
      %v4759 = vld [vmem:[%s2 + $0x58] sm:$0xff]
      %v4760 = vld [vmem:[%s2 + $0x60] sm:$0xff]
      %v4761 = vld [vmem:[%s2 + $0x68] sm:$0xff]
      %v4762 = vld [vmem:[%s2 + $0x70] sm:$0xff]
      %v4763 = vld [vmem:[%s2 + $0x78] sm:$0xff]
      %v4764 = vld [vmem:[%s2 + $0x80] sm:$0xff]
      %v4765 = vld [vmem:[%s2 + $0x88] sm:$0xff]
      %v4766 = vld [vmem:[%s2 + $0x90] sm:$0xff]
      %v4767 = vld [vmem:[%s2 + $0x98] sm:$0xff]
      %v4768 = vld [vmem:[%s2 + $0xa0] sm:$0xff]
      %v4769 = vld [vmem:[%s2 + $0xa8] sm:$0xff]
      %v4770 = vld [vmem:[%s2 + $0xb0] sm:$0xff]
      %v4771 = vld [vmem:[%s2 + $0xb8] sm:$0xff]
      %v4772 = vld [vmem:[%s2 + $0xc0] sm:$0xff]
      %v4773 = vld [vmem:[%s2 + $0xc8] sm:$0xff]
      %v4774 = vld [vmem:[%s2 + $0xd0] sm:$0xff]
      %v4775 = vld [vmem:[%s2 + $0xd8] sm:$0xff]
      %v4777 = vsel %vm498, %v4748, 0
      %v4780 = vsel %vm498, %v4749, 0
      %v4783 = vsel %vm498, %v4750, 0
      %v4786 = vsel %vm498, %v4751, 0
      %v4789 = vsel %vm498, %v4752, 0
      %v4792 = vsel %vm498, %v4753, 0
      %v4795 = vsel %vm498, %v4754, 0
      %v4798 = vsel %vm498, %v4755, 0
      %v4801 = vsel %vm498, %v4756, 0
      %v4804 = vsel %vm498, %v4757, 0
      %v4807 = vsel %vm498, %v4758, 0
      %v4810 = vsel %vm498, %v4759, 0
      %v4813 = vsel %vm498, %v4760, 0
      %v4816 = vsel %vm498, %v4761, 0
      %v4819 = vsel %vm498, %v4762, 0
      %v4822 = vsel %vm498, %v4763, 0
      %v4825 = vsel %vm498, %v4764, 0
      %v4828 = vsel %vm498, %v4765, 0
      %v4831 = vsel %vm498, %v4766, 0
      %v4834 = vsel %vm498, %v4767, 0
      %v4837 = vsel %vm498, %v4768, 0
      %v4840 = vsel %vm498, %v4769, 0
      %v4843 = vsel %vm498, %v4770, 0
      %v4846 = vsel %vm498, %v4771, 0
      %v4849 = vsel %vm498, %v4772, 0
      %v4852 = vsel %vm498, %v4773, 0
      %v4855 = vsel %vm498, %v4774, 0
      %v4858 = vsel %vm498, %v4775, 0
      %4860 = vmatprep.subr.mxu0 0.0
      %4861 = vmatpush1.msra.mxu0 0.0
      %4862 = vmatprep.subr.mxu0 0.0
      %4863 = vmatpush1.msra.mxu0 0.0
      %4864 = vmatprep.subr.mxu0 0.0
      %4865 = vmatpush1.msra.mxu0 0.0
      %4866 = vmatprep.subr.mxu0 0.0
      %4867 = vmatpush1.msra.mxu0 0.0
      %4868 = vmatprep.subr.mxu0 0.0
      %4869 = vmatpush1.msra.mxu0 0.0
      %4870 = vmatprep.subr.mxu0 0.0
      %4871 = vmatpush1.msra.mxu0 0.0
      %4872 = vmatprep.subr.mxu0 0.0
      %4873 = vmatpush1.msra.mxu0 0.0
      %4874 = vmatprep.subr.mxu0 0.0
      %4875 = vmatpush1.msra.mxu0 0.0
      %4876 = vmatprep.subr.mxu0 0.0
      %4877 = vmatpush1.msra.mxu0 0.0
      %4878 = vmatprep.subr.mxu0 0.0
      %4879 = vmatpush1.msra.mxu0 0.0
      %4880 = vmatprep.subr.mxu0 0.0
      %4881 = vmatpush1.msra.mxu0 0.0
      %4882 = vmatprep.subr.mxu0 0.0
      %4883 = vmatpush1.msra.mxu0 0.0
      %4884 = vmatprep.subr.mxu0 0.0
      %4885 = vmatpush1.msra.mxu0 %v4745
      %4886 = vmatprep.subr.mxu0 0.0
      %4887 = vmatpush1.msra.mxu0 %v4740
      %4888 = vmatprep.subr.mxu0 0.0
      %4889 = vmatpush1.msra.mxu0 %v4735
      %4890 = vmatprep.subr.mxu0 0.0
      %4891 = vmatpush1.msra.mxu0 %v4730
      %4892 = vmatprep.subr.mxu0 0.0
      %4893 = vmatpush2.msra.mxu0 0.0
      %4894 = vmatprep.subr.mxu0 0.0
      %4895 = vmatpush2.msra.mxu0 0.0
      %4896 = vmatprep.subr.mxu0 0.0
      %4897 = vmatpush2.msra.mxu0 0.0
      %4898 = vmatprep.subr.mxu0 0.0
      %4899 = vmatpush2.msra.mxu0 0.0
      %4900 = vmatprep.subr.mxu0 0.0
      %4901 = vmatpush2.msra.mxu0 0.0
      %4902 = vmatprep.subr.mxu0 0.0
      %4903 = vmatpush2.msra.mxu0 0.0
      %4904 = vmatprep.subr.mxu0 0.0
      %4905 = vmatpush2.msra.mxu0 0.0
      %4906 = vmatprep.subr.mxu0 0.0
      %4907 = vmatpush2.msra.mxu0 0.0
      %4908 = vmatprep.subr.mxu0 0.0
      %4909 = vmatpush2.msra.mxu0 0.0
      %4910 = vmatprep.subr.mxu0 0.0
      %4911 = vmatpush2.msra.mxu0 0.0
      %4912 = vmatprep.subr.mxu0 0.0
      %4913 = vmatpush2.msra.mxu0 0.0
      %4914 = vmatprep.subr.mxu0 0.0
      %4915 = vmatpush2.msra.mxu0 0.0
      %4916 = vmatprep.subr.mxu0 0.0
      %4917 = vmatpush2.msra.mxu0 0.0
      %4918 = vmatprep.subr.mxu0 0.0
      %4919 = vmatpush2.msra.mxu0 0.0
      %4920 = vmatprep.subr.mxu0 0.0
      %4921 = vmatpush2.msra.mxu0 0.0
      %4922 = vmatprep.subr.mxu0 0.0
      %4923 = vmatpush2.msra.mxu0 0.0
      %4924 = vmatprep.mubr.f32.mxu0 0.0
      %4925 = vmatmul.mubr.f32.gmra.mxu0 %v4777
      %v4926 = vpop.f32.mrf.mxu0
      %v4927 = vadd.f32 0.0, %v4926
      %v4928 = vpop.f32.mrf.mxu0
      %4929 = vmatprep.mubr.f32.mxu0 0.0
      %4930 = vmatmul.mubr.f32.gmra.mxu0 %v4780
      %v4931 = vpop.f32.mrf.mxu0
      %v4932 = vadd.f32 0.0, %v4931
      %v4933 = vpop.f32.mrf.mxu0
      %4934 = vmatprep.mubr.f32.mxu0 0.0
      %4935 = vmatmul.mubr.f32.gmra.mxu0 %v4783
      %v4936 = vpop.f32.mrf.mxu0
      %v4937 = vadd.f32 0.0, %v4936
      %v4938 = vpop.f32.mrf.mxu0
      %4939 = vmatprep.mubr.f32.mxu0 0.0
      %4940 = vmatmul.mubr.f32.gmra.mxu0 %v4786
      %v4941 = vpop.f32.mrf.mxu0
      %v4942 = vadd.f32 0.0, %v4941
      %v4943 = vpop.f32.mrf.mxu0
      %4944 = vmatprep.mubr.f32.mxu0 0.0
      %4945 = vmatmul.mubr.f32.gmra.mxu0 %v4789
      %v4946 = vpop.f32.mrf.mxu0
      %v4947 = vadd.f32 0.0, %v4946
      %v4948 = vpop.f32.mrf.mxu0
      %4949 = vmatprep.mubr.f32.mxu0 0.0
      %4950 = vmatmul.mubr.f32.gmra.mxu0 %v4792
      %v4951 = vpop.f32.mrf.mxu0
      %v4952 = vadd.f32 0.0, %v4951
      %v4953 = vpop.f32.mrf.mxu0
      %4954 = vmatprep.mubr.f32.mxu0 0.0
      %4955 = vmatmul.mubr.f32.gmra.mxu0 %v4795
      %v4956 = vpop.f32.mrf.mxu0
      %v4957 = vadd.f32 0.0, %v4956
      %v4958 = vpop.f32.mrf.mxu0
      %4959 = vmatprep.mubr.f32.mxu0 0.0
      %4960 = vmatmul.mubr.f32.gmra.mxu0 %v4798
      %v4961 = vpop.f32.mrf.mxu0
      %v4962 = vadd.f32 0.0, %v4961
      %v4963 = vpop.f32.mrf.mxu0
      %4964 = vmatprep.mubr.f32.mxu0 0.0
      %4965 = vmatmul.mubr.f32.gmra.mxu0 %v4801
      %v4966 = vpop.f32.mrf.mxu0
      %v4967 = vadd.f32 0.0, %v4966
      %v4968 = vpop.f32.mrf.mxu0
      %4969 = vmatprep.mubr.f32.mxu0 0.0
      %4970 = vmatmul.mubr.f32.gmra.mxu0 %v4804
      %v4971 = vpop.f32.mrf.mxu0
      %v4972 = vadd.f32 0.0, %v4971
      %v4973 = vpop.f32.mrf.mxu0
      %4974 = vmatprep.mubr.f32.mxu0 0.0
      %4975 = vmatmul.mubr.f32.gmra.mxu0 %v4807
      %v4976 = vpop.f32.mrf.mxu0
      %v4977 = vadd.f32 0.0, %v4976
      %v4978 = vpop.f32.mrf.mxu0
      %4979 = vmatprep.mubr.f32.mxu0 0.0
      %4980 = vmatmul.mubr.f32.gmra.mxu0 %v4810
      %v4981 = vpop.f32.mrf.mxu0
      %v4982 = vadd.f32 0.0, %v4981
      %v4983 = vpop.f32.mrf.mxu0
      %4984 = vmatprep.mubr.f32.mxu0 0.0
      %4985 = vmatmul.mubr.f32.gmra.mxu0 %v4813
      %v4986 = vpop.f32.mrf.mxu0
      %v4987 = vadd.f32 0.0, %v4986
      %v4988 = vpop.f32.mrf.mxu0
      %4989 = vmatprep.mubr.f32.mxu0 0.0
      %4990 = vmatmul.mubr.f32.gmra.mxu0 %v4816
      %v4991 = vpop.f32.mrf.mxu0
      %v4992 = vadd.f32 0.0, %v4991
      %v4993 = vpop.f32.mrf.mxu0
      %4994 = vmatprep.mubr.f32.mxu0 0.0
      %4995 = vmatmul.mubr.f32.gmra.mxu0 %v4819
      %v4996 = vpop.f32.mrf.mxu0
      %v4997 = vadd.f32 0.0, %v4996
      %v4998 = vpop.f32.mrf.mxu0
      %4999 = vmatprep.mubr.f32.mxu0 0.0
      %5000 = vmatmul.mubr.f32.gmra.mxu0 %v4822
      %v5001 = vpop.f32.mrf.mxu0
      %v5002 = vadd.f32 0.0, %v5001
      %v5003 = vpop.f32.mrf.mxu0
      %5004 = vmatprep.mubr.f32.mxu0 0.0
      %5005 = vmatmul.mubr.f32.gmra.mxu0 %v4825
      %v5006 = vpop.f32.mrf.mxu0
      %v5007 = vadd.f32 0.0, %v5006
      %v5008 = vpop.f32.mrf.mxu0
      %5009 = vmatprep.mubr.f32.mxu0 0.0
      %5010 = vmatmul.mubr.f32.gmra.mxu0 %v4828
      %v5011 = vpop.f32.mrf.mxu0
      %v5012 = vadd.f32 0.0, %v5011
      %v5013 = vpop.f32.mrf.mxu0
      %5014 = vmatprep.mubr.f32.mxu0 0.0
      %5015 = vmatmul.mubr.f32.gmra.mxu0 %v4831
      %v5016 = vpop.f32.mrf.mxu0
      %v5017 = vadd.f32 0.0, %v5016
      %v5018 = vpop.f32.mrf.mxu0
      %5019 = vmatprep.mubr.f32.mxu0 0.0
      %5020 = vmatmul.mubr.f32.gmra.mxu0 %v4834
      %v5021 = vpop.f32.mrf.mxu0
      %v5022 = vadd.f32 0.0, %v5021
      %v5023 = vpop.f32.mrf.mxu0
      %5024 = vmatprep.mubr.f32.mxu0 0.0
      %5025 = vmatmul.mubr.f32.gmra.mxu0 %v4837
      %v5026 = vpop.f32.mrf.mxu0
      %v5027 = vadd.f32 0.0, %v5026
      %v5028 = vpop.f32.mrf.mxu0
      %5029 = vmatprep.mubr.f32.mxu0 0.0
      %5030 = vmatmul.mubr.f32.gmra.mxu0 %v4840
      %v5031 = vpop.f32.mrf.mxu0
      %v5032 = vadd.f32 0.0, %v5031
      %v5033 = vpop.f32.mrf.mxu0
      %5034 = vmatprep.mubr.f32.mxu0 0.0
      %5035 = vmatmul.mubr.f32.gmra.mxu0 %v4843
      %v5036 = vpop.f32.mrf.mxu0
      %v5037 = vadd.f32 0.0, %v5036
      %v5038 = vpop.f32.mrf.mxu0
      %5039 = vmatprep.mubr.f32.mxu0 0.0
      %5040 = vmatmul.mubr.f32.gmra.mxu0 %v4846
      %v5041 = vpop.f32.mrf.mxu0
      %v5042 = vadd.f32 0.0, %v5041
      %v5043 = vpop.f32.mrf.mxu0
      %5044 = vmatprep.mubr.f32.mxu0 0.0
      %5045 = vmatmul.mubr.f32.gmra.mxu0 %v4849
      %v5046 = vpop.f32.mrf.mxu0
      %v5047 = vadd.f32 0.0, %v5046
      %v5048 = vpop.f32.mrf.mxu0
      %5049 = vmatprep.mubr.f32.mxu0 0.0
      %5050 = vmatmul.mubr.f32.gmra.mxu0 %v4852
      %v5051 = vpop.f32.mrf.mxu0
      %v5052 = vadd.f32 0.0, %v5051
      %v5053 = vpop.f32.mrf.mxu0
      %5054 = vmatprep.mubr.f32.mxu0 0.0
      %5055 = vmatmul.mubr.f32.gmra.mxu0 %v4855
      %v5056 = vpop.f32.mrf.mxu0
      %v5057 = vadd.f32 0.0, %v5056
      %v5058 = vpop.f32.mrf.mxu0
      %5059 = vmatprep.mubr.f32.mxu0 0.0
      %5060 = vmatmul.mubr.f32.gmra.mxu0 %v4858
      %v5061 = vpop.f32.mrf.mxu0
      %v5062 = vadd.f32 0.0, %v5061
      %v5063 = vpop.f32.mrf.mxu0
      %5064 = vdwg.mxu0
      %v5065 = vld [vmem:[#allocation2 + $0x22] sm:$0xff]
      %v5066 = vld [vmem:[#allocation2 + $0x2a] sm:$0xff]
      %v5067 = vld [vmem:[#allocation2 + $0x32] sm:$0xff]
      %v5068 = vld [vmem:[#allocation2 + $0x3a] sm:$0xff]
      %v5069 = vld [vmem:[#allocation2 + $0x42] sm:$0xff]
      %v5070 = vld [vmem:[#allocation2 + $0x4a] sm:$0xff]
      %v5071 = vld [vmem:[#allocation2 + $0x52] sm:$0xff]
      %v5072 = vld [vmem:[#allocation2 + $0x5a] sm:$0xff]
      %v5073 = vld [vmem:[#allocation2 + $0x62] sm:$0xff]
      %v5074 = vld [vmem:[#allocation2 + $0x6a] sm:$0xff]
      %v5075 = vld [vmem:[#allocation2 + $0x72] sm:$0xff]
      %v5076 = vld [vmem:[#allocation2 + $0x7a] sm:$0xff]
      %v5077 = vld [vmem:[#allocation2 + $0x82] sm:$0xff]
      %v5078 = vld [vmem:[#allocation2 + $0x8a] sm:$0xff]
      %v5079 = vld [vmem:[#allocation2 + $0x92] sm:$0xff]
      %v5080 = vld [vmem:[#allocation2 + $0x9a] sm:$0xff]
      %v5081 = vld [vmem:[#allocation2 + $0xa2] sm:$0xff]
      %v5082 = vld [vmem:[#allocation2 + $0xaa] sm:$0xff]
      %v5083 = vld [vmem:[#allocation2 + $0xb2] sm:$0xff]
      %v5084 = vld [vmem:[#allocation2 + $0xba] sm:$0xff]
      %v5085 = vld [vmem:[#allocation2 + $0xc2] sm:$0xff]
      %v5086 = vld [vmem:[#allocation2 + $0xca] sm:$0xff]
      %v5087 = vld [vmem:[#allocation2 + $0xd2] sm:$0xff]
      %v5088 = vld [vmem:[#allocation2 + $0xda] sm:$0xff]
      %v5089 = vld [vmem:[#allocation2 + $0xe2] sm:$0xff]
      %v5090 = vld [vmem:[#allocation2 + $0xea] sm:$0xff]
      %v5091 = vld [vmem:[#allocation2 + $0xf2] sm:$0xff]
      %v5092 = vld [vmem:[#allocation2 + $0xfa] sm:$0xff]
      %v5093 = vadd.f32 %v5065, %v4927
      %v5094 = vadd.f32 %v5066, %v4932
      %v5095 = vadd.f32 %v5067, %v4937
      %v5096 = vadd.f32 %v5068, %v4942
      %v5097 = vadd.f32 %v5069, %v4947
      %v5098 = vadd.f32 %v5070, %v4952
      %v5099 = vadd.f32 %v5071, %v4957
      %v5100 = vadd.f32 %v5072, %v4962
      %v5101 = vadd.f32 %v5073, %v4967
      %v5102 = vadd.f32 %v5074, %v4972
      %v5103 = vadd.f32 %v5075, %v4977
      %v5104 = vadd.f32 %v5076, %v4982
      %v5105 = vadd.f32 %v5077, %v4987
      %v5106 = vadd.f32 %v5078, %v4992
      %v5107 = vadd.f32 %v5079, %v4997
      %v5108 = vadd.f32 %v5080, %v5002
      %v5109 = vadd.f32 %v5081, %v5007
      %v5110 = vadd.f32 %v5082, %v5012
      %v5111 = vadd.f32 %v5083, %v5017
      %v5112 = vadd.f32 %v5084, %v5022
      %v5113 = vadd.f32 %v5085, %v5027
      %v5114 = vadd.f32 %v5086, %v5032
      %v5115 = vadd.f32 %v5087, %v5037
      %v5116 = vadd.f32 %v5088, %v5042
      %v5117 = vadd.f32 %v5089, %v5047
      %v5118 = vadd.f32 %v5090, %v5052
      %v5119 = vadd.f32 %v5091, %v5057
      %v5120 = vadd.f32 %v5092, %v5062
      %5121 = vst.msk [vmem:[#allocation2 + $0x22] sm:$0xff] %vm292, %v5093
      %5122 = vst.msk [vmem:[#allocation2 + $0x2a] sm:$0xff] %vm292, %v5094
      %5123 = vst.msk [vmem:[#allocation2 + $0x32] sm:$0xff] %vm292, %v5095
      %5124 = vst.msk [vmem:[#allocation2 + $0x3a] sm:$0xff] %vm292, %v5096
      %5125 = vst.msk [vmem:[#allocation2 + $0x42] sm:$0xff] %vm292, %v5097
      %5126 = vst.msk [vmem:[#allocation2 + $0x4a] sm:$0xff] %vm292, %v5098
      %5127 = vst.msk [vmem:[#allocation2 + $0x52] sm:$0xff] %vm292, %v5099
      %5128 = vst.msk [vmem:[#allocation2 + $0x5a] sm:$0xff] %vm292, %v5100
      %5129 = vst.msk [vmem:[#allocation2 + $0x62] sm:$0xff] %vm292, %v5101
      %5130 = vst.msk [vmem:[#allocation2 + $0x6a] sm:$0xff] %vm292, %v5102
      %5131 = vst.msk [vmem:[#allocation2 + $0x72] sm:$0xff] %vm292, %v5103
      %5132 = vst.msk [vmem:[#allocation2 + $0x7a] sm:$0xff] %vm292, %v5104
      %5133 = vst.msk [vmem:[#allocation2 + $0x82] sm:$0xff] %vm292, %v5105
      %5134 = vst.msk [vmem:[#allocation2 + $0x8a] sm:$0xff] %vm292, %v5106
      %5135 = vst.msk [vmem:[#allocation2 + $0x92] sm:$0xff] %vm292, %v5107
      %5136 = vst.msk [vmem:[#allocation2 + $0x9a] sm:$0xff] %vm292, %v5108
      %5137 = vst.msk [vmem:[#allocation2 + $0xa2] sm:$0xff] %vm292, %v5109
      %5138 = vst.msk [vmem:[#allocation2 + $0xaa] sm:$0xff] %vm292, %v5110
      %5139 = vst.msk [vmem:[#allocation2 + $0xb2] sm:$0xff] %vm292, %v5111
      %5140 = vst.msk [vmem:[#allocation2 + $0xba] sm:$0xff] %vm292, %v5112
      %5141 = vst.msk [vmem:[#allocation2 + $0xc2] sm:$0xff] %vm292, %v5113
      %5142 = vst.msk [vmem:[#allocation2 + $0xca] sm:$0xff] %vm292, %v5114
      %5143 = vst.msk [vmem:[#allocation2 + $0xd2] sm:$0xff] %vm292, %v5115
      %5144 = vst.msk [vmem:[#allocation2 + $0xda] sm:$0xff] %vm292, %v5116
      %5145 = vst.msk [vmem:[#allocation2 + $0xe2] sm:$0xff] %vm292, %v5117
      %5146 = vst.msk [vmem:[#allocation2 + $0xea] sm:$0xff] %vm292, %v5118
      %5147 = vst.msk [vmem:[#allocation2 + $0xf2] sm:$0xff] %vm292, %v5119
      %5148 = vst.msk [vmem:[#allocation2 + $0xfa] sm:$0xff] %vm292, %v5120
      %vm5149 = vcmp.gt.f32.partialorder %v226, 0.0
      %vm5150 = vcmp.gt.f32.partialorder %v227, 0.0
      %vm5151 = vcmp.gt.f32.partialorder %v228, 0.0
      %vm5152 = vcmp.gt.f32.partialorder %v229, 0.0
      %vm5153 = vcmp.gt.f32.partialorder %v230, 0.0
      %vm5154 = vcmp.gt.f32.partialorder %v231, 0.0
      %vm5155 = vcmp.gt.f32.partialorder %v232, 0.0
      %vm5156 = vcmp.gt.f32.partialorder %v233, 0.0
      %vm5157 = vcmp.gt.f32.partialorder %v234, 0.0
      %vm5158 = vcmp.gt.f32.partialorder %v235, 0.0
      %vm5159 = vcmp.gt.f32.partialorder %v236, 0.0
      %vm5160 = vcmp.gt.f32.partialorder %v237, 0.0
      %vm5161 = vcmp.gt.f32.partialorder %v238, 0.0
      %vm5162 = vcmp.gt.f32.partialorder %v239, 0.0
      %vm5163 = vcmp.gt.f32.partialorder %v240, 0.0
      %vm5164 = vcmp.gt.f32.partialorder %v241, 0.0
      %vm5165 = vcmp.gt.f32.partialorder %v242, 0.0
      %vm5166 = vcmp.gt.f32.partialorder %v243, 0.0
      %vm5167 = vcmp.gt.f32.partialorder %v244, 0.0
      %vm5168 = vcmp.gt.f32.partialorder %v245, 0.0
      %vm5169 = vcmp.gt.f32.partialorder %v246, 0.0
      %vm5170 = vcmp.gt.f32.partialorder %v247, 0.0
      %vm5171 = vcmp.gt.f32.partialorder %v248, 0.0
      %vm5172 = vcmp.gt.f32.partialorder %v249, 0.0
      %vm5173 = vcmp.gt.f32.partialorder %v250, 0.0
      %vm5174 = vcmp.gt.f32.partialorder %v251, 0.0
      %vm5175 = vcmp.gt.f32.partialorder %v252, 0.0
      %vm5176 = vcmp.gt.f32.partialorder %v253, 0.0
      %vm5177 = vcmp.gt.f32.partialorder %v254, 0.0
      %vm5178 = vcmp.gt.f32.partialorder %v255, 0.0
      %vm5179 = vcmp.gt.f32.partialorder %v256, 0.0
      %vm5180 = vcmp.gt.f32.partialorder %v257, 0.0
      %vm5181 = vcmp.lt.f32.partialorder %v226, 0.0
      %vm5182 = vcmp.lt.f32.partialorder %v227, 0.0
      %vm5183 = vcmp.lt.f32.partialorder %v228, 0.0
      %vm5184 = vcmp.lt.f32.partialorder %v229, 0.0
      %vm5185 = vcmp.lt.f32.partialorder %v230, 0.0
      %vm5186 = vcmp.lt.f32.partialorder %v231, 0.0
      %vm5187 = vcmp.lt.f32.partialorder %v232, 0.0
      %vm5188 = vcmp.lt.f32.partialorder %v233, 0.0
      %vm5189 = vcmp.lt.f32.partialorder %v234, 0.0
      %vm5190 = vcmp.lt.f32.partialorder %v235, 0.0
      %vm5191 = vcmp.lt.f32.partialorder %v236, 0.0
      %vm5192 = vcmp.lt.f32.partialorder %v237, 0.0
      %vm5193 = vcmp.lt.f32.partialorder %v238, 0.0
      %vm5194 = vcmp.lt.f32.partialorder %v239, 0.0
      %vm5195 = vcmp.lt.f32.partialorder %v240, 0.0
      %vm5196 = vcmp.lt.f32.partialorder %v241, 0.0
      %vm5197 = vcmp.lt.f32.partialorder %v242, 0.0
      %vm5198 = vcmp.lt.f32.partialorder %v243, 0.0
      %vm5199 = vcmp.lt.f32.partialorder %v244, 0.0
      %vm5200 = vcmp.lt.f32.partialorder %v245, 0.0
      %vm5201 = vcmp.lt.f32.partialorder %v246, 0.0
      %vm5202 = vcmp.lt.f32.partialorder %v247, 0.0
      %vm5203 = vcmp.lt.f32.partialorder %v248, 0.0
      %vm5204 = vcmp.lt.f32.partialorder %v249, 0.0
      %vm5205 = vcmp.lt.f32.partialorder %v250, 0.0
      %vm5206 = vcmp.lt.f32.partialorder %v251, 0.0
      %vm5207 = vcmp.lt.f32.partialorder %v252, 0.0
      %vm5208 = vcmp.lt.f32.partialorder %v253, 0.0
      %vm5209 = vcmp.lt.f32.partialorder %v254, 0.0
      %vm5210 = vcmp.lt.f32.partialorder %v255, 0.0
      %vm5211 = vcmp.lt.f32.partialorder %v256, 0.0
      %vm5212 = vcmp.lt.f32.partialorder %v257, 0.0
      %v5213 = vsel %vm5181, -1.0, 0.0
      %v5214 = vsel %vm5182, -1.0, 0.0
      %v5215 = vsel %vm5183, -1.0, 0.0
      %v5216 = vsel %vm5184, -1.0, 0.0
      %v5217 = vsel %vm5185, -1.0, 0.0
      %v5218 = vsel %vm5186, -1.0, 0.0
      %v5219 = vsel %vm5187, -1.0, 0.0
      %v5220 = vsel %vm5188, -1.0, 0.0
      %v5221 = vsel %vm5189, -1.0, 0.0
      %v5222 = vsel %vm5190, -1.0, 0.0
      %v5223 = vsel %vm5191, -1.0, 0.0
      %v5224 = vsel %vm5192, -1.0, 0.0
      %v5225 = vsel %vm5193, -1.0, 0.0
      %v5226 = vsel %vm5194, -1.0, 0.0
      %v5227 = vsel %vm5195, -1.0, 0.0
      %v5228 = vsel %vm5196, -1.0, 0.0
      %v5229 = vsel %vm5197, -1.0, 0.0
      %v5230 = vsel %vm5198, -1.0, 0.0
      %v5231 = vsel %vm5199, -1.0, 0.0
      %v5232 = vsel %vm5200, -1.0, 0.0
      %v5233 = vsel %vm5201, -1.0, 0.0
      %v5234 = vsel %vm5202, -1.0, 0.0
      %v5235 = vsel %vm5203, -1.0, 0.0
      %v5236 = vsel %vm5204, -1.0, 0.0
      %v5237 = vsel %vm5205, -1.0, 0.0
      %v5238 = vsel %vm5206, -1.0, 0.0
      %v5239 = vsel %vm5207, -1.0, 0.0
      %v5240 = vsel %vm5208, -1.0, 0.0
      %v5241 = vsel %vm5209, -1.0, 0.0
      %v5242 = vsel %vm5210, -1.0, 0.0
      %v5243 = vsel %vm5211, -1.0, 0.0
      %v5244 = vsel %vm5212, -1.0, 0.0
      %v5245 = vsel %vm5149, 1.0, %v5213
      %v5246 = vsel %vm5150, 1.0, %v5214
      %v5247 = vsel %vm5151, 1.0, %v5215
      %v5248 = vsel %vm5152, 1.0, %v5216
      %v5249 = vsel %vm5153, 1.0, %v5217
      %v5250 = vsel %vm5154, 1.0, %v5218
      %v5251 = vsel %vm5155, 1.0, %v5219
      %v5252 = vsel %vm5156, 1.0, %v5220
      %v5253 = vsel %vm5157, 1.0, %v5221
      %v5254 = vsel %vm5158, 1.0, %v5222
      %v5255 = vsel %vm5159, 1.0, %v5223
      %v5256 = vsel %vm5160, 1.0, %v5224
      %v5257 = vsel %vm5161, 1.0, %v5225
      %v5258 = vsel %vm5162, 1.0, %v5226
      %v5259 = vsel %vm5163, 1.0, %v5227
      %v5260 = vsel %vm5164, 1.0, %v5228
      %v5261 = vsel %vm5165, 1.0, %v5229
      %v5262 = vsel %vm5166, 1.0, %v5230
      %v5263 = vsel %vm5167, 1.0, %v5231
      %v5264 = vsel %vm5168, 1.0, %v5232
      %v5265 = vsel %vm5169, 1.0, %v5233
      %v5266 = vsel %vm5170, 1.0, %v5234
      %v5267 = vsel %vm5171, 1.0, %v5235
      %v5268 = vsel %vm5172, 1.0, %v5236
      %v5269 = vsel %vm5173, 1.0, %v5237
      %v5270 = vsel %vm5174, 1.0, %v5238
      %v5271 = vsel %vm5175, 1.0, %v5239
      %v5272 = vsel %vm5176, 1.0, %v5240
      %v5273 = vsel %vm5177, 1.0, %v5241
      %v5274 = vsel %vm5178, 1.0, %v5242
      %v5275 = vsel %vm5179, 1.0, %v5243
      %v5276 = vsel %vm5180, 1.0, %v5244
      %v5277 = vld [vmem:[#allocation2] sm:$0xff]
      %v5278 = vld [vmem:[#allocation2 + $0x8] sm:$0xff]
      %v5279 = vld [vmem:[#allocation2 + $0x10] sm:$0xff]
      %v5280 = vld [vmem:[#allocation2 + $0x18] sm:$0xff]
      %v5281 = vld [vmem:[#allocation2 + $0x20] sm:$0xff]
      %v5282 = vld [vmem:[#allocation2 + $0x28] sm:$0xff]
      %v5283 = vld [vmem:[#allocation2 + $0x30] sm:$0xff]
      %v5284 = vld [vmem:[#allocation2 + $0x38] sm:$0xff]
      %v5285 = vld [vmem:[#allocation2 + $0x40] sm:$0xff]
      %v5286 = vld [vmem:[#allocation2 + $0x48] sm:$0xff]
      %v5287 = vld [vmem:[#allocation2 + $0x50] sm:$0xff]
      %v5288 = vld [vmem:[#allocation2 + $0x58] sm:$0xff]
      %v5289 = vld [vmem:[#allocation2 + $0x60] sm:$0xff]
      %v5290 = vld [vmem:[#allocation2 + $0x68] sm:$0xff]
      %v5291 = vld [vmem:[#allocation2 + $0x70] sm:$0xff]
      %v5292 = vld [vmem:[#allocation2 + $0x78] sm:$0xff]
      %v5293 = vld [vmem:[#allocation2 + $0x80] sm:$0xff]
      %v5294 = vld [vmem:[#allocation2 + $0x88] sm:$0xff]
      %v5295 = vld [vmem:[#allocation2 + $0x90] sm:$0xff]
      %v5296 = vld [vmem:[#allocation2 + $0x98] sm:$0xff]
      %v5297 = vld [vmem:[#allocation2 + $0xa0] sm:$0xff]
      %v5298 = vld [vmem:[#allocation2 + $0xa8] sm:$0xff]
      %v5299 = vld [vmem:[#allocation2 + $0xb0] sm:$0xff]
      %v5300 = vld [vmem:[#allocation2 + $0xb8] sm:$0xff]
      %v5301 = vld [vmem:[#allocation2 + $0xc0] sm:$0xff]
      %v5302 = vld [vmem:[#allocation2 + $0xc8] sm:$0xff]
      %v5303 = vld [vmem:[#allocation2 + $0xd0] sm:$0xff]
      %v5304 = vld [vmem:[#allocation2 + $0xd8] sm:$0xff]
      %v5305 = vld [vmem:[#allocation2 + $0xe0] sm:$0xff]
      %v5306 = vld [vmem:[#allocation2 + $0xe8] sm:$0xff]
      %v5307 = vld [vmem:[#allocation2 + $0xf0] sm:$0xff]
      %v5308 = vld [vmem:[#allocation2 + $0xf8] sm:$0xff]
      %v5309 = vmul.f32 %v5245, %v5277
      %v5310 = vmul.f32 %v5246, %v5278
      %v5311 = vmul.f32 %v5247, %v5279
      %v5312 = vmul.f32 %v5248, %v5280
      %v5313 = vmul.f32 %v5249, %v5281
      %v5314 = vmul.f32 %v5250, %v5282
      %v5315 = vmul.f32 %v5251, %v5283
      %v5316 = vmul.f32 %v5252, %v5284
      %v5317 = vmul.f32 %v5253, %v5285
      %v5318 = vmul.f32 %v5254, %v5286
      %v5319 = vmul.f32 %v5255, %v5287
      %v5320 = vmul.f32 %v5256, %v5288
      %v5321 = vmul.f32 %v5257, %v5289
      %v5322 = vmul.f32 %v5258, %v5290
      %v5323 = vmul.f32 %v5259, %v5291
      %v5324 = vmul.f32 %v5260, %v5292
      %v5325 = vmul.f32 %v5261, %v5293
      %v5326 = vmul.f32 %v5262, %v5294
      %v5327 = vmul.f32 %v5263, %v5295
      %v5328 = vmul.f32 %v5264, %v5296
      %v5329 = vmul.f32 %v5265, %v5297
      %v5330 = vmul.f32 %v5266, %v5298
      %v5331 = vmul.f32 %v5267, %v5299
      %v5332 = vmul.f32 %v5268, %v5300
      %v5333 = vmul.f32 %v5269, %v5301
      %v5334 = vmul.f32 %v5270, %v5302
      %v5335 = vmul.f32 %v5271, %v5303
      %v5336 = vmul.f32 %v5272, %v5304
      %v5337 = vmul.f32 %v5273, %v5305
      %v5338 = vmul.f32 %v5274, %v5306
      %v5339 = vmul.f32 %v5275, %v5307
      %v5340 = vmul.f32 %v5276, %v5308
      %5341 = vst.msk [vmem:[#allocation3 + $0x18] sm:$0xff] %vm292, %v5309
      %5342 = vst.msk [vmem:[#allocation3 + $0x20] sm:$0xff] %vm292, %v5310
      %5343 = vst.msk [vmem:[#allocation3 + $0x28] sm:$0xff] %vm292, %v5311
      %5344 = vst.msk [vmem:[#allocation3 + $0x30] sm:$0xff] %vm292, %v5312
      %5345 = vst.msk [vmem:[#allocation3 + $0x38] sm:$0xff] %vm292, %v5313
      %5346 = vst.msk [vmem:[#allocation3 + $0x40] sm:$0xff] %vm292, %v5314
      %5347 = vst.msk [vmem:[#allocation3 + $0x48] sm:$0xff] %vm292, %v5315
      %5348 = vst.msk [vmem:[#allocation3 + $0x50] sm:$0xff] %vm292, %v5316
      %5349 = vst.msk [vmem:[#allocation3 + $0x58] sm:$0xff] %vm292, %v5317
      %5350 = vst.msk [vmem:[#allocation3 + $0x60] sm:$0xff] %vm292, %v5318
      %5351 = vst.msk [vmem:[#allocation3 + $0x68] sm:$0xff] %vm292, %v5319
      %5352 = vst.msk [vmem:[#allocation3 + $0x70] sm:$0xff] %vm292, %v5320
      %5353 = vst.msk [vmem:[#allocation3 + $0x78] sm:$0xff] %vm292, %v5321
      %5354 = vst.msk [vmem:[#allocation3 + $0x80] sm:$0xff] %vm292, %v5322
      %5355 = vst.msk [vmem:[#allocation3 + $0x88] sm:$0xff] %vm292, %v5323
      %5356 = vst.msk [vmem:[#allocation3 + $0x90] sm:$0xff] %vm292, %v5324
      %5357 = vst.msk [vmem:[#allocation3 + $0x98] sm:$0xff] %vm292, %v5325
      %5358 = vst.msk [vmem:[#allocation3 + $0xa0] sm:$0xff] %vm292, %v5326
      %5359 = vst.msk [vmem:[#allocation3 + $0xa8] sm:$0xff] %vm292, %v5327
      %5360 = vst.msk [vmem:[#allocation3 + $0xb0] sm:$0xff] %vm292, %v5328
      %5361 = vst.msk [vmem:[#allocation3 + $0xb8] sm:$0xff] %vm292, %v5329
      %5362 = vst.msk [vmem:[#allocation3 + $0xc0] sm:$0xff] %vm292, %v5330
      %5363 = vst.msk [vmem:[#allocation3 + $0xc8] sm:$0xff] %vm292, %v5331
      %5364 = vst.msk [vmem:[#allocation3 + $0xd0] sm:$0xff] %vm292, %v5332
      %5365 = vst.msk [vmem:[#allocation3 + $0xd8] sm:$0xff] %vm292, %v5333
      %5366 = vst.msk [vmem:[#allocation3 + $0xe0] sm:$0xff] %vm292, %v5334
      %5367 = vst.msk [vmem:[#allocation3 + $0xe8] sm:$0xff] %vm292, %v5335
      %5368 = vst.msk [vmem:[#allocation3 + $0xf0] sm:$0xff] %vm292, %v5336
      %5369 = vst.msk [vmem:[#allocation3 + $0xf8] sm:$0xff] %vm292, %v5337
      %5370 = vst.msk [vmem:[#allocation3 + $0x100] sm:$0xff] %vm292, %v5338
      %5371 = vst.msk [vmem:[#allocation3 + $0x108] sm:$0xff] %vm292, %v5339
      %5372 = vst.msk [vmem:[#allocation3 + $0x110] sm:$0xff] %vm292, %v5340
      %v5373 = vlaneseq
      %v5374 = vshrl.u32 %v5373, 7
      %v5375 = vadd.s32 %v5374, 8
      %v5376 = vadd.s32 %v5374, 16
      %v5377 = vadd.s32 %v5374, 24
      %v5378 = vadd.s32 %v5374, 32
      %v5379 = vadd.s32 %v5374, 40
      %v5380 = vadd.s32 %v5374, 48
      %v5381 = vadd.s32 %v5374, 56
      %v5382 = vadd.s32 %v5374, 64
      %v5383 = vadd.s32 %v5374, 72
      %v5384 = vadd.s32 %v5374, 80
      %v5385 = vadd.s32 %v5374, 88
      %v5386 = vadd.s32 %v5374, 96
      %v5387 = vadd.s32 %v5374, 104
      %v5388 = vadd.s32 %v5374, 112
      %v5389 = vadd.s32 %v5374, 120
      %v5390 = vadd.s32 %v5374, 128
      %v5391 = vadd.s32 %v5374, 136
      %v5392 = vadd.s32 %v5374, 144
      %v5393 = vadd.s32 %v5374, 152
      %v5394 = vadd.s32 %v5374, 160
      %v5395 = vadd.s32 %v5374, 168
      %v5396 = vadd.s32 %v5374, 176
      %v5397 = vadd.s32 %v5374, 184
      %v5398 = vadd.s32 %v5374, 192
      %v5399 = vadd.s32 %v5374, 200
      %v5400 = vadd.s32 %v5374, 208
      %v5401 = vadd.s32 %v5374, 216
      %v5402 = vadd.s32 %v5374, 224
      %v5403 = vadd.s32 %v5374, 232
      %v5404 = vadd.s32 %v5374, 240
      %v5405 = vadd.s32 %v5374, 248
      %vm5406 = vcmp.lt.s32.totalorder %v5374, 0
      %v5407 = vsub.s32 0, %v5374
      %v5408 = vsel %vm5406, %v5407, %v5374
      %v5409 = vshrl.u32 %v5408, 4
      %v5410 = vand.u32 %v5408, 15
      %v5411 = vsub.s32 0, %v5410
      %v5412 = vsel %vm5406, %v5411, %v5410
      %vm5413 = vcmp.lt.s32.totalorder %v5375, 0
      %v5414 = vsub.s32 0, %v5375
      %v5415 = vsel %vm5413, %v5414, %v5375
      %v5416 = vshrl.u32 %v5415, 4
      %v5417 = vand.u32 %v5415, 15
      %v5418 = vsub.s32 0, %v5417
      %v5419 = vsel %vm5413, %v5418, %v5417
      %vm5420 = vcmp.lt.s32.totalorder %v5376, 0
      %v5421 = vsub.s32 0, %v5376
      %v5422 = vsel %vm5420, %v5421, %v5376
      %v5423 = vshrl.u32 %v5422, 4
      %v5424 = vand.u32 %v5422, 15
      %v5425 = vsub.s32 0, %v5424
      %v5426 = vsel %vm5420, %v5425, %v5424
      %vm5427 = vcmp.lt.s32.totalorder %v5377, 0
      %v5428 = vsub.s32 0, %v5377
      %v5429 = vsel %vm5427, %v5428, %v5377
      %v5430 = vshrl.u32 %v5429, 4
      %v5431 = vand.u32 %v5429, 15
      %v5432 = vsub.s32 0, %v5431
      %v5433 = vsel %vm5427, %v5432, %v5431
      %vm5434 = vcmp.lt.s32.totalorder %v5378, 0
      %v5435 = vsub.s32 0, %v5378
      %v5436 = vsel %vm5434, %v5435, %v5378
      %v5437 = vshrl.u32 %v5436, 4
      %v5438 = vand.u32 %v5436, 15
      %v5439 = vsub.s32 0, %v5438
      %v5440 = vsel %vm5434, %v5439, %v5438
      %vm5441 = vcmp.lt.s32.totalorder %v5379, 0
      %v5442 = vsub.s32 0, %v5379
      %v5443 = vsel %vm5441, %v5442, %v5379
      %v5444 = vshrl.u32 %v5443, 4
      %v5445 = vand.u32 %v5443, 15
      %v5446 = vsub.s32 0, %v5445
      %v5447 = vsel %vm5441, %v5446, %v5445
      %vm5448 = vcmp.lt.s32.totalorder %v5380, 0
      %v5449 = vsub.s32 0, %v5380
      %v5450 = vsel %vm5448, %v5449, %v5380
      %v5451 = vshrl.u32 %v5450, 4
      %v5452 = vand.u32 %v5450, 15
      %v5453 = vsub.s32 0, %v5452
      %v5454 = vsel %vm5448, %v5453, %v5452
      %vm5455 = vcmp.lt.s32.totalorder %v5381, 0
      %v5456 = vsub.s32 0, %v5381
      %v5457 = vsel %vm5455, %v5456, %v5381
      %v5458 = vshrl.u32 %v5457, 4
      %v5459 = vand.u32 %v5457, 15
      %v5460 = vsub.s32 0, %v5459
      %v5461 = vsel %vm5455, %v5460, %v5459
      %vm5462 = vcmp.lt.s32.totalorder %v5382, 0
      %v5463 = vsub.s32 0, %v5382
      %v5464 = vsel %vm5462, %v5463, %v5382
      %v5465 = vshrl.u32 %v5464, 4
      %v5466 = vand.u32 %v5464, 15
      %v5467 = vsub.s32 0, %v5466
      %v5468 = vsel %vm5462, %v5467, %v5466
      %vm5469 = vcmp.lt.s32.totalorder %v5383, 0
      %v5470 = vsub.s32 0, %v5383
      %v5471 = vsel %vm5469, %v5470, %v5383
      %v5472 = vshrl.u32 %v5471, 4
      %v5473 = vand.u32 %v5471, 15
      %v5474 = vsub.s32 0, %v5473
      %v5475 = vsel %vm5469, %v5474, %v5473
      %vm5476 = vcmp.lt.s32.totalorder %v5384, 0
      %v5477 = vsub.s32 0, %v5384
      %v5478 = vsel %vm5476, %v5477, %v5384
      %v5479 = vshrl.u32 %v5478, 4
      %v5480 = vand.u32 %v5478, 15
      %v5481 = vsub.s32 0, %v5480
      %v5482 = vsel %vm5476, %v5481, %v5480
      %vm5483 = vcmp.lt.s32.totalorder %v5385, 0
      %v5484 = vsub.s32 0, %v5385
      %v5485 = vsel %vm5483, %v5484, %v5385
      %v5486 = vshrl.u32 %v5485, 4
      %v5487 = vand.u32 %v5485, 15
      %v5488 = vsub.s32 0, %v5487
      %v5489 = vsel %vm5483, %v5488, %v5487
      %vm5490 = vcmp.lt.s32.totalorder %v5386, 0
      %v5491 = vsub.s32 0, %v5386
      %v5492 = vsel %vm5490, %v5491, %v5386
      %v5493 = vshrl.u32 %v5492, 4
      %v5494 = vand.u32 %v5492, 15
      %v5495 = vsub.s32 0, %v5494
      %v5496 = vsel %vm5490, %v5495, %v5494
      %vm5497 = vcmp.lt.s32.totalorder %v5387, 0
      %v5498 = vsub.s32 0, %v5387
      %v5499 = vsel %vm5497, %v5498, %v5387
      %v5500 = vshrl.u32 %v5499, 4
      %v5501 = vand.u32 %v5499, 15
      %v5502 = vsub.s32 0, %v5501
      %v5503 = vsel %vm5497, %v5502, %v5501
      %vm5504 = vcmp.lt.s32.totalorder %v5388, 0
      %v5505 = vsub.s32 0, %v5388
      %v5506 = vsel %vm5504, %v5505, %v5388
      %v5507 = vshrl.u32 %v5506, 4
      %v5508 = vand.u32 %v5506, 15
      %v5509 = vsub.s32 0, %v5508
      %v5510 = vsel %vm5504, %v5509, %v5508
      %vm5511 = vcmp.lt.s32.totalorder %v5389, 0
      %v5512 = vsub.s32 0, %v5389
      %v5513 = vsel %vm5511, %v5512, %v5389
      %v5514 = vshrl.u32 %v5513, 4
      %v5515 = vand.u32 %v5513, 15
      %v5516 = vsub.s32 0, %v5515
      %v5517 = vsel %vm5511, %v5516, %v5515
      %vm5518 = vcmp.lt.s32.totalorder %v5390, 0
      %v5519 = vsub.s32 0, %v5390
      %v5520 = vsel %vm5518, %v5519, %v5390
      %v5521 = vshrl.u32 %v5520, 4
      %v5522 = vand.u32 %v5520, 15
      %v5523 = vsub.s32 0, %v5522
      %v5524 = vsel %vm5518, %v5523, %v5522
      %vm5525 = vcmp.lt.s32.totalorder %v5391, 0
      %v5526 = vsub.s32 0, %v5391
      %v5527 = vsel %vm5525, %v5526, %v5391
      %v5528 = vshrl.u32 %v5527, 4
      %v5529 = vand.u32 %v5527, 15
      %v5530 = vsub.s32 0, %v5529
      %v5531 = vsel %vm5525, %v5530, %v5529
      %vm5532 = vcmp.lt.s32.totalorder %v5392, 0
      %v5533 = vsub.s32 0, %v5392
      %v5534 = vsel %vm5532, %v5533, %v5392
      %v5535 = vshrl.u32 %v5534, 4
      %v5536 = vand.u32 %v5534, 15
      %v5537 = vsub.s32 0, %v5536
      %v5538 = vsel %vm5532, %v5537, %v5536
      %vm5539 = vcmp.lt.s32.totalorder %v5393, 0
      %v5540 = vsub.s32 0, %v5393
      %v5541 = vsel %vm5539, %v5540, %v5393
      %v5542 = vshrl.u32 %v5541, 4
      %v5543 = vand.u32 %v5541, 15
      %v5544 = vsub.s32 0, %v5543
      %v5545 = vsel %vm5539, %v5544, %v5543
      %vm5546 = vcmp.lt.s32.totalorder %v5394, 0
      %v5547 = vsub.s32 0, %v5394
      %v5548 = vsel %vm5546, %v5547, %v5394
      %v5549 = vshrl.u32 %v5548, 4
      %v5550 = vand.u32 %v5548, 15
      %v5551 = vsub.s32 0, %v5550
      %v5552 = vsel %vm5546, %v5551, %v5550
      %vm5553 = vcmp.lt.s32.totalorder %v5395, 0
      %v5554 = vsub.s32 0, %v5395
      %v5555 = vsel %vm5553, %v5554, %v5395
      %v5556 = vshrl.u32 %v5555, 4
      %v5557 = vand.u32 %v5555, 15
      %v5558 = vsub.s32 0, %v5557
      %v5559 = vsel %vm5553, %v5558, %v5557
      %vm5560 = vcmp.lt.s32.totalorder %v5396, 0
      %v5561 = vsub.s32 0, %v5396
      %v5562 = vsel %vm5560, %v5561, %v5396
      %v5563 = vshrl.u32 %v5562, 4
      %v5564 = vand.u32 %v5562, 15
      %v5565 = vsub.s32 0, %v5564
      %v5566 = vsel %vm5560, %v5565, %v5564
      %vm5567 = vcmp.lt.s32.totalorder %v5397, 0
      %v5568 = vsub.s32 0, %v5397
      %v5569 = vsel %vm5567, %v5568, %v5397
      %v5570 = vshrl.u32 %v5569, 4
      %v5571 = vand.u32 %v5569, 15
      %v5572 = vsub.s32 0, %v5571
      %v5573 = vsel %vm5567, %v5572, %v5571
      %vm5574 = vcmp.lt.s32.totalorder %v5398, 0
      %v5575 = vsub.s32 0, %v5398
      %v5576 = vsel %vm5574, %v5575, %v5398
      %v5577 = vshrl.u32 %v5576, 4
      %v5578 = vand.u32 %v5576, 15
      %v5579 = vsub.s32 0, %v5578
      %v5580 = vsel %vm5574, %v5579, %v5578
      %vm5581 = vcmp.lt.s32.totalorder %v5399, 0
      %v5582 = vsub.s32 0, %v5399
      %v5583 = vsel %vm5581, %v5582, %v5399
      %v5584 = vshrl.u32 %v5583, 4
      %v5585 = vand.u32 %v5583, 15
      %v5586 = vsub.s32 0, %v5585
      %v5587 = vsel %vm5581, %v5586, %v5585
      %vm5588 = vcmp.lt.s32.totalorder %v5400, 0
      %v5589 = vsub.s32 0, %v5400
      %v5590 = vsel %vm5588, %v5589, %v5400
      %v5591 = vshrl.u32 %v5590, 4
      %v5592 = vand.u32 %v5590, 15
      %v5593 = vsub.s32 0, %v5592
      %v5594 = vsel %vm5588, %v5593, %v5592
      %vm5595 = vcmp.lt.s32.totalorder %v5401, 0
      %v5596 = vsub.s32 0, %v5401
      %v5597 = vsel %vm5595, %v5596, %v5401
      %v5598 = vshrl.u32 %v5597, 4
      %v5599 = vand.u32 %v5597, 15
      %v5600 = vsub.s32 0, %v5599
      %v5601 = vsel %vm5595, %v5600, %v5599
      %vm5602 = vcmp.lt.s32.totalorder %v5402, 0
      %v5603 = vsub.s32 0, %v5402
      %v5604 = vsel %vm5602, %v5603, %v5402
      %v5605 = vshrl.u32 %v5604, 4
      %v5606 = vand.u32 %v5604, 15
      %v5607 = vsub.s32 0, %v5606
      %v5608 = vsel %vm5602, %v5607, %v5606
      %vm5609 = vcmp.lt.s32.totalorder %v5403, 0
      %v5610 = vsub.s32 0, %v5403
      %v5611 = vsel %vm5609, %v5610, %v5403
      %v5612 = vshrl.u32 %v5611, 4
      %v5613 = vand.u32 %v5611, 15
      %v5614 = vsub.s32 0, %v5613
      %v5615 = vsel %vm5609, %v5614, %v5613
      %vm5616 = vcmp.lt.s32.totalorder %v5404, 0
      %v5617 = vsub.s32 0, %v5404
      %v5618 = vsel %vm5616, %v5617, %v5404
      %v5619 = vshrl.u32 %v5618, 4
      %v5620 = vand.u32 %v5618, 15
      %v5621 = vsub.s32 0, %v5620
      %v5622 = vsel %vm5616, %v5621, %v5620
      %vm5623 = vcmp.lt.s32.totalorder %v5405, 0
      %v5624 = vsub.s32 0, %v5405
      %v5625 = vsel %vm5623, %v5624, %v5405
      %v5626 = vshrl.u32 %v5625, 4
      %v5627 = vand.u32 %v5625, 15
      %v5628 = vsub.s32 0, %v5627
      %v5629 = vsel %vm5623, %v5628, %v5627
      %vm5630 = vcmp.ne.s32.totalorder %v5412, 0
      %vm5631 = vcmp.ne.s32.totalorder %v5419, 0
      %vm5632 = vcmp.ne.s32.totalorder %v5426, 0
      %vm5633 = vcmp.ne.s32.totalorder %v5433, 0
      %vm5634 = vcmp.ne.s32.totalorder %v5440, 0
      %vm5635 = vcmp.ne.s32.totalorder %v5447, 0
      %vm5636 = vcmp.ne.s32.totalorder %v5454, 0
      %vm5637 = vcmp.ne.s32.totalorder %v5461, 0
      %vm5638 = vcmp.ne.s32.totalorder %v5468, 0
      %vm5639 = vcmp.ne.s32.totalorder %v5475, 0
      %vm5640 = vcmp.ne.s32.totalorder %v5482, 0
      %vm5641 = vcmp.ne.s32.totalorder %v5489, 0
      %vm5642 = vcmp.ne.s32.totalorder %v5496, 0
      %vm5643 = vcmp.ne.s32.totalorder %v5503, 0
      %vm5644 = vcmp.ne.s32.totalorder %v5510, 0
      %vm5645 = vcmp.ne.s32.totalorder %v5517, 0
      %vm5646 = vcmp.ne.s32.totalorder %v5524, 0
      %vm5647 = vcmp.ne.s32.totalorder %v5531, 0
      %vm5648 = vcmp.ne.s32.totalorder %v5538, 0
      %vm5649 = vcmp.ne.s32.totalorder %v5545, 0
      %vm5650 = vcmp.ne.s32.totalorder %v5552, 0
      %vm5651 = vcmp.ne.s32.totalorder %v5559, 0
      %vm5652 = vcmp.ne.s32.totalorder %v5566, 0
      %vm5653 = vcmp.ne.s32.totalorder %v5573, 0
      %vm5654 = vcmp.ne.s32.totalorder %v5580, 0
      %vm5655 = vcmp.ne.s32.totalorder %v5587, 0
      %vm5656 = vcmp.ne.s32.totalorder %v5594, 0
      %vm5657 = vcmp.ne.s32.totalorder %v5601, 0
      %vm5658 = vcmp.ne.s32.totalorder %v5608, 0
      %vm5659 = vcmp.ne.s32.totalorder %v5615, 0
      %vm5660 = vcmp.ne.s32.totalorder %v5622, 0
      %vm5661 = vcmp.ne.s32.totalorder %v5629, 0
      %vm5662 = vcmp.lt.s32.totalorder %v5412, 0
      %vm5663 = vcmp.lt.s32.totalorder %v5419, 0
      %vm5664 = vcmp.lt.s32.totalorder %v5426, 0
      %vm5665 = vcmp.lt.s32.totalorder %v5433, 0
      %vm5666 = vcmp.lt.s32.totalorder %v5440, 0
      %vm5667 = vcmp.lt.s32.totalorder %v5447, 0
      %vm5668 = vcmp.lt.s32.totalorder %v5454, 0
      %vm5669 = vcmp.lt.s32.totalorder %v5461, 0
      %vm5670 = vcmp.lt.s32.totalorder %v5468, 0
      %vm5671 = vcmp.lt.s32.totalorder %v5475, 0
      %vm5672 = vcmp.lt.s32.totalorder %v5482, 0
      %vm5673 = vcmp.lt.s32.totalorder %v5489, 0
      %vm5674 = vcmp.lt.s32.totalorder %v5496, 0
      %vm5675 = vcmp.lt.s32.totalorder %v5503, 0
      %vm5676 = vcmp.lt.s32.totalorder %v5510, 0
      %vm5677 = vcmp.lt.s32.totalorder %v5517, 0
      %vm5678 = vcmp.lt.s32.totalorder %v5524, 0
      %vm5679 = vcmp.lt.s32.totalorder %v5531, 0
      %vm5680 = vcmp.lt.s32.totalorder %v5538, 0
      %vm5681 = vcmp.lt.s32.totalorder %v5545, 0
      %vm5682 = vcmp.lt.s32.totalorder %v5552, 0
      %vm5683 = vcmp.lt.s32.totalorder %v5559, 0
      %vm5684 = vcmp.lt.s32.totalorder %v5566, 0
      %vm5685 = vcmp.lt.s32.totalorder %v5573, 0
      %vm5686 = vcmp.lt.s32.totalorder %v5580, 0
      %vm5687 = vcmp.lt.s32.totalorder %v5587, 0
      %vm5688 = vcmp.lt.s32.totalorder %v5594, 0
      %vm5689 = vcmp.lt.s32.totalorder %v5601, 0
      %vm5690 = vcmp.lt.s32.totalorder %v5608, 0
      %vm5691 = vcmp.lt.s32.totalorder %v5615, 0
      %vm5692 = vcmp.lt.s32.totalorder %v5622, 0
      %vm5693 = vcmp.lt.s32.totalorder %v5629, 0
      %vm5694 = vmand %vm5662, %vm5630
      %vm5695 = vmand %vm5663, %vm5631
      %vm5696 = vmand %vm5664, %vm5632
      %vm5697 = vmand %vm5665, %vm5633
      %vm5698 = vmand %vm5666, %vm5634
      %vm5699 = vmand %vm5667, %vm5635
      %vm5700 = vmand %vm5668, %vm5636
      %vm5701 = vmand %vm5669, %vm5637
      %vm5702 = vmand %vm5670, %vm5638
      %vm5703 = vmand %vm5671, %vm5639
      %vm5704 = vmand %vm5672, %vm5640
      %vm5705 = vmand %vm5673, %vm5641
      %vm5706 = vmand %vm5674, %vm5642
      %vm5707 = vmand %vm5675, %vm5643
      %vm5708 = vmand %vm5676, %vm5644
      %vm5709 = vmand %vm5677, %vm5645
      %vm5710 = vmand %vm5678, %vm5646
      %vm5711 = vmand %vm5679, %vm5647
      %vm5712 = vmand %vm5680, %vm5648
      %vm5713 = vmand %vm5681, %vm5649
      %vm5714 = vmand %vm5682, %vm5650
      %vm5715 = vmand %vm5683, %vm5651
      %vm5716 = vmand %vm5684, %vm5652
      %vm5717 = vmand %vm5685, %vm5653
      %vm5718 = vmand %vm5686, %vm5654
      %vm5719 = vmand %vm5687, %vm5655
      %vm5720 = vmand %vm5688, %vm5656
      %vm5721 = vmand %vm5689, %vm5657
      %vm5722 = vmand %vm5690, %vm5658
      %vm5723 = vmand %vm5691, %vm5659
      %vm5724 = vmand %vm5692, %vm5660
      %vm5725 = vmand %vm5693, %vm5661
      %v5726 = vadd.s32 %v5412, 16
      %v5727 = vadd.s32 %v5419, 16
      %v5728 = vadd.s32 %v5426, 16
      %v5729 = vadd.s32 %v5433, 16
      %v5730 = vadd.s32 %v5440, 16
      %v5731 = vadd.s32 %v5447, 16
      %v5732 = vadd.s32 %v5454, 16
      %v5733 = vadd.s32 %v5461, 16
      %v5734 = vadd.s32 %v5468, 16
      %v5735 = vadd.s32 %v5475, 16
      %v5736 = vadd.s32 %v5482, 16
      %v5737 = vadd.s32 %v5489, 16
      %v5738 = vadd.s32 %v5496, 16
      %v5739 = vadd.s32 %v5503, 16
      %v5740 = vadd.s32 %v5510, 16
      %v5741 = vadd.s32 %v5517, 16
      %v5742 = vadd.s32 %v5524, 16
      %v5743 = vadd.s32 %v5531, 16
      %v5744 = vadd.s32 %v5538, 16
      %v5745 = vadd.s32 %v5545, 16
      %v5746 = vadd.s32 %v5552, 16
      %v5747 = vadd.s32 %v5559, 16
      %v5748 = vadd.s32 %v5566, 16
      %v5749 = vadd.s32 %v5573, 16
      %v5750 = vadd.s32 %v5580, 16
      %v5751 = vadd.s32 %v5587, 16
      %v5752 = vadd.s32 %v5594, 16
      %v5753 = vadd.s32 %v5601, 16
      %v5754 = vadd.s32 %v5608, 16
      %v5755 = vadd.s32 %v5615, 16
      %v5756 = vadd.s32 %v5622, 16
      %v5757 = vadd.s32 %v5629, 16
      %v5758 = vsel %vm5694, %v5726, %v5412
      %v5759 = vsel %vm5695, %v5727, %v5419
      %v5760 = vsel %vm5696, %v5728, %v5426
      %v5761 = vsel %vm5697, %v5729, %v5433
      %v5762 = vsel %vm5698, %v5730, %v5440
      %v5763 = vsel %vm5699, %v5731, %v5447
      %v5764 = vsel %vm5700, %v5732, %v5454
      %v5765 = vsel %vm5701, %v5733, %v5461
      %v5766 = vsel %vm5702, %v5734, %v5468
      %v5767 = vsel %vm5703, %v5735, %v5475
      %v5768 = vsel %vm5704, %v5736, %v5482
      %v5769 = vsel %vm5705, %v5737, %v5489
      %v5770 = vsel %vm5706, %v5738, %v5496
      %v5771 = vsel %vm5707, %v5739, %v5503
      %v5772 = vsel %vm5708, %v5740, %v5510
      %v5773 = vsel %vm5709, %v5741, %v5517
      %v5774 = vsel %vm5710, %v5742, %v5524
      %v5775 = vsel %vm5711, %v5743, %v5531
      %v5776 = vsel %vm5712, %v5744, %v5538
      %v5777 = vsel %vm5713, %v5745, %v5545
      %v5778 = vsel %vm5714, %v5746, %v5552
      %v5779 = vsel %vm5715, %v5747, %v5559
      %v5780 = vsel %vm5716, %v5748, %v5566
      %v5781 = vsel %vm5717, %v5749, %v5573
      %v5782 = vsel %vm5718, %v5750, %v5580
      %v5783 = vsel %vm5719, %v5751, %v5587
      %v5784 = vsel %vm5720, %v5752, %v5594
      %v5785 = vsel %vm5721, %v5753, %v5601
      %v5786 = vsel %vm5722, %v5754, %v5608
      %v5787 = vsel %vm5723, %v5755, %v5615
      %v5788 = vsel %vm5724, %v5756, %v5622
      %v5789 = vsel %vm5725, %v5757, %v5629
      %vm5790 = vcmp.ne.s32.totalorder %v5758, 0
      %vm5791 = vcmp.ne.s32.totalorder %v5759, 0
      %vm5792 = vcmp.ne.s32.totalorder %v5760, 0
      %vm5793 = vcmp.ne.s32.totalorder %v5761, 0
      %vm5794 = vcmp.ne.s32.totalorder %v5762, 0
      %vm5795 = vcmp.ne.s32.totalorder %v5763, 0
      %vm5796 = vcmp.ne.s32.totalorder %v5764, 0
      %vm5797 = vcmp.ne.s32.totalorder %v5765, 0
      %vm5798 = vcmp.ne.s32.totalorder %v5766, 0
      %vm5799 = vcmp.ne.s32.totalorder %v5767, 0
      %vm5800 = vcmp.ne.s32.totalorder %v5768, 0
      %vm5801 = vcmp.ne.s32.totalorder %v5769, 0
      %vm5802 = vcmp.ne.s32.totalorder %v5770, 0
      %vm5803 = vcmp.ne.s32.totalorder %v5771, 0
      %vm5804 = vcmp.ne.s32.totalorder %v5772, 0
      %vm5805 = vcmp.ne.s32.totalorder %v5773, 0
      %vm5806 = vcmp.ne.s32.totalorder %v5774, 0
      %vm5807 = vcmp.ne.s32.totalorder %v5775, 0
      %vm5808 = vcmp.ne.s32.totalorder %v5776, 0
      %vm5809 = vcmp.ne.s32.totalorder %v5777, 0
      %vm5810 = vcmp.ne.s32.totalorder %v5778, 0
      %vm5811 = vcmp.ne.s32.totalorder %v5779, 0
      %vm5812 = vcmp.ne.s32.totalorder %v5780, 0
      %vm5813 = vcmp.ne.s32.totalorder %v5781, 0
      %vm5814 = vcmp.ne.s32.totalorder %v5782, 0
      %vm5815 = vcmp.ne.s32.totalorder %v5783, 0
      %vm5816 = vcmp.ne.s32.totalorder %v5784, 0
      %vm5817 = vcmp.ne.s32.totalorder %v5785, 0
      %vm5818 = vcmp.ne.s32.totalorder %v5786, 0
      %vm5819 = vcmp.ne.s32.totalorder %v5787, 0
      %vm5820 = vcmp.ne.s32.totalorder %v5788, 0
      %vm5821 = vcmp.ne.s32.totalorder %v5789, 0
      %v5822 = vsel %vm5790, 1, 0
      %v5823 = vsel %vm5791, 1, 0
      %v5824 = vsel %vm5792, 1, 0
      %v5825 = vsel %vm5793, 1, 0
      %v5826 = vsel %vm5794, 1, 0
      %v5827 = vsel %vm5795, 1, 0
      %v5828 = vsel %vm5796, 1, 0
      %v5829 = vsel %vm5797, 1, 0
      %v5830 = vsel %vm5798, 1, 0
      %v5831 = vsel %vm5799, 1, 0
      %v5832 = vsel %vm5800, 1, 0
      %v5833 = vsel %vm5801, 1, 0
      %v5834 = vsel %vm5802, 1, 0
      %v5835 = vsel %vm5803, 1, 0
      %v5836 = vsel %vm5804, 1, 0
      %v5837 = vsel %vm5805, 1, 0
      %v5838 = vsel %vm5806, 1, 0
      %v5839 = vsel %vm5807, 1, 0
      %v5840 = vsel %vm5808, 1, 0
      %v5841 = vsel %vm5809, 1, 0
      %v5842 = vsel %vm5810, 1, 0
      %v5843 = vsel %vm5811, 1, 0
      %v5844 = vsel %vm5812, 1, 0
      %v5845 = vsel %vm5813, 1, 0
      %v5846 = vsel %vm5814, 1, 0
      %v5847 = vsel %vm5815, 1, 0
      %v5848 = vsel %vm5816, 1, 0
      %v5849 = vsel %vm5817, 1, 0
      %v5850 = vsel %vm5818, 1, 0
      %v5851 = vsel %vm5819, 1, 0
      %v5852 = vsel %vm5820, 1, 0
      %v5853 = vsel %vm5821, 1, 0
      %v5854 = vcvt.s32.f32 %v5822
      %v5855 = vcvt.s32.f32 %v5823
      %v5856 = vcvt.s32.f32 %v5824
      %v5857 = vcvt.s32.f32 %v5825
      %v5858 = vcvt.s32.f32 %v5826
      %v5859 = vcvt.s32.f32 %v5827
      %v5860 = vcvt.s32.f32 %v5828
      %v5861 = vcvt.s32.f32 %v5829
      %v5862 = vcvt.s32.f32 %v5830
      %v5863 = vcvt.s32.f32 %v5831
      %v5864 = vcvt.s32.f32 %v5832
      %v5865 = vcvt.s32.f32 %v5833
      %v5866 = vcvt.s32.f32 %v5834
      %v5867 = vcvt.s32.f32 %v5835
      %v5868 = vcvt.s32.f32 %v5836
      %v5869 = vcvt.s32.f32 %v5837
      %v5870 = vcvt.s32.f32 %v5838
      %v5871 = vcvt.s32.f32 %v5839
      %v5872 = vcvt.s32.f32 %v5840
      %v5873 = vcvt.s32.f32 %v5841
      %v5874 = vcvt.s32.f32 %v5842
      %v5875 = vcvt.s32.f32 %v5843
      %v5876 = vcvt.s32.f32 %v5844
      %v5877 = vcvt.s32.f32 %v5845
      %v5878 = vcvt.s32.f32 %v5846
      %v5879 = vcvt.s32.f32 %v5847
      %v5880 = vcvt.s32.f32 %v5848
      %v5881 = vcvt.s32.f32 %v5849
      %v5882 = vcvt.s32.f32 %v5850
      %v5883 = vcvt.s32.f32 %v5851
      %v5884 = vcvt.s32.f32 %v5852
      %v5885 = vcvt.s32.f32 %v5853
      %v5886 = vpack.c.bf16 %v5855, %v5854
      %v5887 = vpack.c.bf16 %v5857, %v5856
      %v5888 = vpack.c.bf16 %v5859, %v5858
      %v5889 = vpack.c.bf16 %v5861, %v5860
      %v5890 = vpack.c.bf16 %v5863, %v5862
      %v5891 = vpack.c.bf16 %v5865, %v5864
      %v5892 = vpack.c.bf16 %v5867, %v5866
      %v5893 = vpack.c.bf16 %v5869, %v5868
      %v5894 = vpack.c.bf16 %v5871, %v5870
      %v5895 = vpack.c.bf16 %v5873, %v5872
      %v5896 = vpack.c.bf16 %v5875, %v5874
      %v5897 = vpack.c.bf16 %v5877, %v5876
      %v5898 = vpack.c.bf16 %v5879, %v5878
      %v5899 = vpack.c.bf16 %v5881, %v5880
      %v5900 = vpack.c.bf16 %v5883, %v5882
      %v5901 = vpack.c.bf16 %v5885, %v5884
      %vm5902 = vcmp.ne.s32.totalorder %v5758, 15
      %vm5903 = vcmp.ne.s32.totalorder %v5759, 15
      %vm5904 = vcmp.ne.s32.totalorder %v5760, 15
      %vm5905 = vcmp.ne.s32.totalorder %v5761, 15
      %vm5906 = vcmp.ne.s32.totalorder %v5762, 15
      %vm5907 = vcmp.ne.s32.totalorder %v5763, 15
      %vm5908 = vcmp.ne.s32.totalorder %v5764, 15
      %vm5909 = vcmp.ne.s32.totalorder %v5765, 15
      %vm5910 = vcmp.ne.s32.totalorder %v5766, 15
      %vm5911 = vcmp.ne.s32.totalorder %v5767, 15
      %vm5912 = vcmp.ne.s32.totalorder %v5768, 15
      %vm5913 = vcmp.ne.s32.totalorder %v5769, 15
      %vm5914 = vcmp.ne.s32.totalorder %v5770, 15
      %vm5915 = vcmp.ne.s32.totalorder %v5771, 15
      %vm5916 = vcmp.ne.s32.totalorder %v5772, 15
      %vm5917 = vcmp.ne.s32.totalorder %v5773, 15
      %vm5918 = vcmp.ne.s32.totalorder %v5774, 15
      %vm5919 = vcmp.ne.s32.totalorder %v5775, 15
      %vm5920 = vcmp.ne.s32.totalorder %v5776, 15
      %vm5921 = vcmp.ne.s32.totalorder %v5777, 15
      %vm5922 = vcmp.ne.s32.totalorder %v5778, 15
      %vm5923 = vcmp.ne.s32.totalorder %v5779, 15
      %vm5924 = vcmp.ne.s32.totalorder %v5780, 15
      %vm5925 = vcmp.ne.s32.totalorder %v5781, 15
      %vm5926 = vcmp.ne.s32.totalorder %v5782, 15
      %vm5927 = vcmp.ne.s32.totalorder %v5783, 15
      %vm5928 = vcmp.ne.s32.totalorder %v5784, 15
      %vm5929 = vcmp.ne.s32.totalorder %v5785, 15
      %vm5930 = vcmp.ne.s32.totalorder %v5786, 15
      %vm5931 = vcmp.ne.s32.totalorder %v5787, 15
      %vm5932 = vcmp.ne.s32.totalorder %v5788, 15
      %vm5933 = vcmp.ne.s32.totalorder %v5789, 15
      %v5934 = vsel %vm5902, 1, 0
      %v5935 = vsel %vm5903, 1, 0
      %v5936 = vsel %vm5904, 1, 0
      %v5937 = vsel %vm5905, 1, 0
      %v5938 = vsel %vm5906, 1, 0
      %v5939 = vsel %vm5907, 1, 0
      %v5940 = vsel %vm5908, 1, 0
      %v5941 = vsel %vm5909, 1, 0
      %v5942 = vsel %vm5910, 1, 0
      %v5943 = vsel %vm5911, 1, 0
      %v5944 = vsel %vm5912, 1, 0
      %v5945 = vsel %vm5913, 1, 0
      %v5946 = vsel %vm5914, 1, 0
      %v5947 = vsel %vm5915, 1, 0
      %v5948 = vsel %vm5916, 1, 0
      %v5949 = vsel %vm5917, 1, 0
      %v5950 = vsel %vm5918, 1, 0
      %v5951 = vsel %vm5919, 1, 0
      %v5952 = vsel %vm5920, 1, 0
      %v5953 = vsel %vm5921, 1, 0
      %v5954 = vsel %vm5922, 1, 0
      %v5955 = vsel %vm5923, 1, 0
      %v5956 = vsel %vm5924, 1, 0
      %v5957 = vsel %vm5925, 1, 0
      %v5958 = vsel %vm5926, 1, 0
      %v5959 = vsel %vm5927, 1, 0
      %v5960 = vsel %vm5928, 1, 0
      %v5961 = vsel %vm5929, 1, 0
      %v5962 = vsel %vm5930, 1, 0
      %v5963 = vsel %vm5931, 1, 0
      %v5964 = vsel %vm5932, 1, 0
      %v5965 = vsel %vm5933, 1, 0
      %v5966 = vcvt.s32.f32 %v5934
      %v5967 = vcvt.s32.f32 %v5935
      %v5968 = vcvt.s32.f32 %v5936
      %v5969 = vcvt.s32.f32 %v5937
      %v5970 = vcvt.s32.f32 %v5938
      %v5971 = vcvt.s32.f32 %v5939
      %v5972 = vcvt.s32.f32 %v5940
      %v5973 = vcvt.s32.f32 %v5941
      %v5974 = vcvt.s32.f32 %v5942
      %v5975 = vcvt.s32.f32 %v5943
      %v5976 = vcvt.s32.f32 %v5944
      %v5977 = vcvt.s32.f32 %v5945
      %v5978 = vcvt.s32.f32 %v5946
      %v5979 = vcvt.s32.f32 %v5947
      %v5980 = vcvt.s32.f32 %v5948
      %v5981 = vcvt.s32.f32 %v5949
      %v5982 = vcvt.s32.f32 %v5950
      %v5983 = vcvt.s32.f32 %v5951
      %v5984 = vcvt.s32.f32 %v5952
      %v5985 = vcvt.s32.f32 %v5953
      %v5986 = vcvt.s32.f32 %v5954
      %v5987 = vcvt.s32.f32 %v5955
      %v5988 = vcvt.s32.f32 %v5956
      %v5989 = vcvt.s32.f32 %v5957
      %v5990 = vcvt.s32.f32 %v5958
      %v5991 = vcvt.s32.f32 %v5959
      %v5992 = vcvt.s32.f32 %v5960
      %v5993 = vcvt.s32.f32 %v5961
      %v5994 = vcvt.s32.f32 %v5962
      %v5995 = vcvt.s32.f32 %v5963
      %v5996 = vcvt.s32.f32 %v5964
      %v5997 = vcvt.s32.f32 %v5965
      %v5998 = vpack.c.bf16 %v5967, %v5966
      %v5999 = vpack.c.bf16 %v5969, %v5968
      %v6000 = vpack.c.bf16 %v5971, %v5970
      %v6001 = vpack.c.bf16 %v5973, %v5972
      %v6002 = vpack.c.bf16 %v5975, %v5974
      %v6003 = vpack.c.bf16 %v5977, %v5976
      %v6004 = vpack.c.bf16 %v5979, %v5978
      %v6005 = vpack.c.bf16 %v5981, %v5980
      %v6006 = vpack.c.bf16 %v5983, %v5982
      %v6007 = vpack.c.bf16 %v5985, %v5984
      %v6008 = vpack.c.bf16 %v5987, %v5986
      %v6009 = vpack.c.bf16 %v5989, %v5988
      %v6010 = vpack.c.bf16 %v5991, %v5990
      %v6011 = vpack.c.bf16 %v5993, %v5992
      %v6012 = vpack.c.bf16 %v5995, %v5994
      %v6013 = vpack.c.bf16 %v5997, %v5996
      %v6014 = vld [vmem:[#allocation3 + $0x7] sm:$0xff]
      %v6015 = vld [vmem:[#allocation3 + $0xf] sm:$0xff]
      %v6016 = vld [vmem:[#allocation3 + $0x17] sm:$0xff]
      %v6017 = vld [vmem:[#allocation3 + $0x1f] sm:$0xff]
      %v6018 = vld [vmem:[#allocation3 + $0x27] sm:$0xff]
      %v6019 = vld [vmem:[#allocation3 + $0x2f] sm:$0xff]
      %v6020 = vld [vmem:[#allocation3 + $0x37] sm:$0xff]
      %v6021 = vld [vmem:[#allocation3 + $0x3f] sm:$0xff]
      %v6022 = vld [vmem:[#allocation3 + $0x47] sm:$0xff]
      %v6023 = vld [vmem:[#allocation3 + $0x4f] sm:$0xff]
      %v6024 = vld [vmem:[#allocation3 + $0x57] sm:$0xff]
      %v6025 = vld [vmem:[#allocation3 + $0x5f] sm:$0xff]
      %v6026 = vld [vmem:[#allocation3 + $0x67] sm:$0xff]
      %v6027 = vld [vmem:[#allocation3 + $0x6f] sm:$0xff]
      %v6028 = vld [vmem:[#allocation3 + $0x77] sm:$0xff]
      %v6029 = vld [vmem:[#allocation3 + $0x7f] sm:$0xff]
      %v6030 = vld [vmem:[#allocation3 + $0x87] sm:$0xff]
      %v6031 = vld [vmem:[#allocation3 + $0x8f] sm:$0xff]
      %v6032 = vld [vmem:[#allocation3 + $0x97] sm:$0xff]
      %v6033 = vld [vmem:[#allocation3 + $0x9f] sm:$0xff]
      %v6034 = vld [vmem:[#allocation3 + $0xa7] sm:$0xff]
      %v6035 = vld [vmem:[#allocation3 + $0xaf] sm:$0xff]
      %v6036 = vld [vmem:[#allocation3 + $0xb7] sm:$0xff]
      %v6037 = vld [vmem:[#allocation3 + $0xbf] sm:$0xff]
      %v6038 = vld [vmem:[#allocation3 + $0xc7] sm:$0xff]
      %v6039 = vld [vmem:[#allocation3 + $0xcf] sm:$0xff]
      %v6040 = vld [vmem:[#allocation3 + $0xd7] sm:$0xff]
      %v6041 = vld [vmem:[#allocation3 + $0xdf] sm:$0xff]
      %v6042 = vld [vmem:[#allocation3 + $0xe7] sm:$0xff]
      %v6043 = vld [vmem:[#allocation3 + $0xef] sm:$0xff]
      %v6044 = vld [vmem:[#allocation3 + $0xf7] sm:$0xff]
      %v6045 = vld [vmem:[#allocation3 + $0xff] sm:$0xff]
      %v6046 = vpack.c.bf16 %v6015, %v6014
      %v6047 = vpack.c.bf16 %v6017, %v6016
      %v6048 = vpack.c.bf16 %v6019, %v6018
      %v6049 = vpack.c.bf16 %v6021, %v6020
      %v6050 = vpack.c.bf16 %v6023, %v6022
      %v6051 = vpack.c.bf16 %v6025, %v6024
      %v6052 = vpack.c.bf16 %v6027, %v6026
      %v6053 = vpack.c.bf16 %v6029, %v6028
      %v6054 = vpack.c.bf16 %v6031, %v6030
      %v6055 = vpack.c.bf16 %v6033, %v6032
      %v6056 = vpack.c.bf16 %v6035, %v6034
      %v6057 = vpack.c.bf16 %v6037, %v6036
      %v6058 = vpack.c.bf16 %v6039, %v6038
      %v6059 = vpack.c.bf16 %v6041, %v6040
      %v6060 = vpack.c.bf16 %v6043, %v6042
      %v6061 = vpack.c.bf16 %v6045, %v6044
      %v6062 = vmul.bf16 %v6046, %v5886
      %v6063 = vmul.bf16 %v6047, %v5887
      %v6064 = vmul.bf16 %v6048, %v5888
      %v6065 = vmul.bf16 %v6049, %v5889
      %v6066 = vmul.bf16 %v6050, %v5890
      %v6067 = vmul.bf16 %v6051, %v5891
      %v6068 = vmul.bf16 %v6052, %v5892
      %v6069 = vmul.bf16 %v6053, %v5893
      %v6070 = vmul.bf16 %v6054, %v5894
      %v6071 = vmul.bf16 %v6055, %v5895
      %v6072 = vmul.bf16 %v6056, %v5896
      %v6073 = vmul.bf16 %v6057, %v5897
      %v6074 = vmul.bf16 %v6058, %v5898
      %v6075 = vmul.bf16 %v6059, %v5899
      %v6076 = vmul.bf16 %v6060, %v5900
      %v6077 = vmul.bf16 %v6061, %v5901
      %v6078 = vld [vmem:[%s3] sm:$0x3]
      %v6079 = vld [vmem:[#allocation3 + $0x8] sm:$0xff]
      %v6080 = vld [vmem:[#allocation3 + $0x10] sm:$0xff]
      %v6081 = vld [vmem:[#allocation3 + $0x18] sm:$0xff]
      %v6082 = vld [vmem:[#allocation3 + $0x20] sm:$0xff]
      %v6083 = vld [vmem:[#allocation3 + $0x28] sm:$0xff]
      %v6084 = vld [vmem:[#allocation3 + $0x30] sm:$0xff]
      %v6085 = vld [vmem:[#allocation3 + $0x38] sm:$0xff]
      %v6086 = vld [vmem:[#allocation3 + $0x40] sm:$0xff]
      %v6087 = vld [vmem:[#allocation3 + $0x48] sm:$0xff]
      %v6088 = vld [vmem:[#allocation3 + $0x50] sm:$0xff]
      %v6089 = vld [vmem:[#allocation3 + $0x58] sm:$0xff]
      %v6090 = vld [vmem:[#allocation3 + $0x60] sm:$0xff]
      %v6091 = vld [vmem:[#allocation3 + $0x68] sm:$0xff]
      %v6092 = vld [vmem:[#allocation3 + $0x70] sm:$0xff]
      %v6093 = vld [vmem:[#allocation3 + $0x78] sm:$0xff]
      %v6094 = vld [vmem:[#allocation3 + $0x80] sm:$0xff]
      %v6095 = vld [vmem:[#allocation3 + $0x88] sm:$0xff]
      %v6096 = vld [vmem:[#allocation3 + $0x90] sm:$0xff]
      %v6097 = vld [vmem:[#allocation3 + $0x98] sm:$0xff]
      %v6098 = vld [vmem:[#allocation3 + $0xa0] sm:$0xff]
      %v6099 = vld [vmem:[#allocation3 + $0xa8] sm:$0xff]
      %v6100 = vld [vmem:[#allocation3 + $0xb0] sm:$0xff]
      %v6101 = vld [vmem:[#allocation3 + $0xb8] sm:$0xff]
      %v6102 = vld [vmem:[#allocation3 + $0xc0] sm:$0xff]
      %v6103 = vld [vmem:[#allocation3 + $0xc8] sm:$0xff]
      %v6104 = vld [vmem:[#allocation3 + $0xd0] sm:$0xff]
      %v6105 = vld [vmem:[#allocation3 + $0xd8] sm:$0xff]
      %v6106 = vld [vmem:[#allocation3 + $0xe0] sm:$0xff]
      %v6107 = vld [vmem:[#allocation3 + $0xe8] sm:$0xff]
      %v6108 = vld [vmem:[#allocation3 + $0xf0] sm:$0xff]
      %v6109 = vld [vmem:[#allocation3 + $0xf8] sm:$0xff]
      %v6110 = vld [vmem:[#allocation3 + $0x100] sm:$0xff]
      %v6111 = vpack.c.bf16 %v6080, %v6079
      %v6112 = vpack.c.bf16 %v6082, %v6081
      %v6113 = vpack.c.bf16 %v6084, %v6083
      %v6114 = vpack.c.bf16 %v6086, %v6085
      %v6115 = vpack.c.bf16 %v6088, %v6087
      %v6116 = vpack.c.bf16 %v6090, %v6089
      %v6117 = vpack.c.bf16 %v6092, %v6091
      %v6118 = vpack.c.bf16 %v6094, %v6093
      %v6119 = vpack.c.bf16 %v6096, %v6095
      %v6120 = vpack.c.bf16 %v6098, %v6097
      %v6121 = vpack.c.bf16 %v6100, %v6099
      %v6122 = vpack.c.bf16 %v6102, %v6101
      %v6123 = vpack.c.bf16 %v6104, %v6103
      %v6124 = vpack.c.bf16 %v6106, %v6105
      %v6125 = vpack.c.bf16 %v6108, %v6107
      %v6126 = vpack.c.bf16 %v6110, %v6109
      %s6127 = scalar_lea.vmem %s3, 2
      %v6128 = vld [vmem:[%s6127] sm:$0x3]
      %v6130 = vsel %vm292, %v6111, 0
      %v6133 = vsel %vm292, %v6112, 0
      %v6136 = vsel %vm292, %v6113, 0
      %v6139 = vsel %vm292, %v6114, 0
      %v6142 = vsel %vm292, %v6115, 0
      %v6145 = vsel %vm292, %v6116, 0
      %v6148 = vsel %vm292, %v6117, 0
      %v6151 = vsel %vm292, %v6118, 0
      %v6154 = vsel %vm292, %v6119, 0
      %v6157 = vsel %vm292, %v6120, 0
      %v6160 = vsel %vm292, %v6121, 0
      %v6163 = vsel %vm292, %v6122, 0
      %v6166 = vsel %vm292, %v6123, 0
      %v6169 = vsel %vm292, %v6124, 0
      %v6172 = vsel %vm292, %v6125, 0
      %v6175 = vsel %vm292, %v6126, 0
      %vm6177 = vcmask 1041408
      %v6179 = vsel %vm6177, %v6128, 0
      %6181 = vmatprep.subr.bf16.mxu0 0
      %6182 = vmatpush1.bf16.msra.mxu0 0
      %6183 = vmatprep.subr.bf16.mxu0 0
      %6184 = vmatpush1.bf16.msra.mxu0 0
      %6185 = vmatprep.subr.bf16.mxu0 0
      %6186 = vmatpush1.bf16.msra.mxu0 0
      %6187 = vmatprep.subr.bf16.mxu0 0
      %6188 = vmatpush1.bf16.msra.mxu0 0
      %6189 = vmatprep.subr.bf16.mxu0 0
      %6190 = vmatpush1.bf16.msra.mxu0 0
      %6191 = vmatprep.subr.bf16.mxu0 0
      %6192 = vmatpush1.bf16.msra.mxu0 0
      %6193 = vmatprep.subr.bf16.mxu0 0
      %6194 = vmatpush1.bf16.msra.mxu0 0
      %6195 = vmatprep.subr.bf16.mxu0 0
      %6196 = vmatpush1.bf16.msra.mxu0 %v6179
      %6197 = vmatprep.subr.bf16.mxu0 0
      %6198 = vmatpush2.bf16.msra.mxu0 0
      %6199 = vmatprep.subr.bf16.mxu0 0
      %6200 = vmatpush2.bf16.msra.mxu0 0
      %6201 = vmatprep.subr.bf16.mxu0 0
      %6202 = vmatpush2.bf16.msra.mxu0 0
      %6203 = vmatprep.subr.bf16.mxu0 0
      %6204 = vmatpush2.bf16.msra.mxu0 0
      %6205 = vmatprep.subr.bf16.mxu0 0
      %6206 = vmatpush2.bf16.msra.mxu0 0
      %6207 = vmatprep.subr.bf16.mxu0 0
      %6208 = vmatpush2.bf16.msra.mxu0 0
      %6209 = vmatprep.subr.bf16.mxu0 0
      %6210 = vmatpush2.bf16.msra.mxu0 0
      %6211 = vmatprep.subr.bf16.mxu0 0
      %6212 = vmatpush2.bf16.msra.mxu0 0
      %6213 = vmatprep.mubr.bf16.mxu0 0
      %6214 = vmatmul.mubr.bf16.gmra.mxu0 %v6130
      %v6215 = vpop.f32.mrf.mxu0
      %v6216 = vadd.f32 0.0, %v6215
      %v6217 = vpop.f32.mrf.mxu0
      %v6218 = vpop.f32.mrf.mxu0
      %v6219 = vadd.f32 0.0, %v6218
      %v6220 = vpop.f32.mrf.mxu0
      %6221 = vmatprep.mubr.bf16.mxu0 0
      %6222 = vmatmul.mubr.bf16.gmra.mxu0 %v6133
      %v6223 = vpop.f32.mrf.mxu0
      %v6224 = vadd.f32 0.0, %v6223
      %v6225 = vpop.f32.mrf.mxu0
      %v6226 = vpop.f32.mrf.mxu0
      %v6227 = vadd.f32 0.0, %v6226
      %v6228 = vpop.f32.mrf.mxu0
      %6229 = vmatprep.mubr.bf16.mxu0 0
      %6230 = vmatmul.mubr.bf16.gmra.mxu0 %v6136
      %v6231 = vpop.f32.mrf.mxu0
      %v6232 = vadd.f32 0.0, %v6231
      %v6233 = vpop.f32.mrf.mxu0
      %v6234 = vpop.f32.mrf.mxu0
      %v6235 = vadd.f32 0.0, %v6234
      %v6236 = vpop.f32.mrf.mxu0
      %6237 = vmatprep.mubr.bf16.mxu0 0
      %6238 = vmatmul.mubr.bf16.gmra.mxu0 %v6139
      %v6239 = vpop.f32.mrf.mxu0
      %v6240 = vadd.f32 0.0, %v6239
      %v6241 = vpop.f32.mrf.mxu0
      %v6242 = vpop.f32.mrf.mxu0
      %v6243 = vadd.f32 0.0, %v6242
      %v6244 = vpop.f32.mrf.mxu0
      %6245 = vmatprep.mubr.bf16.mxu0 0
      %6246 = vmatmul.mubr.bf16.gmra.mxu0 %v6142
      %v6247 = vpop.f32.mrf.mxu0
      %v6248 = vadd.f32 0.0, %v6247
      %v6249 = vpop.f32.mrf.mxu0
      %v6250 = vpop.f32.mrf.mxu0
      %v6251 = vadd.f32 0.0, %v6250
      %v6252 = vpop.f32.mrf.mxu0
      %6253 = vmatprep.mubr.bf16.mxu0 0
      %6254 = vmatmul.mubr.bf16.gmra.mxu0 %v6145
      %v6255 = vpop.f32.mrf.mxu0
      %v6256 = vadd.f32 0.0, %v6255
      %v6257 = vpop.f32.mrf.mxu0
      %v6258 = vpop.f32.mrf.mxu0
      %v6259 = vadd.f32 0.0, %v6258
      %v6260 = vpop.f32.mrf.mxu0
      %6261 = vmatprep.mubr.bf16.mxu0 0
      %6262 = vmatmul.mubr.bf16.gmra.mxu0 %v6148
      %v6263 = vpop.f32.mrf.mxu0
      %v6264 = vadd.f32 0.0, %v6263
      %v6265 = vpop.f32.mrf.mxu0
      %v6266 = vpop.f32.mrf.mxu0
      %v6267 = vadd.f32 0.0, %v6266
      %v6268 = vpop.f32.mrf.mxu0
      %6269 = vmatprep.mubr.bf16.mxu0 0
      %6270 = vmatmul.mubr.bf16.gmra.mxu0 %v6151
      %v6271 = vpop.f32.mrf.mxu0
      %v6272 = vadd.f32 0.0, %v6271
      %v6273 = vpop.f32.mrf.mxu0
      %v6274 = vpop.f32.mrf.mxu0
      %v6275 = vadd.f32 0.0, %v6274
      %v6276 = vpop.f32.mrf.mxu0
      %6277 = vmatprep.mubr.bf16.mxu0 0
      %6278 = vmatmul.mubr.bf16.gmra.mxu0 %v6154
      %v6279 = vpop.f32.mrf.mxu0
      %v6280 = vadd.f32 0.0, %v6279
      %v6281 = vpop.f32.mrf.mxu0
      %v6282 = vpop.f32.mrf.mxu0
      %v6283 = vadd.f32 0.0, %v6282
      %v6284 = vpop.f32.mrf.mxu0
      %6285 = vmatprep.mubr.bf16.mxu0 0
      %6286 = vmatmul.mubr.bf16.gmra.mxu0 %v6157
      %v6287 = vpop.f32.mrf.mxu0
      %v6288 = vadd.f32 0.0, %v6287
      %v6289 = vpop.f32.mrf.mxu0
      %v6290 = vpop.f32.mrf.mxu0
      %v6291 = vadd.f32 0.0, %v6290
      %v6292 = vpop.f32.mrf.mxu0
      %6293 = vmatprep.mubr.bf16.mxu0 0
      %6294 = vmatmul.mubr.bf16.gmra.mxu0 %v6160
      %v6295 = vpop.f32.mrf.mxu0
      %v6296 = vadd.f32 0.0, %v6295
      %v6297 = vpop.f32.mrf.mxu0
      %v6298 = vpop.f32.mrf.mxu0
      %v6299 = vadd.f32 0.0, %v6298
      %v6300 = vpop.f32.mrf.mxu0
      %6301 = vmatprep.mubr.bf16.mxu0 0
      %6302 = vmatmul.mubr.bf16.gmra.mxu0 %v6163
      %v6303 = vpop.f32.mrf.mxu0
      %v6304 = vadd.f32 0.0, %v6303
      %v6305 = vpop.f32.mrf.mxu0
      %v6306 = vpop.f32.mrf.mxu0
      %v6307 = vadd.f32 0.0, %v6306
      %v6308 = vpop.f32.mrf.mxu0
      %6309 = vmatprep.mubr.bf16.mxu0 0
      %6310 = vmatmul.mubr.bf16.gmra.mxu0 %v6166
      %v6311 = vpop.f32.mrf.mxu0
      %v6312 = vadd.f32 0.0, %v6311
      %v6313 = vpop.f32.mrf.mxu0
      %v6314 = vpop.f32.mrf.mxu0
      %v6315 = vadd.f32 0.0, %v6314
      %v6316 = vpop.f32.mrf.mxu0
      %6317 = vmatprep.mubr.bf16.mxu0 0
      %6318 = vmatmul.mubr.bf16.gmra.mxu0 %v6169
      %v6319 = vpop.f32.mrf.mxu0
      %v6320 = vadd.f32 0.0, %v6319
      %v6321 = vpop.f32.mrf.mxu0
      %v6322 = vpop.f32.mrf.mxu0
      %v6323 = vadd.f32 0.0, %v6322
      %v6324 = vpop.f32.mrf.mxu0
      %6325 = vmatprep.mubr.bf16.mxu0 0
      %6326 = vmatmul.mubr.bf16.gmra.mxu0 %v6172
      %v6327 = vpop.f32.mrf.mxu0
      %v6328 = vadd.f32 0.0, %v6327
      %v6329 = vpop.f32.mrf.mxu0
      %v6330 = vpop.f32.mrf.mxu0
      %v6331 = vadd.f32 0.0, %v6330
      %v6332 = vpop.f32.mrf.mxu0
      %6333 = vmatprep.mubr.bf16.mxu0 0
      %6334 = vmatmul.mubr.bf16.gmra.mxu0 %v6175
      %v6335 = vpop.f32.mrf.mxu0
      %v6336 = vadd.f32 0.0, %v6335
      %v6337 = vpop.f32.mrf.mxu0
      %v6338 = vpop.f32.mrf.mxu0
      %v6339 = vadd.f32 0.0, %v6338
      %v6340 = vpop.f32.mrf.mxu0
      %6341 = vdwg.mxu0
      %v6343 = vsel %vm292, %v6062, 0
      %v6346 = vsel %vm292, %v6063, 0
      %v6349 = vsel %vm292, %v6064, 0
      %v6352 = vsel %vm292, %v6065, 0
      %v6355 = vsel %vm292, %v6066, 0
      %v6358 = vsel %vm292, %v6067, 0
      %v6361 = vsel %vm292, %v6068, 0
      %v6364 = vsel %vm292, %v6069, 0
      %v6367 = vsel %vm292, %v6070, 0
      %v6370 = vsel %vm292, %v6071, 0
      %v6373 = vsel %vm292, %v6072, 0
      %v6376 = vsel %vm292, %v6073, 0
      %v6379 = vsel %vm292, %v6074, 0
      %v6382 = vsel %vm292, %v6075, 0
      %v6385 = vsel %vm292, %v6076, 0
      %v6388 = vsel %vm292, %v6077, 0
      %v6391 = vsel %vm6177, %v6078, 0
      %6393 = vmatprep.subr.bf16.mxu0 0
      %6394 = vmatpush1.bf16.msra.mxu0 0
      %6395 = vmatprep.subr.bf16.mxu0 0
      %6396 = vmatpush1.bf16.msra.mxu0 0
      %6397 = vmatprep.subr.bf16.mxu0 0
      %6398 = vmatpush1.bf16.msra.mxu0 0
      %6399 = vmatprep.subr.bf16.mxu0 0
      %6400 = vmatpush1.bf16.msra.mxu0 0
      %6401 = vmatprep.subr.bf16.mxu0 0
      %6402 = vmatpush1.bf16.msra.mxu0 0
      %6403 = vmatprep.subr.bf16.mxu0 0
      %6404 = vmatpush1.bf16.msra.mxu0 0
      %6405 = vmatprep.subr.bf16.mxu0 0
      %6406 = vmatpush1.bf16.msra.mxu0 0
      %6407 = vmatprep.subr.bf16.mxu0 0
      %6408 = vmatpush1.bf16.msra.mxu0 %v6391
      %6409 = vmatprep.subr.bf16.mxu0 0
      %6410 = vmatpush2.bf16.msra.mxu0 0
      %6411 = vmatprep.subr.bf16.mxu0 0
      %6412 = vmatpush2.bf16.msra.mxu0 0
      %6413 = vmatprep.subr.bf16.mxu0 0
      %6414 = vmatpush2.bf16.msra.mxu0 0
      %6415 = vmatprep.subr.bf16.mxu0 0
      %6416 = vmatpush2.bf16.msra.mxu0 0
      %6417 = vmatprep.subr.bf16.mxu0 0
      %6418 = vmatpush2.bf16.msra.mxu0 0
      %6419 = vmatprep.subr.bf16.mxu0 0
      %6420 = vmatpush2.bf16.msra.mxu0 0
      %6421 = vmatprep.subr.bf16.mxu0 0
      %6422 = vmatpush2.bf16.msra.mxu0 0
      %6423 = vmatprep.subr.bf16.mxu0 0
      %6424 = vmatpush2.bf16.msra.mxu0 0
      %6425 = vmatprep.mubr.bf16.mxu0 0
      %6426 = vmatmul.mubr.bf16.gmra.mxu0 %v6343
      %v6427 = vpop.f32.mrf.mxu0
      %v6428 = vadd.f32 %v6216, %v6427
      %v6429 = vpop.f32.mrf.mxu0
      %v6430 = vpop.f32.mrf.mxu0
      %v6431 = vadd.f32 %v6219, %v6430
      %v6432 = vpop.f32.mrf.mxu0
      %6433 = vmatprep.mubr.bf16.mxu0 0
      %6434 = vmatmul.mubr.bf16.gmra.mxu0 %v6346
      %v6435 = vpop.f32.mrf.mxu0
      %v6436 = vadd.f32 %v6224, %v6435
      %v6437 = vpop.f32.mrf.mxu0
      %v6438 = vpop.f32.mrf.mxu0
      %v6439 = vadd.f32 %v6227, %v6438
      %v6440 = vpop.f32.mrf.mxu0
      %6441 = vmatprep.mubr.bf16.mxu0 0
      %6442 = vmatmul.mubr.bf16.gmra.mxu0 %v6349
      %v6443 = vpop.f32.mrf.mxu0
      %v6444 = vadd.f32 %v6232, %v6443
      %v6445 = vpop.f32.mrf.mxu0
      %v6446 = vpop.f32.mrf.mxu0
      %v6447 = vadd.f32 %v6235, %v6446
      %v6448 = vpop.f32.mrf.mxu0
      %6449 = vmatprep.mubr.bf16.mxu0 0
      %6450 = vmatmul.mubr.bf16.gmra.mxu0 %v6352
      %v6451 = vpop.f32.mrf.mxu0
      %v6452 = vadd.f32 %v6240, %v6451
      %v6453 = vpop.f32.mrf.mxu0
      %v6454 = vpop.f32.mrf.mxu0
      %v6455 = vadd.f32 %v6243, %v6454
      %v6456 = vpop.f32.mrf.mxu0
      %6457 = vmatprep.mubr.bf16.mxu0 0
      %6458 = vmatmul.mubr.bf16.gmra.mxu0 %v6355
      %v6459 = vpop.f32.mrf.mxu0
      %v6460 = vadd.f32 %v6248, %v6459
      %v6461 = vpop.f32.mrf.mxu0
      %v6462 = vpop.f32.mrf.mxu0
      %v6463 = vadd.f32 %v6251, %v6462
      %v6464 = vpop.f32.mrf.mxu0
      %6465 = vmatprep.mubr.bf16.mxu0 0
      %6466 = vmatmul.mubr.bf16.gmra.mxu0 %v6358
      %v6467 = vpop.f32.mrf.mxu0
      %v6468 = vadd.f32 %v6256, %v6467
      %v6469 = vpop.f32.mrf.mxu0
      %v6470 = vpop.f32.mrf.mxu0
      %v6471 = vadd.f32 %v6259, %v6470
      %v6472 = vpop.f32.mrf.mxu0
      %6473 = vmatprep.mubr.bf16.mxu0 0
      %6474 = vmatmul.mubr.bf16.gmra.mxu0 %v6361
      %v6475 = vpop.f32.mrf.mxu0
      %v6476 = vadd.f32 %v6264, %v6475
      %v6477 = vpop.f32.mrf.mxu0
      %v6478 = vpop.f32.mrf.mxu0
      %v6479 = vadd.f32 %v6267, %v6478
      %v6480 = vpop.f32.mrf.mxu0
      %6481 = vmatprep.mubr.bf16.mxu0 0
      %6482 = vmatmul.mubr.bf16.gmra.mxu0 %v6364
      %v6483 = vpop.f32.mrf.mxu0
      %v6484 = vadd.f32 %v6272, %v6483
      %v6485 = vpop.f32.mrf.mxu0
      %v6486 = vpop.f32.mrf.mxu0
      %v6487 = vadd.f32 %v6275, %v6486
      %v6488 = vpop.f32.mrf.mxu0
      %6489 = vmatprep.mubr.bf16.mxu0 0
      %6490 = vmatmul.mubr.bf16.gmra.mxu0 %v6367
      %v6491 = vpop.f32.mrf.mxu0
      %v6492 = vadd.f32 %v6280, %v6491
      %v6493 = vpop.f32.mrf.mxu0
      %v6494 = vpop.f32.mrf.mxu0
      %v6495 = vadd.f32 %v6283, %v6494
      %v6496 = vpop.f32.mrf.mxu0
      %6497 = vmatprep.mubr.bf16.mxu0 0
      %6498 = vmatmul.mubr.bf16.gmra.mxu0 %v6370
      %v6499 = vpop.f32.mrf.mxu0
      %v6500 = vadd.f32 %v6288, %v6499
      %v6501 = vpop.f32.mrf.mxu0
      %v6502 = vpop.f32.mrf.mxu0
      %v6503 = vadd.f32 %v6291, %v6502
      %v6504 = vpop.f32.mrf.mxu0
      %6505 = vmatprep.mubr.bf16.mxu0 0
      %6506 = vmatmul.mubr.bf16.gmra.mxu0 %v6373
      %v6507 = vpop.f32.mrf.mxu0
      %v6508 = vadd.f32 %v6296, %v6507
      %v6509 = vpop.f32.mrf.mxu0
      %v6510 = vpop.f32.mrf.mxu0
      %v6511 = vadd.f32 %v6299, %v6510
      %v6512 = vpop.f32.mrf.mxu0
      %6513 = vmatprep.mubr.bf16.mxu0 0
      %6514 = vmatmul.mubr.bf16.gmra.mxu0 %v6376
      %v6515 = vpop.f32.mrf.mxu0
      %v6516 = vadd.f32 %v6304, %v6515
      %v6517 = vpop.f32.mrf.mxu0
      %v6518 = vpop.f32.mrf.mxu0
      %v6519 = vadd.f32 %v6307, %v6518
      %v6520 = vpop.f32.mrf.mxu0
      %6521 = vmatprep.mubr.bf16.mxu0 0
      %6522 = vmatmul.mubr.bf16.gmra.mxu0 %v6379
      %v6523 = vpop.f32.mrf.mxu0
      %v6524 = vadd.f32 %v6312, %v6523
      %v6525 = vpop.f32.mrf.mxu0
      %v6526 = vpop.f32.mrf.mxu0
      %v6527 = vadd.f32 %v6315, %v6526
      %v6528 = vpop.f32.mrf.mxu0
      %6529 = vmatprep.mubr.bf16.mxu0 0
      %6530 = vmatmul.mubr.bf16.gmra.mxu0 %v6382
      %v6531 = vpop.f32.mrf.mxu0
      %v6532 = vadd.f32 %v6320, %v6531
      %v6533 = vpop.f32.mrf.mxu0
      %v6534 = vpop.f32.mrf.mxu0
      %v6535 = vadd.f32 %v6323, %v6534
      %v6536 = vpop.f32.mrf.mxu0
      %6537 = vmatprep.mubr.bf16.mxu0 0
      %6538 = vmatmul.mubr.bf16.gmra.mxu0 %v6385
      %v6539 = vpop.f32.mrf.mxu0
      %v6540 = vadd.f32 %v6328, %v6539
      %v6541 = vpop.f32.mrf.mxu0
      %v6542 = vpop.f32.mrf.mxu0
      %v6543 = vadd.f32 %v6331, %v6542
      %v6544 = vpop.f32.mrf.mxu0
      %6545 = vmatprep.mubr.bf16.mxu0 0
      %6546 = vmatmul.mubr.bf16.gmra.mxu0 %v6388
      %v6547 = vpop.f32.mrf.mxu0
      %v6548 = vadd.f32 %v6336, %v6547
      %v6549 = vpop.f32.mrf.mxu0
      %v6550 = vpop.f32.mrf.mxu0
      %v6551 = vadd.f32 %v6339, %v6550
      %v6552 = vpop.f32.mrf.mxu0
      %6553 = vdwg.mxu0
      %v6554 = vld [vmem:[#allocation3 + $0x9] sm:$0xff]
      %v6555 = vld [vmem:[#allocation3 + $0x11] sm:$0xff]
      %v6556 = vld [vmem:[#allocation3 + $0x19] sm:$0xff]
      %v6557 = vld [vmem:[#allocation3 + $0x21] sm:$0xff]
      %v6558 = vld [vmem:[#allocation3 + $0x29] sm:$0xff]
      %v6559 = vld [vmem:[#allocation3 + $0x31] sm:$0xff]
      %v6560 = vld [vmem:[#allocation3 + $0x39] sm:$0xff]
      %v6561 = vld [vmem:[#allocation3 + $0x41] sm:$0xff]
      %v6562 = vld [vmem:[#allocation3 + $0x49] sm:$0xff]
      %v6563 = vld [vmem:[#allocation3 + $0x51] sm:$0xff]
      %v6564 = vld [vmem:[#allocation3 + $0x59] sm:$0xff]
      %v6565 = vld [vmem:[#allocation3 + $0x61] sm:$0xff]
      %v6566 = vld [vmem:[#allocation3 + $0x69] sm:$0xff]
      %v6567 = vld [vmem:[#allocation3 + $0x71] sm:$0xff]
      %v6568 = vld [vmem:[#allocation3 + $0x79] sm:$0xff]
      %v6569 = vld [vmem:[#allocation3 + $0x81] sm:$0xff]
      %v6570 = vld [vmem:[#allocation3 + $0x89] sm:$0xff]
      %v6571 = vld [vmem:[#allocation3 + $0x91] sm:$0xff]
      %v6572 = vld [vmem:[#allocation3 + $0x99] sm:$0xff]
      %v6573 = vld [vmem:[#allocation3 + $0xa1] sm:$0xff]
      %v6574 = vld [vmem:[#allocation3 + $0xa9] sm:$0xff]
      %v6575 = vld [vmem:[#allocation3 + $0xb1] sm:$0xff]
      %v6576 = vld [vmem:[#allocation3 + $0xb9] sm:$0xff]
      %v6577 = vld [vmem:[#allocation3 + $0xc1] sm:$0xff]
      %v6578 = vld [vmem:[#allocation3 + $0xc9] sm:$0xff]
      %v6579 = vld [vmem:[#allocation3 + $0xd1] sm:$0xff]
      %v6580 = vld [vmem:[#allocation3 + $0xd9] sm:$0xff]
      %v6581 = vld [vmem:[#allocation3 + $0xe1] sm:$0xff]
      %v6582 = vld [vmem:[#allocation3 + $0xe9] sm:$0xff]
      %v6583 = vld [vmem:[#allocation3 + $0xf1] sm:$0xff]
      %v6584 = vld [vmem:[#allocation3 + $0xf9] sm:$0xff]
      %v6585 = vld [vmem:[#allocation3 + $0x101] sm:$0xff]
      %v6586 = vpack.c.bf16 %v6555, %v6554
      %v6587 = vpack.c.bf16 %v6557, %v6556
      %v6588 = vpack.c.bf16 %v6559, %v6558
      %v6589 = vpack.c.bf16 %v6561, %v6560
      %v6590 = vpack.c.bf16 %v6563, %v6562
      %v6591 = vpack.c.bf16 %v6565, %v6564
      %v6592 = vpack.c.bf16 %v6567, %v6566
      %v6593 = vpack.c.bf16 %v6569, %v6568
      %v6594 = vpack.c.bf16 %v6571, %v6570
      %v6595 = vpack.c.bf16 %v6573, %v6572
      %v6596 = vpack.c.bf16 %v6575, %v6574
      %v6597 = vpack.c.bf16 %v6577, %v6576
      %v6598 = vpack.c.bf16 %v6579, %v6578
      %v6599 = vpack.c.bf16 %v6581, %v6580
      %v6600 = vpack.c.bf16 %v6583, %v6582
      %v6601 = vpack.c.bf16 %v6585, %v6584
      %v6602 = vmul.bf16 %v6586, %v5998
      %v6603 = vmul.bf16 %v6587, %v5999
      %v6604 = vmul.bf16 %v6588, %v6000
      %v6605 = vmul.bf16 %v6589, %v6001
      %v6606 = vmul.bf16 %v6590, %v6002
      %v6607 = vmul.bf16 %v6591, %v6003
      %v6608 = vmul.bf16 %v6592, %v6004
      %v6609 = vmul.bf16 %v6593, %v6005
      %v6610 = vmul.bf16 %v6594, %v6006
      %v6611 = vmul.bf16 %v6595, %v6007
      %v6612 = vmul.bf16 %v6596, %v6008
      %v6613 = vmul.bf16 %v6597, %v6009
      %v6614 = vmul.bf16 %v6598, %v6010
      %v6615 = vmul.bf16 %v6599, %v6011
      %v6616 = vmul.bf16 %v6600, %v6012
      %v6617 = vmul.bf16 %v6601, %v6013
      %s6618 = scalar_lea.vmem %s3, 4
      %v6619 = vld [vmem:[%s6618] sm:$0x3]
      %v6621 = vsel %vm292, %v6602, 0
      %v6624 = vsel %vm292, %v6603, 0
      %v6627 = vsel %vm292, %v6604, 0
      %v6630 = vsel %vm292, %v6605, 0
      %v6633 = vsel %vm292, %v6606, 0
      %v6636 = vsel %vm292, %v6607, 0
      %v6639 = vsel %vm292, %v6608, 0
      %v6642 = vsel %vm292, %v6609, 0
      %v6645 = vsel %vm292, %v6610, 0
      %v6648 = vsel %vm292, %v6611, 0
      %v6651 = vsel %vm292, %v6612, 0
      %v6654 = vsel %vm292, %v6613, 0
      %v6657 = vsel %vm292, %v6614, 0
      %v6660 = vsel %vm292, %v6615, 0
      %v6663 = vsel %vm292, %v6616, 0
      %v6666 = vsel %vm292, %v6617, 0
      %v6669 = vsel %vm6177, %v6619, 0
      %6671 = vmatprep.subr.bf16.mxu0 0
      %6672 = vmatpush1.bf16.msra.mxu0 0
      %6673 = vmatprep.subr.bf16.mxu0 0
      %6674 = vmatpush1.bf16.msra.mxu0 0
      %6675 = vmatprep.subr.bf16.mxu0 0
      %6676 = vmatpush1.bf16.msra.mxu0 0
      %6677 = vmatprep.subr.bf16.mxu0 0
      %6678 = vmatpush1.bf16.msra.mxu0 0
      %6679 = vmatprep.subr.bf16.mxu0 0
      %6680 = vmatpush1.bf16.msra.mxu0 0
      %6681 = vmatprep.subr.bf16.mxu0 0
      %6682 = vmatpush1.bf16.msra.mxu0 0
      %6683 = vmatprep.subr.bf16.mxu0 0
      %6684 = vmatpush1.bf16.msra.mxu0 0
      %6685 = vmatprep.subr.bf16.mxu0 0
      %6686 = vmatpush1.bf16.msra.mxu0 %v6669
      %6687 = vmatprep.subr.bf16.mxu0 0
      %6688 = vmatpush2.bf16.msra.mxu0 0
      %6689 = vmatprep.subr.bf16.mxu0 0
      %6690 = vmatpush2.bf16.msra.mxu0 0
      %6691 = vmatprep.subr.bf16.mxu0 0
      %6692 = vmatpush2.bf16.msra.mxu0 0
      %6693 = vmatprep.subr.bf16.mxu0 0
      %6694 = vmatpush2.bf16.msra.mxu0 0
      %6695 = vmatprep.subr.bf16.mxu0 0
      %6696 = vmatpush2.bf16.msra.mxu0 0
      %6697 = vmatprep.subr.bf16.mxu0 0
      %6698 = vmatpush2.bf16.msra.mxu0 0
      %6699 = vmatprep.subr.bf16.mxu0 0
      %6700 = vmatpush2.bf16.msra.mxu0 0
      %6701 = vmatprep.subr.bf16.mxu0 0
      %6702 = vmatpush2.bf16.msra.mxu0 0
      %6703 = vmatprep.mubr.bf16.mxu0 0
      %6704 = vmatmul.mubr.bf16.gmra.mxu0 %v6621
      %v6705 = vpop.f32.mrf.mxu0
      %v6706 = vadd.f32 0.0, %v6705
      %v6707 = vpop.f32.mrf.mxu0
      %v6708 = vpop.f32.mrf.mxu0
      %v6709 = vadd.f32 0.0, %v6708
      %v6710 = vpop.f32.mrf.mxu0
      %6711 = vmatprep.mubr.bf16.mxu0 0
      %6712 = vmatmul.mubr.bf16.gmra.mxu0 %v6624
      %v6713 = vpop.f32.mrf.mxu0
      %v6714 = vadd.f32 0.0, %v6713
      %v6715 = vpop.f32.mrf.mxu0
      %v6716 = vpop.f32.mrf.mxu0
      %v6717 = vadd.f32 0.0, %v6716
      %v6718 = vpop.f32.mrf.mxu0
      %6719 = vmatprep.mubr.bf16.mxu0 0
      %6720 = vmatmul.mubr.bf16.gmra.mxu0 %v6627
      %v6721 = vpop.f32.mrf.mxu0
      %v6722 = vadd.f32 0.0, %v6721
      %v6723 = vpop.f32.mrf.mxu0
      %v6724 = vpop.f32.mrf.mxu0
      %v6725 = vadd.f32 0.0, %v6724
      %v6726 = vpop.f32.mrf.mxu0
      %6727 = vmatprep.mubr.bf16.mxu0 0
      %6728 = vmatmul.mubr.bf16.gmra.mxu0 %v6630
      %v6729 = vpop.f32.mrf.mxu0
      %v6730 = vadd.f32 0.0, %v6729
      %v6731 = vpop.f32.mrf.mxu0
      %v6732 = vpop.f32.mrf.mxu0
      %v6733 = vadd.f32 0.0, %v6732
      %v6734 = vpop.f32.mrf.mxu0
      %6735 = vmatprep.mubr.bf16.mxu0 0
      %6736 = vmatmul.mubr.bf16.gmra.mxu0 %v6633
      %v6737 = vpop.f32.mrf.mxu0
      %v6738 = vadd.f32 0.0, %v6737
      %v6739 = vpop.f32.mrf.mxu0
      %v6740 = vpop.f32.mrf.mxu0
      %v6741 = vadd.f32 0.0, %v6740
      %v6742 = vpop.f32.mrf.mxu0
      %6743 = vmatprep.mubr.bf16.mxu0 0
      %6744 = vmatmul.mubr.bf16.gmra.mxu0 %v6636
      %v6745 = vpop.f32.mrf.mxu0
      %v6746 = vadd.f32 0.0, %v6745
      %v6747 = vpop.f32.mrf.mxu0
      %v6748 = vpop.f32.mrf.mxu0
      %v6749 = vadd.f32 0.0, %v6748
      %v6750 = vpop.f32.mrf.mxu0
      %6751 = vmatprep.mubr.bf16.mxu0 0
      %6752 = vmatmul.mubr.bf16.gmra.mxu0 %v6639
      %v6753 = vpop.f32.mrf.mxu0
      %v6754 = vadd.f32 0.0, %v6753
      %v6755 = vpop.f32.mrf.mxu0
      %v6756 = vpop.f32.mrf.mxu0
      %v6757 = vadd.f32 0.0, %v6756
      %v6758 = vpop.f32.mrf.mxu0
      %6759 = vmatprep.mubr.bf16.mxu0 0
      %6760 = vmatmul.mubr.bf16.gmra.mxu0 %v6642
      %v6761 = vpop.f32.mrf.mxu0
      %v6762 = vadd.f32 0.0, %v6761
      %v6763 = vpop.f32.mrf.mxu0
      %v6764 = vpop.f32.mrf.mxu0
      %v6765 = vadd.f32 0.0, %v6764
      %v6766 = vpop.f32.mrf.mxu0
      %6767 = vmatprep.mubr.bf16.mxu0 0
      %6768 = vmatmul.mubr.bf16.gmra.mxu0 %v6645
      %v6769 = vpop.f32.mrf.mxu0
      %v6770 = vadd.f32 0.0, %v6769
      %v6771 = vpop.f32.mrf.mxu0
      %v6772 = vpop.f32.mrf.mxu0
      %v6773 = vadd.f32 0.0, %v6772
      %v6774 = vpop.f32.mrf.mxu0
      %6775 = vmatprep.mubr.bf16.mxu0 0
      %6776 = vmatmul.mubr.bf16.gmra.mxu0 %v6648
      %v6777 = vpop.f32.mrf.mxu0
      %v6778 = vadd.f32 0.0, %v6777
      %v6779 = vpop.f32.mrf.mxu0
      %v6780 = vpop.f32.mrf.mxu0
      %v6781 = vadd.f32 0.0, %v6780
      %v6782 = vpop.f32.mrf.mxu0
      %6783 = vmatprep.mubr.bf16.mxu0 0
      %6784 = vmatmul.mubr.bf16.gmra.mxu0 %v6651
      %v6785 = vpop.f32.mrf.mxu0
      %v6786 = vadd.f32 0.0, %v6785
      %v6787 = vpop.f32.mrf.mxu0
      %v6788 = vpop.f32.mrf.mxu0
      %v6789 = vadd.f32 0.0, %v6788
      %v6790 = vpop.f32.mrf.mxu0
      %6791 = vmatprep.mubr.bf16.mxu0 0
      %6792 = vmatmul.mubr.bf16.gmra.mxu0 %v6654
      %v6793 = vpop.f32.mrf.mxu0
      %v6794 = vadd.f32 0.0, %v6793
      %v6795 = vpop.f32.mrf.mxu0
      %v6796 = vpop.f32.mrf.mxu0
      %v6797 = vadd.f32 0.0, %v6796
      %v6798 = vpop.f32.mrf.mxu0
      %6799 = vmatprep.mubr.bf16.mxu0 0
      %6800 = vmatmul.mubr.bf16.gmra.mxu0 %v6657
      %v6801 = vpop.f32.mrf.mxu0
      %v6802 = vadd.f32 0.0, %v6801
      %v6803 = vpop.f32.mrf.mxu0
      %v6804 = vpop.f32.mrf.mxu0
      %v6805 = vadd.f32 0.0, %v6804
      %v6806 = vpop.f32.mrf.mxu0
      %6807 = vmatprep.mubr.bf16.mxu0 0
      %6808 = vmatmul.mubr.bf16.gmra.mxu0 %v6660
      %v6809 = vpop.f32.mrf.mxu0
      %v6810 = vadd.f32 0.0, %v6809
      %v6811 = vpop.f32.mrf.mxu0
      %v6812 = vpop.f32.mrf.mxu0
      %v6813 = vadd.f32 0.0, %v6812
      %v6814 = vpop.f32.mrf.mxu0
      %6815 = vmatprep.mubr.bf16.mxu0 0
      %6816 = vmatmul.mubr.bf16.gmra.mxu0 %v6663
      %v6817 = vpop.f32.mrf.mxu0
      %v6818 = vadd.f32 0.0, %v6817
      %v6819 = vpop.f32.mrf.mxu0
      %v6820 = vpop.f32.mrf.mxu0
      %v6821 = vadd.f32 0.0, %v6820
      %v6822 = vpop.f32.mrf.mxu0
      %6823 = vmatprep.mubr.bf16.mxu0 0
      %6824 = vmatmul.mubr.bf16.gmra.mxu0 %v6666
      %v6825 = vpop.f32.mrf.mxu0
      %v6826 = vadd.f32 0.0, %v6825
      %v6827 = vpop.f32.mrf.mxu0
      %v6828 = vpop.f32.mrf.mxu0
      %v6829 = vadd.f32 0.0, %v6828
      %v6830 = vpop.f32.mrf.mxu0
      %6831 = vdwg.mxu0
      %v6832 = vadd.f32 %v6428, %v6706
      %v6833 = vadd.f32 %v6431, %v6709
      %v6834 = vadd.f32 %v6436, %v6714
      %v6835 = vadd.f32 %v6439, %v6717
      %v6836 = vadd.f32 %v6444, %v6722
      %v6837 = vadd.f32 %v6447, %v6725
      %v6838 = vadd.f32 %v6452, %v6730
      %v6839 = vadd.f32 %v6455, %v6733
      %v6840 = vadd.f32 %v6460, %v6738
      %v6841 = vadd.f32 %v6463, %v6741
      %v6842 = vadd.f32 %v6468, %v6746
      %v6843 = vadd.f32 %v6471, %v6749
      %v6844 = vadd.f32 %v6476, %v6754
      %v6845 = vadd.f32 %v6479, %v6757
      %v6846 = vadd.f32 %v6484, %v6762
      %v6847 = vadd.f32 %v6487, %v6765
      %v6848 = vadd.f32 %v6492, %v6770
      %v6849 = vadd.f32 %v6495, %v6773
      %v6850 = vadd.f32 %v6500, %v6778
      %v6851 = vadd.f32 %v6503, %v6781
      %v6852 = vadd.f32 %v6508, %v6786
      %v6853 = vadd.f32 %v6511, %v6789
      %v6854 = vadd.f32 %v6516, %v6794
      %v6855 = vadd.f32 %v6519, %v6797
      %v6856 = vadd.f32 %v6524, %v6802
      %v6857 = vadd.f32 %v6527, %v6805
      %v6858 = vadd.f32 %v6532, %v6810
      %v6859 = vadd.f32 %v6535, %v6813
      %v6860 = vadd.f32 %v6540, %v6818
      %v6861 = vadd.f32 %v6543, %v6821
      %v6862 = vadd.f32 %v6548, %v6826
      %v6863 = vadd.f32 %v6551, %v6829
      %v6864 = vld [vmem:[#allocation3 + $0x17] sm:$0xff]
      %v6865 = vld [vmem:[#allocation3 + $0x1f] sm:$0xff]
      %v6866 = vld [vmem:[#allocation3 + $0x27] sm:$0xff]
      %v6867 = vld [vmem:[#allocation3 + $0x2f] sm:$0xff]
      %v6868 = vld [vmem:[#allocation3 + $0x37] sm:$0xff]
      %v6869 = vld [vmem:[#allocation3 + $0x3f] sm:$0xff]
      %v6870 = vld [vmem:[#allocation3 + $0x47] sm:$0xff]
      %v6871 = vld [vmem:[#allocation3 + $0x4f] sm:$0xff]
      %v6872 = vld [vmem:[#allocation3 + $0x57] sm:$0xff]
      %v6873 = vld [vmem:[#allocation3 + $0x5f] sm:$0xff]
      %v6874 = vld [vmem:[#allocation3 + $0x67] sm:$0xff]
      %v6875 = vld [vmem:[#allocation3 + $0x6f] sm:$0xff]
      %v6876 = vld [vmem:[#allocation3 + $0x77] sm:$0xff]
      %v6877 = vld [vmem:[#allocation3 + $0x7f] sm:$0xff]
      %v6878 = vld [vmem:[#allocation3 + $0x87] sm:$0xff]
      %v6879 = vld [vmem:[#allocation3 + $0x8f] sm:$0xff]
      %v6880 = vld [vmem:[#allocation3 + $0x97] sm:$0xff]
      %v6881 = vld [vmem:[#allocation3 + $0x9f] sm:$0xff]
      %v6882 = vld [vmem:[#allocation3 + $0xa7] sm:$0xff]
      %v6883 = vld [vmem:[#allocation3 + $0xaf] sm:$0xff]
      %v6884 = vld [vmem:[#allocation3 + $0xb7] sm:$0xff]
      %v6885 = vld [vmem:[#allocation3 + $0xbf] sm:$0xff]
      %v6886 = vld [vmem:[#allocation3 + $0xc7] sm:$0xff]
      %v6887 = vld [vmem:[#allocation3 + $0xcf] sm:$0xff]
      %v6888 = vld [vmem:[#allocation3 + $0xd7] sm:$0xff]
      %v6889 = vld [vmem:[#allocation3 + $0xdf] sm:$0xff]
      %v6890 = vld [vmem:[#allocation3 + $0xe7] sm:$0xff]
      %v6891 = vld [vmem:[#allocation3 + $0xef] sm:$0xff]
      %v6892 = vld [vmem:[#allocation3 + $0xf7] sm:$0xff]
      %v6893 = vld [vmem:[#allocation3 + $0xff] sm:$0xff]
      %v6894 = vld [vmem:[#allocation3 + $0x107] sm:$0xff]
      %v6895 = vld [vmem:[#allocation3 + $0x10f] sm:$0xff]
      %v6896 = vpack.c.bf16 %v6865, %v6864
      %v6897 = vpack.c.bf16 %v6867, %v6866
      %v6898 = vpack.c.bf16 %v6869, %v6868
      %v6899 = vpack.c.bf16 %v6871, %v6870
      %v6900 = vpack.c.bf16 %v6873, %v6872
      %v6901 = vpack.c.bf16 %v6875, %v6874
      %v6902 = vpack.c.bf16 %v6877, %v6876
      %v6903 = vpack.c.bf16 %v6879, %v6878
      %v6904 = vpack.c.bf16 %v6881, %v6880
      %v6905 = vpack.c.bf16 %v6883, %v6882
      %v6906 = vpack.c.bf16 %v6885, %v6884
      %v6907 = vpack.c.bf16 %v6887, %v6886
      %v6908 = vpack.c.bf16 %v6889, %v6888
      %v6909 = vpack.c.bf16 %v6891, %v6890
      %v6910 = vpack.c.bf16 %v6893, %v6892
      %v6911 = vpack.c.bf16 %v6895, %v6894
      %v6912 = vmul.bf16 %v6896, %v5886
      %v6913 = vmul.bf16 %v6897, %v5887
      %v6914 = vmul.bf16 %v6898, %v5888
      %v6915 = vmul.bf16 %v6899, %v5889
      %v6916 = vmul.bf16 %v6900, %v5890
      %v6917 = vmul.bf16 %v6901, %v5891
      %v6918 = vmul.bf16 %v6902, %v5892
      %v6919 = vmul.bf16 %v6903, %v5893
      %v6920 = vmul.bf16 %v6904, %v5894
      %v6921 = vmul.bf16 %v6905, %v5895
      %v6922 = vmul.bf16 %v6906, %v5896
      %v6923 = vmul.bf16 %v6907, %v5897
      %v6924 = vmul.bf16 %v6908, %v5898
      %v6925 = vmul.bf16 %v6909, %v5899
      %v6926 = vmul.bf16 %v6910, %v5900
      %v6927 = vmul.bf16 %v6911, %v5901
      %s6928 = scalar_lea.vmem %s3, 6
      %v6929 = vld [vmem:[%s6928] sm:$0x3]
      %v6931 = vsel %vm292, %v6912, 0
      %v6934 = vsel %vm292, %v6913, 0
      %v6937 = vsel %vm292, %v6914, 0
      %v6940 = vsel %vm292, %v6915, 0
      %v6943 = vsel %vm292, %v6916, 0
      %v6946 = vsel %vm292, %v6917, 0
      %v6949 = vsel %vm292, %v6918, 0
      %v6952 = vsel %vm292, %v6919, 0
      %v6955 = vsel %vm292, %v6920, 0
      %v6958 = vsel %vm292, %v6921, 0
      %v6961 = vsel %vm292, %v6922, 0
      %v6964 = vsel %vm292, %v6923, 0
      %v6967 = vsel %vm292, %v6924, 0
      %v6970 = vsel %vm292, %v6925, 0
      %v6973 = vsel %vm292, %v6926, 0
      %v6976 = vsel %vm292, %v6927, 0
      %v6979 = vsel %vm6177, %v6929, 0
      %6981 = vmatprep.subr.bf16.mxu0 0
      %6982 = vmatpush1.bf16.msra.mxu0 0
      %6983 = vmatprep.subr.bf16.mxu0 0
      %6984 = vmatpush1.bf16.msra.mxu0 0
      %6985 = vmatprep.subr.bf16.mxu0 0
      %6986 = vmatpush1.bf16.msra.mxu0 0
      %6987 = vmatprep.subr.bf16.mxu0 0
      %6988 = vmatpush1.bf16.msra.mxu0 0
      %6989 = vmatprep.subr.bf16.mxu0 0
      %6990 = vmatpush1.bf16.msra.mxu0 0
      %6991 = vmatprep.subr.bf16.mxu0 0
      %6992 = vmatpush1.bf16.msra.mxu0 0
      %6993 = vmatprep.subr.bf16.mxu0 0
      %6994 = vmatpush1.bf16.msra.mxu0 0
      %6995 = vmatprep.subr.bf16.mxu0 0
      %6996 = vmatpush1.bf16.msra.mxu0 %v6979
      %6997 = vmatprep.subr.bf16.mxu0 0
      %6998 = vmatpush2.bf16.msra.mxu0 0
      %6999 = vmatprep.subr.bf16.mxu0 0
      %7000 = vmatpush2.bf16.msra.mxu0 0
      %7001 = vmatprep.subr.bf16.mxu0 0
      %7002 = vmatpush2.bf16.msra.mxu0 0
      %7003 = vmatprep.subr.bf16.mxu0 0
      %7004 = vmatpush2.bf16.msra.mxu0 0
      %7005 = vmatprep.subr.bf16.mxu0 0
      %7006 = vmatpush2.bf16.msra.mxu0 0
      %7007 = vmatprep.subr.bf16.mxu0 0
      %7008 = vmatpush2.bf16.msra.mxu0 0
      %7009 = vmatprep.subr.bf16.mxu0 0
      %7010 = vmatpush2.bf16.msra.mxu0 0
      %7011 = vmatprep.subr.bf16.mxu0 0
      %7012 = vmatpush2.bf16.msra.mxu0 0
      %7013 = vmatprep.mubr.bf16.mxu0 0
      %7014 = vmatmul.mubr.bf16.gmra.mxu0 %v6931
      %v7015 = vpop.f32.mrf.mxu0
      %v7016 = vadd.f32 0.0, %v7015
      %v7017 = vpop.f32.mrf.mxu0
      %v7018 = vpop.f32.mrf.mxu0
      %v7019 = vadd.f32 0.0, %v7018
      %v7020 = vpop.f32.mrf.mxu0
      %7021 = vmatprep.mubr.bf16.mxu0 0
      %7022 = vmatmul.mubr.bf16.gmra.mxu0 %v6934
      %v7023 = vpop.f32.mrf.mxu0
      %v7024 = vadd.f32 0.0, %v7023
      %v7025 = vpop.f32.mrf.mxu0
      %v7026 = vpop.f32.mrf.mxu0
      %v7027 = vadd.f32 0.0, %v7026
      %v7028 = vpop.f32.mrf.mxu0
      %7029 = vmatprep.mubr.bf16.mxu0 0
      %7030 = vmatmul.mubr.bf16.gmra.mxu0 %v6937
      %v7031 = vpop.f32.mrf.mxu0
      %v7032 = vadd.f32 0.0, %v7031
      %v7033 = vpop.f32.mrf.mxu0
      %v7034 = vpop.f32.mrf.mxu0
      %v7035 = vadd.f32 0.0, %v7034
      %v7036 = vpop.f32.mrf.mxu0
      %7037 = vmatprep.mubr.bf16.mxu0 0
      %7038 = vmatmul.mubr.bf16.gmra.mxu0 %v6940
      %v7039 = vpop.f32.mrf.mxu0
      %v7040 = vadd.f32 0.0, %v7039
      %v7041 = vpop.f32.mrf.mxu0
      %v7042 = vpop.f32.mrf.mxu0
      %v7043 = vadd.f32 0.0, %v7042
      %v7044 = vpop.f32.mrf.mxu0
      %7045 = vmatprep.mubr.bf16.mxu0 0
      %7046 = vmatmul.mubr.bf16.gmra.mxu0 %v6943
      %v7047 = vpop.f32.mrf.mxu0
      %v7048 = vadd.f32 0.0, %v7047
      %v7049 = vpop.f32.mrf.mxu0
      %v7050 = vpop.f32.mrf.mxu0
      %v7051 = vadd.f32 0.0, %v7050
      %v7052 = vpop.f32.mrf.mxu0
      %7053 = vmatprep.mubr.bf16.mxu0 0
      %7054 = vmatmul.mubr.bf16.gmra.mxu0 %v6946
      %v7055 = vpop.f32.mrf.mxu0
      %v7056 = vadd.f32 0.0, %v7055
      %v7057 = vpop.f32.mrf.mxu0
      %v7058 = vpop.f32.mrf.mxu0
      %v7059 = vadd.f32 0.0, %v7058
      %v7060 = vpop.f32.mrf.mxu0
      %7061 = vmatprep.mubr.bf16.mxu0 0
      %7062 = vmatmul.mubr.bf16.gmra.mxu0 %v6949
      %v7063 = vpop.f32.mrf.mxu0
      %v7064 = vadd.f32 0.0, %v7063
      %v7065 = vpop.f32.mrf.mxu0
      %v7066 = vpop.f32.mrf.mxu0
      %v7067 = vadd.f32 0.0, %v7066
      %v7068 = vpop.f32.mrf.mxu0
      %7069 = vmatprep.mubr.bf16.mxu0 0
      %7070 = vmatmul.mubr.bf16.gmra.mxu0 %v6952
      %v7071 = vpop.f32.mrf.mxu0
      %v7072 = vadd.f32 0.0, %v7071
      %v7073 = vpop.f32.mrf.mxu0
      %v7074 = vpop.f32.mrf.mxu0
      %v7075 = vadd.f32 0.0, %v7074
      %v7076 = vpop.f32.mrf.mxu0
      %7077 = vmatprep.mubr.bf16.mxu0 0
      %7078 = vmatmul.mubr.bf16.gmra.mxu0 %v6955
      %v7079 = vpop.f32.mrf.mxu0
      %v7080 = vadd.f32 0.0, %v7079
      %v7081 = vpop.f32.mrf.mxu0
      %v7082 = vpop.f32.mrf.mxu0
      %v7083 = vadd.f32 0.0, %v7082
      %v7084 = vpop.f32.mrf.mxu0
      %7085 = vmatprep.mubr.bf16.mxu0 0
      %7086 = vmatmul.mubr.bf16.gmra.mxu0 %v6958
      %v7087 = vpop.f32.mrf.mxu0
      %v7088 = vadd.f32 0.0, %v7087
      %v7089 = vpop.f32.mrf.mxu0
      %v7090 = vpop.f32.mrf.mxu0
      %v7091 = vadd.f32 0.0, %v7090
      %v7092 = vpop.f32.mrf.mxu0
      %7093 = vmatprep.mubr.bf16.mxu0 0
      %7094 = vmatmul.mubr.bf16.gmra.mxu0 %v6961
      %v7095 = vpop.f32.mrf.mxu0
      %v7096 = vadd.f32 0.0, %v7095
      %v7097 = vpop.f32.mrf.mxu0
      %v7098 = vpop.f32.mrf.mxu0
      %v7099 = vadd.f32 0.0, %v7098
      %v7100 = vpop.f32.mrf.mxu0
      %7101 = vmatprep.mubr.bf16.mxu0 0
      %7102 = vmatmul.mubr.bf16.gmra.mxu0 %v6964
      %v7103 = vpop.f32.mrf.mxu0
      %v7104 = vadd.f32 0.0, %v7103
      %v7105 = vpop.f32.mrf.mxu0
      %v7106 = vpop.f32.mrf.mxu0
      %v7107 = vadd.f32 0.0, %v7106
      %v7108 = vpop.f32.mrf.mxu0
      %7109 = vmatprep.mubr.bf16.mxu0 0
      %7110 = vmatmul.mubr.bf16.gmra.mxu0 %v6967
      %v7111 = vpop.f32.mrf.mxu0
      %v7112 = vadd.f32 0.0, %v7111
      %v7113 = vpop.f32.mrf.mxu0
      %v7114 = vpop.f32.mrf.mxu0
      %v7115 = vadd.f32 0.0, %v7114
      %v7116 = vpop.f32.mrf.mxu0
      %7117 = vmatprep.mubr.bf16.mxu0 0
      %7118 = vmatmul.mubr.bf16.gmra.mxu0 %v6970
      %v7119 = vpop.f32.mrf.mxu0
      %v7120 = vadd.f32 0.0, %v7119
      %v7121 = vpop.f32.mrf.mxu0
      %v7122 = vpop.f32.mrf.mxu0
      %v7123 = vadd.f32 0.0, %v7122
      %v7124 = vpop.f32.mrf.mxu0
      %7125 = vmatprep.mubr.bf16.mxu0 0
      %7126 = vmatmul.mubr.bf16.gmra.mxu0 %v6973
      %v7127 = vpop.f32.mrf.mxu0
      %v7128 = vadd.f32 0.0, %v7127
      %v7129 = vpop.f32.mrf.mxu0
      %v7130 = vpop.f32.mrf.mxu0
      %v7131 = vadd.f32 0.0, %v7130
      %v7132 = vpop.f32.mrf.mxu0
      %7133 = vmatprep.mubr.bf16.mxu0 0
      %7134 = vmatmul.mubr.bf16.gmra.mxu0 %v6976
      %v7135 = vpop.f32.mrf.mxu0
      %v7136 = vadd.f32 0.0, %v7135
      %v7137 = vpop.f32.mrf.mxu0
      %v7138 = vpop.f32.mrf.mxu0
      %v7139 = vadd.f32 0.0, %v7138
      %v7140 = vpop.f32.mrf.mxu0
      %7141 = vdwg.mxu0
      %v7142 = vadd.f32 %v6832, %v7016
      %v7143 = vadd.f32 %v6833, %v7019
      %v7144 = vadd.f32 %v6834, %v7024
      %v7145 = vadd.f32 %v6835, %v7027
      %v7146 = vadd.f32 %v6836, %v7032
      %v7147 = vadd.f32 %v6837, %v7035
      %v7148 = vadd.f32 %v6838, %v7040
      %v7149 = vadd.f32 %v6839, %v7043
      %v7150 = vadd.f32 %v6840, %v7048
      %v7151 = vadd.f32 %v6841, %v7051
      %v7152 = vadd.f32 %v6842, %v7056
      %v7153 = vadd.f32 %v6843, %v7059
      %v7154 = vadd.f32 %v6844, %v7064
      %v7155 = vadd.f32 %v6845, %v7067
      %v7156 = vadd.f32 %v6846, %v7072
      %v7157 = vadd.f32 %v6847, %v7075
      %v7158 = vadd.f32 %v6848, %v7080
      %v7159 = vadd.f32 %v6849, %v7083
      %v7160 = vadd.f32 %v6850, %v7088
      %v7161 = vadd.f32 %v6851, %v7091
      %v7162 = vadd.f32 %v6852, %v7096
      %v7163 = vadd.f32 %v6853, %v7099
      %v7164 = vadd.f32 %v6854, %v7104
      %v7165 = vadd.f32 %v6855, %v7107
      %v7166 = vadd.f32 %v6856, %v7112
      %v7167 = vadd.f32 %v6857, %v7115
      %v7168 = vadd.f32 %v6858, %v7120
      %v7169 = vadd.f32 %v6859, %v7123
      %v7170 = vadd.f32 %v6860, %v7128
      %v7171 = vadd.f32 %v6861, %v7131
      %v7172 = vadd.f32 %v6862, %v7136
      %v7173 = vadd.f32 %v6863, %v7139
      %v7174 = vld [vmem:[#allocation3 + $0x18] sm:$0xff]
      %v7175 = vld [vmem:[#allocation3 + $0x20] sm:$0xff]
      %v7176 = vld [vmem:[#allocation3 + $0x28] sm:$0xff]
      %v7177 = vld [vmem:[#allocation3 + $0x30] sm:$0xff]
      %v7178 = vld [vmem:[#allocation3 + $0x38] sm:$0xff]
      %v7179 = vld [vmem:[#allocation3 + $0x40] sm:$0xff]
      %v7180 = vld [vmem:[#allocation3 + $0x48] sm:$0xff]
      %v7181 = vld [vmem:[#allocation3 + $0x50] sm:$0xff]
      %v7182 = vld [vmem:[#allocation3 + $0x58] sm:$0xff]
      %v7183 = vld [vmem:[#allocation3 + $0x60] sm:$0xff]
      %v7184 = vld [vmem:[#allocation3 + $0x68] sm:$0xff]
      %v7185 = vld [vmem:[#allocation3 + $0x70] sm:$0xff]
      %v7186 = vld [vmem:[#allocation3 + $0x78] sm:$0xff]
      %v7187 = vld [vmem:[#allocation3 + $0x80] sm:$0xff]
      %v7188 = vld [vmem:[#allocation3 + $0x88] sm:$0xff]
      %v7189 = vld [vmem:[#allocation3 + $0x90] sm:$0xff]
      %v7190 = vld [vmem:[#allocation3 + $0x98] sm:$0xff]
      %v7191 = vld [vmem:[#allocation3 + $0xa0] sm:$0xff]
      %v7192 = vld [vmem:[#allocation3 + $0xa8] sm:$0xff]
      %v7193 = vld [vmem:[#allocation3 + $0xb0] sm:$0xff]
      %v7194 = vld [vmem:[#allocation3 + $0xb8] sm:$0xff]
      %v7195 = vld [vmem:[#allocation3 + $0xc0] sm:$0xff]
      %v7196 = vld [vmem:[#allocation3 + $0xc8] sm:$0xff]
      %v7197 = vld [vmem:[#allocation3 + $0xd0] sm:$0xff]
      %v7198 = vld [vmem:[#allocation3 + $0xd8] sm:$0xff]
      %v7199 = vld [vmem:[#allocation3 + $0xe0] sm:$0xff]
      %v7200 = vld [vmem:[#allocation3 + $0xe8] sm:$0xff]
      %v7201 = vld [vmem:[#allocation3 + $0xf0] sm:$0xff]
      %v7202 = vld [vmem:[#allocation3 + $0xf8] sm:$0xff]
      %v7203 = vld [vmem:[#allocation3 + $0x100] sm:$0xff]
      %v7204 = vld [vmem:[#allocation3 + $0x108] sm:$0xff]
      %v7205 = vld [vmem:[#allocation3 + $0x110] sm:$0xff]
      %v7206 = vpack.c.bf16 %v7175, %v7174
      %v7207 = vpack.c.bf16 %v7177, %v7176
      %v7208 = vpack.c.bf16 %v7179, %v7178
      %v7209 = vpack.c.bf16 %v7181, %v7180
      %v7210 = vpack.c.bf16 %v7183, %v7182
      %v7211 = vpack.c.bf16 %v7185, %v7184
      %v7212 = vpack.c.bf16 %v7187, %v7186
      %v7213 = vpack.c.bf16 %v7189, %v7188
      %v7214 = vpack.c.bf16 %v7191, %v7190
      %v7215 = vpack.c.bf16 %v7193, %v7192
      %v7216 = vpack.c.bf16 %v7195, %v7194
      %v7217 = vpack.c.bf16 %v7197, %v7196
      %v7218 = vpack.c.bf16 %v7199, %v7198
      %v7219 = vpack.c.bf16 %v7201, %v7200
      %v7220 = vpack.c.bf16 %v7203, %v7202
      %v7221 = vpack.c.bf16 %v7205, %v7204
      %s7222 = scalar_lea.vmem %s3, 8
      %v7223 = vld [vmem:[%s7222] sm:$0x3]
      %v7225 = vsel %vm292, %v7206, 0
      %v7228 = vsel %vm292, %v7207, 0
      %v7231 = vsel %vm292, %v7208, 0
      %v7234 = vsel %vm292, %v7209, 0
      %v7237 = vsel %vm292, %v7210, 0
      %v7240 = vsel %vm292, %v7211, 0
      %v7243 = vsel %vm292, %v7212, 0
      %v7246 = vsel %vm292, %v7213, 0
      %v7249 = vsel %vm292, %v7214, 0
      %v7252 = vsel %vm292, %v7215, 0
      %v7255 = vsel %vm292, %v7216, 0
      %v7258 = vsel %vm292, %v7217, 0
      %v7261 = vsel %vm292, %v7218, 0
      %v7264 = vsel %vm292, %v7219, 0
      %v7267 = vsel %vm292, %v7220, 0
      %v7270 = vsel %vm292, %v7221, 0
      %v7273 = vsel %vm6177, %v7223, 0
      %7275 = vmatprep.subr.bf16.mxu0 0
      %7276 = vmatpush1.bf16.msra.mxu0 0
      %7277 = vmatprep.subr.bf16.mxu0 0
      %7278 = vmatpush1.bf16.msra.mxu0 0
      %7279 = vmatprep.subr.bf16.mxu0 0
      %7280 = vmatpush1.bf16.msra.mxu0 0
      %7281 = vmatprep.subr.bf16.mxu0 0
      %7282 = vmatpush1.bf16.msra.mxu0 0
      %7283 = vmatprep.subr.bf16.mxu0 0
      %7284 = vmatpush1.bf16.msra.mxu0 0
      %7285 = vmatprep.subr.bf16.mxu0 0
      %7286 = vmatpush1.bf16.msra.mxu0 0
      %7287 = vmatprep.subr.bf16.mxu0 0
      %7288 = vmatpush1.bf16.msra.mxu0 0
      %7289 = vmatprep.subr.bf16.mxu0 0
      %7290 = vmatpush1.bf16.msra.mxu0 %v7273
      %7291 = vmatprep.subr.bf16.mxu0 0
      %7292 = vmatpush2.bf16.msra.mxu0 0
      %7293 = vmatprep.subr.bf16.mxu0 0
      %7294 = vmatpush2.bf16.msra.mxu0 0
      %7295 = vmatprep.subr.bf16.mxu0 0
      %7296 = vmatpush2.bf16.msra.mxu0 0
      %7297 = vmatprep.subr.bf16.mxu0 0
      %7298 = vmatpush2.bf16.msra.mxu0 0
      %7299 = vmatprep.subr.bf16.mxu0 0
      %7300 = vmatpush2.bf16.msra.mxu0 0
      %7301 = vmatprep.subr.bf16.mxu0 0
      %7302 = vmatpush2.bf16.msra.mxu0 0
      %7303 = vmatprep.subr.bf16.mxu0 0
      %7304 = vmatpush2.bf16.msra.mxu0 0
      %7305 = vmatprep.subr.bf16.mxu0 0
      %7306 = vmatpush2.bf16.msra.mxu0 0
      %7307 = vmatprep.mubr.bf16.mxu0 0
      %7308 = vmatmul.mubr.bf16.gmra.mxu0 %v7225
      %v7309 = vpop.f32.mrf.mxu0
      %v7310 = vadd.f32 0.0, %v7309
      %v7311 = vpop.f32.mrf.mxu0
      %v7312 = vpop.f32.mrf.mxu0
      %v7313 = vadd.f32 0.0, %v7312
      %v7314 = vpop.f32.mrf.mxu0
      %7315 = vmatprep.mubr.bf16.mxu0 0
      %7316 = vmatmul.mubr.bf16.gmra.mxu0 %v7228
      %v7317 = vpop.f32.mrf.mxu0
      %v7318 = vadd.f32 0.0, %v7317
      %v7319 = vpop.f32.mrf.mxu0
      %v7320 = vpop.f32.mrf.mxu0
      %v7321 = vadd.f32 0.0, %v7320
      %v7322 = vpop.f32.mrf.mxu0
      %7323 = vmatprep.mubr.bf16.mxu0 0
      %7324 = vmatmul.mubr.bf16.gmra.mxu0 %v7231
      %v7325 = vpop.f32.mrf.mxu0
      %v7326 = vadd.f32 0.0, %v7325
      %v7327 = vpop.f32.mrf.mxu0
      %v7328 = vpop.f32.mrf.mxu0
      %v7329 = vadd.f32 0.0, %v7328
      %v7330 = vpop.f32.mrf.mxu0
      %7331 = vmatprep.mubr.bf16.mxu0 0
      %7332 = vmatmul.mubr.bf16.gmra.mxu0 %v7234
      %v7333 = vpop.f32.mrf.mxu0
      %v7334 = vadd.f32 0.0, %v7333
      %v7335 = vpop.f32.mrf.mxu0
      %v7336 = vpop.f32.mrf.mxu0
      %v7337 = vadd.f32 0.0, %v7336
      %v7338 = vpop.f32.mrf.mxu0
      %7339 = vmatprep.mubr.bf16.mxu0 0
      %7340 = vmatmul.mubr.bf16.gmra.mxu0 %v7237
      %v7341 = vpop.f32.mrf.mxu0
      %v7342 = vadd.f32 0.0, %v7341
      %v7343 = vpop.f32.mrf.mxu0
      %v7344 = vpop.f32.mrf.mxu0
      %v7345 = vadd.f32 0.0, %v7344
      %v7346 = vpop.f32.mrf.mxu0
      %7347 = vmatprep.mubr.bf16.mxu0 0
      %7348 = vmatmul.mubr.bf16.gmra.mxu0 %v7240
      %v7349 = vpop.f32.mrf.mxu0
      %v7350 = vadd.f32 0.0, %v7349
      %v7351 = vpop.f32.mrf.mxu0
      %v7352 = vpop.f32.mrf.mxu0
      %v7353 = vadd.f32 0.0, %v7352
      %v7354 = vpop.f32.mrf.mxu0
      %7355 = vmatprep.mubr.bf16.mxu0 0
      %7356 = vmatmul.mubr.bf16.gmra.mxu0 %v7243
      %v7357 = vpop.f32.mrf.mxu0
      %v7358 = vadd.f32 0.0, %v7357
      %v7359 = vpop.f32.mrf.mxu0
      %v7360 = vpop.f32.mrf.mxu0
      %v7361 = vadd.f32 0.0, %v7360
      %v7362 = vpop.f32.mrf.mxu0
      %7363 = vmatprep.mubr.bf16.mxu0 0
      %7364 = vmatmul.mubr.bf16.gmra.mxu0 %v7246
      %v7365 = vpop.f32.mrf.mxu0
      %v7366 = vadd.f32 0.0, %v7365
      %v7367 = vpop.f32.mrf.mxu0
      %v7368 = vpop.f32.mrf.mxu0
      %v7369 = vadd.f32 0.0, %v7368
      %v7370 = vpop.f32.mrf.mxu0
      %7371 = vmatprep.mubr.bf16.mxu0 0
      %7372 = vmatmul.mubr.bf16.gmra.mxu0 %v7249
      %v7373 = vpop.f32.mrf.mxu0
      %v7374 = vadd.f32 0.0, %v7373
      %v7375 = vpop.f32.mrf.mxu0
      %v7376 = vpop.f32.mrf.mxu0
      %v7377 = vadd.f32 0.0, %v7376
      %v7378 = vpop.f32.mrf.mxu0
      %7379 = vmatprep.mubr.bf16.mxu0 0
      %7380 = vmatmul.mubr.bf16.gmra.mxu0 %v7252
      %v7381 = vpop.f32.mrf.mxu0
      %v7382 = vadd.f32 0.0, %v7381
      %v7383 = vpop.f32.mrf.mxu0
      %v7384 = vpop.f32.mrf.mxu0
      %v7385 = vadd.f32 0.0, %v7384
      %v7386 = vpop.f32.mrf.mxu0
      %7387 = vmatprep.mubr.bf16.mxu0 0
      %7388 = vmatmul.mubr.bf16.gmra.mxu0 %v7255
      %v7389 = vpop.f32.mrf.mxu0
      %v7390 = vadd.f32 0.0, %v7389
      %v7391 = vpop.f32.mrf.mxu0
      %v7392 = vpop.f32.mrf.mxu0
      %v7393 = vadd.f32 0.0, %v7392
      %v7394 = vpop.f32.mrf.mxu0
      %7395 = vmatprep.mubr.bf16.mxu0 0
      %7396 = vmatmul.mubr.bf16.gmra.mxu0 %v7258
      %v7397 = vpop.f32.mrf.mxu0
      %v7398 = vadd.f32 0.0, %v7397
      %v7399 = vpop.f32.mrf.mxu0
      %v7400 = vpop.f32.mrf.mxu0
      %v7401 = vadd.f32 0.0, %v7400
      %v7402 = vpop.f32.mrf.mxu0
      %7403 = vmatprep.mubr.bf16.mxu0 0
      %7404 = vmatmul.mubr.bf16.gmra.mxu0 %v7261
      %v7405 = vpop.f32.mrf.mxu0
      %v7406 = vadd.f32 0.0, %v7405
      %v7407 = vpop.f32.mrf.mxu0
      %v7408 = vpop.f32.mrf.mxu0
      %v7409 = vadd.f32 0.0, %v7408
      %v7410 = vpop.f32.mrf.mxu0
      %7411 = vmatprep.mubr.bf16.mxu0 0
      %7412 = vmatmul.mubr.bf16.gmra.mxu0 %v7264
      %v7413 = vpop.f32.mrf.mxu0
      %v7414 = vadd.f32 0.0, %v7413
      %v7415 = vpop.f32.mrf.mxu0
      %v7416 = vpop.f32.mrf.mxu0
      %v7417 = vadd.f32 0.0, %v7416
      %v7418 = vpop.f32.mrf.mxu0
      %7419 = vmatprep.mubr.bf16.mxu0 0
      %7420 = vmatmul.mubr.bf16.gmra.mxu0 %v7267
      %v7421 = vpop.f32.mrf.mxu0
      %v7422 = vadd.f32 0.0, %v7421
      %v7423 = vpop.f32.mrf.mxu0
      %v7424 = vpop.f32.mrf.mxu0
      %v7425 = vadd.f32 0.0, %v7424
      %v7426 = vpop.f32.mrf.mxu0
      %7427 = vmatprep.mubr.bf16.mxu0 0
      %7428 = vmatmul.mubr.bf16.gmra.mxu0 %v7270
      %v7429 = vpop.f32.mrf.mxu0
      %v7430 = vadd.f32 0.0, %v7429
      %v7431 = vpop.f32.mrf.mxu0
      %v7432 = vpop.f32.mrf.mxu0
      %v7433 = vadd.f32 0.0, %v7432
      %v7434 = vpop.f32.mrf.mxu0
      %7435 = vdwg.mxu0
      %v7436 = vadd.f32 %v7142, %v7310
      %v7437 = vadd.f32 %v7143, %v7313
      %v7438 = vadd.f32 %v7144, %v7318
      %v7439 = vadd.f32 %v7145, %v7321
      %v7440 = vadd.f32 %v7146, %v7326
      %v7441 = vadd.f32 %v7147, %v7329
      %v7442 = vadd.f32 %v7148, %v7334
      %v7443 = vadd.f32 %v7149, %v7337
      %v7444 = vadd.f32 %v7150, %v7342
      %v7445 = vadd.f32 %v7151, %v7345
      %v7446 = vadd.f32 %v7152, %v7350
      %v7447 = vadd.f32 %v7153, %v7353
      %v7448 = vadd.f32 %v7154, %v7358
      %v7449 = vadd.f32 %v7155, %v7361
      %v7450 = vadd.f32 %v7156, %v7366
      %v7451 = vadd.f32 %v7157, %v7369
      %v7452 = vadd.f32 %v7158, %v7374
      %v7453 = vadd.f32 %v7159, %v7377
      %v7454 = vadd.f32 %v7160, %v7382
      %v7455 = vadd.f32 %v7161, %v7385
      %v7456 = vadd.f32 %v7162, %v7390
      %v7457 = vadd.f32 %v7163, %v7393
      %v7458 = vadd.f32 %v7164, %v7398
      %v7459 = vadd.f32 %v7165, %v7401
      %v7460 = vadd.f32 %v7166, %v7406
      %v7461 = vadd.f32 %v7167, %v7409
      %v7462 = vadd.f32 %v7168, %v7414
      %v7463 = vadd.f32 %v7169, %v7417
      %v7464 = vadd.f32 %v7170, %v7422
      %v7465 = vadd.f32 %v7171, %v7425
      %v7466 = vadd.f32 %v7172, %v7430
      %v7467 = vadd.f32 %v7173, %v7433
      %v7468 = vld [vmem:[#allocation3 + $0x19] sm:$0xff]
      %v7469 = vld [vmem:[#allocation3 + $0x21] sm:$0xff]
      %v7470 = vld [vmem:[#allocation3 + $0x29] sm:$0xff]
      %v7471 = vld [vmem:[#allocation3 + $0x31] sm:$0xff]
      %v7472 = vld [vmem:[#allocation3 + $0x39] sm:$0xff]
      %v7473 = vld [vmem:[#allocation3 + $0x41] sm:$0xff]
      %v7474 = vld [vmem:[#allocation3 + $0x49] sm:$0xff]
      %v7475 = vld [vmem:[#allocation3 + $0x51] sm:$0xff]
      %v7476 = vld [vmem:[#allocation3 + $0x59] sm:$0xff]
      %v7477 = vld [vmem:[#allocation3 + $0x61] sm:$0xff]
      %v7478 = vld [vmem:[#allocation3 + $0x69] sm:$0xff]
      %v7479 = vld [vmem:[#allocation3 + $0x71] sm:$0xff]
      %v7480 = vld [vmem:[#allocation3 + $0x79] sm:$0xff]
      %v7481 = vld [vmem:[#allocation3 + $0x81] sm:$0xff]
      %v7482 = vld [vmem:[#allocation3 + $0x89] sm:$0xff]
      %v7483 = vld [vmem:[#allocation3 + $0x91] sm:$0xff]
      %v7484 = vld [vmem:[#allocation3 + $0x99] sm:$0xff]
      %v7485 = vld [vmem:[#allocation3 + $0xa1] sm:$0xff]
      %v7486 = vld [vmem:[#allocation3 + $0xa9] sm:$0xff]
      %v7487 = vld [vmem:[#allocation3 + $0xb1] sm:$0xff]
      %v7488 = vld [vmem:[#allocation3 + $0xb9] sm:$0xff]
      %v7489 = vld [vmem:[#allocation3 + $0xc1] sm:$0xff]
      %v7490 = vld [vmem:[#allocation3 + $0xc9] sm:$0xff]
      %v7491 = vld [vmem:[#allocation3 + $0xd1] sm:$0xff]
      %v7492 = vld [vmem:[#allocation3 + $0xd9] sm:$0xff]
      %v7493 = vld [vmem:[#allocation3 + $0xe1] sm:$0xff]
      %v7494 = vld [vmem:[#allocation3 + $0xe9] sm:$0xff]
      %v7495 = vld [vmem:[#allocation3 + $0xf1] sm:$0xff]
      %v7496 = vld [vmem:[#allocation3 + $0xf9] sm:$0xff]
      %v7497 = vld [vmem:[#allocation3 + $0x101] sm:$0xff]
      %v7498 = vld [vmem:[#allocation3 + $0x109] sm:$0xff]
      %v7499 = vld [vmem:[#allocation3 + $0x111] sm:$0xff]
      %v7500 = vpack.c.bf16 %v7469, %v7468
      %v7501 = vpack.c.bf16 %v7471, %v7470
      %v7502 = vpack.c.bf16 %v7473, %v7472
      %v7503 = vpack.c.bf16 %v7475, %v7474
      %v7504 = vpack.c.bf16 %v7477, %v7476
      %v7505 = vpack.c.bf16 %v7479, %v7478
      %v7506 = vpack.c.bf16 %v7481, %v7480
      %v7507 = vpack.c.bf16 %v7483, %v7482
      %v7508 = vpack.c.bf16 %v7485, %v7484
      %v7509 = vpack.c.bf16 %v7487, %v7486
      %v7510 = vpack.c.bf16 %v7489, %v7488
      %v7511 = vpack.c.bf16 %v7491, %v7490
      %v7512 = vpack.c.bf16 %v7493, %v7492
      %v7513 = vpack.c.bf16 %v7495, %v7494
      %v7514 = vpack.c.bf16 %v7497, %v7496
      %v7515 = vpack.c.bf16 %v7499, %v7498
      %v7516 = vmul.bf16 %v7500, %v5998
      %v7517 = vmul.bf16 %v7501, %v5999
      %v7518 = vmul.bf16 %v7502, %v6000
      %v7519 = vmul.bf16 %v7503, %v6001
      %v7520 = vmul.bf16 %v7504, %v6002
      %v7521 = vmul.bf16 %v7505, %v6003
      %v7522 = vmul.bf16 %v7506, %v6004
      %v7523 = vmul.bf16 %v7507, %v6005
      %v7524 = vmul.bf16 %v7508, %v6006
      %v7525 = vmul.bf16 %v7509, %v6007
      %v7526 = vmul.bf16 %v7510, %v6008
      %v7527 = vmul.bf16 %v7511, %v6009
      %v7528 = vmul.bf16 %v7512, %v6010
      %v7529 = vmul.bf16 %v7513, %v6011
      %v7530 = vmul.bf16 %v7514, %v6012
      %v7531 = vmul.bf16 %v7515, %v6013
      %s7532 = scalar_lea.vmem %s3, 10
      %v7533 = vld [vmem:[%s7532] sm:$0x3]
      %v7535 = vsel %vm292, %v7516, 0
      %v7538 = vsel %vm292, %v7517, 0
      %v7541 = vsel %vm292, %v7518, 0
      %v7544 = vsel %vm292, %v7519, 0
      %v7547 = vsel %vm292, %v7520, 0
      %v7550 = vsel %vm292, %v7521, 0
      %v7553 = vsel %vm292, %v7522, 0
      %v7556 = vsel %vm292, %v7523, 0
      %v7559 = vsel %vm292, %v7524, 0
      %v7562 = vsel %vm292, %v7525, 0
      %v7565 = vsel %vm292, %v7526, 0
      %v7568 = vsel %vm292, %v7527, 0
      %v7571 = vsel %vm292, %v7528, 0
      %v7574 = vsel %vm292, %v7529, 0
      %v7577 = vsel %vm292, %v7530, 0
      %v7580 = vsel %vm292, %v7531, 0
      %v7583 = vsel %vm6177, %v7533, 0
      %7585 = vmatprep.subr.bf16.mxu0 0
      %7586 = vmatpush1.bf16.msra.mxu0 0
      %7587 = vmatprep.subr.bf16.mxu0 0
      %7588 = vmatpush1.bf16.msra.mxu0 0
      %7589 = vmatprep.subr.bf16.mxu0 0
      %7590 = vmatpush1.bf16.msra.mxu0 0
      %7591 = vmatprep.subr.bf16.mxu0 0
      %7592 = vmatpush1.bf16.msra.mxu0 0
      %7593 = vmatprep.subr.bf16.mxu0 0
      %7594 = vmatpush1.bf16.msra.mxu0 0
      %7595 = vmatprep.subr.bf16.mxu0 0
      %7596 = vmatpush1.bf16.msra.mxu0 0
      %7597 = vmatprep.subr.bf16.mxu0 0
      %7598 = vmatpush1.bf16.msra.mxu0 0
      %7599 = vmatprep.subr.bf16.mxu0 0
      %7600 = vmatpush1.bf16.msra.mxu0 %v7583
      %7601 = vmatprep.subr.bf16.mxu0 0
      %7602 = vmatpush2.bf16.msra.mxu0 0
      %7603 = vmatprep.subr.bf16.mxu0 0
      %7604 = vmatpush2.bf16.msra.mxu0 0
      %7605 = vmatprep.subr.bf16.mxu0 0
      %7606 = vmatpush2.bf16.msra.mxu0 0
      %7607 = vmatprep.subr.bf16.mxu0 0
      %7608 = vmatpush2.bf16.msra.mxu0 0
      %7609 = vmatprep.subr.bf16.mxu0 0
      %7610 = vmatpush2.bf16.msra.mxu0 0
      %7611 = vmatprep.subr.bf16.mxu0 0
      %7612 = vmatpush2.bf16.msra.mxu0 0
      %7613 = vmatprep.subr.bf16.mxu0 0
      %7614 = vmatpush2.bf16.msra.mxu0 0
      %7615 = vmatprep.subr.bf16.mxu0 0
      %7616 = vmatpush2.bf16.msra.mxu0 0
      %7617 = vmatprep.mubr.bf16.mxu0 0
      %7618 = vmatmul.mubr.bf16.gmra.mxu0 %v7535
      %v7619 = vpop.f32.mrf.mxu0
      %v7620 = vadd.f32 0.0, %v7619
      %v7621 = vpop.f32.mrf.mxu0
      %v7622 = vpop.f32.mrf.mxu0
      %v7623 = vadd.f32 0.0, %v7622
      %v7624 = vpop.f32.mrf.mxu0
      %7625 = vmatprep.mubr.bf16.mxu0 0
      %7626 = vmatmul.mubr.bf16.gmra.mxu0 %v7538
      %v7627 = vpop.f32.mrf.mxu0
      %v7628 = vadd.f32 0.0, %v7627
      %v7629 = vpop.f32.mrf.mxu0
      %v7630 = vpop.f32.mrf.mxu0
      %v7631 = vadd.f32 0.0, %v7630
      %v7632 = vpop.f32.mrf.mxu0
      %7633 = vmatprep.mubr.bf16.mxu0 0
      %7634 = vmatmul.mubr.bf16.gmra.mxu0 %v7541
      %v7635 = vpop.f32.mrf.mxu0
      %v7636 = vadd.f32 0.0, %v7635
      %v7637 = vpop.f32.mrf.mxu0
      %v7638 = vpop.f32.mrf.mxu0
      %v7639 = vadd.f32 0.0, %v7638
      %v7640 = vpop.f32.mrf.mxu0
      %7641 = vmatprep.mubr.bf16.mxu0 0
      %7642 = vmatmul.mubr.bf16.gmra.mxu0 %v7544
      %v7643 = vpop.f32.mrf.mxu0
      %v7644 = vadd.f32 0.0, %v7643
      %v7645 = vpop.f32.mrf.mxu0
      %v7646 = vpop.f32.mrf.mxu0
      %v7647 = vadd.f32 0.0, %v7646
      %v7648 = vpop.f32.mrf.mxu0
      %7649 = vmatprep.mubr.bf16.mxu0 0
      %7650 = vmatmul.mubr.bf16.gmra.mxu0 %v7547
      %v7651 = vpop.f32.mrf.mxu0
      %v7652 = vadd.f32 0.0, %v7651
      %v7653 = vpop.f32.mrf.mxu0
      %v7654 = vpop.f32.mrf.mxu0
      %v7655 = vadd.f32 0.0, %v7654
      %v7656 = vpop.f32.mrf.mxu0
      %7657 = vmatprep.mubr.bf16.mxu0 0
      %7658 = vmatmul.mubr.bf16.gmra.mxu0 %v7550
      %v7659 = vpop.f32.mrf.mxu0
      %v7660 = vadd.f32 0.0, %v7659
      %v7661 = vpop.f32.mrf.mxu0
      %v7662 = vpop.f32.mrf.mxu0
      %v7663 = vadd.f32 0.0, %v7662
      %v7664 = vpop.f32.mrf.mxu0
      %7665 = vmatprep.mubr.bf16.mxu0 0
      %7666 = vmatmul.mubr.bf16.gmra.mxu0 %v7553
      %v7667 = vpop.f32.mrf.mxu0
      %v7668 = vadd.f32 0.0, %v7667
      %v7669 = vpop.f32.mrf.mxu0
      %v7670 = vpop.f32.mrf.mxu0
      %v7671 = vadd.f32 0.0, %v7670
      %v7672 = vpop.f32.mrf.mxu0
      %7673 = vmatprep.mubr.bf16.mxu0 0
      %7674 = vmatmul.mubr.bf16.gmra.mxu0 %v7556
      %v7675 = vpop.f32.mrf.mxu0
      %v7676 = vadd.f32 0.0, %v7675
      %v7677 = vpop.f32.mrf.mxu0
      %v7678 = vpop.f32.mrf.mxu0
      %v7679 = vadd.f32 0.0, %v7678
      %v7680 = vpop.f32.mrf.mxu0
      %7681 = vmatprep.mubr.bf16.mxu0 0
      %7682 = vmatmul.mubr.bf16.gmra.mxu0 %v7559
      %v7683 = vpop.f32.mrf.mxu0
      %v7684 = vadd.f32 0.0, %v7683
      %v7685 = vpop.f32.mrf.mxu0
      %v7686 = vpop.f32.mrf.mxu0
      %v7687 = vadd.f32 0.0, %v7686
      %v7688 = vpop.f32.mrf.mxu0
      %7689 = vmatprep.mubr.bf16.mxu0 0
      %7690 = vmatmul.mubr.bf16.gmra.mxu0 %v7562
      %v7691 = vpop.f32.mrf.mxu0
      %v7692 = vadd.f32 0.0, %v7691
      %v7693 = vpop.f32.mrf.mxu0
      %v7694 = vpop.f32.mrf.mxu0
      %v7695 = vadd.f32 0.0, %v7694
      %v7696 = vpop.f32.mrf.mxu0
      %7697 = vmatprep.mubr.bf16.mxu0 0
      %7698 = vmatmul.mubr.bf16.gmra.mxu0 %v7565
      %v7699 = vpop.f32.mrf.mxu0
      %v7700 = vadd.f32 0.0, %v7699
      %v7701 = vpop.f32.mrf.mxu0
      %v7702 = vpop.f32.mrf.mxu0
      %v7703 = vadd.f32 0.0, %v7702
      %v7704 = vpop.f32.mrf.mxu0
      %7705 = vmatprep.mubr.bf16.mxu0 0
      %7706 = vmatmul.mubr.bf16.gmra.mxu0 %v7568
      %v7707 = vpop.f32.mrf.mxu0
      %v7708 = vadd.f32 0.0, %v7707
      %v7709 = vpop.f32.mrf.mxu0
      %v7710 = vpop.f32.mrf.mxu0
      %v7711 = vadd.f32 0.0, %v7710
      %v7712 = vpop.f32.mrf.mxu0
      %7713 = vmatprep.mubr.bf16.mxu0 0
      %7714 = vmatmul.mubr.bf16.gmra.mxu0 %v7571
      %v7715 = vpop.f32.mrf.mxu0
      %v7716 = vadd.f32 0.0, %v7715
      %v7717 = vpop.f32.mrf.mxu0
      %v7718 = vpop.f32.mrf.mxu0
      %v7719 = vadd.f32 0.0, %v7718
      %v7720 = vpop.f32.mrf.mxu0
      %7721 = vmatprep.mubr.bf16.mxu0 0
      %7722 = vmatmul.mubr.bf16.gmra.mxu0 %v7574
      %v7723 = vpop.f32.mrf.mxu0
      %v7724 = vadd.f32 0.0, %v7723
      %v7725 = vpop.f32.mrf.mxu0
      %v7726 = vpop.f32.mrf.mxu0
      %v7727 = vadd.f32 0.0, %v7726
      %v7728 = vpop.f32.mrf.mxu0
      %7729 = vmatprep.mubr.bf16.mxu0 0
      %7730 = vmatmul.mubr.bf16.gmra.mxu0 %v7577
      %v7731 = vpop.f32.mrf.mxu0
      %v7732 = vadd.f32 0.0, %v7731
      %v7733 = vpop.f32.mrf.mxu0
      %v7734 = vpop.f32.mrf.mxu0
      %v7735 = vadd.f32 0.0, %v7734
      %v7736 = vpop.f32.mrf.mxu0
      %7737 = vmatprep.mubr.bf16.mxu0 0
      %7738 = vmatmul.mubr.bf16.gmra.mxu0 %v7580
      %v7739 = vpop.f32.mrf.mxu0
      %v7740 = vadd.f32 0.0, %v7739
      %v7741 = vpop.f32.mrf.mxu0
      %v7742 = vpop.f32.mrf.mxu0
      %v7743 = vadd.f32 0.0, %v7742
      %v7744 = vpop.f32.mrf.mxu0
      %7745 = vdwg.mxu0
      %v7746 = vadd.f32 %v7436, %v7620
      %v7747 = vadd.f32 %v7437, %v7623
      %v7748 = vadd.f32 %v7438, %v7628
      %v7749 = vadd.f32 %v7439, %v7631
      %v7750 = vadd.f32 %v7440, %v7636
      %v7751 = vadd.f32 %v7441, %v7639
      %v7752 = vadd.f32 %v7442, %v7644
      %v7753 = vadd.f32 %v7443, %v7647
      %v7754 = vadd.f32 %v7444, %v7652
      %v7755 = vadd.f32 %v7445, %v7655
      %v7756 = vadd.f32 %v7446, %v7660
      %v7757 = vadd.f32 %v7447, %v7663
      %v7758 = vadd.f32 %v7448, %v7668
      %v7759 = vadd.f32 %v7449, %v7671
      %v7760 = vadd.f32 %v7450, %v7676
      %v7761 = vadd.f32 %v7451, %v7679
      %v7762 = vadd.f32 %v7452, %v7684
      %v7763 = vadd.f32 %v7453, %v7687
      %v7764 = vadd.f32 %v7454, %v7692
      %v7765 = vadd.f32 %v7455, %v7695
      %v7766 = vadd.f32 %v7456, %v7700
      %v7767 = vadd.f32 %v7457, %v7703
      %v7768 = vadd.f32 %v7458, %v7708
      %v7769 = vadd.f32 %v7459, %v7711
      %v7770 = vadd.f32 %v7460, %v7716
      %v7771 = vadd.f32 %v7461, %v7719
      %v7772 = vadd.f32 %v7462, %v7724
      %v7773 = vadd.f32 %v7463, %v7727
      %v7774 = vadd.f32 %v7464, %v7732
      %v7775 = vadd.f32 %v7465, %v7735
      %v7776 = vadd.f32 %v7466, %v7740
      %v7777 = vadd.f32 %v7467, %v7743
      %v7778 = vld [vmem:[#allocation3 + $0x27] sm:$0xff]
      %v7779 = vld [vmem:[#allocation3 + $0x2f] sm:$0xff]
      %v7780 = vld [vmem:[#allocation3 + $0x37] sm:$0xff]
      %v7781 = vld [vmem:[#allocation3 + $0x3f] sm:$0xff]
      %v7782 = vld [vmem:[#allocation3 + $0x47] sm:$0xff]
      %v7783 = vld [vmem:[#allocation3 + $0x4f] sm:$0xff]
      %v7784 = vld [vmem:[#allocation3 + $0x57] sm:$0xff]
      %v7785 = vld [vmem:[#allocation3 + $0x5f] sm:$0xff]
      %v7786 = vld [vmem:[#allocation3 + $0x67] sm:$0xff]
      %v7787 = vld [vmem:[#allocation3 + $0x6f] sm:$0xff]
      %v7788 = vld [vmem:[#allocation3 + $0x77] sm:$0xff]
      %v7789 = vld [vmem:[#allocation3 + $0x7f] sm:$0xff]
      %v7790 = vld [vmem:[#allocation3 + $0x87] sm:$0xff]
      %v7791 = vld [vmem:[#allocation3 + $0x8f] sm:$0xff]
      %v7792 = vld [vmem:[#allocation3 + $0x97] sm:$0xff]
      %v7793 = vld [vmem:[#allocation3 + $0x9f] sm:$0xff]
      %v7794 = vld [vmem:[#allocation3 + $0xa7] sm:$0xff]
      %v7795 = vld [vmem:[#allocation3 + $0xaf] sm:$0xff]
      %v7796 = vld [vmem:[#allocation3 + $0xb7] sm:$0xff]
      %v7797 = vld [vmem:[#allocation3 + $0xbf] sm:$0xff]
      %v7798 = vld [vmem:[#allocation3 + $0xc7] sm:$0xff]
      %v7799 = vld [vmem:[#allocation3 + $0xcf] sm:$0xff]
      %v7800 = vld [vmem:[#allocation3 + $0xd7] sm:$0xff]
      %v7801 = vld [vmem:[#allocation3 + $0xdf] sm:$0xff]
      %v7802 = vld [vmem:[#allocation3 + $0xe7] sm:$0xff]
      %v7803 = vld [vmem:[#allocation3 + $0xef] sm:$0xff]
      %v7804 = vld [vmem:[#allocation3 + $0xf7] sm:$0xff]
      %v7805 = vld [vmem:[#allocation3 + $0xff] sm:$0xff]
      %v7806 = vld [vmem:[#allocation3 + $0x107] sm:$0xff]
      %v7807 = vld [vmem:[#allocation3 + $0x10f] sm:$0xff]
      %v7808 = vld [vmem:[#allocation3 + $0x117] sm:$0xff]
      %v7809 = vld [vmem:[#allocation3 + $0x11f] sm:$0xff]
      %v7810 = vpack.c.bf16 %v7779, %v7778
      %v7811 = vpack.c.bf16 %v7781, %v7780
      %v7812 = vpack.c.bf16 %v7783, %v7782
      %v7813 = vpack.c.bf16 %v7785, %v7784
      %v7814 = vpack.c.bf16 %v7787, %v7786
      %v7815 = vpack.c.bf16 %v7789, %v7788
      %v7816 = vpack.c.bf16 %v7791, %v7790
      %v7817 = vpack.c.bf16 %v7793, %v7792
      %v7818 = vpack.c.bf16 %v7795, %v7794
      %v7819 = vpack.c.bf16 %v7797, %v7796
      %v7820 = vpack.c.bf16 %v7799, %v7798
      %v7821 = vpack.c.bf16 %v7801, %v7800
      %v7822 = vpack.c.bf16 %v7803, %v7802
      %v7823 = vpack.c.bf16 %v7805, %v7804
      %v7824 = vpack.c.bf16 %v7807, %v7806
      %v7825 = vpack.c.bf16 %v7809, %v7808
      %v7826 = vmul.bf16 %v7810, %v5886
      %v7827 = vmul.bf16 %v7811, %v5887
      %v7828 = vmul.bf16 %v7812, %v5888
      %v7829 = vmul.bf16 %v7813, %v5889
      %v7830 = vmul.bf16 %v7814, %v5890
      %v7831 = vmul.bf16 %v7815, %v5891
      %v7832 = vmul.bf16 %v7816, %v5892
      %v7833 = vmul.bf16 %v7817, %v5893
      %v7834 = vmul.bf16 %v7818, %v5894
      %v7835 = vmul.bf16 %v7819, %v5895
      %v7836 = vmul.bf16 %v7820, %v5896
      %v7837 = vmul.bf16 %v7821, %v5897
      %v7838 = vmul.bf16 %v7822, %v5898
      %v7839 = vmul.bf16 %v7823, %v5899
      %v7840 = vmul.bf16 %v7824, %v5900
      %v7841 = vmul.bf16 %v7825, %v5901
      %s7842 = scalar_lea.vmem %s3, 12
      %v7843 = vld [vmem:[%s7842] sm:$0x3]
      %v7845 = vsel %vm292, %v7826, 0
      %v7848 = vsel %vm292, %v7827, 0
      %v7851 = vsel %vm292, %v7828, 0
      %v7854 = vsel %vm292, %v7829, 0
      %v7857 = vsel %vm292, %v7830, 0
      %v7860 = vsel %vm292, %v7831, 0
      %v7863 = vsel %vm292, %v7832, 0
      %v7866 = vsel %vm292, %v7833, 0
      %v7869 = vsel %vm292, %v7834, 0
      %v7872 = vsel %vm292, %v7835, 0
      %v7875 = vsel %vm292, %v7836, 0
      %v7878 = vsel %vm292, %v7837, 0
      %v7881 = vsel %vm292, %v7838, 0
      %v7884 = vsel %vm292, %v7839, 0
      %v7887 = vsel %vm292, %v7840, 0
      %v7890 = vsel %vm292, %v7841, 0
      %v7893 = vsel %vm6177, %v7843, 0
      %7895 = vmatprep.subr.bf16.mxu0 0
      %7896 = vmatpush1.bf16.msra.mxu0 0
      %7897 = vmatprep.subr.bf16.mxu0 0
      %7898 = vmatpush1.bf16.msra.mxu0 0
      %7899 = vmatprep.subr.bf16.mxu0 0
      %7900 = vmatpush1.bf16.msra.mxu0 0
      %7901 = vmatprep.subr.bf16.mxu0 0
      %7902 = vmatpush1.bf16.msra.mxu0 0
      %7903 = vmatprep.subr.bf16.mxu0 0
      %7904 = vmatpush1.bf16.msra.mxu0 0
      %7905 = vmatprep.subr.bf16.mxu0 0
      %7906 = vmatpush1.bf16.msra.mxu0 0
      %7907 = vmatprep.subr.bf16.mxu0 0
      %7908 = vmatpush1.bf16.msra.mxu0 0
      %7909 = vmatprep.subr.bf16.mxu0 0
      %7910 = vmatpush1.bf16.msra.mxu0 %v7893
      %7911 = vmatprep.subr.bf16.mxu0 0
      %7912 = vmatpush2.bf16.msra.mxu0 0
      %7913 = vmatprep.subr.bf16.mxu0 0
      %7914 = vmatpush2.bf16.msra.mxu0 0
      %7915 = vmatprep.subr.bf16.mxu0 0
      %7916 = vmatpush2.bf16.msra.mxu0 0
      %7917 = vmatprep.subr.bf16.mxu0 0
      %7918 = vmatpush2.bf16.msra.mxu0 0
      %7919 = vmatprep.subr.bf16.mxu0 0
      %7920 = vmatpush2.bf16.msra.mxu0 0
      %7921 = vmatprep.subr.bf16.mxu0 0
      %7922 = vmatpush2.bf16.msra.mxu0 0
      %7923 = vmatprep.subr.bf16.mxu0 0
      %7924 = vmatpush2.bf16.msra.mxu0 0
      %7925 = vmatprep.subr.bf16.mxu0 0
      %7926 = vmatpush2.bf16.msra.mxu0 0
      %7927 = vmatprep.mubr.bf16.mxu0 0
      %7928 = vmatmul.mubr.bf16.gmra.mxu0 %v7845
      %v7929 = vpop.f32.mrf.mxu0
      %v7930 = vadd.f32 0.0, %v7929
      %v7931 = vpop.f32.mrf.mxu0
      %v7932 = vpop.f32.mrf.mxu0
      %v7933 = vadd.f32 0.0, %v7932
      %v7934 = vpop.f32.mrf.mxu0
      %7935 = vmatprep.mubr.bf16.mxu0 0
      %7936 = vmatmul.mubr.bf16.gmra.mxu0 %v7848
      %v7937 = vpop.f32.mrf.mxu0
      %v7938 = vadd.f32 0.0, %v7937
      %v7939 = vpop.f32.mrf.mxu0
      %v7940 = vpop.f32.mrf.mxu0
      %v7941 = vadd.f32 0.0, %v7940
      %v7942 = vpop.f32.mrf.mxu0
      %7943 = vmatprep.mubr.bf16.mxu0 0
      %7944 = vmatmul.mubr.bf16.gmra.mxu0 %v7851
      %v7945 = vpop.f32.mrf.mxu0
      %v7946 = vadd.f32 0.0, %v7945
      %v7947 = vpop.f32.mrf.mxu0
      %v7948 = vpop.f32.mrf.mxu0
      %v7949 = vadd.f32 0.0, %v7948
      %v7950 = vpop.f32.mrf.mxu0
      %7951 = vmatprep.mubr.bf16.mxu0 0
      %7952 = vmatmul.mubr.bf16.gmra.mxu0 %v7854
      %v7953 = vpop.f32.mrf.mxu0
      %v7954 = vadd.f32 0.0, %v7953
      %v7955 = vpop.f32.mrf.mxu0
      %v7956 = vpop.f32.mrf.mxu0
      %v7957 = vadd.f32 0.0, %v7956
      %v7958 = vpop.f32.mrf.mxu0
      %7959 = vmatprep.mubr.bf16.mxu0 0
      %7960 = vmatmul.mubr.bf16.gmra.mxu0 %v7857
      %v7961 = vpop.f32.mrf.mxu0
      %v7962 = vadd.f32 0.0, %v7961
      %v7963 = vpop.f32.mrf.mxu0
      %v7964 = vpop.f32.mrf.mxu0
      %v7965 = vadd.f32 0.0, %v7964
      %v7966 = vpop.f32.mrf.mxu0
      %7967 = vmatprep.mubr.bf16.mxu0 0
      %7968 = vmatmul.mubr.bf16.gmra.mxu0 %v7860
      %v7969 = vpop.f32.mrf.mxu0
      %v7970 = vadd.f32 0.0, %v7969
      %v7971 = vpop.f32.mrf.mxu0
      %v7972 = vpop.f32.mrf.mxu0
      %v7973 = vadd.f32 0.0, %v7972
      %v7974 = vpop.f32.mrf.mxu0
      %7975 = vmatprep.mubr.bf16.mxu0 0
      %7976 = vmatmul.mubr.bf16.gmra.mxu0 %v7863
      %v7977 = vpop.f32.mrf.mxu0
      %v7978 = vadd.f32 0.0, %v7977
      %v7979 = vpop.f32.mrf.mxu0
      %v7980 = vpop.f32.mrf.mxu0
      %v7981 = vadd.f32 0.0, %v7980
      %v7982 = vpop.f32.mrf.mxu0
      %7983 = vmatprep.mubr.bf16.mxu0 0
      %7984 = vmatmul.mubr.bf16.gmra.mxu0 %v7866
      %v7985 = vpop.f32.mrf.mxu0
      %v7986 = vadd.f32 0.0, %v7985
      %v7987 = vpop.f32.mrf.mxu0
      %v7988 = vpop.f32.mrf.mxu0
      %v7989 = vadd.f32 0.0, %v7988
      %v7990 = vpop.f32.mrf.mxu0
      %7991 = vmatprep.mubr.bf16.mxu0 0
      %7992 = vmatmul.mubr.bf16.gmra.mxu0 %v7869
      %v7993 = vpop.f32.mrf.mxu0
      %v7994 = vadd.f32 0.0, %v7993
      %v7995 = vpop.f32.mrf.mxu0
      %v7996 = vpop.f32.mrf.mxu0
      %v7997 = vadd.f32 0.0, %v7996
      %v7998 = vpop.f32.mrf.mxu0
      %7999 = vmatprep.mubr.bf16.mxu0 0
      %8000 = vmatmul.mubr.bf16.gmra.mxu0 %v7872
      %v8001 = vpop.f32.mrf.mxu0
      %v8002 = vadd.f32 0.0, %v8001
      %v8003 = vpop.f32.mrf.mxu0
      %v8004 = vpop.f32.mrf.mxu0
      %v8005 = vadd.f32 0.0, %v8004
      %v8006 = vpop.f32.mrf.mxu0
      %8007 = vmatprep.mubr.bf16.mxu0 0
      %8008 = vmatmul.mubr.bf16.gmra.mxu0 %v7875
      %v8009 = vpop.f32.mrf.mxu0
      %v8010 = vadd.f32 0.0, %v8009
      %v8011 = vpop.f32.mrf.mxu0
      %v8012 = vpop.f32.mrf.mxu0
      %v8013 = vadd.f32 0.0, %v8012
      %v8014 = vpop.f32.mrf.mxu0
      %8015 = vmatprep.mubr.bf16.mxu0 0
      %8016 = vmatmul.mubr.bf16.gmra.mxu0 %v7878
      %v8017 = vpop.f32.mrf.mxu0
      %v8018 = vadd.f32 0.0, %v8017
      %v8019 = vpop.f32.mrf.mxu0
      %v8020 = vpop.f32.mrf.mxu0
      %v8021 = vadd.f32 0.0, %v8020
      %v8022 = vpop.f32.mrf.mxu0
      %8023 = vmatprep.mubr.bf16.mxu0 0
      %8024 = vmatmul.mubr.bf16.gmra.mxu0 %v7881
      %v8025 = vpop.f32.mrf.mxu0
      %v8026 = vadd.f32 0.0, %v8025
      %v8027 = vpop.f32.mrf.mxu0
      %v8028 = vpop.f32.mrf.mxu0
      %v8029 = vadd.f32 0.0, %v8028
      %v8030 = vpop.f32.mrf.mxu0
      %8031 = vmatprep.mubr.bf16.mxu0 0
      %8032 = vmatmul.mubr.bf16.gmra.mxu0 %v7884
      %v8033 = vpop.f32.mrf.mxu0
      %v8034 = vadd.f32 0.0, %v8033
      %v8035 = vpop.f32.mrf.mxu0
      %v8036 = vpop.f32.mrf.mxu0
      %v8037 = vadd.f32 0.0, %v8036
      %v8038 = vpop.f32.mrf.mxu0
      %8039 = vmatprep.mubr.bf16.mxu0 0
      %8040 = vmatmul.mubr.bf16.gmra.mxu0 %v7887
      %v8041 = vpop.f32.mrf.mxu0
      %v8042 = vadd.f32 0.0, %v8041
      %v8043 = vpop.f32.mrf.mxu0
      %v8044 = vpop.f32.mrf.mxu0
      %v8045 = vadd.f32 0.0, %v8044
      %v8046 = vpop.f32.mrf.mxu0
      %8047 = vmatprep.mubr.bf16.mxu0 0
      %8048 = vmatmul.mubr.bf16.gmra.mxu0 %v7890
      %v8049 = vpop.f32.mrf.mxu0
      %v8050 = vadd.f32 0.0, %v8049
      %v8051 = vpop.f32.mrf.mxu0
      %v8052 = vpop.f32.mrf.mxu0
      %v8053 = vadd.f32 0.0, %v8052
      %v8054 = vpop.f32.mrf.mxu0
      %8055 = vdwg.mxu0
      %v8056 = vadd.f32 %v7746, %v7930
      %v8057 = vadd.f32 %v7747, %v7933
      %v8058 = vadd.f32 %v7748, %v7938
      %v8059 = vadd.f32 %v7749, %v7941
      %v8060 = vadd.f32 %v7750, %v7946
      %v8061 = vadd.f32 %v7751, %v7949
      %v8062 = vadd.f32 %v7752, %v7954
      %v8063 = vadd.f32 %v7753, %v7957
      %v8064 = vadd.f32 %v7754, %v7962
      %v8065 = vadd.f32 %v7755, %v7965
      %v8066 = vadd.f32 %v7756, %v7970
      %v8067 = vadd.f32 %v7757, %v7973
      %v8068 = vadd.f32 %v7758, %v7978
      %v8069 = vadd.f32 %v7759, %v7981
      %v8070 = vadd.f32 %v7760, %v7986
      %v8071 = vadd.f32 %v7761, %v7989
      %v8072 = vadd.f32 %v7762, %v7994
      %v8073 = vadd.f32 %v7763, %v7997
      %v8074 = vadd.f32 %v7764, %v8002
      %v8075 = vadd.f32 %v7765, %v8005
      %v8076 = vadd.f32 %v7766, %v8010
      %v8077 = vadd.f32 %v7767, %v8013
      %v8078 = vadd.f32 %v7768, %v8018
      %v8079 = vadd.f32 %v7769, %v8021
      %v8080 = vadd.f32 %v7770, %v8026
      %v8081 = vadd.f32 %v7771, %v8029
      %v8082 = vadd.f32 %v7772, %v8034
      %v8083 = vadd.f32 %v7773, %v8037
      %v8084 = vadd.f32 %v7774, %v8042
      %v8085 = vadd.f32 %v7775, %v8045
      %v8086 = vadd.f32 %v7776, %v8050
      %v8087 = vadd.f32 %v7777, %v8053
      %v8088 = vld [vmem:[#allocation3 + $0x28] sm:$0xff]
      %v8089 = vld [vmem:[#allocation3 + $0x30] sm:$0xff]
      %v8090 = vld [vmem:[#allocation3 + $0x38] sm:$0xff]
      %v8091 = vld [vmem:[#allocation3 + $0x40] sm:$0xff]
      %v8092 = vld [vmem:[#allocation3 + $0x48] sm:$0xff]
      %v8093 = vld [vmem:[#allocation3 + $0x50] sm:$0xff]
      %v8094 = vld [vmem:[#allocation3 + $0x58] sm:$0xff]
      %v8095 = vld [vmem:[#allocation3 + $0x60] sm:$0xff]
      %v8096 = vld [vmem:[#allocation3 + $0x68] sm:$0xff]
      %v8097 = vld [vmem:[#allocation3 + $0x70] sm:$0xff]
      %v8098 = vld [vmem:[#allocation3 + $0x78] sm:$0xff]
      %v8099 = vld [vmem:[#allocation3 + $0x80] sm:$0xff]
      %v8100 = vld [vmem:[#allocation3 + $0x88] sm:$0xff]
      %v8101 = vld [vmem:[#allocation3 + $0x90] sm:$0xff]
      %v8102 = vld [vmem:[#allocation3 + $0x98] sm:$0xff]
      %v8103 = vld [vmem:[#allocation3 + $0xa0] sm:$0xff]
      %v8104 = vld [vmem:[#allocation3 + $0xa8] sm:$0xff]
      %v8105 = vld [vmem:[#allocation3 + $0xb0] sm:$0xff]
      %v8106 = vld [vmem:[#allocation3 + $0xb8] sm:$0xff]
      %v8107 = vld [vmem:[#allocation3 + $0xc0] sm:$0xff]
      %v8108 = vld [vmem:[#allocation3 + $0xc8] sm:$0xff]
      %v8109 = vld [vmem:[#allocation3 + $0xd0] sm:$0xff]
      %v8110 = vld [vmem:[#allocation3 + $0xd8] sm:$0xff]
      %v8111 = vld [vmem:[#allocation3 + $0xe0] sm:$0xff]
      %v8112 = vld [vmem:[#allocation3 + $0xe8] sm:$0xff]
      %v8113 = vld [vmem:[#allocation3 + $0xf0] sm:$0xff]
      %v8114 = vld [vmem:[#allocation3 + $0xf8] sm:$0xff]
      %v8115 = vld [vmem:[#allocation3 + $0x100] sm:$0xff]
      %v8116 = vld [vmem:[#allocation3 + $0x108] sm:$0xff]
      %v8117 = vld [vmem:[#allocation3 + $0x110] sm:$0xff]
      %v8118 = vld [vmem:[#allocation3 + $0x118] sm:$0xff]
      %v8119 = vld [vmem:[#allocation3 + $0x120] sm:$0xff]
      %v8120 = vpack.c.bf16 %v8089, %v8088
      %v8121 = vpack.c.bf16 %v8091, %v8090
      %v8122 = vpack.c.bf16 %v8093, %v8092
      %v8123 = vpack.c.bf16 %v8095, %v8094
      %v8124 = vpack.c.bf16 %v8097, %v8096
      %v8125 = vpack.c.bf16 %v8099, %v8098
      %v8126 = vpack.c.bf16 %v8101, %v8100
      %v8127 = vpack.c.bf16 %v8103, %v8102
      %v8128 = vpack.c.bf16 %v8105, %v8104
      %v8129 = vpack.c.bf16 %v8107, %v8106
      %v8130 = vpack.c.bf16 %v8109, %v8108
      %v8131 = vpack.c.bf16 %v8111, %v8110
      %v8132 = vpack.c.bf16 %v8113, %v8112
      %v8133 = vpack.c.bf16 %v8115, %v8114
      %v8134 = vpack.c.bf16 %v8117, %v8116
      %v8135 = vpack.c.bf16 %v8119, %v8118
      %s8136 = scalar_lea.vmem %s3, 14
      %v8137 = vld [vmem:[%s8136] sm:$0x3]
      %v8139 = vsel %vm292, %v8120, 0
      %v8142 = vsel %vm292, %v8121, 0
      %v8145 = vsel %vm292, %v8122, 0
      %v8148 = vsel %vm292, %v8123, 0
      %v8151 = vsel %vm292, %v8124, 0
      %v8154 = vsel %vm292, %v8125, 0
      %v8157 = vsel %vm292, %v8126, 0
      %v8160 = vsel %vm292, %v8127, 0
      %v8163 = vsel %vm292, %v8128, 0
      %v8166 = vsel %vm292, %v8129, 0
      %v8169 = vsel %vm292, %v8130, 0
      %v8172 = vsel %vm292, %v8131, 0
      %v8175 = vsel %vm292, %v8132, 0
      %v8178 = vsel %vm292, %v8133, 0
      %v8181 = vsel %vm292, %v8134, 0
      %v8184 = vsel %vm292, %v8135, 0
      %v8187 = vsel %vm6177, %v8137, 0
      %8189 = vmatprep.subr.bf16.mxu0 0
      %8190 = vmatpush1.bf16.msra.mxu0 0
      %8191 = vmatprep.subr.bf16.mxu0 0
      %8192 = vmatpush1.bf16.msra.mxu0 0
      %8193 = vmatprep.subr.bf16.mxu0 0
      %8194 = vmatpush1.bf16.msra.mxu0 0
      %8195 = vmatprep.subr.bf16.mxu0 0
      %8196 = vmatpush1.bf16.msra.mxu0 0
      %8197 = vmatprep.subr.bf16.mxu0 0
      %8198 = vmatpush1.bf16.msra.mxu0 0
      %8199 = vmatprep.subr.bf16.mxu0 0
      %8200 = vmatpush1.bf16.msra.mxu0 0
      %8201 = vmatprep.subr.bf16.mxu0 0
      %8202 = vmatpush1.bf16.msra.mxu0 0
      %8203 = vmatprep.subr.bf16.mxu0 0
      %8204 = vmatpush1.bf16.msra.mxu0 %v8187
      %8205 = vmatprep.subr.bf16.mxu0 0
      %8206 = vmatpush2.bf16.msra.mxu0 0
      %8207 = vmatprep.subr.bf16.mxu0 0
      %8208 = vmatpush2.bf16.msra.mxu0 0
      %8209 = vmatprep.subr.bf16.mxu0 0
      %8210 = vmatpush2.bf16.msra.mxu0 0
      %8211 = vmatprep.subr.bf16.mxu0 0
      %8212 = vmatpush2.bf16.msra.mxu0 0
      %8213 = vmatprep.subr.bf16.mxu0 0
      %8214 = vmatpush2.bf16.msra.mxu0 0
      %8215 = vmatprep.subr.bf16.mxu0 0
      %8216 = vmatpush2.bf16.msra.mxu0 0
      %8217 = vmatprep.subr.bf16.mxu0 0
      %8218 = vmatpush2.bf16.msra.mxu0 0
      %8219 = vmatprep.subr.bf16.mxu0 0
      %8220 = vmatpush2.bf16.msra.mxu0 0
      %8221 = vmatprep.mubr.bf16.mxu0 0
      %8222 = vmatmul.mubr.bf16.gmra.mxu0 %v8139
      %v8223 = vpop.f32.mrf.mxu0
      %v8224 = vadd.f32 0.0, %v8223
      %v8225 = vpop.f32.mrf.mxu0
      %v8226 = vpop.f32.mrf.mxu0
      %v8227 = vadd.f32 0.0, %v8226
      %v8228 = vpop.f32.mrf.mxu0
      %8229 = vmatprep.mubr.bf16.mxu0 0
      %8230 = vmatmul.mubr.bf16.gmra.mxu0 %v8142
      %v8231 = vpop.f32.mrf.mxu0
      %v8232 = vadd.f32 0.0, %v8231
      %v8233 = vpop.f32.mrf.mxu0
      %v8234 = vpop.f32.mrf.mxu0
      %v8235 = vadd.f32 0.0, %v8234
      %v8236 = vpop.f32.mrf.mxu0
      %8237 = vmatprep.mubr.bf16.mxu0 0
      %8238 = vmatmul.mubr.bf16.gmra.mxu0 %v8145
      %v8239 = vpop.f32.mrf.mxu0
      %v8240 = vadd.f32 0.0, %v8239
      %v8241 = vpop.f32.mrf.mxu0
      %v8242 = vpop.f32.mrf.mxu0
      %v8243 = vadd.f32 0.0, %v8242
      %v8244 = vpop.f32.mrf.mxu0
      %8245 = vmatprep.mubr.bf16.mxu0 0
      %8246 = vmatmul.mubr.bf16.gmra.mxu0 %v8148
      %v8247 = vpop.f32.mrf.mxu0
      %v8248 = vadd.f32 0.0, %v8247
      %v8249 = vpop.f32.mrf.mxu0
      %v8250 = vpop.f32.mrf.mxu0
      %v8251 = vadd.f32 0.0, %v8250
      %v8252 = vpop.f32.mrf.mxu0
      %8253 = vmatprep.mubr.bf16.mxu0 0
      %8254 = vmatmul.mubr.bf16.gmra.mxu0 %v8151
      %v8255 = vpop.f32.mrf.mxu0
      %v8256 = vadd.f32 0.0, %v8255
      %v8257 = vpop.f32.mrf.mxu0
      %v8258 = vpop.f32.mrf.mxu0
      %v8259 = vadd.f32 0.0, %v8258
      %v8260 = vpop.f32.mrf.mxu0
      %8261 = vmatprep.mubr.bf16.mxu0 0
      %8262 = vmatmul.mubr.bf16.gmra.mxu0 %v8154
      %v8263 = vpop.f32.mrf.mxu0
      %v8264 = vadd.f32 0.0, %v8263
      %v8265 = vpop.f32.mrf.mxu0
      %v8266 = vpop.f32.mrf.mxu0
      %v8267 = vadd.f32 0.0, %v8266
      %v8268 = vpop.f32.mrf.mxu0
      %8269 = vmatprep.mubr.bf16.mxu0 0
      %8270 = vmatmul.mubr.bf16.gmra.mxu0 %v8157
      %v8271 = vpop.f32.mrf.mxu0
      %v8272 = vadd.f32 0.0, %v8271
      %v8273 = vpop.f32.mrf.mxu0
      %v8274 = vpop.f32.mrf.mxu0
      %v8275 = vadd.f32 0.0, %v8274
      %v8276 = vpop.f32.mrf.mxu0
      %8277 = vmatprep.mubr.bf16.mxu0 0
      %8278 = vmatmul.mubr.bf16.gmra.mxu0 %v8160
      %v8279 = vpop.f32.mrf.mxu0
      %v8280 = vadd.f32 0.0, %v8279
      %v8281 = vpop.f32.mrf.mxu0
      %v8282 = vpop.f32.mrf.mxu0
      %v8283 = vadd.f32 0.0, %v8282
      %v8284 = vpop.f32.mrf.mxu0
      %8285 = vmatprep.mubr.bf16.mxu0 0
      %8286 = vmatmul.mubr.bf16.gmra.mxu0 %v8163
      %v8287 = vpop.f32.mrf.mxu0
      %v8288 = vadd.f32 0.0, %v8287
      %v8289 = vpop.f32.mrf.mxu0
      %v8290 = vpop.f32.mrf.mxu0
      %v8291 = vadd.f32 0.0, %v8290
      %v8292 = vpop.f32.mrf.mxu0
      %8293 = vmatprep.mubr.bf16.mxu0 0
      %8294 = vmatmul.mubr.bf16.gmra.mxu0 %v8166
      %v8295 = vpop.f32.mrf.mxu0
      %v8296 = vadd.f32 0.0, %v8295
      %v8297 = vpop.f32.mrf.mxu0
      %v8298 = vpop.f32.mrf.mxu0
      %v8299 = vadd.f32 0.0, %v8298
      %v8300 = vpop.f32.mrf.mxu0
      %8301 = vmatprep.mubr.bf16.mxu0 0
      %8302 = vmatmul.mubr.bf16.gmra.mxu0 %v8169
      %v8303 = vpop.f32.mrf.mxu0
      %v8304 = vadd.f32 0.0, %v8303
      %v8305 = vpop.f32.mrf.mxu0
      %v8306 = vpop.f32.mrf.mxu0
      %v8307 = vadd.f32 0.0, %v8306
      %v8308 = vpop.f32.mrf.mxu0
      %8309 = vmatprep.mubr.bf16.mxu0 0
      %8310 = vmatmul.mubr.bf16.gmra.mxu0 %v8172
      %v8311 = vpop.f32.mrf.mxu0
      %v8312 = vadd.f32 0.0, %v8311
      %v8313 = vpop.f32.mrf.mxu0
      %v8314 = vpop.f32.mrf.mxu0
      %v8315 = vadd.f32 0.0, %v8314
      %v8316 = vpop.f32.mrf.mxu0
      %8317 = vmatprep.mubr.bf16.mxu0 0
      %8318 = vmatmul.mubr.bf16.gmra.mxu0 %v8175
      %v8319 = vpop.f32.mrf.mxu0
      %v8320 = vadd.f32 0.0, %v8319
      %v8321 = vpop.f32.mrf.mxu0
      %v8322 = vpop.f32.mrf.mxu0
      %v8323 = vadd.f32 0.0, %v8322
      %v8324 = vpop.f32.mrf.mxu0
      %8325 = vmatprep.mubr.bf16.mxu0 0
      %8326 = vmatmul.mubr.bf16.gmra.mxu0 %v8178
      %v8327 = vpop.f32.mrf.mxu0
      %v8328 = vadd.f32 0.0, %v8327
      %v8329 = vpop.f32.mrf.mxu0
      %v8330 = vpop.f32.mrf.mxu0
      %v8331 = vadd.f32 0.0, %v8330
      %v8332 = vpop.f32.mrf.mxu0
      %8333 = vmatprep.mubr.bf16.mxu0 0
      %8334 = vmatmul.mubr.bf16.gmra.mxu0 %v8181
      %v8335 = vpop.f32.mrf.mxu0
      %v8336 = vadd.f32 0.0, %v8335
      %v8337 = vpop.f32.mrf.mxu0
      %v8338 = vpop.f32.mrf.mxu0
      %v8339 = vadd.f32 0.0, %v8338
      %v8340 = vpop.f32.mrf.mxu0
      %8341 = vmatprep.mubr.bf16.mxu0 0
      %8342 = vmatmul.mubr.bf16.gmra.mxu0 %v8184
      %v8343 = vpop.f32.mrf.mxu0
      %v8344 = vadd.f32 0.0, %v8343
      %v8345 = vpop.f32.mrf.mxu0
      %v8346 = vpop.f32.mrf.mxu0
      %v8347 = vadd.f32 0.0, %v8346
      %v8348 = vpop.f32.mrf.mxu0
      %8349 = vdwg.mxu0
      %v8350 = vadd.f32 %v8056, %v8224
      %v8351 = vadd.f32 %v8057, %v8227
      %v8352 = vadd.f32 %v8058, %v8232
      %v8353 = vadd.f32 %v8059, %v8235
      %v8354 = vadd.f32 %v8060, %v8240
      %v8355 = vadd.f32 %v8061, %v8243
      %v8356 = vadd.f32 %v8062, %v8248
      %v8357 = vadd.f32 %v8063, %v8251
      %v8358 = vadd.f32 %v8064, %v8256
      %v8359 = vadd.f32 %v8065, %v8259
      %v8360 = vadd.f32 %v8066, %v8264
      %v8361 = vadd.f32 %v8067, %v8267
      %v8362 = vadd.f32 %v8068, %v8272
      %v8363 = vadd.f32 %v8069, %v8275
      %v8364 = vadd.f32 %v8070, %v8280
      %v8365 = vadd.f32 %v8071, %v8283
      %v8366 = vadd.f32 %v8072, %v8288
      %v8367 = vadd.f32 %v8073, %v8291
      %v8368 = vadd.f32 %v8074, %v8296
      %v8369 = vadd.f32 %v8075, %v8299
      %v8370 = vadd.f32 %v8076, %v8304
      %v8371 = vadd.f32 %v8077, %v8307
      %v8372 = vadd.f32 %v8078, %v8312
      %v8373 = vadd.f32 %v8079, %v8315
      %v8374 = vadd.f32 %v8080, %v8320
      %v8375 = vadd.f32 %v8081, %v8323
      %v8376 = vadd.f32 %v8082, %v8328
      %v8377 = vadd.f32 %v8083, %v8331
      %v8378 = vadd.f32 %v8084, %v8336
      %v8379 = vadd.f32 %v8085, %v8339
      %v8380 = vadd.f32 %v8086, %v8344
      %v8381 = vadd.f32 %v8087, %v8347
      %v8382 = vld [vmem:[#allocation3 + $0x29] sm:$0xff]
      %v8383 = vld [vmem:[#allocation3 + $0x31] sm:$0xff]
      %v8384 = vld [vmem:[#allocation3 + $0x39] sm:$0xff]
      %v8385 = vld [vmem:[#allocation3 + $0x41] sm:$0xff]
      %v8386 = vld [vmem:[#allocation3 + $0x49] sm:$0xff]
      %v8387 = vld [vmem:[#allocation3 + $0x51] sm:$0xff]
      %v8388 = vld [vmem:[#allocation3 + $0x59] sm:$0xff]
      %v8389 = vld [vmem:[#allocation3 + $0x61] sm:$0xff]
      %v8390 = vld [vmem:[#allocation3 + $0x69] sm:$0xff]
      %v8391 = vld [vmem:[#allocation3 + $0x71] sm:$0xff]
      %v8392 = vld [vmem:[#allocation3 + $0x79] sm:$0xff]
      %v8393 = vld [vmem:[#allocation3 + $0x81] sm:$0xff]
      %v8394 = vld [vmem:[#allocation3 + $0x89] sm:$0xff]
      %v8395 = vld [vmem:[#allocation3 + $0x91] sm:$0xff]
      %v8396 = vld [vmem:[#allocation3 + $0x99] sm:$0xff]
      %v8397 = vld [vmem:[#allocation3 + $0xa1] sm:$0xff]
      %v8398 = vld [vmem:[#allocation3 + $0xa9] sm:$0xff]
      %v8399 = vld [vmem:[#allocation3 + $0xb1] sm:$0xff]
      %v8400 = vld [vmem:[#allocation3 + $0xb9] sm:$0xff]
      %v8401 = vld [vmem:[#allocation3 + $0xc1] sm:$0xff]
      %v8402 = vld [vmem:[#allocation3 + $0xc9] sm:$0xff]
      %v8403 = vld [vmem:[#allocation3 + $0xd1] sm:$0xff]
      %v8404 = vld [vmem:[#allocation3 + $0xd9] sm:$0xff]
      %v8405 = vld [vmem:[#allocation3 + $0xe1] sm:$0xff]
      %v8406 = vld [vmem:[#allocation3 + $0xe9] sm:$0xff]
      %v8407 = vld [vmem:[#allocation3 + $0xf1] sm:$0xff]
      %v8408 = vld [vmem:[#allocation3 + $0xf9] sm:$0xff]
      %v8409 = vld [vmem:[#allocation3 + $0x101] sm:$0xff]
      %v8410 = vld [vmem:[#allocation3 + $0x109] sm:$0xff]
      %v8411 = vld [vmem:[#allocation3 + $0x111] sm:$0xff]
      %v8412 = vld [vmem:[#allocation3 + $0x119] sm:$0xff]
      %v8413 = vld [vmem:[#allocation3 + $0x121] sm:$0xff]
      %v8414 = vpack.c.bf16 %v8383, %v8382
      %v8415 = vpack.c.bf16 %v8385, %v8384
      %v8416 = vpack.c.bf16 %v8387, %v8386
      %v8417 = vpack.c.bf16 %v8389, %v8388
      %v8418 = vpack.c.bf16 %v8391, %v8390
      %v8419 = vpack.c.bf16 %v8393, %v8392
      %v8420 = vpack.c.bf16 %v8395, %v8394
      %v8421 = vpack.c.bf16 %v8397, %v8396
      %v8422 = vpack.c.bf16 %v8399, %v8398
      %v8423 = vpack.c.bf16 %v8401, %v8400
      %v8424 = vpack.c.bf16 %v8403, %v8402
      %v8425 = vpack.c.bf16 %v8405, %v8404
      %v8426 = vpack.c.bf16 %v8407, %v8406
      %v8427 = vpack.c.bf16 %v8409, %v8408
      %v8428 = vpack.c.bf16 %v8411, %v8410
      %v8429 = vpack.c.bf16 %v8413, %v8412
      %v8430 = vmul.bf16 %v8414, %v5998
      %v8431 = vmul.bf16 %v8415, %v5999
      %v8432 = vmul.bf16 %v8416, %v6000
      %v8433 = vmul.bf16 %v8417, %v6001
      %v8434 = vmul.bf16 %v8418, %v6002
      %v8435 = vmul.bf16 %v8419, %v6003
      %v8436 = vmul.bf16 %v8420, %v6004
      %v8437 = vmul.bf16 %v8421, %v6005
      %v8438 = vmul.bf16 %v8422, %v6006
      %v8439 = vmul.bf16 %v8423, %v6007
      %v8440 = vmul.bf16 %v8424, %v6008
      %v8441 = vmul.bf16 %v8425, %v6009
      %v8442 = vmul.bf16 %v8426, %v6010
      %v8443 = vmul.bf16 %v8427, %v6011
      %v8444 = vmul.bf16 %v8428, %v6012
      %v8445 = vmul.bf16 %v8429, %v6013
      %s8446 = scalar_lea.vmem %s3, 16
      %v8447 = vld [vmem:[%s8446] sm:$0x3]
      %v8449 = vsel %vm292, %v8430, 0
      %v8452 = vsel %vm292, %v8431, 0
      %v8455 = vsel %vm292, %v8432, 0
      %v8458 = vsel %vm292, %v8433, 0
      %v8461 = vsel %vm292, %v8434, 0
      %v8464 = vsel %vm292, %v8435, 0
      %v8467 = vsel %vm292, %v8436, 0
      %v8470 = vsel %vm292, %v8437, 0
      %v8473 = vsel %vm292, %v8438, 0
      %v8476 = vsel %vm292, %v8439, 0
      %v8479 = vsel %vm292, %v8440, 0
      %v8482 = vsel %vm292, %v8441, 0
      %v8485 = vsel %vm292, %v8442, 0
      %v8488 = vsel %vm292, %v8443, 0
      %v8491 = vsel %vm292, %v8444, 0
      %v8494 = vsel %vm292, %v8445, 0
      %v8497 = vsel %vm6177, %v8447, 0
      %8499 = vmatprep.subr.bf16.mxu0 0
      %8500 = vmatpush1.bf16.msra.mxu0 0
      %8501 = vmatprep.subr.bf16.mxu0 0
      %8502 = vmatpush1.bf16.msra.mxu0 0
      %8503 = vmatprep.subr.bf16.mxu0 0
      %8504 = vmatpush1.bf16.msra.mxu0 0
      %8505 = vmatprep.subr.bf16.mxu0 0
      %8506 = vmatpush1.bf16.msra.mxu0 0
      %8507 = vmatprep.subr.bf16.mxu0 0
      %8508 = vmatpush1.bf16.msra.mxu0 0
      %8509 = vmatprep.subr.bf16.mxu0 0
      %8510 = vmatpush1.bf16.msra.mxu0 0
      %8511 = vmatprep.subr.bf16.mxu0 0
      %8512 = vmatpush1.bf16.msra.mxu0 0
      %8513 = vmatprep.subr.bf16.mxu0 0
      %8514 = vmatpush1.bf16.msra.mxu0 %v8497
      %8515 = vmatprep.subr.bf16.mxu0 0
      %8516 = vmatpush2.bf16.msra.mxu0 0
      %8517 = vmatprep.subr.bf16.mxu0 0
      %8518 = vmatpush2.bf16.msra.mxu0 0
      %8519 = vmatprep.subr.bf16.mxu0 0
      %8520 = vmatpush2.bf16.msra.mxu0 0
      %8521 = vmatprep.subr.bf16.mxu0 0
      %8522 = vmatpush2.bf16.msra.mxu0 0
      %8523 = vmatprep.subr.bf16.mxu0 0
      %8524 = vmatpush2.bf16.msra.mxu0 0
      %8525 = vmatprep.subr.bf16.mxu0 0
      %8526 = vmatpush2.bf16.msra.mxu0 0
      %8527 = vmatprep.subr.bf16.mxu0 0
      %8528 = vmatpush2.bf16.msra.mxu0 0
      %8529 = vmatprep.subr.bf16.mxu0 0
      %8530 = vmatpush2.bf16.msra.mxu0 0
      %8531 = vmatprep.mubr.bf16.mxu0 0
      %8532 = vmatmul.mubr.bf16.gmra.mxu0 %v8449
      %v8533 = vpop.f32.mrf.mxu0
      %v8534 = vadd.f32 0.0, %v8533
      %v8535 = vpop.f32.mrf.mxu0
      %v8536 = vpop.f32.mrf.mxu0
      %v8537 = vadd.f32 0.0, %v8536
      %v8538 = vpop.f32.mrf.mxu0
      %8539 = vmatprep.mubr.bf16.mxu0 0
      %8540 = vmatmul.mubr.bf16.gmra.mxu0 %v8452
      %v8541 = vpop.f32.mrf.mxu0
      %v8542 = vadd.f32 0.0, %v8541
      %v8543 = vpop.f32.mrf.mxu0
      %v8544 = vpop.f32.mrf.mxu0
      %v8545 = vadd.f32 0.0, %v8544
      %v8546 = vpop.f32.mrf.mxu0
      %8547 = vmatprep.mubr.bf16.mxu0 0
      %8548 = vmatmul.mubr.bf16.gmra.mxu0 %v8455
      %v8549 = vpop.f32.mrf.mxu0
      %v8550 = vadd.f32 0.0, %v8549
      %v8551 = vpop.f32.mrf.mxu0
      %v8552 = vpop.f32.mrf.mxu0
      %v8553 = vadd.f32 0.0, %v8552
      %v8554 = vpop.f32.mrf.mxu0
      %8555 = vmatprep.mubr.bf16.mxu0 0
      %8556 = vmatmul.mubr.bf16.gmra.mxu0 %v8458
      %v8557 = vpop.f32.mrf.mxu0
      %v8558 = vadd.f32 0.0, %v8557
      %v8559 = vpop.f32.mrf.mxu0
      %v8560 = vpop.f32.mrf.mxu0
      %v8561 = vadd.f32 0.0, %v8560
      %v8562 = vpop.f32.mrf.mxu0
      %8563 = vmatprep.mubr.bf16.mxu0 0
      %8564 = vmatmul.mubr.bf16.gmra.mxu0 %v8461
      %v8565 = vpop.f32.mrf.mxu0
      %v8566 = vadd.f32 0.0, %v8565
      %v8567 = vpop.f32.mrf.mxu0
      %v8568 = vpop.f32.mrf.mxu0
      %v8569 = vadd.f32 0.0, %v8568
      %v8570 = vpop.f32.mrf.mxu0
      %8571 = vmatprep.mubr.bf16.mxu0 0
      %8572 = vmatmul.mubr.bf16.gmra.mxu0 %v8464
      %v8573 = vpop.f32.mrf.mxu0
      %v8574 = vadd.f32 0.0, %v8573
      %v8575 = vpop.f32.mrf.mxu0
      %v8576 = vpop.f32.mrf.mxu0
      %v8577 = vadd.f32 0.0, %v8576
      %v8578 = vpop.f32.mrf.mxu0
      %8579 = vmatprep.mubr.bf16.mxu0 0
      %8580 = vmatmul.mubr.bf16.gmra.mxu0 %v8467
      %v8581 = vpop.f32.mrf.mxu0
      %v8582 = vadd.f32 0.0, %v8581
      %v8583 = vpop.f32.mrf.mxu0
      %v8584 = vpop.f32.mrf.mxu0
      %v8585 = vadd.f32 0.0, %v8584
      %v8586 = vpop.f32.mrf.mxu0
      %8587 = vmatprep.mubr.bf16.mxu0 0
      %8588 = vmatmul.mubr.bf16.gmra.mxu0 %v8470
      %v8589 = vpop.f32.mrf.mxu0
      %v8590 = vadd.f32 0.0, %v8589
      %v8591 = vpop.f32.mrf.mxu0
      %v8592 = vpop.f32.mrf.mxu0
      %v8593 = vadd.f32 0.0, %v8592
      %v8594 = vpop.f32.mrf.mxu0
      %8595 = vmatprep.mubr.bf16.mxu0 0
      %8596 = vmatmul.mubr.bf16.gmra.mxu0 %v8473
      %v8597 = vpop.f32.mrf.mxu0
      %v8598 = vadd.f32 0.0, %v8597
      %v8599 = vpop.f32.mrf.mxu0
      %v8600 = vpop.f32.mrf.mxu0
      %v8601 = vadd.f32 0.0, %v8600
      %v8602 = vpop.f32.mrf.mxu0
      %8603 = vmatprep.mubr.bf16.mxu0 0
      %8604 = vmatmul.mubr.bf16.gmra.mxu0 %v8476
      %v8605 = vpop.f32.mrf.mxu0
      %v8606 = vadd.f32 0.0, %v8605
      %v8607 = vpop.f32.mrf.mxu0
      %v8608 = vpop.f32.mrf.mxu0
      %v8609 = vadd.f32 0.0, %v8608
      %v8610 = vpop.f32.mrf.mxu0
      %8611 = vmatprep.mubr.bf16.mxu0 0
      %8612 = vmatmul.mubr.bf16.gmra.mxu0 %v8479
      %v8613 = vpop.f32.mrf.mxu0
      %v8614 = vadd.f32 0.0, %v8613
      %v8615 = vpop.f32.mrf.mxu0
      %v8616 = vpop.f32.mrf.mxu0
      %v8617 = vadd.f32 0.0, %v8616
      %v8618 = vpop.f32.mrf.mxu0
      %8619 = vmatprep.mubr.bf16.mxu0 0
      %8620 = vmatmul.mubr.bf16.gmra.mxu0 %v8482
      %v8621 = vpop.f32.mrf.mxu0
      %v8622 = vadd.f32 0.0, %v8621
      %v8623 = vpop.f32.mrf.mxu0
      %v8624 = vpop.f32.mrf.mxu0
      %v8625 = vadd.f32 0.0, %v8624
      %v8626 = vpop.f32.mrf.mxu0
      %8627 = vmatprep.mubr.bf16.mxu0 0
      %8628 = vmatmul.mubr.bf16.gmra.mxu0 %v8485
      %v8629 = vpop.f32.mrf.mxu0
      %v8630 = vadd.f32 0.0, %v8629
      %v8631 = vpop.f32.mrf.mxu0
      %v8632 = vpop.f32.mrf.mxu0
      %v8633 = vadd.f32 0.0, %v8632
      %v8634 = vpop.f32.mrf.mxu0
      %8635 = vmatprep.mubr.bf16.mxu0 0
      %8636 = vmatmul.mubr.bf16.gmra.mxu0 %v8488
      %v8637 = vpop.f32.mrf.mxu0
      %v8638 = vadd.f32 0.0, %v8637
      %v8639 = vpop.f32.mrf.mxu0
      %v8640 = vpop.f32.mrf.mxu0
      %v8641 = vadd.f32 0.0, %v8640
      %v8642 = vpop.f32.mrf.mxu0
      %8643 = vmatprep.mubr.bf16.mxu0 0
      %8644 = vmatmul.mubr.bf16.gmra.mxu0 %v8491
      %v8645 = vpop.f32.mrf.mxu0
      %v8646 = vadd.f32 0.0, %v8645
      %v8647 = vpop.f32.mrf.mxu0
      %v8648 = vpop.f32.mrf.mxu0
      %v8649 = vadd.f32 0.0, %v8648
      %v8650 = vpop.f32.mrf.mxu0
      %8651 = vmatprep.mubr.bf16.mxu0 0
      %8652 = vmatmul.mubr.bf16.gmra.mxu0 %v8494
      %v8653 = vpop.f32.mrf.mxu0
      %v8654 = vadd.f32 0.0, %v8653
      %v8655 = vpop.f32.mrf.mxu0
      %v8656 = vpop.f32.mrf.mxu0
      %v8657 = vadd.f32 0.0, %v8656
      %v8658 = vpop.f32.mrf.mxu0
      %8659 = vdwg.mxu0
      %v8660 = vadd.f32 %v8350, %v8534
      %v8661 = vadd.f32 %v8351, %v8537
      %v8662 = vadd.f32 %v8352, %v8542
      %v8663 = vadd.f32 %v8353, %v8545
      %v8664 = vadd.f32 %v8354, %v8550
      %v8665 = vadd.f32 %v8355, %v8553
      %v8666 = vadd.f32 %v8356, %v8558
      %v8667 = vadd.f32 %v8357, %v8561
      %v8668 = vadd.f32 %v8358, %v8566
      %v8669 = vadd.f32 %v8359, %v8569
      %v8670 = vadd.f32 %v8360, %v8574
      %v8671 = vadd.f32 %v8361, %v8577
      %v8672 = vadd.f32 %v8362, %v8582
      %v8673 = vadd.f32 %v8363, %v8585
      %v8674 = vadd.f32 %v8364, %v8590
      %v8675 = vadd.f32 %v8365, %v8593
      %v8676 = vadd.f32 %v8366, %v8598
      %v8677 = vadd.f32 %v8367, %v8601
      %v8678 = vadd.f32 %v8368, %v8606
      %v8679 = vadd.f32 %v8369, %v8609
      %v8680 = vadd.f32 %v8370, %v8614
      %v8681 = vadd.f32 %v8371, %v8617
      %v8682 = vadd.f32 %v8372, %v8622
      %v8683 = vadd.f32 %v8373, %v8625
      %v8684 = vadd.f32 %v8374, %v8630
      %v8685 = vadd.f32 %v8375, %v8633
      %v8686 = vadd.f32 %v8376, %v8638
      %v8687 = vadd.f32 %v8377, %v8641
      %v8688 = vadd.f32 %v8378, %v8646
      %v8689 = vadd.f32 %v8379, %v8649
      %v8690 = vadd.f32 %v8380, %v8654
      %v8691 = vadd.f32 %v8381, %v8657
      %v8692 = vld [vmem:[%s4] sm:$0x1]
      %v8694 = vlaneseq
      %v8695 = vshrl.u32 %v8694, 7
      %v8696 = vsub.s32 0, %v8695
      %v8697 = vrot.slane %v8692, %v8696
      %v8699 = vadd.f32 %v8660, %v8697
      %v8700 = vadd.f32 %v8661, %v8697
      %v8701 = vadd.f32 %v8662, %v8697
      %v8702 = vadd.f32 %v8663, %v8697
      %v8703 = vadd.f32 %v8664, %v8697
      %v8704 = vadd.f32 %v8665, %v8697
      %v8705 = vadd.f32 %v8666, %v8697
      %v8706 = vadd.f32 %v8667, %v8697
      %v8707 = vadd.f32 %v8668, %v8697
      %v8708 = vadd.f32 %v8669, %v8697
      %v8709 = vadd.f32 %v8670, %v8697
      %v8710 = vadd.f32 %v8671, %v8697
      %v8711 = vadd.f32 %v8672, %v8697
      %v8712 = vadd.f32 %v8673, %v8697
      %v8713 = vadd.f32 %v8674, %v8697
      %v8714 = vadd.f32 %v8675, %v8697
      %v8715 = vadd.f32 %v8676, %v8697
      %v8716 = vadd.f32 %v8677, %v8697
      %v8717 = vadd.f32 %v8678, %v8697
      %v8718 = vadd.f32 %v8679, %v8697
      %v8719 = vadd.f32 %v8680, %v8697
      %v8720 = vadd.f32 %v8681, %v8697
      %v8721 = vadd.f32 %v8682, %v8697
      %v8722 = vadd.f32 %v8683, %v8697
      %v8723 = vadd.f32 %v8684, %v8697
      %v8724 = vadd.f32 %v8685, %v8697
      %v8725 = vadd.f32 %v8686, %v8697
      %v8726 = vadd.f32 %v8687, %v8697
      %v8727 = vadd.f32 %v8688, %v8697
      %v8728 = vadd.f32 %v8689, %v8697
      %v8729 = vadd.f32 %v8690, %v8697
      %v8730 = vadd.f32 %v8691, %v8697
      %v8731 = vmax.f32 %v8699, 0.0
      %v8732 = vmax.f32 %v8700, 0.0
      %v8733 = vmax.f32 %v8701, 0.0
      %v8734 = vmax.f32 %v8702, 0.0
      %v8735 = vmax.f32 %v8703, 0.0
      %v8736 = vmax.f32 %v8704, 0.0
      %v8737 = vmax.f32 %v8705, 0.0
      %v8738 = vmax.f32 %v8706, 0.0
      %v8739 = vmax.f32 %v8707, 0.0
      %v8740 = vmax.f32 %v8708, 0.0
      %v8741 = vmax.f32 %v8709, 0.0
      %v8742 = vmax.f32 %v8710, 0.0
      %v8743 = vmax.f32 %v8711, 0.0
      %v8744 = vmax.f32 %v8712, 0.0
      %v8745 = vmax.f32 %v8713, 0.0
      %v8746 = vmax.f32 %v8714, 0.0
      %v8747 = vmax.f32 %v8715, 0.0
      %v8748 = vmax.f32 %v8716, 0.0
      %v8749 = vmax.f32 %v8717, 0.0
      %v8750 = vmax.f32 %v8718, 0.0
      %v8751 = vmax.f32 %v8719, 0.0
      %v8752 = vmax.f32 %v8720, 0.0
      %v8753 = vmax.f32 %v8721, 0.0
      %v8754 = vmax.f32 %v8722, 0.0
      %v8755 = vmax.f32 %v8723, 0.0
      %v8756 = vmax.f32 %v8724, 0.0
      %v8757 = vmax.f32 %v8725, 0.0
      %v8758 = vmax.f32 %v8726, 0.0
      %v8759 = vmax.f32 %v8727, 0.0
      %v8760 = vmax.f32 %v8728, 0.0
      %v8761 = vmax.f32 %v8729, 0.0
      %v8762 = vmax.f32 %v8730, 0.0
      %vm8763 = vcmask 64512
      %8764 = vst.msk [vmem:[%s224] sm:$0xff] %vm8763, %v8731
      %8765 = vst.msk [vmem:[%s224 + $0x8] sm:$0xff] %vm8763, %v8732
      %8766 = vst.msk [vmem:[%s224 + $0x10] sm:$0xff] %vm8763, %v8733
      %8767 = vst.msk [vmem:[%s224 + $0x18] sm:$0xff] %vm8763, %v8734
      %8768 = vst.msk [vmem:[%s224 + $0x20] sm:$0xff] %vm8763, %v8735
      %8769 = vst.msk [vmem:[%s224 + $0x28] sm:$0xff] %vm8763, %v8736
      %8770 = vst.msk [vmem:[%s224 + $0x30] sm:$0xff] %vm8763, %v8737
      %8771 = vst.msk [vmem:[%s224 + $0x38] sm:$0xff] %vm8763, %v8738
      %8772 = vst.msk [vmem:[%s224 + $0x40] sm:$0xff] %vm8763, %v8739
      %8773 = vst.msk [vmem:[%s224 + $0x48] sm:$0xff] %vm8763, %v8740
      %8774 = vst.msk [vmem:[%s224 + $0x50] sm:$0xff] %vm8763, %v8741
      %8775 = vst.msk [vmem:[%s224 + $0x58] sm:$0xff] %vm8763, %v8742
      %8776 = vst.msk [vmem:[%s224 + $0x60] sm:$0xff] %vm8763, %v8743
      %8777 = vst.msk [vmem:[%s224 + $0x68] sm:$0xff] %vm8763, %v8744
      %8778 = vst.msk [vmem:[%s224 + $0x70] sm:$0xff] %vm8763, %v8745
      %8779 = vst.msk [vmem:[%s224 + $0x78] sm:$0xff] %vm8763, %v8746
      %8780 = vst.msk [vmem:[%s224 + $0x80] sm:$0xff] %vm8763, %v8747
      %8781 = vst.msk [vmem:[%s224 + $0x88] sm:$0xff] %vm8763, %v8748
      %8782 = vst.msk [vmem:[%s224 + $0x90] sm:$0xff] %vm8763, %v8749
      %8783 = vst.msk [vmem:[%s224 + $0x98] sm:$0xff] %vm8763, %v8750
      %8784 = vst.msk [vmem:[%s224 + $0xa0] sm:$0xff] %vm8763, %v8751
      %8785 = vst.msk [vmem:[%s224 + $0xa8] sm:$0xff] %vm8763, %v8752
      %8786 = vst.msk [vmem:[%s224 + $0xb0] sm:$0xff] %vm8763, %v8753
      %8787 = vst.msk [vmem:[%s224 + $0xb8] sm:$0xff] %vm8763, %v8754
      %8788 = vst.msk [vmem:[%s224 + $0xc0] sm:$0xff] %vm8763, %v8755
      %8789 = vst.msk [vmem:[%s224 + $0xc8] sm:$0xff] %vm8763, %v8756
      %8790 = vst.msk [vmem:[%s224 + $0xd0] sm:$0xff] %vm8763, %v8757
      %8791 = vst.msk [vmem:[%s224 + $0xd8] sm:$0xff] %vm8763, %v8758
      %8792 = vst.msk [vmem:[%s224 + $0xe0] sm:$0xff] %vm8763, %v8759
      %8793 = vst.msk [vmem:[%s224 + $0xe8] sm:$0xff] %vm8763, %v8760
      %8794 = vst.msk [vmem:[%s224 + $0xf0] sm:$0xff] %vm8763, %v8761
      %8795 = vst.msk [vmem:[%s224 + $0xf8] sm:$0xff] %vm8763, %v8762
      %p8796 = scmp.lt.s32.totalorder %s16, 1
      %s8797 = scalar_select %p8796, %s16, 1
      %s8798 = smul.addr %s8797, 32
      %s8799 = smul.addr %s8798, 8
      %s8800 = scalar_lea.vmem %s5, %s8799
      // Predicated region
      $region41: #{hb_pass_forward.1} parent=39 // pred_check
        %p8801 = pneg %p144
      $region42: #{hb_pass_forward.1} parent=39 // pred_check_branch
        %8803 = sbr.rel (%p8801) target = $region44
      $region43: #{hb_pass_forward.1} parent=39 // pred_region
        _
      $region44: #{hb_pass_forward.1} parent=39 // pred_fallthru
        _
    $region40: #{hb_pass_forward.1} parent=5 // pred_fallthru
      _
    %p8804 = scmp.le.s32.totalorder 2, %s11
    // Predicated region
    $region45: #{hb_pass_forward.1} parent=5 // pred_check
      %p8805 = pneg %p8804
    $region46: #{hb_pass_forward.1} parent=5 // pred_check_branch
      %8807 = sbr.rel (%p8805) target = $region48
    $region47: #{hb_pass_forward.1} parent=5 // pred_region
      %s8808 = ssub.s32 %s11, 2
      // Predicated region
      $region49: #{hb_pass_forward.1} parent=47 // pred_check
        %p8809 = pneg %p150
      $region50: #{hb_pass_forward.1} parent=47 // pred_check_branch
        %8811 = sbr.rel (%p8809) target = $region52
      $region51: #{hb_pass_forward.1} parent=47 // pred_region
        %p8812 = scmp.lt.s32.totalorder %s17, 1
        %s8813 = scalar_select %p8812, %s17, 1
        %s8814 = smul.addr %s8813, 32
        %s8815 = smul.addr %s8814, 8
        %s8816 = scalar_lea.vmem %s5, %s8815
      $region52: #{hb_pass_forward.1} parent=47 // pred_fallthru
        _
    $region48: #{hb_pass_forward.1} parent=5 // pred_fallthru
      _
  $region6: #{hb_pass_forward.1} parent=0 // loop_footer
    %s15 = sadd.s32 1, %s11
  $region7: #{hb_pass_forward.1} parent=0 // loop_footer_branch
    %10 = sbr.rel target = $region3
  $region8: #{hb_pass_forward.1} parent=0 // loop_exit
    _

</llo_original>
